<compile_context>
chip_gen: v6e
topology: v6e:2x2x1
jax: 0.10.0
libtpu: 0.0.40
codegen_flags: <defaults>
</compile_context>

<pallas_src>
import jax
import jax.numpy as jnp
from jax.experimental import pallas as pl
from jax.experimental.pallas import tpu as pltpu

# ---- problem sizes (512 and 32 are hard-wired by the module) ------------------
B = 2
C = 512
HIDDEN = 32
H = W = 4
BN_EPS = 1e-5


# ============================= Pallas kernel ===================================

def _channel_attention_kernel(sa_ref, w1_ref, w2_ref, aff_ref, out_ref):
    # sa_ref : [B, C, H*W] f32   (channels on sublanes, spatial on lanes)
    # w1_ref : [C, HIDDEN] bf16  (Linear1 weight with eval-mode BN scale folded)
    # w2_ref : [HIDDEN, C] bf16  (Linear2 weight)
    # aff_ref: [2, C]      f32   (row0[:HIDDEN] = folded BN shift, row1 = Linear2 bias)
    # out_ref: [B, C]      f32

    # Global average pool over the spatial axis — stays in VMEM/vregs.
    gap = jnp.mean(sa_ref[...], axis=-1)                        # [B, C] f32

    aff = aff_ref[...]                                          # [2, C] f32
    shift = aff[0:1, 0:HIDDEN]                                  # [1, HIDDEN]
    b2 = aff[1:2, :]                                            # [1, C]

    # Linear(512, 32) with BN scale folded into the weight; bf16 MXU, f32 acc.
    h = jnp.dot(gap.astype(jnp.bfloat16), w1_ref[...],
                preferred_element_type=jnp.float32)             # [B, HIDDEN]
    h = jnp.maximum(h + shift, 0.0)                             # BN shift + ReLU (f32 VPU)

    # Linear(32, 512) + bias.
    y = jnp.dot(h.astype(jnp.bfloat16), w2_ref[...],
                preferred_element_type=jnp.float32) + b2        # [B, C]

    # Numerically-stable sigmoid; reciprocal lands on the EUP slot.
    e = jnp.exp(-jnp.abs(y))
    r = pl.reciprocal(1.0 + e, approx=True)
    sig = jnp.where(y >= 0.0, r, e * r)

    # out = pooled_sa * attention   (lane-dense [B, 512] store)
    out_ref[...] = gap * sig


# ============================= wrapper =========================================

def channel_attention(sa_nchw, params):
    """Forward pass of ChannelAttention. sa_nchw: [B, 512, H, W] -> [B, 512]."""
    b, c, h, w = sa_nchw.shape

    # Free contiguous reshape (no transpose, no HBM copy): [B, C, H, W] -> [B, C, H*W].
    sa = sa_nchw.reshape(b, c, h * w).astype(jnp.float32)

    # Fold eval-mode BatchNorm1d(32) (+ first Linear's bias) into scale/shift,
    # then fold the scale into w1's columns in f32 and cast to bf16 ONCE.
    # TODO(synk): BN is implemented in eval mode (running stats); training-mode
    # batch statistics are not modelled here.
    scale = params["bn_g"] * jax.lax.rsqrt(params["bn_v"] + BN_EPS)        # [32]
    shift = scale * (params["b1"] - params["bn_m"]) + params["bn_b"]       # [32]

    w1f = (params["w1"].T * scale[None, :]).astype(jnp.bfloat16)           # [512, 32]
    w2 = params["w2"].T.astype(jnp.bfloat16)                               # [32, 512]

    # Pack the two small f32 vectors into one lane-dense [2, C] operand.
    aff = jnp.stack([jnp.pad(shift, (0, c - HIDDEN)),
                     params["b2"]]).astype(jnp.float32)                    # [2, 512]

    vmem = pl.BlockSpec(memory_space=pltpu.MemorySpace.VMEM)
    return pl.pallas_call(
        _channel_attention_kernel,
        out_shape=jax.ShapeDtypeStruct((b, c), jnp.float32),
        in_specs=[vmem, vmem, vmem, vmem],
        out_specs=vmem,
    )(sa, w1f, w2, aff)


# ============================= pure-JAX reference ==============================

def channel_attention_ref(sa_nchw, params):
    gap = jnp.mean(sa_nchw.astype(jnp.float32), axis=(2, 3))               # [B, 512]
    h = gap @ params["w1"].T + params["b1"]
    h = (h - params["bn_m"]) * jax.lax.rsqrt(params["bn_v"] + BN_EPS) \
        * params["bn_g"] + params["bn_b"]
    h = jnp.maximum(h, 0.0)
    y = jax.nn.sigmoid(h @ params["w2"].T + params["b2"])
    return gap * y


# ============================= parameter init ==================================

def init_params(key):
    """Matches PyTorch defaults: Linear ~ U(-1/sqrt(fan_in), ..), BN identity."""
    k1, k2, k3, k4 = jax.random.split(key, 4)
    bound1 = 1.0 / (C ** 0.5)
    bound2 = 1.0 / (HIDDEN ** 0.5)
    return dict(
        w1=jax.random.uniform(k1, (HIDDEN, C), jnp.float32, -bound1, bound1),
        b1=jax.random.uniform(k2, (HIDDEN,), jnp.float32, -bound1, bound1),
        bn_g=jnp.ones((HIDDEN,), jnp.float32),
        bn_b=jnp.zeros((HIDDEN,), jnp.float32),
        bn_m=jnp.zeros((HIDDEN,), jnp.float32),
        bn_v=jnp.ones((HIDDEN,), jnp.float32),
        w2=jax.random.uniform(k3, (C, HIDDEN), jnp.float32, -bound2, bound2),
        b2=jax.random.uniform(k4, (C,), jnp.float32, -bound2, bound2),
    )


# ============================= main ============================================

if __name__ == "__main__":
    key = jax.random.PRNGKey(0)
    kx, kp = jax.random.split(key)

    x = jax.random.normal(kx, (B, C, H, W), jnp.float32)   # [2, 512, 4, 4]
    params = init_params(kp)

    fwd = jax.jit(channel_attention)
    out = fwd(x, params)
    jax.block_until_ready(out)

    assert out.shape == (B, C)
    assert bool(jnp.all(jnp.isfinite(out)))

    # Loose tolerance: bf16 MXU operands (+ approx reciprocal) vs f32 reference.
    ref = channel_attention_ref(x, params)
    assert bool(jnp.allclose(out, ref, rtol=2e-2, atol=1e-2))

    print("KERNEL_OK")
</pallas_src>

<mosaic_0001>
module attributes {stable_mosaic.version = 11 : i64} {
  func.func @_channel_attention_kernel(%arg0: memref<2x512x16xf32, #tpu.memory_space<vmem>>, %arg1: memref<512x32xbf16, #tpu.memory_space<vmem>>, %arg2: memref<32x512xbf16, #tpu.memory_space<vmem>>, %arg3: memref<2x512xf32, #tpu.memory_space<vmem>>, %arg4: memref<2x512xf32, #tpu.memory_space<vmem>>) attributes {dimension_semantics = [], scalar_prefetch = 0 : i64, scratch_operands = 0 : i64, tpu.core_type = #tpu.core_type<tc>} {
    %c0 = arith.constant 0 : index
    %c0_0 = arith.constant 0 : index
    %c0_1 = arith.constant 0 : index
    %0 = vector.load %arg0[%c0, %c0_0, %c0_1] : memref<2x512x16xf32, #tpu.memory_space<vmem>>, vector<2x512x16xf32>
    %cst = arith.constant dense<0.000000e+00> : vector<2x512xf32>
    %1 = vector.multi_reduction <add>, %0, %cst [2] : vector<2x512x16xf32> to vector<2x512xf32>
    %cst_2 = arith.constant 1.600000e+01 : f32
    %2 = vector.broadcast %cst_2 : f32 to vector<2x512xf32>
    %3 = arith.divf %1, %2 : vector<2x512xf32>
    %c0_3 = arith.constant 0 : index
    %c0_4 = arith.constant 0 : index
    %4 = vector.load %arg3[%c0_3, %c0_4] : memref<2x512xf32, #tpu.memory_space<vmem>>, vector<2x512xf32>
    %5 = vector.extract_strided_slice %4 {offsets = [0, 0], sizes = [1, 32], strides = [1, 1]} : vector<2x512xf32> to vector<1x32xf32>
    %6 = vector.extract_strided_slice %4 {offsets = [1, 0], sizes = [1, 512], strides = [1, 1]} : vector<2x512xf32> to vector<1x512xf32>
    %7 = arith.truncf %3 : vector<2x512xf32> to vector<2x512xbf16>
    %c0_5 = arith.constant 0 : index
    %c0_6 = arith.constant 0 : index
    %8 = vector.load %arg1[%c0_5, %c0_6] : memref<512x32xbf16, #tpu.memory_space<vmem>>, vector<512x32xbf16>
    %cst_7 = arith.constant dense<0.000000e+00> : vector<2x32xf32>
    %9 = tpu.matmul %7, %8, %cst_7 {dimension_numbers = #tpu.dot_dimension_numbers<[1], [0], [0], [1], [0, 0, 1, 1], [], []>} : vector<2x512xbf16>, vector<512x32xbf16>, vector<2x32xf32> -> vector<2x32xf32>
    %10 = vector.broadcast %5 : vector<1x32xf32> to vector<2x32xf32>
    %11 = arith.addf %9, %10 : vector<2x32xf32>
    %cst_8 = arith.constant 0.000000e+00 : f32
    %12 = vector.broadcast %cst_8 : f32 to vector<2x32xf32>
    %13 = arith.maximumf %11, %12 : vector<2x32xf32>
    %14 = arith.truncf %13 : vector<2x32xf32> to vector<2x32xbf16>
    %c0_9 = arith.constant 0 : index
    %c0_10 = arith.constant 0 : index
    %15 = vector.load %arg2[%c0_9, %c0_10] : memref<32x512xbf16, #tpu.memory_space<vmem>>, vector<32x512xbf16>
    %cst_11 = arith.constant dense<0.000000e+00> : vector<2x512xf32>
    %16 = tpu.matmul %14, %15, %cst_11 {dimension_numbers = #tpu.dot_dimension_numbers<[1], [0], [0], [1], [0, 0, 1, 1], [], []>} : vector<2x32xbf16>, vector<32x512xbf16>, vector<2x512xf32> -> vector<2x512xf32>
    %17 = vector.broadcast %6 : vector<1x512xf32> to vector<2x512xf32>
    %18 = arith.addf %16, %17 : vector<2x512xf32>
    %19 = math.absf %18 : vector<2x512xf32>
    %cst_12 = arith.constant 0.000000e+00 : f32
    %20 = vector.broadcast %cst_12 : f32 to vector<2x512xf32>
    %21 = arith.subf %20, %19 : vector<2x512xf32>
    %22 = math.exp %21 : vector<2x512xf32>
    %cst_13 = arith.constant 1.000000e+00 : f32
    %23 = vector.broadcast %cst_13 : f32 to vector<2x512xf32>
    %24 = arith.addf %23, %22 : vector<2x512xf32>
    %25 = tpu.reciprocal %24 {approx = true} : vector<2x512xf32> -> vector<2x512xf32>
    %cst_14 = arith.constant 0.000000e+00 : f32
    %26 = vector.broadcast %cst_14 : f32 to vector<2x512xf32>
    %27 = arith.cmpf oge, %18, %26 : vector<2x512xf32>
    %28 = arith.mulf %22, %25 : vector<2x512xf32>
    %29 = arith.select %27, %25, %28 : vector<2x512xi1>, vector<2x512xf32>
    %30 = arith.mulf %3, %29 : vector<2x512xf32>
    %c0_15 = arith.constant 0 : index
    %c0_16 = arith.constant 0 : index
    %31 = vector.load %arg4[%c0_15, %c0_16] : memref<2x512xf32, #tpu.memory_space<vmem>>, vector<2x512xf32>
    tpu.vector_store %arg4[%c0_15, %c0_16], %30 {strides = array<i32>} : memref<2x512xf32, #tpu.memory_space<vmem>>, vector<2x512xf32>,
    return
  }
}

</mosaic_0001>

<llo_original>
// kernel: channel_attention.1
$region0: #{channel_attention.1}
  #allocation0 [shape = 'u32[]', space=smem, size = 0x4, offset = 0x4, fixed_abs, tag = 'smem constant byte address 0x4 - core index']
  #allocation1 [shape = 'u32[144,128]{1,0:T(1,128)}', space=vmem, size = 0x12000, scoped, tag = 'internal scratch']
  %s0 = inlined_call_operand.vmem [shape: f32[2,512,16], index: 0, kind: input, shape index: {}]
  %s1 = inlined_call_operand.vmem [shape: bf16[512,32], index: 1, kind: input, shape index: {}]
  %s2 = inlined_call_operand.vmem [shape: bf16[32,512], index: 2, kind: input, shape index: {}]
  %s3 = inlined_call_operand.vmem [shape: f32[2,512], index: 3, kind: input, shape index: {}]
  %s4 = inlined_call_operand.hbm [shape: f32[2,512], index: 4, kind: output, shape index: {}]
  %s5 = sld [smem:[#allocation0]]
  $region26: #{channel_attention.1} parent=0
    _
  %s7 = ssub.s32 1, %s5
  %s8 = scalar_select 0, %s7, %s5
  $region1: #{channel_attention.1} parent=0
    #allocation2 [shape = 'u8[4096]{0}', space=vmem, size = 0x1000, scoped, tag = 'output window, operand 0, single buffered']
    #allocation3 [shape = 's32[1]{0}', space=sflag, size = 0x4, scoped, tag = 'scoped memory for channel_attention.1']
    %9 = vsyncpa [#allocation3], 0
    // Predicated region
    $region2: #{channel_attention.1} parent=1 // pred_check
      _
    $region3: #{channel_attention.1} parent=1 // pred_check_branch
      %11 = sbr.rel (0) target = $region5
    $region4: #{channel_attention.1} parent=1 // pred_region
      _
    $region5: #{channel_attention.1} parent=1 // pred_fallthru
      _
    // Predicated region
    $region6: #{channel_attention.1} parent=1 // pred_check
      _
    $region7: #{channel_attention.1} parent=1 // pred_check_branch
      %13 = sbr.rel (0) target = $region9
    $region8: #{channel_attention.1} parent=1 // pred_region
      _
    $region9: #{channel_attention.1} parent=1 // pred_fallthru
      _
    // Predicated region
    $region10: #{channel_attention.1} parent=1 // pred_check
      _
    $region11: #{channel_attention.1} parent=1 // pred_check_branch
      %15 = sbr.rel (0) target = $region13
    $region12: #{channel_attention.1} parent=1 // pred_region
      _
    $region13: #{channel_attention.1} parent=1 // pred_fallthru
      _
    // Predicated region
    $region14: #{channel_attention.1} parent=1 // pred_check
      _
    $region15: #{channel_attention.1} parent=1 // pred_check_branch
      %17 = sbr.rel (0) target = $region17
    $region16: #{channel_attention.1} parent=1 // pred_region
      _
    $region17: #{channel_attention.1} parent=1 // pred_fallthru
      _
    %v19 = vld [vmem:[%s0] sm:$0xff]
    %v20 = vld [vmem:[%s0 + $0x8] sm:$0xff]
    %v21 = vld [vmem:[%s0 + $0x10] sm:$0xff]
    %v22 = vld [vmem:[%s0 + $0x18] sm:$0xff]
    %v23 = vld [vmem:[%s0 + $0x20] sm:$0xff]
    %v24 = vld [vmem:[%s0 + $0x28] sm:$0xff]
    %v25 = vld [vmem:[%s0 + $0x30] sm:$0xff]
    %v26 = vld [vmem:[%s0 + $0x38] sm:$0xff]
    %v27 = vld [vmem:[%s0 + $0x40] sm:$0xff]
    %v28 = vld [vmem:[%s0 + $0x48] sm:$0xff]
    %v29 = vld [vmem:[%s0 + $0x50] sm:$0xff]
    %v30 = vld [vmem:[%s0 + $0x58] sm:$0xff]
    %v31 = vld [vmem:[%s0 + $0x60] sm:$0xff]
    %v32 = vld [vmem:[%s0 + $0x68] sm:$0xff]
    %v33 = vld [vmem:[%s0 + $0x70] sm:$0xff]
    %v34 = vld [vmem:[%s0 + $0x78] sm:$0xff]
    %v35 = vld [vmem:[%s0 + $0x80] sm:$0xff]
    %v36 = vld [vmem:[%s0 + $0x88] sm:$0xff]
    %v37 = vld [vmem:[%s0 + $0x90] sm:$0xff]
    %v38 = vld [vmem:[%s0 + $0x98] sm:$0xff]
    %v39 = vld [vmem:[%s0 + $0xa0] sm:$0xff]
    %v40 = vld [vmem:[%s0 + $0xa8] sm:$0xff]
    %v41 = vld [vmem:[%s0 + $0xb0] sm:$0xff]
    %v42 = vld [vmem:[%s0 + $0xb8] sm:$0xff]
    %v43 = vld [vmem:[%s0 + $0xc0] sm:$0xff]
    %v44 = vld [vmem:[%s0 + $0xc8] sm:$0xff]
    %v45 = vld [vmem:[%s0 + $0xd0] sm:$0xff]
    %v46 = vld [vmem:[%s0 + $0xd8] sm:$0xff]
    %v47 = vld [vmem:[%s0 + $0xe0] sm:$0xff]
    %v48 = vld [vmem:[%s0 + $0xe8] sm:$0xff]
    %v49 = vld [vmem:[%s0 + $0xf0] sm:$0xff]
    %v50 = vld [vmem:[%s0 + $0xf8] sm:$0xff]
    %v51 = vld [vmem:[%s0 + $0x100] sm:$0xff]
    %v52 = vld [vmem:[%s0 + $0x108] sm:$0xff]
    %v53 = vld [vmem:[%s0 + $0x110] sm:$0xff]
    %v54 = vld [vmem:[%s0 + $0x118] sm:$0xff]
    %v55 = vld [vmem:[%s0 + $0x120] sm:$0xff]
    %v56 = vld [vmem:[%s0 + $0x128] sm:$0xff]
    %v57 = vld [vmem:[%s0 + $0x130] sm:$0xff]
    %v58 = vld [vmem:[%s0 + $0x138] sm:$0xff]
    %v59 = vld [vmem:[%s0 + $0x140] sm:$0xff]
    %v60 = vld [vmem:[%s0 + $0x148] sm:$0xff]
    %v61 = vld [vmem:[%s0 + $0x150] sm:$0xff]
    %v62 = vld [vmem:[%s0 + $0x158] sm:$0xff]
    %v63 = vld [vmem:[%s0 + $0x160] sm:$0xff]
    %v64 = vld [vmem:[%s0 + $0x168] sm:$0xff]
    %v65 = vld [vmem:[%s0 + $0x170] sm:$0xff]
    %v66 = vld [vmem:[%s0 + $0x178] sm:$0xff]
    %v67 = vld [vmem:[%s0 + $0x180] sm:$0xff]
    %v68 = vld [vmem:[%s0 + $0x188] sm:$0xff]
    %v69 = vld [vmem:[%s0 + $0x190] sm:$0xff]
    %v70 = vld [vmem:[%s0 + $0x198] sm:$0xff]
    %v71 = vld [vmem:[%s0 + $0x1a0] sm:$0xff]
    %v72 = vld [vmem:[%s0 + $0x1a8] sm:$0xff]
    %v73 = vld [vmem:[%s0 + $0x1b0] sm:$0xff]
    %v74 = vld [vmem:[%s0 + $0x1b8] sm:$0xff]
    %v75 = vld [vmem:[%s0 + $0x1c0] sm:$0xff]
    %v76 = vld [vmem:[%s0 + $0x1c8] sm:$0xff]
    %v77 = vld [vmem:[%s0 + $0x1d0] sm:$0xff]
    %v78 = vld [vmem:[%s0 + $0x1d8] sm:$0xff]
    %v79 = vld [vmem:[%s0 + $0x1e0] sm:$0xff]
    %v80 = vld [vmem:[%s0 + $0x1e8] sm:$0xff]
    %v81 = vld [vmem:[%s0 + $0x1f0] sm:$0xff]
    %v82 = vld [vmem:[%s0 + $0x1f8] sm:$0xff]
    %v83 = vld [vmem:[%s0 + $0x200] sm:$0xff]
    %v84 = vld [vmem:[%s0 + $0x208] sm:$0xff]
    %v85 = vld [vmem:[%s0 + $0x210] sm:$0xff]
    %v86 = vld [vmem:[%s0 + $0x218] sm:$0xff]
    %v87 = vld [vmem:[%s0 + $0x220] sm:$0xff]
    %v88 = vld [vmem:[%s0 + $0x228] sm:$0xff]
    %v89 = vld [vmem:[%s0 + $0x230] sm:$0xff]
    %v90 = vld [vmem:[%s0 + $0x238] sm:$0xff]
    %v91 = vld [vmem:[%s0 + $0x240] sm:$0xff]
    %v92 = vld [vmem:[%s0 + $0x248] sm:$0xff]
    %v93 = vld [vmem:[%s0 + $0x250] sm:$0xff]
    %v94 = vld [vmem:[%s0 + $0x258] sm:$0xff]
    %v95 = vld [vmem:[%s0 + $0x260] sm:$0xff]
    %v96 = vld [vmem:[%s0 + $0x268] sm:$0xff]
    %v97 = vld [vmem:[%s0 + $0x270] sm:$0xff]
    %v98 = vld [vmem:[%s0 + $0x278] sm:$0xff]
    %v99 = vld [vmem:[%s0 + $0x280] sm:$0xff]
    %v100 = vld [vmem:[%s0 + $0x288] sm:$0xff]
    %v101 = vld [vmem:[%s0 + $0x290] sm:$0xff]
    %v102 = vld [vmem:[%s0 + $0x298] sm:$0xff]
    %v103 = vld [vmem:[%s0 + $0x2a0] sm:$0xff]
    %v104 = vld [vmem:[%s0 + $0x2a8] sm:$0xff]
    %v105 = vld [vmem:[%s0 + $0x2b0] sm:$0xff]
    %v106 = vld [vmem:[%s0 + $0x2b8] sm:$0xff]
    %v107 = vld [vmem:[%s0 + $0x2c0] sm:$0xff]
    %v108 = vld [vmem:[%s0 + $0x2c8] sm:$0xff]
    %v109 = vld [vmem:[%s0 + $0x2d0] sm:$0xff]
    %v110 = vld [vmem:[%s0 + $0x2d8] sm:$0xff]
    %v111 = vld [vmem:[%s0 + $0x2e0] sm:$0xff]
    %v112 = vld [vmem:[%s0 + $0x2e8] sm:$0xff]
    %v113 = vld [vmem:[%s0 + $0x2f0] sm:$0xff]
    %v114 = vld [vmem:[%s0 + $0x2f8] sm:$0xff]
    %v115 = vld [vmem:[%s0 + $0x300] sm:$0xff]
    %v116 = vld [vmem:[%s0 + $0x308] sm:$0xff]
    %v117 = vld [vmem:[%s0 + $0x310] sm:$0xff]
    %v118 = vld [vmem:[%s0 + $0x318] sm:$0xff]
    %v119 = vld [vmem:[%s0 + $0x320] sm:$0xff]
    %v120 = vld [vmem:[%s0 + $0x328] sm:$0xff]
    %v121 = vld [vmem:[%s0 + $0x330] sm:$0xff]
    %v122 = vld [vmem:[%s0 + $0x338] sm:$0xff]
    %v123 = vld [vmem:[%s0 + $0x340] sm:$0xff]
    %v124 = vld [vmem:[%s0 + $0x348] sm:$0xff]
    %v125 = vld [vmem:[%s0 + $0x350] sm:$0xff]
    %v126 = vld [vmem:[%s0 + $0x358] sm:$0xff]
    %v127 = vld [vmem:[%s0 + $0x360] sm:$0xff]
    %v128 = vld [vmem:[%s0 + $0x368] sm:$0xff]
    %v129 = vld [vmem:[%s0 + $0x370] sm:$0xff]
    %v130 = vld [vmem:[%s0 + $0x378] sm:$0xff]
    %v131 = vld [vmem:[%s0 + $0x380] sm:$0xff]
    %v132 = vld [vmem:[%s0 + $0x388] sm:$0xff]
    %v133 = vld [vmem:[%s0 + $0x390] sm:$0xff]
    %v134 = vld [vmem:[%s0 + $0x398] sm:$0xff]
    %v135 = vld [vmem:[%s0 + $0x3a0] sm:$0xff]
    %v136 = vld [vmem:[%s0 + $0x3a8] sm:$0xff]
    %v137 = vld [vmem:[%s0 + $0x3b0] sm:$0xff]
    %v138 = vld [vmem:[%s0 + $0x3b8] sm:$0xff]
    %v139 = vld [vmem:[%s0 + $0x3c0] sm:$0xff]
    %v140 = vld [vmem:[%s0 + $0x3c8] sm:$0xff]
    %v141 = vld [vmem:[%s0 + $0x3d0] sm:$0xff]
    %v142 = vld [vmem:[%s0 + $0x3d8] sm:$0xff]
    %v143 = vld [vmem:[%s0 + $0x3e0] sm:$0xff]
    %v144 = vld [vmem:[%s0 + $0x3e8] sm:$0xff]
    %v145 = vld [vmem:[%s0 + $0x3f0] sm:$0xff]
    %v146 = vld [vmem:[%s0 + $0x3f8] sm:$0xff]
    %vm147 = vcmask 130048
    %v148 = vsel %vm147, %v19, 0.0
    %149 = vadd.xlane.f32.xlu0 %v148
    %v150 = vpop.xlane.xlu0 %149
    %v151 = vsel %vm147, %v20, 0.0
    %152 = vadd.xlane.f32.xlu0 %v151
    %v153 = vpop.xlane.xlu0 %152
    %v154 = vsel %vm147, %v21, 0.0
    %155 = vadd.xlane.f32.xlu0 %v154
    %v156 = vpop.xlane.xlu0 %155
    %v157 = vsel %vm147, %v22, 0.0
    %158 = vadd.xlane.f32.xlu0 %v157
    %v159 = vpop.xlane.xlu0 %158
    %v160 = vsel %vm147, %v23, 0.0
    %161 = vadd.xlane.f32.xlu0 %v160
    %v162 = vpop.xlane.xlu0 %161
    %v163 = vsel %vm147, %v24, 0.0
    %164 = vadd.xlane.f32.xlu0 %v163
    %v165 = vpop.xlane.xlu0 %164
    %v166 = vsel %vm147, %v25, 0.0
    %167 = vadd.xlane.f32.xlu0 %v166
    %v168 = vpop.xlane.xlu0 %167
    %v169 = vsel %vm147, %v26, 0.0
    %170 = vadd.xlane.f32.xlu0 %v169
    %v171 = vpop.xlane.xlu0 %170
    %v172 = vsel %vm147, %v27, 0.0
    %173 = vadd.xlane.f32.xlu0 %v172
    %v174 = vpop.xlane.xlu0 %173
    %v175 = vsel %vm147, %v28, 0.0
    %176 = vadd.xlane.f32.xlu0 %v175
    %v177 = vpop.xlane.xlu0 %176
    %v178 = vsel %vm147, %v29, 0.0
    %179 = vadd.xlane.f32.xlu0 %v178
    %v180 = vpop.xlane.xlu0 %179
    %v181 = vsel %vm147, %v30, 0.0
    %182 = vadd.xlane.f32.xlu0 %v181
    %v183 = vpop.xlane.xlu0 %182
    %v184 = vsel %vm147, %v31, 0.0
    %185 = vadd.xlane.f32.xlu0 %v184
    %v186 = vpop.xlane.xlu0 %185
    %v187 = vsel %vm147, %v32, 0.0
    %188 = vadd.xlane.f32.xlu0 %v187
    %v189 = vpop.xlane.xlu0 %188
    %v190 = vsel %vm147, %v33, 0.0
    %191 = vadd.xlane.f32.xlu0 %v190
    %v192 = vpop.xlane.xlu0 %191
    %v193 = vsel %vm147, %v34, 0.0
    %194 = vadd.xlane.f32.xlu0 %v193
    %v195 = vpop.xlane.xlu0 %194
    %v196 = vsel %vm147, %v35, 0.0
    %197 = vadd.xlane.f32.xlu0 %v196
    %v198 = vpop.xlane.xlu0 %197
    %v199 = vsel %vm147, %v36, 0.0
    %200 = vadd.xlane.f32.xlu0 %v199
    %v201 = vpop.xlane.xlu0 %200
    %v202 = vsel %vm147, %v37, 0.0
    %203 = vadd.xlane.f32.xlu0 %v202
    %v204 = vpop.xlane.xlu0 %203
    %v205 = vsel %vm147, %v38, 0.0
    %206 = vadd.xlane.f32.xlu0 %v205
    %v207 = vpop.xlane.xlu0 %206
    %v208 = vsel %vm147, %v39, 0.0
    %209 = vadd.xlane.f32.xlu0 %v208
    %v210 = vpop.xlane.xlu0 %209
    %v211 = vsel %vm147, %v40, 0.0
    %212 = vadd.xlane.f32.xlu0 %v211
    %v213 = vpop.xlane.xlu0 %212
    %v214 = vsel %vm147, %v41, 0.0
    %215 = vadd.xlane.f32.xlu0 %v214
    %v216 = vpop.xlane.xlu0 %215
    %v217 = vsel %vm147, %v42, 0.0
    %218 = vadd.xlane.f32.xlu0 %v217
    %v219 = vpop.xlane.xlu0 %218
    %v220 = vsel %vm147, %v43, 0.0
    %221 = vadd.xlane.f32.xlu0 %v220
    %v222 = vpop.xlane.xlu0 %221
    %v223 = vsel %vm147, %v44, 0.0
    %224 = vadd.xlane.f32.xlu0 %v223
    %v225 = vpop.xlane.xlu0 %224
    %v226 = vsel %vm147, %v45, 0.0
    %227 = vadd.xlane.f32.xlu0 %v226
    %v228 = vpop.xlane.xlu0 %227
    %v229 = vsel %vm147, %v46, 0.0
    %230 = vadd.xlane.f32.xlu0 %v229
    %v231 = vpop.xlane.xlu0 %230
    %v232 = vsel %vm147, %v47, 0.0
    %233 = vadd.xlane.f32.xlu0 %v232
    %v234 = vpop.xlane.xlu0 %233
    %v235 = vsel %vm147, %v48, 0.0
    %236 = vadd.xlane.f32.xlu0 %v235
    %v237 = vpop.xlane.xlu0 %236
    %v238 = vsel %vm147, %v49, 0.0
    %239 = vadd.xlane.f32.xlu0 %v238
    %v240 = vpop.xlane.xlu0 %239
    %v241 = vsel %vm147, %v50, 0.0
    %242 = vadd.xlane.f32.xlu0 %v241
    %v243 = vpop.xlane.xlu0 %242
    %v244 = vsel %vm147, %v51, 0.0
    %245 = vadd.xlane.f32.xlu0 %v244
    %v246 = vpop.xlane.xlu0 %245
    %v247 = vsel %vm147, %v52, 0.0
    %248 = vadd.xlane.f32.xlu0 %v247
    %v249 = vpop.xlane.xlu0 %248
    %v250 = vsel %vm147, %v53, 0.0
    %251 = vadd.xlane.f32.xlu0 %v250
    %v252 = vpop.xlane.xlu0 %251
    %v253 = vsel %vm147, %v54, 0.0
    %254 = vadd.xlane.f32.xlu0 %v253
    %v255 = vpop.xlane.xlu0 %254
    %v256 = vsel %vm147, %v55, 0.0
    %257 = vadd.xlane.f32.xlu0 %v256
    %v258 = vpop.xlane.xlu0 %257
    %v259 = vsel %vm147, %v56, 0.0
    %260 = vadd.xlane.f32.xlu0 %v259
    %v261 = vpop.xlane.xlu0 %260
    %v262 = vsel %vm147, %v57, 0.0
    %263 = vadd.xlane.f32.xlu0 %v262
    %v264 = vpop.xlane.xlu0 %263
    %v265 = vsel %vm147, %v58, 0.0
    %266 = vadd.xlane.f32.xlu0 %v265
    %v267 = vpop.xlane.xlu0 %266
    %v268 = vsel %vm147, %v59, 0.0
    %269 = vadd.xlane.f32.xlu0 %v268
    %v270 = vpop.xlane.xlu0 %269
    %v271 = vsel %vm147, %v60, 0.0
    %272 = vadd.xlane.f32.xlu0 %v271
    %v273 = vpop.xlane.xlu0 %272
    %v274 = vsel %vm147, %v61, 0.0
    %275 = vadd.xlane.f32.xlu0 %v274
    %v276 = vpop.xlane.xlu0 %275
    %v277 = vsel %vm147, %v62, 0.0
    %278 = vadd.xlane.f32.xlu0 %v277
    %v279 = vpop.xlane.xlu0 %278
    %v280 = vsel %vm147, %v63, 0.0
    %281 = vadd.xlane.f32.xlu0 %v280
    %v282 = vpop.xlane.xlu0 %281
    %v283 = vsel %vm147, %v64, 0.0
    %284 = vadd.xlane.f32.xlu0 %v283
    %v285 = vpop.xlane.xlu0 %284
    %v286 = vsel %vm147, %v65, 0.0
    %287 = vadd.xlane.f32.xlu0 %v286
    %v288 = vpop.xlane.xlu0 %287
    %v289 = vsel %vm147, %v66, 0.0
    %290 = vadd.xlane.f32.xlu0 %v289
    %v291 = vpop.xlane.xlu0 %290
    %v292 = vsel %vm147, %v67, 0.0
    %293 = vadd.xlane.f32.xlu0 %v292
    %v294 = vpop.xlane.xlu0 %293
    %v295 = vsel %vm147, %v68, 0.0
    %296 = vadd.xlane.f32.xlu0 %v295
    %v297 = vpop.xlane.xlu0 %296
    %v298 = vsel %vm147, %v69, 0.0
    %299 = vadd.xlane.f32.xlu0 %v298
    %v300 = vpop.xlane.xlu0 %299
    %v301 = vsel %vm147, %v70, 0.0
    %302 = vadd.xlane.f32.xlu0 %v301
    %v303 = vpop.xlane.xlu0 %302
    %v304 = vsel %vm147, %v71, 0.0
    %305 = vadd.xlane.f32.xlu0 %v304
    %v306 = vpop.xlane.xlu0 %305
    %v307 = vsel %vm147, %v72, 0.0
    %308 = vadd.xlane.f32.xlu0 %v307
    %v309 = vpop.xlane.xlu0 %308
    %v310 = vsel %vm147, %v73, 0.0
    %311 = vadd.xlane.f32.xlu0 %v310
    %v312 = vpop.xlane.xlu0 %311
    %v313 = vsel %vm147, %v74, 0.0
    %314 = vadd.xlane.f32.xlu0 %v313
    %v315 = vpop.xlane.xlu0 %314
    %v316 = vsel %vm147, %v75, 0.0
    %317 = vadd.xlane.f32.xlu0 %v316
    %v318 = vpop.xlane.xlu0 %317
    %v319 = vsel %vm147, %v76, 0.0
    %320 = vadd.xlane.f32.xlu0 %v319
    %v321 = vpop.xlane.xlu0 %320
    %v322 = vsel %vm147, %v77, 0.0
    %323 = vadd.xlane.f32.xlu0 %v322
    %v324 = vpop.xlane.xlu0 %323
    %v325 = vsel %vm147, %v78, 0.0
    %326 = vadd.xlane.f32.xlu0 %v325
    %v327 = vpop.xlane.xlu0 %326
    %v328 = vsel %vm147, %v79, 0.0
    %329 = vadd.xlane.f32.xlu0 %v328
    %v330 = vpop.xlane.xlu0 %329
    %v331 = vsel %vm147, %v80, 0.0
    %332 = vadd.xlane.f32.xlu0 %v331
    %v333 = vpop.xlane.xlu0 %332
    %v334 = vsel %vm147, %v81, 0.0
    %335 = vadd.xlane.f32.xlu0 %v334
    %v336 = vpop.xlane.xlu0 %335
    %v337 = vsel %vm147, %v82, 0.0
    %338 = vadd.xlane.f32.xlu0 %v337
    %v339 = vpop.xlane.xlu0 %338
    %v340 = vsel %vm147, %v83, 0.0
    %341 = vadd.xlane.f32.xlu0 %v340
    %v342 = vpop.xlane.xlu0 %341
    %v343 = vsel %vm147, %v84, 0.0
    %344 = vadd.xlane.f32.xlu0 %v343
    %v345 = vpop.xlane.xlu0 %344
    %v346 = vsel %vm147, %v85, 0.0
    %347 = vadd.xlane.f32.xlu0 %v346
    %v348 = vpop.xlane.xlu0 %347
    %v349 = vsel %vm147, %v86, 0.0
    %350 = vadd.xlane.f32.xlu0 %v349
    %v351 = vpop.xlane.xlu0 %350
    %v352 = vsel %vm147, %v87, 0.0
    %353 = vadd.xlane.f32.xlu0 %v352
    %v354 = vpop.xlane.xlu0 %353
    %v355 = vsel %vm147, %v88, 0.0
    %356 = vadd.xlane.f32.xlu0 %v355
    %v357 = vpop.xlane.xlu0 %356
    %v358 = vsel %vm147, %v89, 0.0
    %359 = vadd.xlane.f32.xlu0 %v358
    %v360 = vpop.xlane.xlu0 %359
    %v361 = vsel %vm147, %v90, 0.0
    %362 = vadd.xlane.f32.xlu0 %v361
    %v363 = vpop.xlane.xlu0 %362
    %v364 = vsel %vm147, %v91, 0.0
    %365 = vadd.xlane.f32.xlu0 %v364
    %v366 = vpop.xlane.xlu0 %365
    %v367 = vsel %vm147, %v92, 0.0
    %368 = vadd.xlane.f32.xlu0 %v367
    %v369 = vpop.xlane.xlu0 %368
    %v370 = vsel %vm147, %v93, 0.0
    %371 = vadd.xlane.f32.xlu0 %v370
    %v372 = vpop.xlane.xlu0 %371
    %v373 = vsel %vm147, %v94, 0.0
    %374 = vadd.xlane.f32.xlu0 %v373
    %v375 = vpop.xlane.xlu0 %374
    %v376 = vsel %vm147, %v95, 0.0
    %377 = vadd.xlane.f32.xlu0 %v376
    %v378 = vpop.xlane.xlu0 %377
    %v379 = vsel %vm147, %v96, 0.0
    %380 = vadd.xlane.f32.xlu0 %v379
    %v381 = vpop.xlane.xlu0 %380
    %v382 = vsel %vm147, %v97, 0.0
    %383 = vadd.xlane.f32.xlu0 %v382
    %v384 = vpop.xlane.xlu0 %383
    %v385 = vsel %vm147, %v98, 0.0
    %386 = vadd.xlane.f32.xlu0 %v385
    %v387 = vpop.xlane.xlu0 %386
    %v388 = vsel %vm147, %v99, 0.0
    %389 = vadd.xlane.f32.xlu0 %v388
    %v390 = vpop.xlane.xlu0 %389
    %v391 = vsel %vm147, %v100, 0.0
    %392 = vadd.xlane.f32.xlu0 %v391
    %v393 = vpop.xlane.xlu0 %392
    %v394 = vsel %vm147, %v101, 0.0
    %395 = vadd.xlane.f32.xlu0 %v394
    %v396 = vpop.xlane.xlu0 %395
    %v397 = vsel %vm147, %v102, 0.0
    %398 = vadd.xlane.f32.xlu0 %v397
    %v399 = vpop.xlane.xlu0 %398
    %v400 = vsel %vm147, %v103, 0.0
    %401 = vadd.xlane.f32.xlu0 %v400
    %v402 = vpop.xlane.xlu0 %401
    %v403 = vsel %vm147, %v104, 0.0
    %404 = vadd.xlane.f32.xlu0 %v403
    %v405 = vpop.xlane.xlu0 %404
    %v406 = vsel %vm147, %v105, 0.0
    %407 = vadd.xlane.f32.xlu0 %v406
    %v408 = vpop.xlane.xlu0 %407
    %v409 = vsel %vm147, %v106, 0.0
    %410 = vadd.xlane.f32.xlu0 %v409
    %v411 = vpop.xlane.xlu0 %410
    %v412 = vsel %vm147, %v107, 0.0
    %413 = vadd.xlane.f32.xlu0 %v412
    %v414 = vpop.xlane.xlu0 %413
    %v415 = vsel %vm147, %v108, 0.0
    %416 = vadd.xlane.f32.xlu0 %v415
    %v417 = vpop.xlane.xlu0 %416
    %v418 = vsel %vm147, %v109, 0.0
    %419 = vadd.xlane.f32.xlu0 %v418
    %v420 = vpop.xlane.xlu0 %419
    %v421 = vsel %vm147, %v110, 0.0
    %422 = vadd.xlane.f32.xlu0 %v421
    %v423 = vpop.xlane.xlu0 %422
    %v424 = vsel %vm147, %v111, 0.0
    %425 = vadd.xlane.f32.xlu0 %v424
    %v426 = vpop.xlane.xlu0 %425
    %v427 = vsel %vm147, %v112, 0.0
    %428 = vadd.xlane.f32.xlu0 %v427
    %v429 = vpop.xlane.xlu0 %428
    %v430 = vsel %vm147, %v113, 0.0
    %431 = vadd.xlane.f32.xlu0 %v430
    %v432 = vpop.xlane.xlu0 %431
    %v433 = vsel %vm147, %v114, 0.0
    %434 = vadd.xlane.f32.xlu0 %v433
    %v435 = vpop.xlane.xlu0 %434
    %v436 = vsel %vm147, %v115, 0.0
    %437 = vadd.xlane.f32.xlu0 %v436
    %v438 = vpop.xlane.xlu0 %437
    %v439 = vsel %vm147, %v116, 0.0
    %440 = vadd.xlane.f32.xlu0 %v439
    %v441 = vpop.xlane.xlu0 %440
    %v442 = vsel %vm147, %v117, 0.0
    %443 = vadd.xlane.f32.xlu0 %v442
    %v444 = vpop.xlane.xlu0 %443
    %v445 = vsel %vm147, %v118, 0.0
    %446 = vadd.xlane.f32.xlu0 %v445
    %v447 = vpop.xlane.xlu0 %446
    %v448 = vsel %vm147, %v119, 0.0
    %449 = vadd.xlane.f32.xlu0 %v448
    %v450 = vpop.xlane.xlu0 %449
    %v451 = vsel %vm147, %v120, 0.0
    %452 = vadd.xlane.f32.xlu0 %v451
    %v453 = vpop.xlane.xlu0 %452
    %v454 = vsel %vm147, %v121, 0.0
    %455 = vadd.xlane.f32.xlu0 %v454
    %v456 = vpop.xlane.xlu0 %455
    %v457 = vsel %vm147, %v122, 0.0
    %458 = vadd.xlane.f32.xlu0 %v457
    %v459 = vpop.xlane.xlu0 %458
    %v460 = vsel %vm147, %v123, 0.0
    %461 = vadd.xlane.f32.xlu0 %v460
    %v462 = vpop.xlane.xlu0 %461
    %v463 = vsel %vm147, %v124, 0.0
    %464 = vadd.xlane.f32.xlu0 %v463
    %v465 = vpop.xlane.xlu0 %464
    %v466 = vsel %vm147, %v125, 0.0
    %467 = vadd.xlane.f32.xlu0 %v466
    %v468 = vpop.xlane.xlu0 %467
    %v469 = vsel %vm147, %v126, 0.0
    %470 = vadd.xlane.f32.xlu0 %v469
    %v471 = vpop.xlane.xlu0 %470
    %v472 = vsel %vm147, %v127, 0.0
    %473 = vadd.xlane.f32.xlu0 %v472
    %v474 = vpop.xlane.xlu0 %473
    %v475 = vsel %vm147, %v128, 0.0
    %476 = vadd.xlane.f32.xlu0 %v475
    %v477 = vpop.xlane.xlu0 %476
    %v478 = vsel %vm147, %v129, 0.0
    %479 = vadd.xlane.f32.xlu0 %v478
    %v480 = vpop.xlane.xlu0 %479
    %v481 = vsel %vm147, %v130, 0.0
    %482 = vadd.xlane.f32.xlu0 %v481
    %v483 = vpop.xlane.xlu0 %482
    %v484 = vsel %vm147, %v131, 0.0
    %485 = vadd.xlane.f32.xlu0 %v484
    %v486 = vpop.xlane.xlu0 %485
    %v487 = vsel %vm147, %v132, 0.0
    %488 = vadd.xlane.f32.xlu0 %v487
    %v489 = vpop.xlane.xlu0 %488
    %v490 = vsel %vm147, %v133, 0.0
    %491 = vadd.xlane.f32.xlu0 %v490
    %v492 = vpop.xlane.xlu0 %491
    %v493 = vsel %vm147, %v134, 0.0
    %494 = vadd.xlane.f32.xlu0 %v493
    %v495 = vpop.xlane.xlu0 %494
    %v496 = vsel %vm147, %v135, 0.0
    %497 = vadd.xlane.f32.xlu0 %v496
    %v498 = vpop.xlane.xlu0 %497
    %v499 = vsel %vm147, %v136, 0.0
    %500 = vadd.xlane.f32.xlu0 %v499
    %v501 = vpop.xlane.xlu0 %500
    %v502 = vsel %vm147, %v137, 0.0
    %503 = vadd.xlane.f32.xlu0 %v502
    %v504 = vpop.xlane.xlu0 %503
    %v505 = vsel %vm147, %v138, 0.0
    %506 = vadd.xlane.f32.xlu0 %v505
    %v507 = vpop.xlane.xlu0 %506
    %v508 = vsel %vm147, %v139, 0.0
    %509 = vadd.xlane.f32.xlu0 %v508
    %v510 = vpop.xlane.xlu0 %509
    %v511 = vsel %vm147, %v140, 0.0
    %512 = vadd.xlane.f32.xlu0 %v511
    %v513 = vpop.xlane.xlu0 %512
    %v514 = vsel %vm147, %v141, 0.0
    %515 = vadd.xlane.f32.xlu0 %v514
    %v516 = vpop.xlane.xlu0 %515
    %v517 = vsel %vm147, %v142, 0.0
    %518 = vadd.xlane.f32.xlu0 %v517
    %v519 = vpop.xlane.xlu0 %518
    %v520 = vsel %vm147, %v143, 0.0
    %521 = vadd.xlane.f32.xlu0 %v520
    %v522 = vpop.xlane.xlu0 %521
    %v523 = vsel %vm147, %v144, 0.0
    %524 = vadd.xlane.f32.xlu0 %v523
    %v525 = vpop.xlane.xlu0 %524
    %v526 = vsel %vm147, %v145, 0.0
    %527 = vadd.xlane.f32.xlu0 %v526
    %v528 = vpop.xlane.xlu0 %527
    %v529 = vsel %vm147, %v146, 0.0
    %530 = vadd.xlane.f32.xlu0 %v529
    %v531 = vpop.xlane.xlu0 %530
    %v532 = vrcp.pop 16.0
    %v533 = vmul.f32 %v150, %v532
    %v534 = vmul.f32 %v153, %v532
    %v535 = vmul.f32 %v156, %v532
    %v536 = vmul.f32 %v159, %v532
    %v537 = vmul.f32 %v162, %v532
    %v538 = vmul.f32 %v165, %v532
    %v539 = vmul.f32 %v168, %v532
    %v540 = vmul.f32 %v171, %v532
    %v541 = vmul.f32 %v174, %v532
    %v542 = vmul.f32 %v177, %v532
    %v543 = vmul.f32 %v180, %v532
    %v544 = vmul.f32 %v183, %v532
    %v545 = vmul.f32 %v186, %v532
    %v546 = vmul.f32 %v189, %v532
    %v547 = vmul.f32 %v192, %v532
    %v548 = vmul.f32 %v195, %v532
    %v549 = vmul.f32 %v198, %v532
    %v550 = vmul.f32 %v201, %v532
    %v551 = vmul.f32 %v204, %v532
    %v552 = vmul.f32 %v207, %v532
    %v553 = vmul.f32 %v210, %v532
    %v554 = vmul.f32 %v213, %v532
    %v555 = vmul.f32 %v216, %v532
    %v556 = vmul.f32 %v219, %v532
    %v557 = vmul.f32 %v222, %v532
    %v558 = vmul.f32 %v225, %v532
    %v559 = vmul.f32 %v228, %v532
    %v560 = vmul.f32 %v231, %v532
    %v561 = vmul.f32 %v234, %v532
    %v562 = vmul.f32 %v237, %v532
    %v563 = vmul.f32 %v240, %v532
    %v564 = vmul.f32 %v243, %v532
    %v565 = vmul.f32 %v246, %v532
    %v566 = vmul.f32 %v249, %v532
    %v567 = vmul.f32 %v252, %v532
    %v568 = vmul.f32 %v255, %v532
    %v569 = vmul.f32 %v258, %v532
    %v570 = vmul.f32 %v261, %v532
    %v571 = vmul.f32 %v264, %v532
    %v572 = vmul.f32 %v267, %v532
    %v573 = vmul.f32 %v270, %v532
    %v574 = vmul.f32 %v273, %v532
    %v575 = vmul.f32 %v276, %v532
    %v576 = vmul.f32 %v279, %v532
    %v577 = vmul.f32 %v282, %v532
    %v578 = vmul.f32 %v285, %v532
    %v579 = vmul.f32 %v288, %v532
    %v580 = vmul.f32 %v291, %v532
    %v581 = vmul.f32 %v294, %v532
    %v582 = vmul.f32 %v297, %v532
    %v583 = vmul.f32 %v300, %v532
    %v584 = vmul.f32 %v303, %v532
    %v585 = vmul.f32 %v306, %v532
    %v586 = vmul.f32 %v309, %v532
    %v587 = vmul.f32 %v312, %v532
    %v588 = vmul.f32 %v315, %v532
    %v589 = vmul.f32 %v318, %v532
    %v590 = vmul.f32 %v321, %v532
    %v591 = vmul.f32 %v324, %v532
    %v592 = vmul.f32 %v327, %v532
    %v593 = vmul.f32 %v330, %v532
    %v594 = vmul.f32 %v333, %v532
    %v595 = vmul.f32 %v336, %v532
    %v596 = vmul.f32 %v339, %v532
    %v597 = vmul.f32 %v342, %v532
    %v598 = vmul.f32 %v345, %v532
    %v599 = vmul.f32 %v348, %v532
    %v600 = vmul.f32 %v351, %v532
    %v601 = vmul.f32 %v354, %v532
    %v602 = vmul.f32 %v357, %v532
    %v603 = vmul.f32 %v360, %v532
    %v604 = vmul.f32 %v363, %v532
    %v605 = vmul.f32 %v366, %v532
    %v606 = vmul.f32 %v369, %v532
    %v607 = vmul.f32 %v372, %v532
    %v608 = vmul.f32 %v375, %v532
    %v609 = vmul.f32 %v378, %v532
    %v610 = vmul.f32 %v381, %v532
    %v611 = vmul.f32 %v384, %v532
    %v612 = vmul.f32 %v387, %v532
    %v613 = vmul.f32 %v390, %v532
    %v614 = vmul.f32 %v393, %v532
    %v615 = vmul.f32 %v396, %v532
    %v616 = vmul.f32 %v399, %v532
    %v617 = vmul.f32 %v402, %v532
    %v618 = vmul.f32 %v405, %v532
    %v619 = vmul.f32 %v408, %v532
    %v620 = vmul.f32 %v411, %v532
    %v621 = vmul.f32 %v414, %v532
    %v622 = vmul.f32 %v417, %v532
    %v623 = vmul.f32 %v420, %v532
    %v624 = vmul.f32 %v423, %v532
    %v625 = vmul.f32 %v426, %v532
    %v626 = vmul.f32 %v429, %v532
    %v627 = vmul.f32 %v432, %v532
    %v628 = vmul.f32 %v435, %v532
    %v629 = vmul.f32 %v438, %v532
    %v630 = vmul.f32 %v441, %v532
    %v631 = vmul.f32 %v444, %v532
    %v632 = vmul.f32 %v447, %v532
    %v633 = vmul.f32 %v450, %v532
    %v634 = vmul.f32 %v453, %v532
    %v635 = vmul.f32 %v456, %v532
    %v636 = vmul.f32 %v459, %v532
    %v637 = vmul.f32 %v462, %v532
    %v638 = vmul.f32 %v465, %v532
    %v639 = vmul.f32 %v468, %v532
    %v640 = vmul.f32 %v471, %v532
    %v641 = vmul.f32 %v474, %v532
    %v642 = vmul.f32 %v477, %v532
    %v643 = vmul.f32 %v480, %v532
    %v644 = vmul.f32 %v483, %v532
    %v645 = vmul.f32 %v486, %v532
    %v646 = vmul.f32 %v489, %v532
    %v647 = vmul.f32 %v492, %v532
    %v648 = vmul.f32 %v495, %v532
    %v649 = vmul.f32 %v498, %v532
    %v650 = vmul.f32 %v501, %v532
    %v651 = vmul.f32 %v504, %v532
    %v652 = vmul.f32 %v507, %v532
    %v653 = vmul.f32 %v510, %v532
    %v654 = vmul.f32 %v513, %v532
    %v655 = vmul.f32 %v516, %v532
    %v656 = vmul.f32 %v519, %v532
    %v657 = vmul.f32 %v522, %v532
    %v658 = vmul.f32 %v525, %v532
    %v659 = vmul.f32 %v528, %v532
    %v660 = vmul.f32 %v531, %v532
    %v661 = vld [vmem:[%s3] sm:$0xff]
    %v662 = vpack.c.bf16 %v534, %v533
    %v663 = vpack.c.bf16 %v536, %v535
    %v664 = vpack.c.bf16 %v538, %v537
    %v665 = vpack.c.bf16 %v540, %v539
    %v666 = vpack.c.bf16 %v542, %v541
    %v667 = vpack.c.bf16 %v544, %v543
    %v668 = vpack.c.bf16 %v546, %v545
    %v669 = vpack.c.bf16 %v548, %v547
    %v670 = vpack.c.bf16 %v550, %v549
    %v671 = vpack.c.bf16 %v552, %v551
    %v672 = vpack.c.bf16 %v554, %v553
    %v673 = vpack.c.bf16 %v556, %v555
    %v674 = vpack.c.bf16 %v558, %v557
    %v675 = vpack.c.bf16 %v560, %v559
    %v676 = vpack.c.bf16 %v562, %v561
    %v677 = vpack.c.bf16 %v564, %v563
    %v678 = vpack.c.bf16 %v566, %v565
    %v679 = vpack.c.bf16 %v568, %v567
    %v680 = vpack.c.bf16 %v570, %v569
    %v681 = vpack.c.bf16 %v572, %v571
    %v682 = vpack.c.bf16 %v574, %v573
    %v683 = vpack.c.bf16 %v576, %v575
    %v684 = vpack.c.bf16 %v578, %v577
    %v685 = vpack.c.bf16 %v580, %v579
    %v686 = vpack.c.bf16 %v582, %v581
    %v687 = vpack.c.bf16 %v584, %v583
    %v688 = vpack.c.bf16 %v586, %v585
    %v689 = vpack.c.bf16 %v588, %v587
    %v690 = vpack.c.bf16 %v590, %v589
    %v691 = vpack.c.bf16 %v592, %v591
    %v692 = vpack.c.bf16 %v594, %v593
    %v693 = vpack.c.bf16 %v596, %v595
    %v694 = vpack.c.bf16 %v598, %v597
    %v695 = vpack.c.bf16 %v600, %v599
    %v696 = vpack.c.bf16 %v602, %v601
    %v697 = vpack.c.bf16 %v604, %v603
    %v698 = vpack.c.bf16 %v606, %v605
    %v699 = vpack.c.bf16 %v608, %v607
    %v700 = vpack.c.bf16 %v610, %v609
    %v701 = vpack.c.bf16 %v612, %v611
    %v702 = vpack.c.bf16 %v614, %v613
    %v703 = vpack.c.bf16 %v616, %v615
    %v704 = vpack.c.bf16 %v618, %v617
    %v705 = vpack.c.bf16 %v620, %v619
    %v706 = vpack.c.bf16 %v622, %v621
    %v707 = vpack.c.bf16 %v624, %v623
    %v708 = vpack.c.bf16 %v626, %v625
    %v709 = vpack.c.bf16 %v628, %v627
    %v710 = vpack.c.bf16 %v630, %v629
    %v711 = vpack.c.bf16 %v632, %v631
    %v712 = vpack.c.bf16 %v634, %v633
    %v713 = vpack.c.bf16 %v636, %v635
    %v714 = vpack.c.bf16 %v638, %v637
    %v715 = vpack.c.bf16 %v640, %v639
    %v716 = vpack.c.bf16 %v642, %v641
    %v717 = vpack.c.bf16 %v644, %v643
    %v718 = vpack.c.bf16 %v646, %v645
    %v719 = vpack.c.bf16 %v648, %v647
    %v720 = vpack.c.bf16 %v650, %v649
    %v721 = vpack.c.bf16 %v652, %v651
    %v722 = vpack.c.bf16 %v654, %v653
    %v723 = vpack.c.bf16 %v656, %v655
    %v724 = vpack.c.bf16 %v658, %v657
    %v725 = vpack.c.bf16 %v660, %v659
    %v726 = vld [vmem:[%s1] sm:$0xf]
    %v727 = vld [vmem:[%s1 + $0x4] sm:$0xf]
    %v728 = vld [vmem:[%s1 + $0x8] sm:$0xf]
    %v729 = vld [vmem:[%s1 + $0xc] sm:$0xf]
    %v730 = vld [vmem:[%s1 + $0x10] sm:$0xf]
    %v731 = vld [vmem:[%s1 + $0x14] sm:$0xf]
    %v732 = vld [vmem:[%s1 + $0x18] sm:$0xf]
    %v733 = vld [vmem:[%s1 + $0x1c] sm:$0xf]
    %v734 = vld [vmem:[%s1 + $0x20] sm:$0xf]
    %v735 = vld [vmem:[%s1 + $0x24] sm:$0xf]
    %v736 = vld [vmem:[%s1 + $0x28] sm:$0xf]
    %v737 = vld [vmem:[%s1 + $0x2c] sm:$0xf]
    %v738 = vld [vmem:[%s1 + $0x30] sm:$0xf]
    %v739 = vld [vmem:[%s1 + $0x34] sm:$0xf]
    %v740 = vld [vmem:[%s1 + $0x38] sm:$0xf]
    %v741 = vld [vmem:[%s1 + $0x3c] sm:$0xf]
    %v742 = vld [vmem:[%s1 + $0x40] sm:$0xf]
    %v743 = vld [vmem:[%s1 + $0x44] sm:$0xf]
    %v744 = vld [vmem:[%s1 + $0x48] sm:$0xf]
    %v745 = vld [vmem:[%s1 + $0x4c] sm:$0xf]
    %v746 = vld [vmem:[%s1 + $0x50] sm:$0xf]
    %v747 = vld [vmem:[%s1 + $0x54] sm:$0xf]
    %v748 = vld [vmem:[%s1 + $0x58] sm:$0xf]
    %v749 = vld [vmem:[%s1 + $0x5c] sm:$0xf]
    %v750 = vld [vmem:[%s1 + $0x60] sm:$0xf]
    %v751 = vld [vmem:[%s1 + $0x64] sm:$0xf]
    %v752 = vld [vmem:[%s1 + $0x68] sm:$0xf]
    %v753 = vld [vmem:[%s1 + $0x6c] sm:$0xf]
    %v754 = vld [vmem:[%s1 + $0x70] sm:$0xf]
    %v755 = vld [vmem:[%s1 + $0x74] sm:$0xf]
    %v756 = vld [vmem:[%s1 + $0x78] sm:$0xf]
    %v757 = vld [vmem:[%s1 + $0x7c] sm:$0xf]
    %v758 = vld [vmem:[%s1 + $0x80] sm:$0xf]
    %v759 = vld [vmem:[%s1 + $0x84] sm:$0xf]
    %v760 = vld [vmem:[%s1 + $0x88] sm:$0xf]
    %v761 = vld [vmem:[%s1 + $0x8c] sm:$0xf]
    %v762 = vld [vmem:[%s1 + $0x90] sm:$0xf]
    %v763 = vld [vmem:[%s1 + $0x94] sm:$0xf]
    %v764 = vld [vmem:[%s1 + $0x98] sm:$0xf]
    %v765 = vld [vmem:[%s1 + $0x9c] sm:$0xf]
    %v766 = vld [vmem:[%s1 + $0xa0] sm:$0xf]
    %v767 = vld [vmem:[%s1 + $0xa4] sm:$0xf]
    %v768 = vld [vmem:[%s1 + $0xa8] sm:$0xf]
    %v769 = vld [vmem:[%s1 + $0xac] sm:$0xf]
    %v770 = vld [vmem:[%s1 + $0xb0] sm:$0xf]
    %v771 = vld [vmem:[%s1 + $0xb4] sm:$0xf]
    %v772 = vld [vmem:[%s1 + $0xb8] sm:$0xf]
    %v773 = vld [vmem:[%s1 + $0xbc] sm:$0xf]
    %v774 = vld [vmem:[%s1 + $0xc0] sm:$0xf]
    %v775 = vld [vmem:[%s1 + $0xc4] sm:$0xf]
    %v776 = vld [vmem:[%s1 + $0xc8] sm:$0xf]
    %v777 = vld [vmem:[%s1 + $0xcc] sm:$0xf]
    %v778 = vld [vmem:[%s1 + $0xd0] sm:$0xf]
    %v779 = vld [vmem:[%s1 + $0xd4] sm:$0xf]
    %v780 = vld [vmem:[%s1 + $0xd8] sm:$0xf]
    %v781 = vld [vmem:[%s1 + $0xdc] sm:$0xf]
    %v782 = vld [vmem:[%s1 + $0xe0] sm:$0xf]
    %v783 = vld [vmem:[%s1 + $0xe4] sm:$0xf]
    %v784 = vld [vmem:[%s1 + $0xe8] sm:$0xf]
    %v785 = vld [vmem:[%s1 + $0xec] sm:$0xf]
    %v786 = vld [vmem:[%s1 + $0xf0] sm:$0xf]
    %v787 = vld [vmem:[%s1 + $0xf4] sm:$0xf]
    %v788 = vld [vmem:[%s1 + $0xf8] sm:$0xf]
    %v789 = vld [vmem:[%s1 + $0xfc] sm:$0xf]
    %v790 = vlaneseq
    %v791 = vshrl.u32 %v790, 7
    %v792 = vsub.s32 0, %v791
    %v793 = vrot.slane %v661, %v792
    %v858 = vunpack.c.l.b16 %v662
    %v859 = vunpack.c.h.b16 %v662
    %v860 = vunpack.c.l.b16 %v663
    %v861 = vunpack.c.h.b16 %v663
    %v862 = vunpack.c.l.b16 %v664
    %v863 = vunpack.c.h.b16 %v664
    %v864 = vunpack.c.l.b16 %v665
    %v865 = vunpack.c.h.b16 %v665
    %v866 = vunpack.c.l.b16 %v666
    %v867 = vunpack.c.h.b16 %v666
    %v868 = vunpack.c.l.b16 %v667
    %v869 = vunpack.c.h.b16 %v667
    %v870 = vunpack.c.l.b16 %v668
    %v871 = vunpack.c.h.b16 %v668
    %v872 = vunpack.c.l.b16 %v669
    %v873 = vunpack.c.h.b16 %v669
    %v874 = vunpack.c.l.b16 %v670
    %v875 = vunpack.c.h.b16 %v670
    %v876 = vunpack.c.l.b16 %v671
    %v877 = vunpack.c.h.b16 %v671
    %v878 = vunpack.c.l.b16 %v672
    %v879 = vunpack.c.h.b16 %v672
    %v880 = vunpack.c.l.b16 %v673
    %v881 = vunpack.c.h.b16 %v673
    %v882 = vunpack.c.l.b16 %v674
    %v883 = vunpack.c.h.b16 %v674
    %v884 = vunpack.c.l.b16 %v675
    %v885 = vunpack.c.h.b16 %v675
    %v886 = vunpack.c.l.b16 %v676
    %v887 = vunpack.c.h.b16 %v676
    %v888 = vunpack.c.l.b16 %v677
    %v889 = vunpack.c.h.b16 %v677
    %v890 = vunpack.c.l.b16 %v678
    %v891 = vunpack.c.h.b16 %v678
    %v892 = vunpack.c.l.b16 %v679
    %v893 = vunpack.c.h.b16 %v679
    %v894 = vunpack.c.l.b16 %v680
    %v895 = vunpack.c.h.b16 %v680
    %v896 = vunpack.c.l.b16 %v681
    %v897 = vunpack.c.h.b16 %v681
    %v898 = vunpack.c.l.b16 %v682
    %v899 = vunpack.c.h.b16 %v682
    %v900 = vunpack.c.l.b16 %v683
    %v901 = vunpack.c.h.b16 %v683
    %v902 = vunpack.c.l.b16 %v684
    %v903 = vunpack.c.h.b16 %v684
    %v904 = vunpack.c.l.b16 %v685
    %v905 = vunpack.c.h.b16 %v685
    %v906 = vunpack.c.l.b16 %v686
    %v907 = vunpack.c.h.b16 %v686
    %v908 = vunpack.c.l.b16 %v687
    %v909 = vunpack.c.h.b16 %v687
    %v910 = vunpack.c.l.b16 %v688
    %v911 = vunpack.c.h.b16 %v688
    %v912 = vunpack.c.l.b16 %v689
    %v913 = vunpack.c.h.b16 %v689
    %v914 = vunpack.c.l.b16 %v690
    %v915 = vunpack.c.h.b16 %v690
    %v916 = vunpack.c.l.b16 %v691
    %v917 = vunpack.c.h.b16 %v691
    %v918 = vunpack.c.l.b16 %v692
    %v919 = vunpack.c.h.b16 %v692
    %v920 = vunpack.c.l.b16 %v693
    %v921 = vunpack.c.h.b16 %v693
    %v922 = vunpack.c.l.b16 %v694
    %v923 = vunpack.c.h.b16 %v694
    %v924 = vunpack.c.l.b16 %v695
    %v925 = vunpack.c.h.b16 %v695
    %v926 = vunpack.c.l.b16 %v696
    %v927 = vunpack.c.h.b16 %v696
    %v928 = vunpack.c.l.b16 %v697
    %v929 = vunpack.c.h.b16 %v697
    %v930 = vunpack.c.l.b16 %v698
    %v931 = vunpack.c.h.b16 %v698
    %v932 = vunpack.c.l.b16 %v699
    %v933 = vunpack.c.h.b16 %v699
    %v934 = vunpack.c.l.b16 %v700
    %v935 = vunpack.c.h.b16 %v700
    %v936 = vunpack.c.l.b16 %v701
    %v937 = vunpack.c.h.b16 %v701
    %v938 = vunpack.c.l.b16 %v702
    %v939 = vunpack.c.h.b16 %v702
    %v940 = vunpack.c.l.b16 %v703
    %v941 = vunpack.c.h.b16 %v703
    %v942 = vunpack.c.l.b16 %v704
    %v943 = vunpack.c.h.b16 %v704
    %v944 = vunpack.c.l.b16 %v705
    %v945 = vunpack.c.h.b16 %v705
    %v946 = vunpack.c.l.b16 %v706
    %v947 = vunpack.c.h.b16 %v706
    %v948 = vunpack.c.l.b16 %v707
    %v949 = vunpack.c.h.b16 %v707
    %v950 = vunpack.c.l.b16 %v708
    %v951 = vunpack.c.h.b16 %v708
    %v952 = vunpack.c.l.b16 %v709
    %v953 = vunpack.c.h.b16 %v709
    %v954 = vunpack.c.l.b16 %v710
    %v955 = vunpack.c.h.b16 %v710
    %v956 = vunpack.c.l.b16 %v711
    %v957 = vunpack.c.h.b16 %v711
    %v958 = vunpack.c.l.b16 %v712
    %v959 = vunpack.c.h.b16 %v712
    %v960 = vunpack.c.l.b16 %v713
    %v961 = vunpack.c.h.b16 %v713
    %v962 = vunpack.c.l.b16 %v714
    %v963 = vunpack.c.h.b16 %v714
    %v964 = vunpack.c.l.b16 %v715
    %v965 = vunpack.c.h.b16 %v715
    %v966 = vunpack.c.l.b16 %v716
    %v967 = vunpack.c.h.b16 %v716
    %v968 = vunpack.c.l.b16 %v717
    %v969 = vunpack.c.h.b16 %v717
    %v970 = vunpack.c.l.b16 %v718
    %v971 = vunpack.c.h.b16 %v718
    %v972 = vunpack.c.l.b16 %v719
    %v973 = vunpack.c.h.b16 %v719
    %v974 = vunpack.c.l.b16 %v720
    %v975 = vunpack.c.h.b16 %v720
    %v976 = vunpack.c.l.b16 %v721
    %v977 = vunpack.c.h.b16 %v721
    %v978 = vunpack.c.l.b16 %v722
    %v979 = vunpack.c.h.b16 %v722
    %v980 = vunpack.c.l.b16 %v723
    %v981 = vunpack.c.h.b16 %v723
    %v982 = vunpack.c.l.b16 %v724
    %v983 = vunpack.c.h.b16 %v724
    %v984 = vunpack.c.l.b16 %v725
    %v985 = vunpack.c.h.b16 %v725
    %v986 = vlaneseq
    %v987 = vand.u32 %v986, 127
    %v988 = vlaneseq
    %v989 = vshrl.u32 %v988, 7
    %v990 = vsub.s32 %v987, %v989
    %v991 = vrot.slane %v858, %v990
    %v992 = vadd.s32 %v987, 4294967288
    %v993 = vlaneseq
    %v994 = vshrl.u32 %v993, 7
    %v995 = vsub.s32 %v992, %v994
    %v996 = vrot.slane %v859, %v995
    %vm997 = vcmask 130112
    %v998 = vsel %vm997, %v996, %v991
    %v999 = vadd.s32 %v987, 4294967280
    %v1000 = vlaneseq
    %v1001 = vshrl.u32 %v1000, 7
    %v1002 = vsub.s32 %v999, %v1001
    %v1003 = vrot.slane %v860, %v1002
    %vm1004 = vcmask 195712
    %v1005 = vsel %vm1004, %v1003, %v998
    %v1006 = vadd.s32 %v987, 4294967272
    %v1007 = vlaneseq
    %v1008 = vshrl.u32 %v1007, 7
    %v1009 = vsub.s32 %v1006, %v1008
    %v1010 = vrot.slane %v861, %v1009
    %vm1011 = vcmask 261312
    %v1012 = vsel %vm1011, %v1010, %v1005
    %v1013 = vadd.s32 %v987, 4294967264
    %v1014 = vlaneseq
    %v1015 = vshrl.u32 %v1014, 7
    %v1016 = vsub.s32 %v1013, %v1015
    %v1017 = vrot.slane %v862, %v1016
    %vm1018 = vcmask 326912
    %v1019 = vsel %vm1018, %v1017, %v1012
    %v1020 = vadd.s32 %v987, 4294967256
    %v1021 = vlaneseq
    %v1022 = vshrl.u32 %v1021, 7
    %v1023 = vsub.s32 %v1020, %v1022
    %v1024 = vrot.slane %v863, %v1023
    %vm1025 = vcmask 392512
    %v1026 = vsel %vm1025, %v1024, %v1019
    %v1027 = vadd.s32 %v987, 4294967248
    %v1028 = vlaneseq
    %v1029 = vshrl.u32 %v1028, 7
    %v1030 = vsub.s32 %v1027, %v1029
    %v1031 = vrot.slane %v864, %v1030
    %vm1032 = vcmask 458112
    %v1033 = vsel %vm1032, %v1031, %v1026
    %v1034 = vadd.s32 %v987, 4294967240
    %v1035 = vlaneseq
    %v1036 = vshrl.u32 %v1035, 7
    %v1037 = vsub.s32 %v1034, %v1036
    %v1038 = vrot.slane %v865, %v1037
    %vm1039 = vcmask 523712
    %v1040 = vsel %vm1039, %v1038, %v1033
    %v1041 = vadd.s32 %v987, 4294967232
    %v1042 = vlaneseq
    %v1043 = vshrl.u32 %v1042, 7
    %v1044 = vsub.s32 %v1041, %v1043
    %v1045 = vrot.slane %v866, %v1044
    %vm1046 = vcmask 589312
    %v1047 = vsel %vm1046, %v1045, %v1040
    %v1048 = vadd.s32 %v987, 4294967224
    %v1049 = vlaneseq
    %v1050 = vshrl.u32 %v1049, 7
    %v1051 = vsub.s32 %v1048, %v1050
    %v1052 = vrot.slane %v867, %v1051
    %vm1053 = vcmask 654912
    %v1054 = vsel %vm1053, %v1052, %v1047
    %v1055 = vadd.s32 %v987, 4294967216
    %v1056 = vlaneseq
    %v1057 = vshrl.u32 %v1056, 7
    %v1058 = vsub.s32 %v1055, %v1057
    %v1059 = vrot.slane %v868, %v1058
    %vm1060 = vcmask 720512
    %v1061 = vsel %vm1060, %v1059, %v1054
    %v1062 = vadd.s32 %v987, 4294967208
    %v1063 = vlaneseq
    %v1064 = vshrl.u32 %v1063, 7
    %v1065 = vsub.s32 %v1062, %v1064
    %v1066 = vrot.slane %v869, %v1065
    %vm1067 = vcmask 786112
    %v1068 = vsel %vm1067, %v1066, %v1061
    %v1069 = vadd.s32 %v987, 4294967200
    %v1070 = vlaneseq
    %v1071 = vshrl.u32 %v1070, 7
    %v1072 = vsub.s32 %v1069, %v1071
    %v1073 = vrot.slane %v870, %v1072
    %vm1074 = vcmask 851712
    %v1075 = vsel %vm1074, %v1073, %v1068
    %v1076 = vadd.s32 %v987, 4294967192
    %v1077 = vlaneseq
    %v1078 = vshrl.u32 %v1077, 7
    %v1079 = vsub.s32 %v1076, %v1078
    %v1080 = vrot.slane %v871, %v1079
    %vm1081 = vcmask 917312
    %v1082 = vsel %vm1081, %v1080, %v1075
    %v1083 = vadd.s32 %v987, 4294967184
    %v1084 = vlaneseq
    %v1085 = vshrl.u32 %v1084, 7
    %v1086 = vsub.s32 %v1083, %v1085
    %v1087 = vrot.slane %v872, %v1086
    %vm1088 = vcmask 982912
    %v1089 = vsel %vm1088, %v1087, %v1082
    %v1090 = vadd.s32 %v987, 4294967176
    %v1091 = vlaneseq
    %v1092 = vshrl.u32 %v1091, 7
    %v1093 = vsub.s32 %v1090, %v1092
    %v1094 = vrot.slane %v873, %v1093
    %vm1095 = vcmask 1048512
    %v1096 = vsel %vm1095, %v1094, %v1089
    %v1097 = vlaneseq
    %v1098 = vshrl.u32 %v1097, 7
    %v1099 = vsub.s32 %v987, %v1098
    %v1100 = vrot.slane %v874, %v1099
    %v1101 = vlaneseq
    %v1102 = vshrl.u32 %v1101, 7
    %v1103 = vsub.s32 %v992, %v1102
    %v1104 = vrot.slane %v875, %v1103
    %v1105 = vsel %vm997, %v1104, %v1100
    %v1106 = vlaneseq
    %v1107 = vshrl.u32 %v1106, 7
    %v1108 = vsub.s32 %v999, %v1107
    %v1109 = vrot.slane %v876, %v1108
    %v1110 = vsel %vm1004, %v1109, %v1105
    %v1111 = vlaneseq
    %v1112 = vshrl.u32 %v1111, 7
    %v1113 = vsub.s32 %v1006, %v1112
    %v1114 = vrot.slane %v877, %v1113
    %v1115 = vsel %vm1011, %v1114, %v1110
    %v1116 = vlaneseq
    %v1117 = vshrl.u32 %v1116, 7
    %v1118 = vsub.s32 %v1013, %v1117
    %v1119 = vrot.slane %v878, %v1118
    %v1120 = vsel %vm1018, %v1119, %v1115
    %v1121 = vlaneseq
    %v1122 = vshrl.u32 %v1121, 7
    %v1123 = vsub.s32 %v1020, %v1122
    %v1124 = vrot.slane %v879, %v1123
    %v1125 = vsel %vm1025, %v1124, %v1120
    %v1126 = vlaneseq
    %v1127 = vshrl.u32 %v1126, 7
    %v1128 = vsub.s32 %v1027, %v1127
    %v1129 = vrot.slane %v880, %v1128
    %v1130 = vsel %vm1032, %v1129, %v1125
    %v1131 = vlaneseq
    %v1132 = vshrl.u32 %v1131, 7
    %v1133 = vsub.s32 %v1034, %v1132
    %v1134 = vrot.slane %v881, %v1133
    %v1135 = vsel %vm1039, %v1134, %v1130
    %v1136 = vlaneseq
    %v1137 = vshrl.u32 %v1136, 7
    %v1138 = vsub.s32 %v1041, %v1137
    %v1139 = vrot.slane %v882, %v1138
    %v1140 = vsel %vm1046, %v1139, %v1135
    %v1141 = vlaneseq
    %v1142 = vshrl.u32 %v1141, 7
    %v1143 = vsub.s32 %v1048, %v1142
    %v1144 = vrot.slane %v883, %v1143
    %v1145 = vsel %vm1053, %v1144, %v1140
    %v1146 = vlaneseq
    %v1147 = vshrl.u32 %v1146, 7
    %v1148 = vsub.s32 %v1055, %v1147
    %v1149 = vrot.slane %v884, %v1148
    %v1150 = vsel %vm1060, %v1149, %v1145
    %v1151 = vlaneseq
    %v1152 = vshrl.u32 %v1151, 7
    %v1153 = vsub.s32 %v1062, %v1152
    %v1154 = vrot.slane %v885, %v1153
    %v1155 = vsel %vm1067, %v1154, %v1150
    %v1156 = vlaneseq
    %v1157 = vshrl.u32 %v1156, 7
    %v1158 = vsub.s32 %v1069, %v1157
    %v1159 = vrot.slane %v886, %v1158
    %v1160 = vsel %vm1074, %v1159, %v1155
    %v1161 = vlaneseq
    %v1162 = vshrl.u32 %v1161, 7
    %v1163 = vsub.s32 %v1076, %v1162
    %v1164 = vrot.slane %v887, %v1163
    %v1165 = vsel %vm1081, %v1164, %v1160
    %v1166 = vlaneseq
    %v1167 = vshrl.u32 %v1166, 7
    %v1168 = vsub.s32 %v1083, %v1167
    %v1169 = vrot.slane %v888, %v1168
    %v1170 = vsel %vm1088, %v1169, %v1165
    %v1171 = vlaneseq
    %v1172 = vshrl.u32 %v1171, 7
    %v1173 = vsub.s32 %v1090, %v1172
    %v1174 = vrot.slane %v889, %v1173
    %v1175 = vsel %vm1095, %v1174, %v1170
    %v1176 = vlaneseq
    %v1177 = vshrl.u32 %v1176, 7
    %v1178 = vsub.s32 %v987, %v1177
    %v1179 = vrot.slane %v890, %v1178
    %v1180 = vlaneseq
    %v1181 = vshrl.u32 %v1180, 7
    %v1182 = vsub.s32 %v992, %v1181
    %v1183 = vrot.slane %v891, %v1182
    %v1184 = vsel %vm997, %v1183, %v1179
    %v1185 = vlaneseq
    %v1186 = vshrl.u32 %v1185, 7
    %v1187 = vsub.s32 %v999, %v1186
    %v1188 = vrot.slane %v892, %v1187
    %v1189 = vsel %vm1004, %v1188, %v1184
    %v1190 = vlaneseq
    %v1191 = vshrl.u32 %v1190, 7
    %v1192 = vsub.s32 %v1006, %v1191
    %v1193 = vrot.slane %v893, %v1192
    %v1194 = vsel %vm1011, %v1193, %v1189
    %v1195 = vlaneseq
    %v1196 = vshrl.u32 %v1195, 7
    %v1197 = vsub.s32 %v1013, %v1196
    %v1198 = vrot.slane %v894, %v1197
    %v1199 = vsel %vm1018, %v1198, %v1194
    %v1200 = vlaneseq
    %v1201 = vshrl.u32 %v1200, 7
    %v1202 = vsub.s32 %v1020, %v1201
    %v1203 = vrot.slane %v895, %v1202
    %v1204 = vsel %vm1025, %v1203, %v1199
    %v1205 = vlaneseq
    %v1206 = vshrl.u32 %v1205, 7
    %v1207 = vsub.s32 %v1027, %v1206
    %v1208 = vrot.slane %v896, %v1207
    %v1209 = vsel %vm1032, %v1208, %v1204
    %v1210 = vlaneseq
    %v1211 = vshrl.u32 %v1210, 7
    %v1212 = vsub.s32 %v1034, %v1211
    %v1213 = vrot.slane %v897, %v1212
    %v1214 = vsel %vm1039, %v1213, %v1209
    %v1215 = vlaneseq
    %v1216 = vshrl.u32 %v1215, 7
    %v1217 = vsub.s32 %v1041, %v1216
    %v1218 = vrot.slane %v898, %v1217
    %v1219 = vsel %vm1046, %v1218, %v1214
    %v1220 = vlaneseq
    %v1221 = vshrl.u32 %v1220, 7
    %v1222 = vsub.s32 %v1048, %v1221
    %v1223 = vrot.slane %v899, %v1222
    %v1224 = vsel %vm1053, %v1223, %v1219
    %v1225 = vlaneseq
    %v1226 = vshrl.u32 %v1225, 7
    %v1227 = vsub.s32 %v1055, %v1226
    %v1228 = vrot.slane %v900, %v1227
    %v1229 = vsel %vm1060, %v1228, %v1224
    %v1230 = vlaneseq
    %v1231 = vshrl.u32 %v1230, 7
    %v1232 = vsub.s32 %v1062, %v1231
    %v1233 = vrot.slane %v901, %v1232
    %v1234 = vsel %vm1067, %v1233, %v1229
    %v1235 = vlaneseq
    %v1236 = vshrl.u32 %v1235, 7
    %v1237 = vsub.s32 %v1069, %v1236
    %v1238 = vrot.slane %v902, %v1237
    %v1239 = vsel %vm1074, %v1238, %v1234
    %v1240 = vlaneseq
    %v1241 = vshrl.u32 %v1240, 7
    %v1242 = vsub.s32 %v1076, %v1241
    %v1243 = vrot.slane %v903, %v1242
    %v1244 = vsel %vm1081, %v1243, %v1239
    %v1245 = vlaneseq
    %v1246 = vshrl.u32 %v1245, 7
    %v1247 = vsub.s32 %v1083, %v1246
    %v1248 = vrot.slane %v904, %v1247
    %v1249 = vsel %vm1088, %v1248, %v1244
    %v1250 = vlaneseq
    %v1251 = vshrl.u32 %v1250, 7
    %v1252 = vsub.s32 %v1090, %v1251
    %v1253 = vrot.slane %v905, %v1252
    %v1254 = vsel %vm1095, %v1253, %v1249
    %v1255 = vlaneseq
    %v1256 = vshrl.u32 %v1255, 7
    %v1257 = vsub.s32 %v987, %v1256
    %v1258 = vrot.slane %v906, %v1257
    %v1259 = vlaneseq
    %v1260 = vshrl.u32 %v1259, 7
    %v1261 = vsub.s32 %v992, %v1260
    %v1262 = vrot.slane %v907, %v1261
    %v1263 = vsel %vm997, %v1262, %v1258
    %v1264 = vlaneseq
    %v1265 = vshrl.u32 %v1264, 7
    %v1266 = vsub.s32 %v999, %v1265
    %v1267 = vrot.slane %v908, %v1266
    %v1268 = vsel %vm1004, %v1267, %v1263
    %v1269 = vlaneseq
    %v1270 = vshrl.u32 %v1269, 7
    %v1271 = vsub.s32 %v1006, %v1270
    %v1272 = vrot.slane %v909, %v1271
    %v1273 = vsel %vm1011, %v1272, %v1268
    %v1274 = vlaneseq
    %v1275 = vshrl.u32 %v1274, 7
    %v1276 = vsub.s32 %v1013, %v1275
    %v1277 = vrot.slane %v910, %v1276
    %v1278 = vsel %vm1018, %v1277, %v1273
    %v1279 = vlaneseq
    %v1280 = vshrl.u32 %v1279, 7
    %v1281 = vsub.s32 %v1020, %v1280
    %v1282 = vrot.slane %v911, %v1281
    %v1283 = vsel %vm1025, %v1282, %v1278
    %v1284 = vlaneseq
    %v1285 = vshrl.u32 %v1284, 7
    %v1286 = vsub.s32 %v1027, %v1285
    %v1287 = vrot.slane %v912, %v1286
    %v1288 = vsel %vm1032, %v1287, %v1283
    %v1289 = vlaneseq
    %v1290 = vshrl.u32 %v1289, 7
    %v1291 = vsub.s32 %v1034, %v1290
    %v1292 = vrot.slane %v913, %v1291
    %v1293 = vsel %vm1039, %v1292, %v1288
    %v1294 = vlaneseq
    %v1295 = vshrl.u32 %v1294, 7
    %v1296 = vsub.s32 %v1041, %v1295
    %v1297 = vrot.slane %v914, %v1296
    %v1298 = vsel %vm1046, %v1297, %v1293
    %v1299 = vlaneseq
    %v1300 = vshrl.u32 %v1299, 7
    %v1301 = vsub.s32 %v1048, %v1300
    %v1302 = vrot.slane %v915, %v1301
    %v1303 = vsel %vm1053, %v1302, %v1298
    %v1304 = vlaneseq
    %v1305 = vshrl.u32 %v1304, 7
    %v1306 = vsub.s32 %v1055, %v1305
    %v1307 = vrot.slane %v916, %v1306
    %v1308 = vsel %vm1060, %v1307, %v1303
    %v1309 = vlaneseq
    %v1310 = vshrl.u32 %v1309, 7
    %v1311 = vsub.s32 %v1062, %v1310
    %v1312 = vrot.slane %v917, %v1311
    %v1313 = vsel %vm1067, %v1312, %v1308
    %v1314 = vlaneseq
    %v1315 = vshrl.u32 %v1314, 7
    %v1316 = vsub.s32 %v1069, %v1315
    %v1317 = vrot.slane %v918, %v1316
    %v1318 = vsel %vm1074, %v1317, %v1313
    %v1319 = vlaneseq
    %v1320 = vshrl.u32 %v1319, 7
    %v1321 = vsub.s32 %v1076, %v1320
    %v1322 = vrot.slane %v919, %v1321
    %v1323 = vsel %vm1081, %v1322, %v1318
    %v1324 = vlaneseq
    %v1325 = vshrl.u32 %v1324, 7
    %v1326 = vsub.s32 %v1083, %v1325
    %v1327 = vrot.slane %v920, %v1326
    %v1328 = vsel %vm1088, %v1327, %v1323
    %v1329 = vlaneseq
    %v1330 = vshrl.u32 %v1329, 7
    %v1331 = vsub.s32 %v1090, %v1330
    %v1332 = vrot.slane %v921, %v1331
    %v1333 = vsel %vm1095, %v1332, %v1328
    %v1334 = vlaneseq
    %v1335 = vshrl.u32 %v1334, 7
    %v1336 = vsub.s32 %v987, %v1335
    %v1337 = vrot.slane %v922, %v1336
    %v1338 = vlaneseq
    %v1339 = vshrl.u32 %v1338, 7
    %v1340 = vsub.s32 %v992, %v1339
    %v1341 = vrot.slane %v923, %v1340
    %v1342 = vsel %vm997, %v1341, %v1337
    %v1343 = vlaneseq
    %v1344 = vshrl.u32 %v1343, 7
    %v1345 = vsub.s32 %v999, %v1344
    %v1346 = vrot.slane %v924, %v1345
    %v1347 = vsel %vm1004, %v1346, %v1342
    %v1348 = vlaneseq
    %v1349 = vshrl.u32 %v1348, 7
    %v1350 = vsub.s32 %v1006, %v1349
    %v1351 = vrot.slane %v925, %v1350
    %v1352 = vsel %vm1011, %v1351, %v1347
    %v1353 = vlaneseq
    %v1354 = vshrl.u32 %v1353, 7
    %v1355 = vsub.s32 %v1013, %v1354
    %v1356 = vrot.slane %v926, %v1355
    %v1357 = vsel %vm1018, %v1356, %v1352
    %v1358 = vlaneseq
    %v1359 = vshrl.u32 %v1358, 7
    %v1360 = vsub.s32 %v1020, %v1359
    %v1361 = vrot.slane %v927, %v1360
    %v1362 = vsel %vm1025, %v1361, %v1357
    %v1363 = vlaneseq
    %v1364 = vshrl.u32 %v1363, 7
    %v1365 = vsub.s32 %v1027, %v1364
    %v1366 = vrot.slane %v928, %v1365
    %v1367 = vsel %vm1032, %v1366, %v1362
    %v1368 = vlaneseq
    %v1369 = vshrl.u32 %v1368, 7
    %v1370 = vsub.s32 %v1034, %v1369
    %v1371 = vrot.slane %v929, %v1370
    %v1372 = vsel %vm1039, %v1371, %v1367
    %v1373 = vlaneseq
    %v1374 = vshrl.u32 %v1373, 7
    %v1375 = vsub.s32 %v1041, %v1374
    %v1376 = vrot.slane %v930, %v1375
    %v1377 = vsel %vm1046, %v1376, %v1372
    %v1378 = vlaneseq
    %v1379 = vshrl.u32 %v1378, 7
    %v1380 = vsub.s32 %v1048, %v1379
    %v1381 = vrot.slane %v931, %v1380
    %v1382 = vsel %vm1053, %v1381, %v1377
    %v1383 = vlaneseq
    %v1384 = vshrl.u32 %v1383, 7
    %v1385 = vsub.s32 %v1055, %v1384
    %v1386 = vrot.slane %v932, %v1385
    %v1387 = vsel %vm1060, %v1386, %v1382
    %v1388 = vlaneseq
    %v1389 = vshrl.u32 %v1388, 7
    %v1390 = vsub.s32 %v1062, %v1389
    %v1391 = vrot.slane %v933, %v1390
    %v1392 = vsel %vm1067, %v1391, %v1387
    %v1393 = vlaneseq
    %v1394 = vshrl.u32 %v1393, 7
    %v1395 = vsub.s32 %v1069, %v1394
    %v1396 = vrot.slane %v934, %v1395
    %v1397 = vsel %vm1074, %v1396, %v1392
    %v1398 = vlaneseq
    %v1399 = vshrl.u32 %v1398, 7
    %v1400 = vsub.s32 %v1076, %v1399
    %v1401 = vrot.slane %v935, %v1400
    %v1402 = vsel %vm1081, %v1401, %v1397
    %v1403 = vlaneseq
    %v1404 = vshrl.u32 %v1403, 7
    %v1405 = vsub.s32 %v1083, %v1404
    %v1406 = vrot.slane %v936, %v1405
    %v1407 = vsel %vm1088, %v1406, %v1402
    %v1408 = vlaneseq
    %v1409 = vshrl.u32 %v1408, 7
    %v1410 = vsub.s32 %v1090, %v1409
    %v1411 = vrot.slane %v937, %v1410
    %v1412 = vsel %vm1095, %v1411, %v1407
    %v1413 = vlaneseq
    %v1414 = vshrl.u32 %v1413, 7
    %v1415 = vsub.s32 %v987, %v1414
    %v1416 = vrot.slane %v938, %v1415
    %v1417 = vlaneseq
    %v1418 = vshrl.u32 %v1417, 7
    %v1419 = vsub.s32 %v992, %v1418
    %v1420 = vrot.slane %v939, %v1419
    %v1421 = vsel %vm997, %v1420, %v1416
    %v1422 = vlaneseq
    %v1423 = vshrl.u32 %v1422, 7
    %v1424 = vsub.s32 %v999, %v1423
    %v1425 = vrot.slane %v940, %v1424
    %v1426 = vsel %vm1004, %v1425, %v1421
    %v1427 = vlaneseq
    %v1428 = vshrl.u32 %v1427, 7
    %v1429 = vsub.s32 %v1006, %v1428
    %v1430 = vrot.slane %v941, %v1429
    %v1431 = vsel %vm1011, %v1430, %v1426
    %v1432 = vlaneseq
    %v1433 = vshrl.u32 %v1432, 7
    %v1434 = vsub.s32 %v1013, %v1433
    %v1435 = vrot.slane %v942, %v1434
    %v1436 = vsel %vm1018, %v1435, %v1431
    %v1437 = vlaneseq
    %v1438 = vshrl.u32 %v1437, 7
    %v1439 = vsub.s32 %v1020, %v1438
    %v1440 = vrot.slane %v943, %v1439
    %v1441 = vsel %vm1025, %v1440, %v1436
    %v1442 = vlaneseq
    %v1443 = vshrl.u32 %v1442, 7
    %v1444 = vsub.s32 %v1027, %v1443
    %v1445 = vrot.slane %v944, %v1444
    %v1446 = vsel %vm1032, %v1445, %v1441
    %v1447 = vlaneseq
    %v1448 = vshrl.u32 %v1447, 7
    %v1449 = vsub.s32 %v1034, %v1448
    %v1450 = vrot.slane %v945, %v1449
    %v1451 = vsel %vm1039, %v1450, %v1446
    %v1452 = vlaneseq
    %v1453 = vshrl.u32 %v1452, 7
    %v1454 = vsub.s32 %v1041, %v1453
    %v1455 = vrot.slane %v946, %v1454
    %v1456 = vsel %vm1046, %v1455, %v1451
    %v1457 = vlaneseq
    %v1458 = vshrl.u32 %v1457, 7
    %v1459 = vsub.s32 %v1048, %v1458
    %v1460 = vrot.slane %v947, %v1459
    %v1461 = vsel %vm1053, %v1460, %v1456
    %v1462 = vlaneseq
    %v1463 = vshrl.u32 %v1462, 7
    %v1464 = vsub.s32 %v1055, %v1463
    %v1465 = vrot.slane %v948, %v1464
    %v1466 = vsel %vm1060, %v1465, %v1461
    %v1467 = vlaneseq
    %v1468 = vshrl.u32 %v1467, 7
    %v1469 = vsub.s32 %v1062, %v1468
    %v1470 = vrot.slane %v949, %v1469
    %v1471 = vsel %vm1067, %v1470, %v1466
    %v1472 = vlaneseq
    %v1473 = vshrl.u32 %v1472, 7
    %v1474 = vsub.s32 %v1069, %v1473
    %v1475 = vrot.slane %v950, %v1474
    %v1476 = vsel %vm1074, %v1475, %v1471
    %v1477 = vlaneseq
    %v1478 = vshrl.u32 %v1477, 7
    %v1479 = vsub.s32 %v1076, %v1478
    %v1480 = vrot.slane %v951, %v1479
    %v1481 = vsel %vm1081, %v1480, %v1476
    %v1482 = vlaneseq
    %v1483 = vshrl.u32 %v1482, 7
    %v1484 = vsub.s32 %v1083, %v1483
    %v1485 = vrot.slane %v952, %v1484
    %v1486 = vsel %vm1088, %v1485, %v1481
    %v1487 = vlaneseq
    %v1488 = vshrl.u32 %v1487, 7
    %v1489 = vsub.s32 %v1090, %v1488
    %v1490 = vrot.slane %v953, %v1489
    %v1491 = vsel %vm1095, %v1490, %v1486
    %v1492 = vlaneseq
    %v1493 = vshrl.u32 %v1492, 7
    %v1494 = vsub.s32 %v987, %v1493
    %v1495 = vrot.slane %v954, %v1494
    %v1496 = vlaneseq
    %v1497 = vshrl.u32 %v1496, 7
    %v1498 = vsub.s32 %v992, %v1497
    %v1499 = vrot.slane %v955, %v1498
    %v1500 = vsel %vm997, %v1499, %v1495
    %v1501 = vlaneseq
    %v1502 = vshrl.u32 %v1501, 7
    %v1503 = vsub.s32 %v999, %v1502
    %v1504 = vrot.slane %v956, %v1503
    %v1505 = vsel %vm1004, %v1504, %v1500
    %v1506 = vlaneseq
    %v1507 = vshrl.u32 %v1506, 7
    %v1508 = vsub.s32 %v1006, %v1507
    %v1509 = vrot.slane %v957, %v1508
    %v1510 = vsel %vm1011, %v1509, %v1505
    %v1511 = vlaneseq
    %v1512 = vshrl.u32 %v1511, 7
    %v1513 = vsub.s32 %v1013, %v1512
    %v1514 = vrot.slane %v958, %v1513
    %v1515 = vsel %vm1018, %v1514, %v1510
    %v1516 = vlaneseq
    %v1517 = vshrl.u32 %v1516, 7
    %v1518 = vsub.s32 %v1020, %v1517
    %v1519 = vrot.slane %v959, %v1518
    %v1520 = vsel %vm1025, %v1519, %v1515
    %v1521 = vlaneseq
    %v1522 = vshrl.u32 %v1521, 7
    %v1523 = vsub.s32 %v1027, %v1522
    %v1524 = vrot.slane %v960, %v1523
    %v1525 = vsel %vm1032, %v1524, %v1520
    %v1526 = vlaneseq
    %v1527 = vshrl.u32 %v1526, 7
    %v1528 = vsub.s32 %v1034, %v1527
    %v1529 = vrot.slane %v961, %v1528
    %v1530 = vsel %vm1039, %v1529, %v1525
    %v1531 = vlaneseq
    %v1532 = vshrl.u32 %v1531, 7
    %v1533 = vsub.s32 %v1041, %v1532
    %v1534 = vrot.slane %v962, %v1533
    %v1535 = vsel %vm1046, %v1534, %v1530
    %v1536 = vlaneseq
    %v1537 = vshrl.u32 %v1536, 7
    %v1538 = vsub.s32 %v1048, %v1537
    %v1539 = vrot.slane %v963, %v1538
    %v1540 = vsel %vm1053, %v1539, %v1535
    %v1541 = vlaneseq
    %v1542 = vshrl.u32 %v1541, 7
    %v1543 = vsub.s32 %v1055, %v1542
    %v1544 = vrot.slane %v964, %v1543
    %v1545 = vsel %vm1060, %v1544, %v1540
    %v1546 = vlaneseq
    %v1547 = vshrl.u32 %v1546, 7
    %v1548 = vsub.s32 %v1062, %v1547
    %v1549 = vrot.slane %v965, %v1548
    %v1550 = vsel %vm1067, %v1549, %v1545
    %v1551 = vlaneseq
    %v1552 = vshrl.u32 %v1551, 7
    %v1553 = vsub.s32 %v1069, %v1552
    %v1554 = vrot.slane %v966, %v1553
    %v1555 = vsel %vm1074, %v1554, %v1550
    %v1556 = vlaneseq
    %v1557 = vshrl.u32 %v1556, 7
    %v1558 = vsub.s32 %v1076, %v1557
    %v1559 = vrot.slane %v967, %v1558
    %v1560 = vsel %vm1081, %v1559, %v1555
    %v1561 = vlaneseq
    %v1562 = vshrl.u32 %v1561, 7
    %v1563 = vsub.s32 %v1083, %v1562
    %v1564 = vrot.slane %v968, %v1563
    %v1565 = vsel %vm1088, %v1564, %v1560
    %v1566 = vlaneseq
    %v1567 = vshrl.u32 %v1566, 7
    %v1568 = vsub.s32 %v1090, %v1567
    %v1569 = vrot.slane %v969, %v1568
    %v1570 = vsel %vm1095, %v1569, %v1565
    %v1571 = vlaneseq
    %v1572 = vshrl.u32 %v1571, 7
    %v1573 = vsub.s32 %v987, %v1572
    %v1574 = vrot.slane %v970, %v1573
    %v1575 = vlaneseq
    %v1576 = vshrl.u32 %v1575, 7
    %v1577 = vsub.s32 %v992, %v1576
    %v1578 = vrot.slane %v971, %v1577
    %v1579 = vsel %vm997, %v1578, %v1574
    %v1580 = vlaneseq
    %v1581 = vshrl.u32 %v1580, 7
    %v1582 = vsub.s32 %v999, %v1581
    %v1583 = vrot.slane %v972, %v1582
    %v1584 = vsel %vm1004, %v1583, %v1579
    %v1585 = vlaneseq
    %v1586 = vshrl.u32 %v1585, 7
    %v1587 = vsub.s32 %v1006, %v1586
    %v1588 = vrot.slane %v973, %v1587
    %v1589 = vsel %vm1011, %v1588, %v1584
    %v1590 = vlaneseq
    %v1591 = vshrl.u32 %v1590, 7
    %v1592 = vsub.s32 %v1013, %v1591
    %v1593 = vrot.slane %v974, %v1592
    %v1594 = vsel %vm1018, %v1593, %v1589
    %v1595 = vlaneseq
    %v1596 = vshrl.u32 %v1595, 7
    %v1597 = vsub.s32 %v1020, %v1596
    %v1598 = vrot.slane %v975, %v1597
    %v1599 = vsel %vm1025, %v1598, %v1594
    %v1600 = vlaneseq
    %v1601 = vshrl.u32 %v1600, 7
    %v1602 = vsub.s32 %v1027, %v1601
    %v1603 = vrot.slane %v976, %v1602
    %v1604 = vsel %vm1032, %v1603, %v1599
    %v1605 = vlaneseq
    %v1606 = vshrl.u32 %v1605, 7
    %v1607 = vsub.s32 %v1034, %v1606
    %v1608 = vrot.slane %v977, %v1607
    %v1609 = vsel %vm1039, %v1608, %v1604
    %v1610 = vlaneseq
    %v1611 = vshrl.u32 %v1610, 7
    %v1612 = vsub.s32 %v1041, %v1611
    %v1613 = vrot.slane %v978, %v1612
    %v1614 = vsel %vm1046, %v1613, %v1609
    %v1615 = vlaneseq
    %v1616 = vshrl.u32 %v1615, 7
    %v1617 = vsub.s32 %v1048, %v1616
    %v1618 = vrot.slane %v979, %v1617
    %v1619 = vsel %vm1053, %v1618, %v1614
    %v1620 = vlaneseq
    %v1621 = vshrl.u32 %v1620, 7
    %v1622 = vsub.s32 %v1055, %v1621
    %v1623 = vrot.slane %v980, %v1622
    %v1624 = vsel %vm1060, %v1623, %v1619
    %v1625 = vlaneseq
    %v1626 = vshrl.u32 %v1625, 7
    %v1627 = vsub.s32 %v1062, %v1626
    %v1628 = vrot.slane %v981, %v1627
    %v1629 = vsel %vm1067, %v1628, %v1624
    %v1630 = vlaneseq
    %v1631 = vshrl.u32 %v1630, 7
    %v1632 = vsub.s32 %v1069, %v1631
    %v1633 = vrot.slane %v982, %v1632
    %v1634 = vsel %vm1074, %v1633, %v1629
    %v1635 = vlaneseq
    %v1636 = vshrl.u32 %v1635, 7
    %v1637 = vsub.s32 %v1076, %v1636
    %v1638 = vrot.slane %v983, %v1637
    %v1639 = vsel %vm1081, %v1638, %v1634
    %v1640 = vlaneseq
    %v1641 = vshrl.u32 %v1640, 7
    %v1642 = vsub.s32 %v1083, %v1641
    %v1643 = vrot.slane %v984, %v1642
    %v1644 = vsel %vm1088, %v1643, %v1639
    %v1645 = vlaneseq
    %v1646 = vshrl.u32 %v1645, 7
    %v1647 = vsub.s32 %v1090, %v1646
    %v1648 = vrot.slane %v985, %v1647
    %v1649 = vsel %vm1095, %v1648, %v1644
    %vm1650 = vcmask 1041409
    %v1651 = vsel %vm1650, %v1412, %v1096
    %v1652 = vsel %vm1650, %v1491, %v1175
    %v1653 = vsel %vm1650, %v1570, %v1254
    %v1654 = vsel %vm1650, %v1649, %v1333
    %v1655 = vpack.c.b16 %v1651, %v1651
    %v1656 = vpack.c.b16 %v1652, %v1652
    %v1657 = vpack.c.b16 %v1653, %v1653
    %v1658 = vpack.c.b16 %v1654, %v1654
    %v1727 = vunpack.c.l.b16 %v726
    %v1728 = vunpack.c.l.b16 %v727
    %v1729 = vunpack.c.l.b16 %v728
    %v1730 = vunpack.c.l.b16 %v729
    %v1731 = vunpack.c.l.b16 %v730
    %v1732 = vunpack.c.l.b16 %v731
    %v1733 = vunpack.c.l.b16 %v732
    %v1734 = vunpack.c.l.b16 %v733
    %v1735 = vunpack.c.l.b16 %v734
    %v1736 = vunpack.c.l.b16 %v735
    %v1737 = vunpack.c.l.b16 %v736
    %v1738 = vunpack.c.l.b16 %v737
    %v1739 = vunpack.c.l.b16 %v738
    %v1740 = vunpack.c.l.b16 %v739
    %v1741 = vunpack.c.l.b16 %v740
    %v1742 = vunpack.c.l.b16 %v741
    %v1743 = vunpack.c.l.b16 %v742
    %v1744 = vunpack.c.l.b16 %v743
    %v1745 = vunpack.c.l.b16 %v744
    %v1746 = vunpack.c.l.b16 %v745
    %v1747 = vunpack.c.l.b16 %v746
    %v1748 = vunpack.c.l.b16 %v747
    %v1749 = vunpack.c.l.b16 %v748
    %v1750 = vunpack.c.l.b16 %v749
    %v1751 = vunpack.c.l.b16 %v750
    %v1752 = vunpack.c.l.b16 %v751
    %v1753 = vunpack.c.l.b16 %v752
    %v1754 = vunpack.c.l.b16 %v753
    %v1755 = vunpack.c.l.b16 %v754
    %v1756 = vunpack.c.l.b16 %v755
    %v1757 = vunpack.c.l.b16 %v756
    %v1758 = vunpack.c.l.b16 %v757
    %v1759 = vunpack.c.l.b16 %v758
    %v1760 = vunpack.c.l.b16 %v759
    %v1761 = vunpack.c.l.b16 %v760
    %v1762 = vunpack.c.l.b16 %v761
    %v1763 = vunpack.c.l.b16 %v762
    %v1764 = vunpack.c.l.b16 %v763
    %v1765 = vunpack.c.l.b16 %v764
    %v1766 = vunpack.c.l.b16 %v765
    %v1767 = vunpack.c.l.b16 %v766
    %v1768 = vunpack.c.l.b16 %v767
    %v1769 = vunpack.c.l.b16 %v768
    %v1770 = vunpack.c.l.b16 %v769
    %v1771 = vunpack.c.l.b16 %v770
    %v1772 = vunpack.c.l.b16 %v771
    %v1773 = vunpack.c.l.b16 %v772
    %v1774 = vunpack.c.l.b16 %v773
    %v1775 = vunpack.c.l.b16 %v774
    %v1776 = vunpack.c.l.b16 %v775
    %v1777 = vunpack.c.l.b16 %v776
    %v1778 = vunpack.c.l.b16 %v777
    %v1779 = vunpack.c.l.b16 %v778
    %v1780 = vunpack.c.l.b16 %v779
    %v1781 = vunpack.c.l.b16 %v780
    %v1782 = vunpack.c.l.b16 %v781
    %v1783 = vunpack.c.l.b16 %v782
    %v1784 = vunpack.c.l.b16 %v783
    %v1785 = vunpack.c.l.b16 %v784
    %v1786 = vunpack.c.l.b16 %v785
    %v1787 = vunpack.c.l.b16 %v786
    %v1788 = vunpack.c.l.b16 %v787
    %v1789 = vunpack.c.l.b16 %v788
    %v1790 = vunpack.c.l.b16 %v789
    %v1791 = vpack.c.b16 %v1728, %v1727
    %v1792 = vpack.c.b16 %v1730, %v1729
    %v1793 = vpack.c.b16 %v1732, %v1731
    %v1794 = vpack.c.b16 %v1734, %v1733
    %v1795 = vpack.c.b16 %v1736, %v1735
    %v1796 = vpack.c.b16 %v1738, %v1737
    %v1797 = vpack.c.b16 %v1740, %v1739
    %v1798 = vpack.c.b16 %v1742, %v1741
    %v1799 = vpack.c.b16 %v1744, %v1743
    %v1800 = vpack.c.b16 %v1746, %v1745
    %v1801 = vpack.c.b16 %v1748, %v1747
    %v1802 = vpack.c.b16 %v1750, %v1749
    %v1803 = vpack.c.b16 %v1752, %v1751
    %v1804 = vpack.c.b16 %v1754, %v1753
    %v1805 = vpack.c.b16 %v1756, %v1755
    %v1806 = vpack.c.b16 %v1758, %v1757
    %v1807 = vpack.c.b16 %v1760, %v1759
    %v1808 = vpack.c.b16 %v1762, %v1761
    %v1809 = vpack.c.b16 %v1764, %v1763
    %v1810 = vpack.c.b16 %v1766, %v1765
    %v1811 = vpack.c.b16 %v1768, %v1767
    %v1812 = vpack.c.b16 %v1770, %v1769
    %v1813 = vpack.c.b16 %v1772, %v1771
    %v1814 = vpack.c.b16 %v1774, %v1773
    %v1815 = vpack.c.b16 %v1776, %v1775
    %v1816 = vpack.c.b16 %v1778, %v1777
    %v1817 = vpack.c.b16 %v1780, %v1779
    %v1818 = vpack.c.b16 %v1782, %v1781
    %v1819 = vpack.c.b16 %v1784, %v1783
    %v1820 = vpack.c.b16 %v1786, %v1785
    %v1821 = vpack.c.b16 %v1788, %v1787
    %v1822 = vpack.c.b16 %v1790, %v1789
    %1855 = vmatprep.subr.bf16.mxu0 0
    %1856 = vmatpush1.bf16.msra.mxu0 %v1798
    %1857 = vmatprep.subr.bf16.mxu0 0
    %1858 = vmatpush1.bf16.msra.mxu0 %v1797
    %1859 = vmatprep.subr.bf16.mxu0 0
    %1860 = vmatpush1.bf16.msra.mxu0 %v1796
    %1861 = vmatprep.subr.bf16.mxu0 0
    %1862 = vmatpush1.bf16.msra.mxu0 %v1795
    %1863 = vmatprep.subr.bf16.mxu0 0
    %1864 = vmatpush1.bf16.msra.mxu0 %v1794
    %1865 = vmatprep.subr.bf16.mxu0 0
    %1866 = vmatpush1.bf16.msra.mxu0 %v1793
    %1867 = vmatprep.subr.bf16.mxu0 0
    %1868 = vmatpush1.bf16.msra.mxu0 %v1792
    %1869 = vmatprep.subr.bf16.mxu0 0
    %1870 = vmatpush1.bf16.msra.mxu0 %v1791
    %1871 = vmatprep.subr.bf16.mxu0 0
    %1872 = vmatpush2.bf16.msra.mxu0 %v1806
    %1873 = vmatprep.subr.bf16.mxu0 0
    %1874 = vmatpush2.bf16.msra.mxu0 %v1805
    %1875 = vmatprep.subr.bf16.mxu0 0
    %1876 = vmatpush2.bf16.msra.mxu0 %v1804
    %1877 = vmatprep.subr.bf16.mxu0 0
    %1878 = vmatpush2.bf16.msra.mxu0 %v1803
    %1879 = vmatprep.subr.bf16.mxu0 0
    %1880 = vmatpush2.bf16.msra.mxu0 %v1802
    %1881 = vmatprep.subr.bf16.mxu0 0
    %1882 = vmatpush2.bf16.msra.mxu0 %v1801
    %1883 = vmatprep.subr.bf16.mxu0 0
    %1884 = vmatpush2.bf16.msra.mxu0 %v1800
    %1885 = vmatprep.subr.bf16.mxu0 0
    %1886 = vmatpush2.bf16.msra.mxu0 %v1799
    %1887 = vmatprep.mubr.bf16.mxu0 %v1656
    %1888 = vmatmul.mubr.bf16.gmra.mxu0 %v1655
    %v1889 = vpop.f32.mrf.mxu0
    %v1890 = vadd.f32 %v793, %v1889
    %v1891 = vpop.f32.mrf.mxu0
    %v1892 = vpop.f32.mrf.mxu0
    %v1893 = vpop.f32.mrf.mxu0
    %1894 = vdwg.mxu0
    %1895 = vmatprep.subr.bf16.mxu0 0
    %1896 = vmatpush1.bf16.msra.mxu0 %v1814
    %1897 = vmatprep.subr.bf16.mxu0 0
    %1898 = vmatpush1.bf16.msra.mxu0 %v1813
    %1899 = vmatprep.subr.bf16.mxu0 0
    %1900 = vmatpush1.bf16.msra.mxu0 %v1812
    %1901 = vmatprep.subr.bf16.mxu0 0
    %1902 = vmatpush1.bf16.msra.mxu0 %v1811
    %1903 = vmatprep.subr.bf16.mxu0 0
    %1904 = vmatpush1.bf16.msra.mxu0 %v1810
    %1905 = vmatprep.subr.bf16.mxu0 0
    %1906 = vmatpush1.bf16.msra.mxu0 %v1809
    %1907 = vmatprep.subr.bf16.mxu0 0
    %1908 = vmatpush1.bf16.msra.mxu0 %v1808
    %1909 = vmatprep.subr.bf16.mxu0 0
    %1910 = vmatpush1.bf16.msra.mxu0 %v1807
    %1911 = vmatprep.subr.bf16.mxu0 0
    %1912 = vmatpush2.bf16.msra.mxu0 %v1822
    %1913 = vmatprep.subr.bf16.mxu0 0
    %1914 = vmatpush2.bf16.msra.mxu0 %v1821
    %1915 = vmatprep.subr.bf16.mxu0 0
    %1916 = vmatpush2.bf16.msra.mxu0 %v1820
    %1917 = vmatprep.subr.bf16.mxu0 0
    %1918 = vmatpush2.bf16.msra.mxu0 %v1819
    %1919 = vmatprep.subr.bf16.mxu0 0
    %1920 = vmatpush2.bf16.msra.mxu0 %v1818
    %1921 = vmatprep.subr.bf16.mxu0 0
    %1922 = vmatpush2.bf16.msra.mxu0 %v1817
    %1923 = vmatprep.subr.bf16.mxu0 0
    %1924 = vmatpush2.bf16.msra.mxu0 %v1816
    %1925 = vmatprep.subr.bf16.mxu0 0
    %1926 = vmatpush2.bf16.msra.mxu0 %v1815
    %1927 = vmatprep.mubr.bf16.mxu0 %v1658
    %1928 = vmatmul.mubr.bf16.gmra.mxu0 %v1657
    %v1929 = vpop.f32.mrf.mxu0
    %v1930 = vadd.f32 %v1890, %v1929
    %v1931 = vpop.f32.mrf.mxu0
    %v1932 = vpop.f32.mrf.mxu0
    %v1933 = vpop.f32.mrf.mxu0
    %1934 = vdwg.mxu0
    %v1935 = vmax.f32 %v1930, 0.0
    %v1936 = vpack.c.bf16 %v1935, %v1935
    %v1937 = vld [vmem:[%s2] sm:$0xff]
    %v1938 = vld [vmem:[%s2 + $0x8] sm:$0xff]
    %v1939 = vld [vmem:[%s2 + $0x10] sm:$0xff]
    %v1940 = vld [vmem:[%s2 + $0x18] sm:$0xff]
    %v1941 = vld [vmem:[%s2 + $0x20] sm:$0xff]
    %v1942 = vld [vmem:[%s2 + $0x28] sm:$0xff]
    %v1943 = vld [vmem:[%s2 + $0x30] sm:$0xff]
    %v1944 = vld [vmem:[%s2 + $0x38] sm:$0xff]
    %v1946 = vlaneseq
    %v1947 = vshrl.u32 %v1946, 7
    %v1948 = vsub.s32 1, %v1947
    %v1949 = vrot.slane %v661, %v1948
    %v1950 = vlaneseq
    %v1951 = vshrl.u32 %v1950, 7
    %v1952 = vsub.s32 3, %v1951
    %v1953 = vrot.slane %v661, %v1952
    %v1954 = vlaneseq
    %v1955 = vshrl.u32 %v1954, 7
    %v1956 = vsub.s32 5, %v1955
    %v1957 = vrot.slane %v661, %v1956
    %v1958 = vlaneseq
    %v1959 = vshrl.u32 %v1958, 7
    %v1960 = vsub.s32 7, %v1959
    %v1961 = vrot.slane %v661, %v1960
    %v1966 = vlaneseq
    %v1967 = vshrl.u32 %v1966, 7
    %v1968 = vsub.s32 1, %v1967
    %v1969 = vrot.slane %v1949, %v1968
    %v1970 = vlaneseq
    %v1971 = vshrl.u32 %v1970, 7
    %v1972 = vsub.s32 1, %v1971
    %v1973 = vrot.slane %v1953, %v1972
    %v1974 = vlaneseq
    %v1975 = vshrl.u32 %v1974, 7
    %v1976 = vsub.s32 1, %v1975
    %v1977 = vrot.slane %v1957, %v1976
    %v1978 = vlaneseq
    %v1979 = vshrl.u32 %v1978, 7
    %v1980 = vsub.s32 1, %v1979
    %v1981 = vrot.slane %v1961, %v1980
    %v1990 = vunpack.c.l.b16 %v1937
    %v1991 = vunpack.c.h.b16 %v1937
    %v1992 = vunpack.c.l.b16 %v1938
    %v1993 = vunpack.c.h.b16 %v1938
    %v1994 = vunpack.c.l.b16 %v1939
    %v1995 = vunpack.c.h.b16 %v1939
    %v1996 = vunpack.c.l.b16 %v1940
    %v1997 = vunpack.c.h.b16 %v1940
    %v1998 = vunpack.c.l.b16 %v1941
    %v1999 = vunpack.c.h.b16 %v1941
    %v2000 = vunpack.c.l.b16 %v1942
    %v2001 = vunpack.c.h.b16 %v1942
    %v2002 = vunpack.c.l.b16 %v1943
    %v2003 = vunpack.c.h.b16 %v1943
    %v2004 = vunpack.c.l.b16 %v1944
    %v2005 = vunpack.c.h.b16 %v1944
    %v2006 = vpack.c.b16 %v1994, %v1990
    %v2007 = vpack.c.b16 %v1995, %v1991
    %v2008 = vpack.c.b16 %v1996, %v1992
    %v2009 = vpack.c.b16 %v1997, %v1993
    %v2010 = vpack.c.b16 %v2002, %v1998
    %v2011 = vpack.c.b16 %v2003, %v1999
    %v2012 = vpack.c.b16 %v2004, %v2000
    %v2013 = vpack.c.b16 %v2005, %v2001
    %vm2022 = vcmask 261120
    %v2024 = vsel %vm2022, %v1936, 0
    %2026 = vmatprep.subr.bf16.mxu0 0
    %2027 = vmatpush1.bf16.msra.mxu0 0
    %2028 = vmatprep.subr.bf16.mxu0 0
    %2029 = vmatpush1.bf16.msra.mxu0 0
    %2030 = vmatprep.subr.bf16.mxu0 0
    %2031 = vmatpush1.bf16.msra.mxu0 0
    %2032 = vmatprep.subr.bf16.mxu0 0
    %2033 = vmatpush1.bf16.msra.mxu0 0
    %2034 = vmatprep.subr.bf16.mxu0 0
    %2035 = vmatpush1.bf16.msra.mxu0 0
    %2036 = vmatprep.subr.bf16.mxu0 0
    %2037 = vmatpush1.bf16.msra.mxu0 0
    %2038 = vmatprep.subr.bf16.mxu0 %v2011
    %2039 = vmatpush1.bf16.msra.mxu0 %v2010
    %2040 = vmatprep.subr.bf16.mxu0 %v2007
    %2041 = vmatpush1.bf16.msra.mxu0 %v2006
    %2042 = vmatprep.subr.bf16.mxu0 0
    %2043 = vmatpush2.bf16.msra.mxu0 0
    %2044 = vmatprep.subr.bf16.mxu0 0
    %2045 = vmatpush2.bf16.msra.mxu0 0
    %2046 = vmatprep.subr.bf16.mxu0 0
    %2047 = vmatpush2.bf16.msra.mxu0 0
    %2048 = vmatprep.subr.bf16.mxu0 0
    %2049 = vmatpush2.bf16.msra.mxu0 0
    %2050 = vmatprep.subr.bf16.mxu0 0
    %2051 = vmatpush2.bf16.msra.mxu0 0
    %2052 = vmatprep.subr.bf16.mxu0 0
    %2053 = vmatpush2.bf16.msra.mxu0 0
    %2054 = vmatprep.subr.bf16.mxu0 0
    %2055 = vmatpush2.bf16.msra.mxu0 0
    %2056 = vmatprep.subr.bf16.mxu0 0
    %2057 = vmatpush2.bf16.msra.mxu0 0
    %2058 = vmatprep.mubr.bf16.mxu0 0
    %2059 = vmatmul.mubr.bf16.gmra.mxu0 %v2024
    %v2060 = vpop.f32.mrf.mxu0
    %v2061 = vadd.f32 %v1969, %v2060
    %v2062 = vpop.f32.mrf.mxu0
    %v2063 = vadd.f32 %v1973, %v2062
    %v2064 = vpop.f32.mrf.mxu0
    %v2065 = vpop.f32.mrf.mxu0
    %2066 = vdwg.mxu0
    %2067 = vmatprep.subr.bf16.mxu0 0
    %2068 = vmatpush1.bf16.msra.mxu0 0
    %2069 = vmatprep.subr.bf16.mxu0 0
    %2070 = vmatpush1.bf16.msra.mxu0 0
    %2071 = vmatprep.subr.bf16.mxu0 0
    %2072 = vmatpush1.bf16.msra.mxu0 0
    %2073 = vmatprep.subr.bf16.mxu0 0
    %2074 = vmatpush1.bf16.msra.mxu0 0
    %2075 = vmatprep.subr.bf16.mxu0 0
    %2076 = vmatpush1.bf16.msra.mxu0 0
    %2077 = vmatprep.subr.bf16.mxu0 0
    %2078 = vmatpush1.bf16.msra.mxu0 0
    %2079 = vmatprep.subr.bf16.mxu0 %v2013
    %2080 = vmatpush1.bf16.msra.mxu0 %v2012
    %2081 = vmatprep.subr.bf16.mxu0 %v2009
    %2082 = vmatpush1.bf16.msra.mxu0 %v2008
    %2083 = vmatprep.subr.bf16.mxu0 0
    %2084 = vmatpush2.bf16.msra.mxu0 0
    %2085 = vmatprep.subr.bf16.mxu0 0
    %2086 = vmatpush2.bf16.msra.mxu0 0
    %2087 = vmatprep.subr.bf16.mxu0 0
    %2088 = vmatpush2.bf16.msra.mxu0 0
    %2089 = vmatprep.subr.bf16.mxu0 0
    %2090 = vmatpush2.bf16.msra.mxu0 0
    %2091 = vmatprep.subr.bf16.mxu0 0
    %2092 = vmatpush2.bf16.msra.mxu0 0
    %2093 = vmatprep.subr.bf16.mxu0 0
    %2094 = vmatpush2.bf16.msra.mxu0 0
    %2095 = vmatprep.subr.bf16.mxu0 0
    %2096 = vmatpush2.bf16.msra.mxu0 0
    %2097 = vmatprep.subr.bf16.mxu0 0
    %2098 = vmatpush2.bf16.msra.mxu0 0
    %2099 = vmatprep.mubr.bf16.mxu0 0
    %2100 = vmatmul.mubr.bf16.gmra.mxu0 %v2024
    %v2101 = vpop.f32.mrf.mxu0
    %v2102 = vadd.f32 %v1977, %v2101
    %v2103 = vpop.f32.mrf.mxu0
    %v2104 = vadd.f32 %v1981, %v2103
    %v2105 = vpop.f32.mrf.mxu0
    %v2106 = vpop.f32.mrf.mxu0
    %2107 = vdwg.mxu0
    %v2108 = vand.u32 2147483647, %v2061
    %v2109 = vand.u32 2147483647, %v2063
    %v2110 = vand.u32 2147483647, %v2102
    %v2111 = vand.u32 2147483647, %v2104
    %v2112 = vsub.f32 0.0, %v2108
    %v2113 = vsub.f32 0.0, %v2109
    %v2114 = vsub.f32 0.0, %v2110
    %v2115 = vsub.f32 0.0, %v2111
    %v2116 = vmul.f32 %v2112, 1.442695
    %v2117 = vpow.pop %v2116
    %v2118 = vmul.f32 %v2113, 1.442695
    %v2119 = vpow.pop %v2118
    %v2120 = vmul.f32 %v2114, 1.442695
    %v2121 = vpow.pop %v2120
    %v2122 = vmul.f32 %v2115, 1.442695
    %v2123 = vpow.pop %v2122
    %v2124 = vadd.f32 %v2117, 1.0
    %v2125 = vadd.f32 %v2119, 1.0
    %v2126 = vadd.f32 %v2121, 1.0
    %v2127 = vadd.f32 %v2123, 1.0
    %v2128 = vrcp.pop %v2124
    %v2129 = vrcp.pop %v2125
    %v2130 = vrcp.pop %v2126
    %v2131 = vrcp.pop %v2127
    %vm2132 = vcmp.ge.f32.partialorder %v2061, 0.0
    %vm2133 = vcmp.ge.f32.partialorder %v2063, 0.0
    %vm2134 = vcmp.ge.f32.partialorder %v2102, 0.0
    %vm2135 = vcmp.ge.f32.partialorder %v2104, 0.0
    %v2136 = vmul.f32 %v2117, %v2128
    %v2137 = vmul.f32 %v2119, %v2129
    %v2138 = vmul.f32 %v2121, %v2130
    %v2139 = vmul.f32 %v2123, %v2131
    %v2140 = vsel %vm2132, %v2128, %v2136
    %v2141 = vsel %vm2133, %v2129, %v2137
    %v2142 = vsel %vm2134, %v2130, %v2138
    %v2143 = vsel %vm2135, %v2131, %v2139
    %v2148 = vlaneseq
    %v2149 = vshrl.u32 %v2148, 7
    %v2150 = vsub.s32 0, %v2149
    %v2151 = vrot.slane %v2140, %v2150
    %2153 = vbcast.lane.b32.xlu0 %v2151, 256
    %v2154 = vpop.permute.xlu0 %2153
    %s2156 = sor.u32 256, 8
    %2157 = vbcast.lane.b32.xlu0 %v2151, %s2156
    %v2158 = vpop.permute.xlu0 %2157
    %s2160 = sor.u32 256, 16
    %2161 = vbcast.lane.b32.xlu0 %v2151, %s2160
    %v2162 = vpop.permute.xlu0 %2161
    %s2164 = sor.u32 256, 24
    %2165 = vbcast.lane.b32.xlu0 %v2151, %s2164
    %v2166 = vpop.permute.xlu0 %2165
    %s2168 = sor.u32 256, 32
    %2169 = vbcast.lane.b32.xlu0 %v2151, %s2168
    %v2170 = vpop.permute.xlu0 %2169
    %s2172 = sor.u32 256, 40
    %2173 = vbcast.lane.b32.xlu0 %v2151, %s2172
    %v2174 = vpop.permute.xlu0 %2173
    %s2176 = sor.u32 256, 48
    %2177 = vbcast.lane.b32.xlu0 %v2151, %s2176
    %v2178 = vpop.permute.xlu0 %2177
    %s2180 = sor.u32 256, 56
    %2181 = vbcast.lane.b32.xlu0 %v2151, %s2180
    %v2182 = vpop.permute.xlu0 %2181
    %s2184 = sor.u32 256, 64
    %2185 = vbcast.lane.b32.xlu0 %v2151, %s2184
    %v2186 = vpop.permute.xlu0 %2185
    %s2188 = sor.u32 256, 72
    %2189 = vbcast.lane.b32.xlu0 %v2151, %s2188
    %v2190 = vpop.permute.xlu0 %2189
    %s2192 = sor.u32 256, 80
    %2193 = vbcast.lane.b32.xlu0 %v2151, %s2192
    %v2194 = vpop.permute.xlu0 %2193
    %s2196 = sor.u32 256, 88
    %2197 = vbcast.lane.b32.xlu0 %v2151, %s2196
    %v2198 = vpop.permute.xlu0 %2197
    %s2200 = sor.u32 256, 96
    %2201 = vbcast.lane.b32.xlu0 %v2151, %s2200
    %v2202 = vpop.permute.xlu0 %2201
    %s2204 = sor.u32 256, 104
    %2205 = vbcast.lane.b32.xlu0 %v2151, %s2204
    %v2206 = vpop.permute.xlu0 %2205
    %s2208 = sor.u32 256, 112
    %2209 = vbcast.lane.b32.xlu0 %v2151, %s2208
    %v2210 = vpop.permute.xlu0 %2209
    %s2212 = sor.u32 256, 120
    %2213 = vbcast.lane.b32.xlu0 %v2151, %s2212
    %v2214 = vpop.permute.xlu0 %2213
    %v2215 = vlaneseq
    %v2216 = vshrl.u32 %v2215, 7
    %v2217 = vsub.s32 0, %v2216
    %v2218 = vrot.slane %v2141, %v2217
    %2220 = vbcast.lane.b32.xlu0 %v2218, 256
    %v2221 = vpop.permute.xlu0 %2220
    %s2223 = sor.u32 256, 8
    %2224 = vbcast.lane.b32.xlu0 %v2218, %s2223
    %v2225 = vpop.permute.xlu0 %2224
    %s2227 = sor.u32 256, 16
    %2228 = vbcast.lane.b32.xlu0 %v2218, %s2227
    %v2229 = vpop.permute.xlu0 %2228
    %s2231 = sor.u32 256, 24
    %2232 = vbcast.lane.b32.xlu0 %v2218, %s2231
    %v2233 = vpop.permute.xlu0 %2232
    %s2235 = sor.u32 256, 32
    %2236 = vbcast.lane.b32.xlu0 %v2218, %s2235
    %v2237 = vpop.permute.xlu0 %2236
    %s2239 = sor.u32 256, 40
    %2240 = vbcast.lane.b32.xlu0 %v2218, %s2239
    %v2241 = vpop.permute.xlu0 %2240
    %s2243 = sor.u32 256, 48
    %2244 = vbcast.lane.b32.xlu0 %v2218, %s2243
    %v2245 = vpop.permute.xlu0 %2244
    %s2247 = sor.u32 256, 56
    %2248 = vbcast.lane.b32.xlu0 %v2218, %s2247
    %v2249 = vpop.permute.xlu0 %2248
    %s2251 = sor.u32 256, 64
    %2252 = vbcast.lane.b32.xlu0 %v2218, %s2251
    %v2253 = vpop.permute.xlu0 %2252
    %s2255 = sor.u32 256, 72
    %2256 = vbcast.lane.b32.xlu0 %v2218, %s2255
    %v2257 = vpop.permute.xlu0 %2256
    %s2259 = sor.u32 256, 80
    %2260 = vbcast.lane.b32.xlu0 %v2218, %s2259
    %v2261 = vpop.permute.xlu0 %2260
    %s2263 = sor.u32 256, 88
    %2264 = vbcast.lane.b32.xlu0 %v2218, %s2263
    %v2265 = vpop.permute.xlu0 %2264
    %s2267 = sor.u32 256, 96
    %2268 = vbcast.lane.b32.xlu0 %v2218, %s2267
    %v2269 = vpop.permute.xlu0 %2268
    %s2271 = sor.u32 256, 104
    %2272 = vbcast.lane.b32.xlu0 %v2218, %s2271
    %v2273 = vpop.permute.xlu0 %2272
    %s2275 = sor.u32 256, 112
    %2276 = vbcast.lane.b32.xlu0 %v2218, %s2275
    %v2277 = vpop.permute.xlu0 %2276
    %s2279 = sor.u32 256, 120
    %2280 = vbcast.lane.b32.xlu0 %v2218, %s2279
    %v2281 = vpop.permute.xlu0 %2280
    %v2282 = vlaneseq
    %v2283 = vshrl.u32 %v2282, 7
    %v2284 = vsub.s32 0, %v2283
    %v2285 = vrot.slane %v2142, %v2284
    %2287 = vbcast.lane.b32.xlu0 %v2285, 256
    %v2288 = vpop.permute.xlu0 %2287
    %s2290 = sor.u32 256, 8
    %2291 = vbcast.lane.b32.xlu0 %v2285, %s2290
    %v2292 = vpop.permute.xlu0 %2291
    %s2294 = sor.u32 256, 16
    %2295 = vbcast.lane.b32.xlu0 %v2285, %s2294
    %v2296 = vpop.permute.xlu0 %2295
    %s2298 = sor.u32 256, 24
    %2299 = vbcast.lane.b32.xlu0 %v2285, %s2298
    %v2300 = vpop.permute.xlu0 %2299
    %s2302 = sor.u32 256, 32
    %2303 = vbcast.lane.b32.xlu0 %v2285, %s2302
    %v2304 = vpop.permute.xlu0 %2303
    %s2306 = sor.u32 256, 40
    %2307 = vbcast.lane.b32.xlu0 %v2285, %s2306
    %v2308 = vpop.permute.xlu0 %2307
    %s2310 = sor.u32 256, 48
    %2311 = vbcast.lane.b32.xlu0 %v2285, %s2310
    %v2312 = vpop.permute.xlu0 %2311
    %s2314 = sor.u32 256, 56
    %2315 = vbcast.lane.b32.xlu0 %v2285, %s2314
    %v2316 = vpop.permute.xlu0 %2315
    %s2318 = sor.u32 256, 64
    %2319 = vbcast.lane.b32.xlu0 %v2285, %s2318
    %v2320 = vpop.permute.xlu0 %2319
    %s2322 = sor.u32 256, 72
    %2323 = vbcast.lane.b32.xlu0 %v2285, %s2322
    %v2324 = vpop.permute.xlu0 %2323
    %s2326 = sor.u32 256, 80
    %2327 = vbcast.lane.b32.xlu0 %v2285, %s2326
    %v2328 = vpop.permute.xlu0 %2327
    %s2330 = sor.u32 256, 88
    %2331 = vbcast.lane.b32.xlu0 %v2285, %s2330
    %v2332 = vpop.permute.xlu0 %2331
    %s2334 = sor.u32 256, 96
    %2335 = vbcast.lane.b32.xlu0 %v2285, %s2334
    %v2336 = vpop.permute.xlu0 %2335
    %s2338 = sor.u32 256, 104
    %2339 = vbcast.lane.b32.xlu0 %v2285, %s2338
    %v2340 = vpop.permute.xlu0 %2339
    %s2342 = sor.u32 256, 112
    %2343 = vbcast.lane.b32.xlu0 %v2285, %s2342
    %v2344 = vpop.permute.xlu0 %2343
    %s2346 = sor.u32 256, 120
    %2347 = vbcast.lane.b32.xlu0 %v2285, %s2346
    %v2348 = vpop.permute.xlu0 %2347
    %v2349 = vlaneseq
    %v2350 = vshrl.u32 %v2349, 7
    %v2351 = vsub.s32 0, %v2350
    %v2352 = vrot.slane %v2143, %v2351
    %2354 = vbcast.lane.b32.xlu0 %v2352, 256
    %v2355 = vpop.permute.xlu0 %2354
    %s2357 = sor.u32 256, 8
    %2358 = vbcast.lane.b32.xlu0 %v2352, %s2357
    %v2359 = vpop.permute.xlu0 %2358
    %s2361 = sor.u32 256, 16
    %2362 = vbcast.lane.b32.xlu0 %v2352, %s2361
    %v2363 = vpop.permute.xlu0 %2362
    %s2365 = sor.u32 256, 24
    %2366 = vbcast.lane.b32.xlu0 %v2352, %s2365
    %v2367 = vpop.permute.xlu0 %2366
    %s2369 = sor.u32 256, 32
    %2370 = vbcast.lane.b32.xlu0 %v2352, %s2369
    %v2371 = vpop.permute.xlu0 %2370
    %s2373 = sor.u32 256, 40
    %2374 = vbcast.lane.b32.xlu0 %v2352, %s2373
    %v2375 = vpop.permute.xlu0 %2374
    %s2377 = sor.u32 256, 48
    %2378 = vbcast.lane.b32.xlu0 %v2352, %s2377
    %v2379 = vpop.permute.xlu0 %2378
    %s2381 = sor.u32 256, 56
    %2382 = vbcast.lane.b32.xlu0 %v2352, %s2381
    %v2383 = vpop.permute.xlu0 %2382
    %s2385 = sor.u32 256, 64
    %2386 = vbcast.lane.b32.xlu0 %v2352, %s2385
    %v2387 = vpop.permute.xlu0 %2386
    %s2389 = sor.u32 256, 72
    %2390 = vbcast.lane.b32.xlu0 %v2352, %s2389
    %v2391 = vpop.permute.xlu0 %2390
    %s2393 = sor.u32 256, 80
    %2394 = vbcast.lane.b32.xlu0 %v2352, %s2393
    %v2395 = vpop.permute.xlu0 %2394
    %s2397 = sor.u32 256, 88
    %2398 = vbcast.lane.b32.xlu0 %v2352, %s2397
    %v2399 = vpop.permute.xlu0 %2398
    %s2401 = sor.u32 256, 96
    %2402 = vbcast.lane.b32.xlu0 %v2352, %s2401
    %v2403 = vpop.permute.xlu0 %2402
    %s2405 = sor.u32 256, 104
    %2406 = vbcast.lane.b32.xlu0 %v2352, %s2405
    %v2407 = vpop.permute.xlu0 %2406
    %s2409 = sor.u32 256, 112
    %2410 = vbcast.lane.b32.xlu0 %v2352, %s2409
    %v2411 = vpop.permute.xlu0 %2410
    %s2413 = sor.u32 256, 120
    %2414 = vbcast.lane.b32.xlu0 %v2352, %s2413
    %v2415 = vpop.permute.xlu0 %2414
    %v2416 = vlaneseq
    %v2417 = vshrl.u32 %v2416, 7
    %v2418 = vsub.s32 1, %v2417
    %v2419 = vrot.slane %v2140, %v2418
    %2421 = vbcast.lane.b32.xlu0 %v2419, 256
    %v2422 = vpop.permute.xlu0 %2421
    %s2424 = sor.u32 256, 8
    %2425 = vbcast.lane.b32.xlu0 %v2419, %s2424
    %v2426 = vpop.permute.xlu0 %2425
    %s2428 = sor.u32 256, 16
    %2429 = vbcast.lane.b32.xlu0 %v2419, %s2428
    %v2430 = vpop.permute.xlu0 %2429
    %s2432 = sor.u32 256, 24
    %2433 = vbcast.lane.b32.xlu0 %v2419, %s2432
    %v2434 = vpop.permute.xlu0 %2433
    %s2436 = sor.u32 256, 32
    %2437 = vbcast.lane.b32.xlu0 %v2419, %s2436
    %v2438 = vpop.permute.xlu0 %2437
    %s2440 = sor.u32 256, 40
    %2441 = vbcast.lane.b32.xlu0 %v2419, %s2440
    %v2442 = vpop.permute.xlu0 %2441
    %s2444 = sor.u32 256, 48
    %2445 = vbcast.lane.b32.xlu0 %v2419, %s2444
    %v2446 = vpop.permute.xlu0 %2445
    %s2448 = sor.u32 256, 56
    %2449 = vbcast.lane.b32.xlu0 %v2419, %s2448
    %v2450 = vpop.permute.xlu0 %2449
    %s2452 = sor.u32 256, 64
    %2453 = vbcast.lane.b32.xlu0 %v2419, %s2452
    %v2454 = vpop.permute.xlu0 %2453
    %s2456 = sor.u32 256, 72
    %2457 = vbcast.lane.b32.xlu0 %v2419, %s2456
    %v2458 = vpop.permute.xlu0 %2457
    %s2460 = sor.u32 256, 80
    %2461 = vbcast.lane.b32.xlu0 %v2419, %s2460
    %v2462 = vpop.permute.xlu0 %2461
    %s2464 = sor.u32 256, 88
    %2465 = vbcast.lane.b32.xlu0 %v2419, %s2464
    %v2466 = vpop.permute.xlu0 %2465
    %s2468 = sor.u32 256, 96
    %2469 = vbcast.lane.b32.xlu0 %v2419, %s2468
    %v2470 = vpop.permute.xlu0 %2469
    %s2472 = sor.u32 256, 104
    %2473 = vbcast.lane.b32.xlu0 %v2419, %s2472
    %v2474 = vpop.permute.xlu0 %2473
    %s2476 = sor.u32 256, 112
    %2477 = vbcast.lane.b32.xlu0 %v2419, %s2476
    %v2478 = vpop.permute.xlu0 %2477
    %s2480 = sor.u32 256, 120
    %2481 = vbcast.lane.b32.xlu0 %v2419, %s2480
    %v2482 = vpop.permute.xlu0 %2481
    %v2483 = vlaneseq
    %v2484 = vshrl.u32 %v2483, 7
    %v2485 = vsub.s32 1, %v2484
    %v2486 = vrot.slane %v2141, %v2485
    %2488 = vbcast.lane.b32.xlu0 %v2486, 256
    %v2489 = vpop.permute.xlu0 %2488
    %s2491 = sor.u32 256, 8
    %2492 = vbcast.lane.b32.xlu0 %v2486, %s2491
    %v2493 = vpop.permute.xlu0 %2492
    %s2495 = sor.u32 256, 16
    %2496 = vbcast.lane.b32.xlu0 %v2486, %s2495
    %v2497 = vpop.permute.xlu0 %2496
    %s2499 = sor.u32 256, 24
    %2500 = vbcast.lane.b32.xlu0 %v2486, %s2499
    %v2501 = vpop.permute.xlu0 %2500
    %s2503 = sor.u32 256, 32
    %2504 = vbcast.lane.b32.xlu0 %v2486, %s2503
    %v2505 = vpop.permute.xlu0 %2504
    %s2507 = sor.u32 256, 40
    %2508 = vbcast.lane.b32.xlu0 %v2486, %s2507
    %v2509 = vpop.permute.xlu0 %2508
    %s2511 = sor.u32 256, 48
    %2512 = vbcast.lane.b32.xlu0 %v2486, %s2511
    %v2513 = vpop.permute.xlu0 %2512
    %s2515 = sor.u32 256, 56
    %2516 = vbcast.lane.b32.xlu0 %v2486, %s2515
    %v2517 = vpop.permute.xlu0 %2516
    %s2519 = sor.u32 256, 64
    %2520 = vbcast.lane.b32.xlu0 %v2486, %s2519
    %v2521 = vpop.permute.xlu0 %2520
    %s2523 = sor.u32 256, 72
    %2524 = vbcast.lane.b32.xlu0 %v2486, %s2523
    %v2525 = vpop.permute.xlu0 %2524
    %s2527 = sor.u32 256, 80
    %2528 = vbcast.lane.b32.xlu0 %v2486, %s2527
    %v2529 = vpop.permute.xlu0 %2528
    %s2531 = sor.u32 256, 88
    %2532 = vbcast.lane.b32.xlu0 %v2486, %s2531
    %v2533 = vpop.permute.xlu0 %2532
    %s2535 = sor.u32 256, 96
    %2536 = vbcast.lane.b32.xlu0 %v2486, %s2535
    %v2537 = vpop.permute.xlu0 %2536
    %s2539 = sor.u32 256, 104
    %2540 = vbcast.lane.b32.xlu0 %v2486, %s2539
    %v2541 = vpop.permute.xlu0 %2540
    %s2543 = sor.u32 256, 112
    %2544 = vbcast.lane.b32.xlu0 %v2486, %s2543
    %v2545 = vpop.permute.xlu0 %2544
    %s2547 = sor.u32 256, 120
    %2548 = vbcast.lane.b32.xlu0 %v2486, %s2547
    %v2549 = vpop.permute.xlu0 %2548
    %v2550 = vlaneseq
    %v2551 = vshrl.u32 %v2550, 7
    %v2552 = vsub.s32 1, %v2551
    %v2553 = vrot.slane %v2142, %v2552
    %2555 = vbcast.lane.b32.xlu0 %v2553, 256
    %v2556 = vpop.permute.xlu0 %2555
    %s2558 = sor.u32 256, 8
    %2559 = vbcast.lane.b32.xlu0 %v2553, %s2558
    %v2560 = vpop.permute.xlu0 %2559
    %s2562 = sor.u32 256, 16
    %2563 = vbcast.lane.b32.xlu0 %v2553, %s2562
    %v2564 = vpop.permute.xlu0 %2563
    %s2566 = sor.u32 256, 24
    %2567 = vbcast.lane.b32.xlu0 %v2553, %s2566
    %v2568 = vpop.permute.xlu0 %2567
    %s2570 = sor.u32 256, 32
    %2571 = vbcast.lane.b32.xlu0 %v2553, %s2570
    %v2572 = vpop.permute.xlu0 %2571
    %s2574 = sor.u32 256, 40
    %2575 = vbcast.lane.b32.xlu0 %v2553, %s2574
    %v2576 = vpop.permute.xlu0 %2575
    %s2578 = sor.u32 256, 48
    %2579 = vbcast.lane.b32.xlu0 %v2553, %s2578
    %v2580 = vpop.permute.xlu0 %2579
    %s2582 = sor.u32 256, 56
    %2583 = vbcast.lane.b32.xlu0 %v2553, %s2582
    %v2584 = vpop.permute.xlu0 %2583
    %s2586 = sor.u32 256, 64
    %2587 = vbcast.lane.b32.xlu0 %v2553, %s2586
    %v2588 = vpop.permute.xlu0 %2587
    %s2590 = sor.u32 256, 72
    %2591 = vbcast.lane.b32.xlu0 %v2553, %s2590
    %v2592 = vpop.permute.xlu0 %2591
    %s2594 = sor.u32 256, 80
    %2595 = vbcast.lane.b32.xlu0 %v2553, %s2594
    %v2596 = vpop.permute.xlu0 %2595
    %s2598 = sor.u32 256, 88
    %2599 = vbcast.lane.b32.xlu0 %v2553, %s2598
    %v2600 = vpop.permute.xlu0 %2599
    %s2602 = sor.u32 256, 96
    %2603 = vbcast.lane.b32.xlu0 %v2553, %s2602
    %v2604 = vpop.permute.xlu0 %2603
    %s2606 = sor.u32 256, 104
    %2607 = vbcast.lane.b32.xlu0 %v2553, %s2606
    %v2608 = vpop.permute.xlu0 %2607
    %s2610 = sor.u32 256, 112
    %2611 = vbcast.lane.b32.xlu0 %v2553, %s2610
    %v2612 = vpop.permute.xlu0 %2611
    %s2614 = sor.u32 256, 120
    %2615 = vbcast.lane.b32.xlu0 %v2553, %s2614
    %v2616 = vpop.permute.xlu0 %2615
    %v2617 = vlaneseq
    %v2618 = vshrl.u32 %v2617, 7
    %v2619 = vsub.s32 1, %v2618
    %v2620 = vrot.slane %v2143, %v2619
    %2622 = vbcast.lane.b32.xlu0 %v2620, 256
    %v2623 = vpop.permute.xlu0 %2622
    %s2625 = sor.u32 256, 8
    %2626 = vbcast.lane.b32.xlu0 %v2620, %s2625
    %v2627 = vpop.permute.xlu0 %2626
    %s2629 = sor.u32 256, 16
    %2630 = vbcast.lane.b32.xlu0 %v2620, %s2629
    %v2631 = vpop.permute.xlu0 %2630
    %s2633 = sor.u32 256, 24
    %2634 = vbcast.lane.b32.xlu0 %v2620, %s2633
    %v2635 = vpop.permute.xlu0 %2634
    %s2637 = sor.u32 256, 32
    %2638 = vbcast.lane.b32.xlu0 %v2620, %s2637
    %v2639 = vpop.permute.xlu0 %2638
    %s2641 = sor.u32 256, 40
    %2642 = vbcast.lane.b32.xlu0 %v2620, %s2641
    %v2643 = vpop.permute.xlu0 %2642
    %s2645 = sor.u32 256, 48
    %2646 = vbcast.lane.b32.xlu0 %v2620, %s2645
    %v2647 = vpop.permute.xlu0 %2646
    %s2649 = sor.u32 256, 56
    %2650 = vbcast.lane.b32.xlu0 %v2620, %s2649
    %v2651 = vpop.permute.xlu0 %2650
    %s2653 = sor.u32 256, 64
    %2654 = vbcast.lane.b32.xlu0 %v2620, %s2653
    %v2655 = vpop.permute.xlu0 %2654
    %s2657 = sor.u32 256, 72
    %2658 = vbcast.lane.b32.xlu0 %v2620, %s2657
    %v2659 = vpop.permute.xlu0 %2658
    %s2661 = sor.u32 256, 80
    %2662 = vbcast.lane.b32.xlu0 %v2620, %s2661
    %v2663 = vpop.permute.xlu0 %2662
    %s2665 = sor.u32 256, 88
    %2666 = vbcast.lane.b32.xlu0 %v2620, %s2665
    %v2667 = vpop.permute.xlu0 %2666
    %s2669 = sor.u32 256, 96
    %2670 = vbcast.lane.b32.xlu0 %v2620, %s2669
    %v2671 = vpop.permute.xlu0 %2670
    %s2673 = sor.u32 256, 104
    %2674 = vbcast.lane.b32.xlu0 %v2620, %s2673
    %v2675 = vpop.permute.xlu0 %2674
    %s2677 = sor.u32 256, 112
    %2678 = vbcast.lane.b32.xlu0 %v2620, %s2677
    %v2679 = vpop.permute.xlu0 %2678
    %s2681 = sor.u32 256, 120
    %2682 = vbcast.lane.b32.xlu0 %v2620, %s2681
    %v2683 = vpop.permute.xlu0 %2682
    %v2812 = vmul.f32 %v533, %v2154
    %v2813 = vmul.f32 %v534, %v2158
    %v2814 = vmul.f32 %v535, %v2162
    %v2815 = vmul.f32 %v536, %v2166
    %v2816 = vmul.f32 %v537, %v2170
    %v2817 = vmul.f32 %v538, %v2174
    %v2818 = vmul.f32 %v539, %v2178
    %v2819 = vmul.f32 %v540, %v2182
    %v2820 = vmul.f32 %v541, %v2186
    %v2821 = vmul.f32 %v542, %v2190
    %v2822 = vmul.f32 %v543, %v2194
    %v2823 = vmul.f32 %v544, %v2198
    %v2824 = vmul.f32 %v545, %v2202
    %v2825 = vmul.f32 %v546, %v2206
    %v2826 = vmul.f32 %v547, %v2210
    %v2827 = vmul.f32 %v548, %v2214
    %v2828 = vmul.f32 %v549, %v2221
    %v2829 = vmul.f32 %v550, %v2225
    %v2830 = vmul.f32 %v551, %v2229
    %v2831 = vmul.f32 %v552, %v2233
    %v2832 = vmul.f32 %v553, %v2237
    %v2833 = vmul.f32 %v554, %v2241
    %v2834 = vmul.f32 %v555, %v2245
    %v2835 = vmul.f32 %v556, %v2249
    %v2836 = vmul.f32 %v557, %v2253
    %v2837 = vmul.f32 %v558, %v2257
    %v2838 = vmul.f32 %v559, %v2261
    %v2839 = vmul.f32 %v560, %v2265
    %v2840 = vmul.f32 %v561, %v2269
    %v2841 = vmul.f32 %v562, %v2273
    %v2842 = vmul.f32 %v563, %v2277
    %v2843 = vmul.f32 %v564, %v2281
    %v2844 = vmul.f32 %v565, %v2288
    %v2845 = vmul.f32 %v566, %v2292
    %v2846 = vmul.f32 %v567, %v2296
    %v2847 = vmul.f32 %v568, %v2300
    %v2848 = vmul.f32 %v569, %v2304
    %v2849 = vmul.f32 %v570, %v2308
    %v2850 = vmul.f32 %v571, %v2312
    %v2851 = vmul.f32 %v572, %v2316
    %v2852 = vmul.f32 %v573, %v2320
    %v2853 = vmul.f32 %v574, %v2324
    %v2854 = vmul.f32 %v575, %v2328
    %v2855 = vmul.f32 %v576, %v2332
    %v2856 = vmul.f32 %v577, %v2336
    %v2857 = vmul.f32 %v578, %v2340
    %v2858 = vmul.f32 %v579, %v2344
    %v2859 = vmul.f32 %v580, %v2348
    %v2860 = vmul.f32 %v581, %v2355
    %v2861 = vmul.f32 %v582, %v2359
    %v2862 = vmul.f32 %v583, %v2363
    %v2863 = vmul.f32 %v584, %v2367
    %v2864 = vmul.f32 %v585, %v2371
    %v2865 = vmul.f32 %v586, %v2375
    %v2866 = vmul.f32 %v587, %v2379
    %v2867 = vmul.f32 %v588, %v2383
    %v2868 = vmul.f32 %v589, %v2387
    %v2869 = vmul.f32 %v590, %v2391
    %v2870 = vmul.f32 %v591, %v2395
    %v2871 = vmul.f32 %v592, %v2399
    %v2872 = vmul.f32 %v593, %v2403
    %v2873 = vmul.f32 %v594, %v2407
    %v2874 = vmul.f32 %v595, %v2411
    %v2875 = vmul.f32 %v596, %v2415
    %v2876 = vmul.f32 %v597, %v2422
    %v2877 = vmul.f32 %v598, %v2426
    %v2878 = vmul.f32 %v599, %v2430
    %v2879 = vmul.f32 %v600, %v2434
    %v2880 = vmul.f32 %v601, %v2438
    %v2881 = vmul.f32 %v602, %v2442
    %v2882 = vmul.f32 %v603, %v2446
    %v2883 = vmul.f32 %v604, %v2450
    %v2884 = vmul.f32 %v605, %v2454
    %v2885 = vmul.f32 %v606, %v2458
    %v2886 = vmul.f32 %v607, %v2462
    %v2887 = vmul.f32 %v608, %v2466
    %v2888 = vmul.f32 %v609, %v2470
    %v2889 = vmul.f32 %v610, %v2474
    %v2890 = vmul.f32 %v611, %v2478
    %v2891 = vmul.f32 %v612, %v2482
    %v2892 = vmul.f32 %v613, %v2489
    %v2893 = vmul.f32 %v614, %v2493
    %v2894 = vmul.f32 %v615, %v2497
    %v2895 = vmul.f32 %v616, %v2501
    %v2896 = vmul.f32 %v617, %v2505
    %v2897 = vmul.f32 %v618, %v2509
    %v2898 = vmul.f32 %v619, %v2513
    %v2899 = vmul.f32 %v620, %v2517
    %v2900 = vmul.f32 %v621, %v2521
    %v2901 = vmul.f32 %v622, %v2525
    %v2902 = vmul.f32 %v623, %v2529
    %v2903 = vmul.f32 %v624, %v2533
    %v2904 = vmul.f32 %v625, %v2537
    %v2905 = vmul.f32 %v626, %v2541
    %v2906 = vmul.f32 %v627, %v2545
    %v2907 = vmul.f32 %v628, %v2549
    %v2908 = vmul.f32 %v629, %v2556
    %v2909 = vmul.f32 %v630, %v2560
    %v2910 = vmul.f32 %v631, %v2564
    %v2911 = vmul.f32 %v632, %v2568
    %v2912 = vmul.f32 %v633, %v2572
    %v2913 = vmul.f32 %v634, %v2576
    %v2914 = vmul.f32 %v635, %v2580
    %v2915 = vmul.f32 %v636, %v2584
    %v2916 = vmul.f32 %v637, %v2588
    %v2917 = vmul.f32 %v638, %v2592
    %v2918 = vmul.f32 %v639, %v2596
    %v2919 = vmul.f32 %v640, %v2600
    %v2920 = vmul.f32 %v641, %v2604
    %v2921 = vmul.f32 %v642, %v2608
    %v2922 = vmul.f32 %v643, %v2612
    %v2923 = vmul.f32 %v644, %v2616
    %v2924 = vmul.f32 %v645, %v2623
    %v2925 = vmul.f32 %v646, %v2627
    %v2926 = vmul.f32 %v647, %v2631
    %v2927 = vmul.f32 %v648, %v2635
    %v2928 = vmul.f32 %v649, %v2639
    %v2929 = vmul.f32 %v650, %v2643
    %v2930 = vmul.f32 %v651, %v2647
    %v2931 = vmul.f32 %v652, %v2651
    %v2932 = vmul.f32 %v653, %v2655
    %v2933 = vmul.f32 %v654, %v2659
    %v2934 = vmul.f32 %v655, %v2663
    %v2935 = vmul.f32 %v656, %v2667
    %v2936 = vmul.f32 %v657, %v2671
    %v2937 = vmul.f32 %v658, %v2675
    %v2938 = vmul.f32 %v659, %v2679
    %v2939 = vmul.f32 %v660, %v2683
    %v3068 = vcombine.high %v2812, %v2812
    %v3070 = vunpack.c.l.s4 1983009808
    %v3071 = vunpack.c.0.s8 %v3070
    %v3072 = vlaneseq
    %v3073 = vshrl.u32 %v3072, 7
    %v3074 = vsub.s32 %v3071, %v3073
    %v3075 = vrot.slane %v2812, %v3074
    %v3077 = vunpack.c.l.s4 1983009808
    %v3078 = vunpack.c.0.s8 %v3077
    %v3079 = vlaneseq
    %v3080 = vshrl.u32 %v3079, 7
    %v3081 = vsub.s32 %v3078, %v3080
    %v3082 = vrot.slane %v3068, %v3081
    %v3083 = vcombine.high %v3075, %v3075
    %v3084 = vcombine.high %v3082, %v3082
    %v3085 = vcombine.high %v2813, %v2813
    %v3087 = vunpack.c.l.s4 1983009808
    %v3088 = vunpack.c.0.s8 %v3087
    %v3089 = vlaneseq
    %v3090 = vshrl.u32 %v3089, 7
    %v3091 = vsub.s32 %v3088, %v3090
    %v3092 = vrot.slane %v2813, %v3091
    %v3094 = vunpack.c.l.s4 1983009808
    %v3095 = vunpack.c.0.s8 %v3094
    %v3096 = vlaneseq
    %v3097 = vshrl.u32 %v3096, 7
    %v3098 = vsub.s32 %v3095, %v3097
    %v3099 = vrot.slane %v3085, %v3098
    %v3100 = vcombine.high %v3092, %v3092
    %v3101 = vcombine.high %v3099, %v3099
    %v3102 = vcombine.high %v2814, %v2814
    %v3104 = vunpack.c.l.s4 1983009808
    %v3105 = vunpack.c.0.s8 %v3104
    %v3106 = vlaneseq
    %v3107 = vshrl.u32 %v3106, 7
    %v3108 = vsub.s32 %v3105, %v3107
    %v3109 = vrot.slane %v2814, %v3108
    %v3111 = vunpack.c.l.s4 1983009808
    %v3112 = vunpack.c.0.s8 %v3111
    %v3113 = vlaneseq
    %v3114 = vshrl.u32 %v3113, 7
    %v3115 = vsub.s32 %v3112, %v3114
    %v3116 = vrot.slane %v3102, %v3115
    %v3117 = vcombine.high %v3109, %v3109
    %v3118 = vcombine.high %v3116, %v3116
    %v3119 = vcombine.high %v2815, %v2815
    %v3121 = vunpack.c.l.s4 1983009808
    %v3122 = vunpack.c.0.s8 %v3121
    %v3123 = vlaneseq
    %v3124 = vshrl.u32 %v3123, 7
    %v3125 = vsub.s32 %v3122, %v3124
    %v3126 = vrot.slane %v2815, %v3125
    %v3128 = vunpack.c.l.s4 1983009808
    %v3129 = vunpack.c.0.s8 %v3128
    %v3130 = vlaneseq
    %v3131 = vshrl.u32 %v3130, 7
    %v3132 = vsub.s32 %v3129, %v3131
    %v3133 = vrot.slane %v3119, %v3132
    %v3134 = vcombine.high %v3126, %v3126
    %v3135 = vcombine.high %v3133, %v3133
    %v3136 = vcombine.high %v2816, %v2816
    %v3138 = vunpack.c.l.s4 1983009808
    %v3139 = vunpack.c.0.s8 %v3138
    %v3140 = vlaneseq
    %v3141 = vshrl.u32 %v3140, 7
    %v3142 = vsub.s32 %v3139, %v3141
    %v3143 = vrot.slane %v2816, %v3142
    %v3145 = vunpack.c.l.s4 1983009808
    %v3146 = vunpack.c.0.s8 %v3145
    %v3147 = vlaneseq
    %v3148 = vshrl.u32 %v3147, 7
    %v3149 = vsub.s32 %v3146, %v3148
    %v3150 = vrot.slane %v3136, %v3149
    %v3151 = vcombine.high %v3143, %v3143
    %v3152 = vcombine.high %v3150, %v3150
    %v3153 = vcombine.high %v2817, %v2817
    %v3155 = vunpack.c.l.s4 1983009808
    %v3156 = vunpack.c.0.s8 %v3155
    %v3157 = vlaneseq
    %v3158 = vshrl.u32 %v3157, 7
    %v3159 = vsub.s32 %v3156, %v3158
    %v3160 = vrot.slane %v2817, %v3159
    %v3162 = vunpack.c.l.s4 1983009808
    %v3163 = vunpack.c.0.s8 %v3162
    %v3164 = vlaneseq
    %v3165 = vshrl.u32 %v3164, 7
    %v3166 = vsub.s32 %v3163, %v3165
    %v3167 = vrot.slane %v3153, %v3166
    %v3168 = vcombine.high %v3160, %v3160
    %v3169 = vcombine.high %v3167, %v3167
    %v3170 = vcombine.high %v2818, %v2818
    %v3172 = vunpack.c.l.s4 1983009808
    %v3173 = vunpack.c.0.s8 %v3172
    %v3174 = vlaneseq
    %v3175 = vshrl.u32 %v3174, 7
    %v3176 = vsub.s32 %v3173, %v3175
    %v3177 = vrot.slane %v2818, %v3176
    %v3179 = vunpack.c.l.s4 1983009808
    %v3180 = vunpack.c.0.s8 %v3179
    %v3181 = vlaneseq
    %v3182 = vshrl.u32 %v3181, 7
    %v3183 = vsub.s32 %v3180, %v3182
    %v3184 = vrot.slane %v3170, %v3183
    %v3185 = vcombine.high %v3177, %v3177
    %v3186 = vcombine.high %v3184, %v3184
    %v3187 = vcombine.high %v2819, %v2819
    %v3189 = vunpack.c.l.s4 1983009808
    %v3190 = vunpack.c.0.s8 %v3189
    %v3191 = vlaneseq
    %v3192 = vshrl.u32 %v3191, 7
    %v3193 = vsub.s32 %v3190, %v3192
    %v3194 = vrot.slane %v2819, %v3193
    %v3196 = vunpack.c.l.s4 1983009808
    %v3197 = vunpack.c.0.s8 %v3196
    %v3198 = vlaneseq
    %v3199 = vshrl.u32 %v3198, 7
    %v3200 = vsub.s32 %v3197, %v3199
    %v3201 = vrot.slane %v3187, %v3200
    %v3202 = vcombine.high %v3194, %v3194
    %v3203 = vcombine.high %v3201, %v3201
    %v3204 = vcombine.high %v2820, %v2820
    %v3206 = vunpack.c.l.s4 1983009808
    %v3207 = vunpack.c.0.s8 %v3206
    %v3208 = vlaneseq
    %v3209 = vshrl.u32 %v3208, 7
    %v3210 = vsub.s32 %v3207, %v3209
    %v3211 = vrot.slane %v2820, %v3210
    %v3213 = vunpack.c.l.s4 1983009808
    %v3214 = vunpack.c.0.s8 %v3213
    %v3215 = vlaneseq
    %v3216 = vshrl.u32 %v3215, 7
    %v3217 = vsub.s32 %v3214, %v3216
    %v3218 = vrot.slane %v3204, %v3217
    %v3219 = vcombine.high %v3211, %v3211
    %v3220 = vcombine.high %v3218, %v3218
    %v3221 = vcombine.high %v2821, %v2821
    %v3223 = vunpack.c.l.s4 1983009808
    %v3224 = vunpack.c.0.s8 %v3223
    %v3225 = vlaneseq
    %v3226 = vshrl.u32 %v3225, 7
    %v3227 = vsub.s32 %v3224, %v3226
    %v3228 = vrot.slane %v2821, %v3227
    %v3230 = vunpack.c.l.s4 1983009808
    %v3231 = vunpack.c.0.s8 %v3230
    %v3232 = vlaneseq
    %v3233 = vshrl.u32 %v3232, 7
    %v3234 = vsub.s32 %v3231, %v3233
    %v3235 = vrot.slane %v3221, %v3234
    %v3236 = vcombine.high %v3228, %v3228
    %v3237 = vcombine.high %v3235, %v3235
    %v3238 = vcombine.high %v2822, %v2822
    %v3240 = vunpack.c.l.s4 1983009808
    %v3241 = vunpack.c.0.s8 %v3240
    %v3242 = vlaneseq
    %v3243 = vshrl.u32 %v3242, 7
    %v3244 = vsub.s32 %v3241, %v3243
    %v3245 = vrot.slane %v2822, %v3244
    %v3247 = vunpack.c.l.s4 1983009808
    %v3248 = vunpack.c.0.s8 %v3247
    %v3249 = vlaneseq
    %v3250 = vshrl.u32 %v3249, 7
    %v3251 = vsub.s32 %v3248, %v3250
    %v3252 = vrot.slane %v3238, %v3251
    %v3253 = vcombine.high %v3245, %v3245
    %v3254 = vcombine.high %v3252, %v3252
    %v3255 = vcombine.high %v2823, %v2823
    %v3257 = vunpack.c.l.s4 1983009808
    %v3258 = vunpack.c.0.s8 %v3257
    %v3259 = vlaneseq
    %v3260 = vshrl.u32 %v3259, 7
    %v3261 = vsub.s32 %v3258, %v3260
    %v3262 = vrot.slane %v2823, %v3261
    %v3264 = vunpack.c.l.s4 1983009808
    %v3265 = vunpack.c.0.s8 %v3264
    %v3266 = vlaneseq
    %v3267 = vshrl.u32 %v3266, 7
    %v3268 = vsub.s32 %v3265, %v3267
    %v3269 = vrot.slane %v3255, %v3268
    %v3270 = vcombine.high %v3262, %v3262
    %v3271 = vcombine.high %v3269, %v3269
    %v3272 = vcombine.high %v2824, %v2824
    %v3274 = vunpack.c.l.s4 1983009808
    %v3275 = vunpack.c.0.s8 %v3274
    %v3276 = vlaneseq
    %v3277 = vshrl.u32 %v3276, 7
    %v3278 = vsub.s32 %v3275, %v3277
    %v3279 = vrot.slane %v2824, %v3278
    %v3281 = vunpack.c.l.s4 1983009808
    %v3282 = vunpack.c.0.s8 %v3281
    %v3283 = vlaneseq
    %v3284 = vshrl.u32 %v3283, 7
    %v3285 = vsub.s32 %v3282, %v3284
    %v3286 = vrot.slane %v3272, %v3285
    %v3287 = vcombine.high %v3279, %v3279
    %v3288 = vcombine.high %v3286, %v3286
    %v3289 = vcombine.high %v2825, %v2825
    %v3291 = vunpack.c.l.s4 1983009808
    %v3292 = vunpack.c.0.s8 %v3291
    %v3293 = vlaneseq
    %v3294 = vshrl.u32 %v3293, 7
    %v3295 = vsub.s32 %v3292, %v3294
    %v3296 = vrot.slane %v2825, %v3295
    %v3298 = vunpack.c.l.s4 1983009808
    %v3299 = vunpack.c.0.s8 %v3298
    %v3300 = vlaneseq
    %v3301 = vshrl.u32 %v3300, 7
    %v3302 = vsub.s32 %v3299, %v3301
    %v3303 = vrot.slane %v3289, %v3302
    %v3304 = vcombine.high %v3296, %v3296
    %v3305 = vcombine.high %v3303, %v3303
    %v3306 = vcombine.high %v2826, %v2826
    %v3308 = vunpack.c.l.s4 1983009808
    %v3309 = vunpack.c.0.s8 %v3308
    %v3310 = vlaneseq
    %v3311 = vshrl.u32 %v3310, 7
    %v3312 = vsub.s32 %v3309, %v3311
    %v3313 = vrot.slane %v2826, %v3312
    %v3315 = vunpack.c.l.s4 1983009808
    %v3316 = vunpack.c.0.s8 %v3315
    %v3317 = vlaneseq
    %v3318 = vshrl.u32 %v3317, 7
    %v3319 = vsub.s32 %v3316, %v3318
    %v3320 = vrot.slane %v3306, %v3319
    %v3321 = vcombine.high %v3313, %v3313
    %v3322 = vcombine.high %v3320, %v3320
    %v3323 = vcombine.high %v2827, %v2827
    %v3325 = vunpack.c.l.s4 1983009808
    %v3326 = vunpack.c.0.s8 %v3325
    %v3327 = vlaneseq
    %v3328 = vshrl.u32 %v3327, 7
    %v3329 = vsub.s32 %v3326, %v3328
    %v3330 = vrot.slane %v2827, %v3329
    %v3332 = vunpack.c.l.s4 1983009808
    %v3333 = vunpack.c.0.s8 %v3332
    %v3334 = vlaneseq
    %v3335 = vshrl.u32 %v3334, 7
    %v3336 = vsub.s32 %v3333, %v3335
    %v3337 = vrot.slane %v3323, %v3336
    %v3338 = vcombine.high %v3330, %v3330
    %v3339 = vcombine.high %v3337, %v3337
    %v3340 = vcombine.high %v2828, %v2828
    %v3342 = vunpack.c.l.s4 1983009808
    %v3343 = vunpack.c.0.s8 %v3342
    %v3344 = vlaneseq
    %v3345 = vshrl.u32 %v3344, 7
    %v3346 = vsub.s32 %v3343, %v3345
    %v3347 = vrot.slane %v2828, %v3346
    %v3349 = vunpack.c.l.s4 1983009808
    %v3350 = vunpack.c.0.s8 %v3349
    %v3351 = vlaneseq
    %v3352 = vshrl.u32 %v3351, 7
    %v3353 = vsub.s32 %v3350, %v3352
    %v3354 = vrot.slane %v3340, %v3353
    %v3355 = vcombine.high %v3347, %v3347
    %v3356 = vcombine.high %v3354, %v3354
    %v3357 = vcombine.high %v2829, %v2829
    %v3359 = vunpack.c.l.s4 1983009808
    %v3360 = vunpack.c.0.s8 %v3359
    %v3361 = vlaneseq
    %v3362 = vshrl.u32 %v3361, 7
    %v3363 = vsub.s32 %v3360, %v3362
    %v3364 = vrot.slane %v2829, %v3363
    %v3366 = vunpack.c.l.s4 1983009808
    %v3367 = vunpack.c.0.s8 %v3366
    %v3368 = vlaneseq
    %v3369 = vshrl.u32 %v3368, 7
    %v3370 = vsub.s32 %v3367, %v3369
    %v3371 = vrot.slane %v3357, %v3370
    %v3372 = vcombine.high %v3364, %v3364
    %v3373 = vcombine.high %v3371, %v3371
    %v3374 = vcombine.high %v2830, %v2830
    %v3376 = vunpack.c.l.s4 1983009808
    %v3377 = vunpack.c.0.s8 %v3376
    %v3378 = vlaneseq
    %v3379 = vshrl.u32 %v3378, 7
    %v3380 = vsub.s32 %v3377, %v3379
    %v3381 = vrot.slane %v2830, %v3380
    %v3383 = vunpack.c.l.s4 1983009808
    %v3384 = vunpack.c.0.s8 %v3383
    %v3385 = vlaneseq
    %v3386 = vshrl.u32 %v3385, 7
    %v3387 = vsub.s32 %v3384, %v3386
    %v3388 = vrot.slane %v3374, %v3387
    %v3389 = vcombine.high %v3381, %v3381
    %v3390 = vcombine.high %v3388, %v3388
    %v3391 = vcombine.high %v2831, %v2831
    %v3393 = vunpack.c.l.s4 1983009808
    %v3394 = vunpack.c.0.s8 %v3393
    %v3395 = vlaneseq
    %v3396 = vshrl.u32 %v3395, 7
    %v3397 = vsub.s32 %v3394, %v3396
    %v3398 = vrot.slane %v2831, %v3397
    %v3400 = vunpack.c.l.s4 1983009808
    %v3401 = vunpack.c.0.s8 %v3400
    %v3402 = vlaneseq
    %v3403 = vshrl.u32 %v3402, 7
    %v3404 = vsub.s32 %v3401, %v3403
    %v3405 = vrot.slane %v3391, %v3404
    %v3406 = vcombine.high %v3398, %v3398
    %v3407 = vcombine.high %v3405, %v3405
    %v3408 = vcombine.high %v2832, %v2832
    %v3410 = vunpack.c.l.s4 1983009808
    %v3411 = vunpack.c.0.s8 %v3410
    %v3412 = vlaneseq
    %v3413 = vshrl.u32 %v3412, 7
    %v3414 = vsub.s32 %v3411, %v3413
    %v3415 = vrot.slane %v2832, %v3414
    %v3417 = vunpack.c.l.s4 1983009808
    %v3418 = vunpack.c.0.s8 %v3417
    %v3419 = vlaneseq
    %v3420 = vshrl.u32 %v3419, 7
    %v3421 = vsub.s32 %v3418, %v3420
    %v3422 = vrot.slane %v3408, %v3421
    %v3423 = vcombine.high %v3415, %v3415
    %v3424 = vcombine.high %v3422, %v3422
    %v3425 = vcombine.high %v2833, %v2833
    %v3427 = vunpack.c.l.s4 1983009808
    %v3428 = vunpack.c.0.s8 %v3427
    %v3429 = vlaneseq
    %v3430 = vshrl.u32 %v3429, 7
    %v3431 = vsub.s32 %v3428, %v3430
    %v3432 = vrot.slane %v2833, %v3431
    %v3434 = vunpack.c.l.s4 1983009808
    %v3435 = vunpack.c.0.s8 %v3434
    %v3436 = vlaneseq
    %v3437 = vshrl.u32 %v3436, 7
    %v3438 = vsub.s32 %v3435, %v3437
    %v3439 = vrot.slane %v3425, %v3438
    %v3440 = vcombine.high %v3432, %v3432
    %v3441 = vcombine.high %v3439, %v3439
    %v3442 = vcombine.high %v2834, %v2834
    %v3444 = vunpack.c.l.s4 1983009808
    %v3445 = vunpack.c.0.s8 %v3444
    %v3446 = vlaneseq
    %v3447 = vshrl.u32 %v3446, 7
    %v3448 = vsub.s32 %v3445, %v3447
    %v3449 = vrot.slane %v2834, %v3448
    %v3451 = vunpack.c.l.s4 1983009808
    %v3452 = vunpack.c.0.s8 %v3451
    %v3453 = vlaneseq
    %v3454 = vshrl.u32 %v3453, 7
    %v3455 = vsub.s32 %v3452, %v3454
    %v3456 = vrot.slane %v3442, %v3455
    %v3457 = vcombine.high %v3449, %v3449
    %v3458 = vcombine.high %v3456, %v3456
    %v3459 = vcombine.high %v2835, %v2835
    %v3461 = vunpack.c.l.s4 1983009808
    %v3462 = vunpack.c.0.s8 %v3461
    %v3463 = vlaneseq
    %v3464 = vshrl.u32 %v3463, 7
    %v3465 = vsub.s32 %v3462, %v3464
    %v3466 = vrot.slane %v2835, %v3465
    %v3468 = vunpack.c.l.s4 1983009808
    %v3469 = vunpack.c.0.s8 %v3468
    %v3470 = vlaneseq
    %v3471 = vshrl.u32 %v3470, 7
    %v3472 = vsub.s32 %v3469, %v3471
    %v3473 = vrot.slane %v3459, %v3472
    %v3474 = vcombine.high %v3466, %v3466
    %v3475 = vcombine.high %v3473, %v3473
    %v3476 = vcombine.high %v2836, %v2836
    %v3478 = vunpack.c.l.s4 1983009808
    %v3479 = vunpack.c.0.s8 %v3478
    %v3480 = vlaneseq
    %v3481 = vshrl.u32 %v3480, 7
    %v3482 = vsub.s32 %v3479, %v3481
    %v3483 = vrot.slane %v2836, %v3482
    %v3485 = vunpack.c.l.s4 1983009808
    %v3486 = vunpack.c.0.s8 %v3485
    %v3487 = vlaneseq
    %v3488 = vshrl.u32 %v3487, 7
    %v3489 = vsub.s32 %v3486, %v3488
    %v3490 = vrot.slane %v3476, %v3489
    %v3491 = vcombine.high %v3483, %v3483
    %v3492 = vcombine.high %v3490, %v3490
    %v3493 = vcombine.high %v2837, %v2837
    %v3495 = vunpack.c.l.s4 1983009808
    %v3496 = vunpack.c.0.s8 %v3495
    %v3497 = vlaneseq
    %v3498 = vshrl.u32 %v3497, 7
    %v3499 = vsub.s32 %v3496, %v3498
    %v3500 = vrot.slane %v2837, %v3499
    %v3502 = vunpack.c.l.s4 1983009808
    %v3503 = vunpack.c.0.s8 %v3502
    %v3504 = vlaneseq
    %v3505 = vshrl.u32 %v3504, 7
    %v3506 = vsub.s32 %v3503, %v3505
    %v3507 = vrot.slane %v3493, %v3506
    %v3508 = vcombine.high %v3500, %v3500
    %v3509 = vcombine.high %v3507, %v3507
    %v3510 = vcombine.high %v2838, %v2838
    %v3512 = vunpack.c.l.s4 1983009808
    %v3513 = vunpack.c.0.s8 %v3512
    %v3514 = vlaneseq
    %v3515 = vshrl.u32 %v3514, 7
    %v3516 = vsub.s32 %v3513, %v3515
    %v3517 = vrot.slane %v2838, %v3516
    %v3519 = vunpack.c.l.s4 1983009808
    %v3520 = vunpack.c.0.s8 %v3519
    %v3521 = vlaneseq
    %v3522 = vshrl.u32 %v3521, 7
    %v3523 = vsub.s32 %v3520, %v3522
    %v3524 = vrot.slane %v3510, %v3523
    %v3525 = vcombine.high %v3517, %v3517
    %v3526 = vcombine.high %v3524, %v3524
    %v3527 = vcombine.high %v2839, %v2839
    %v3529 = vunpack.c.l.s4 1983009808
    %v3530 = vunpack.c.0.s8 %v3529
    %v3531 = vlaneseq
    %v3532 = vshrl.u32 %v3531, 7
    %v3533 = vsub.s32 %v3530, %v3532
    %v3534 = vrot.slane %v2839, %v3533
    %v3536 = vunpack.c.l.s4 1983009808
    %v3537 = vunpack.c.0.s8 %v3536
    %v3538 = vlaneseq
    %v3539 = vshrl.u32 %v3538, 7
    %v3540 = vsub.s32 %v3537, %v3539
    %v3541 = vrot.slane %v3527, %v3540
    %v3542 = vcombine.high %v3534, %v3534
    %v3543 = vcombine.high %v3541, %v3541
    %v3544 = vcombine.high %v2840, %v2840
    %v3546 = vunpack.c.l.s4 1983009808
    %v3547 = vunpack.c.0.s8 %v3546
    %v3548 = vlaneseq
    %v3549 = vshrl.u32 %v3548, 7
    %v3550 = vsub.s32 %v3547, %v3549
    %v3551 = vrot.slane %v2840, %v3550
    %v3553 = vunpack.c.l.s4 1983009808
    %v3554 = vunpack.c.0.s8 %v3553
    %v3555 = vlaneseq
    %v3556 = vshrl.u32 %v3555, 7
    %v3557 = vsub.s32 %v3554, %v3556
    %v3558 = vrot.slane %v3544, %v3557
    %v3559 = vcombine.high %v3551, %v3551
    %v3560 = vcombine.high %v3558, %v3558
    %v3561 = vcombine.high %v2841, %v2841
    %v3563 = vunpack.c.l.s4 1983009808
    %v3564 = vunpack.c.0.s8 %v3563
    %v3565 = vlaneseq
    %v3566 = vshrl.u32 %v3565, 7
    %v3567 = vsub.s32 %v3564, %v3566
    %v3568 = vrot.slane %v2841, %v3567
    %v3570 = vunpack.c.l.s4 1983009808
    %v3571 = vunpack.c.0.s8 %v3570
    %v3572 = vlaneseq
    %v3573 = vshrl.u32 %v3572, 7
    %v3574 = vsub.s32 %v3571, %v3573
    %v3575 = vrot.slane %v3561, %v3574
    %v3576 = vcombine.high %v3568, %v3568
    %v3577 = vcombine.high %v3575, %v3575
    %v3578 = vcombine.high %v2842, %v2842
    %v3580 = vunpack.c.l.s4 1983009808
    %v3581 = vunpack.c.0.s8 %v3580
    %v3582 = vlaneseq
    %v3583 = vshrl.u32 %v3582, 7
    %v3584 = vsub.s32 %v3581, %v3583
    %v3585 = vrot.slane %v2842, %v3584
    %v3587 = vunpack.c.l.s4 1983009808
    %v3588 = vunpack.c.0.s8 %v3587
    %v3589 = vlaneseq
    %v3590 = vshrl.u32 %v3589, 7
    %v3591 = vsub.s32 %v3588, %v3590
    %v3592 = vrot.slane %v3578, %v3591
    %v3593 = vcombine.high %v3585, %v3585
    %v3594 = vcombine.high %v3592, %v3592
    %v3595 = vcombine.high %v2843, %v2843
    %v3597 = vunpack.c.l.s4 1983009808
    %v3598 = vunpack.c.0.s8 %v3597
    %v3599 = vlaneseq
    %v3600 = vshrl.u32 %v3599, 7
    %v3601 = vsub.s32 %v3598, %v3600
    %v3602 = vrot.slane %v2843, %v3601
    %v3604 = vunpack.c.l.s4 1983009808
    %v3605 = vunpack.c.0.s8 %v3604
    %v3606 = vlaneseq
    %v3607 = vshrl.u32 %v3606, 7
    %v3608 = vsub.s32 %v3605, %v3607
    %v3609 = vrot.slane %v3595, %v3608
    %v3610 = vcombine.high %v3602, %v3602
    %v3611 = vcombine.high %v3609, %v3609
    %v3612 = vcombine.high %v2844, %v2844
    %v3614 = vunpack.c.l.s4 1983009808
    %v3615 = vunpack.c.0.s8 %v3614
    %v3616 = vlaneseq
    %v3617 = vshrl.u32 %v3616, 7
    %v3618 = vsub.s32 %v3615, %v3617
    %v3619 = vrot.slane %v2844, %v3618
    %v3621 = vunpack.c.l.s4 1983009808
    %v3622 = vunpack.c.0.s8 %v3621
    %v3623 = vlaneseq
    %v3624 = vshrl.u32 %v3623, 7
    %v3625 = vsub.s32 %v3622, %v3624
    %v3626 = vrot.slane %v3612, %v3625
    %v3627 = vcombine.high %v3619, %v3619
    %v3628 = vcombine.high %v3626, %v3626
    %v3629 = vcombine.high %v2845, %v2845
    %v3631 = vunpack.c.l.s4 1983009808
    %v3632 = vunpack.c.0.s8 %v3631
    %v3633 = vlaneseq
    %v3634 = vshrl.u32 %v3633, 7
    %v3635 = vsub.s32 %v3632, %v3634
    %v3636 = vrot.slane %v2845, %v3635
    %v3638 = vunpack.c.l.s4 1983009808
    %v3639 = vunpack.c.0.s8 %v3638
    %v3640 = vlaneseq
    %v3641 = vshrl.u32 %v3640, 7
    %v3642 = vsub.s32 %v3639, %v3641
    %v3643 = vrot.slane %v3629, %v3642
    %v3644 = vcombine.high %v3636, %v3636
    %v3645 = vcombine.high %v3643, %v3643
    %v3646 = vcombine.high %v2846, %v2846
    %v3648 = vunpack.c.l.s4 1983009808
    %v3649 = vunpack.c.0.s8 %v3648
    %v3650 = vlaneseq
    %v3651 = vshrl.u32 %v3650, 7
    %v3652 = vsub.s32 %v3649, %v3651
    %v3653 = vrot.slane %v2846, %v3652
    %v3655 = vunpack.c.l.s4 1983009808
    %v3656 = vunpack.c.0.s8 %v3655
    %v3657 = vlaneseq
    %v3658 = vshrl.u32 %v3657, 7
    %v3659 = vsub.s32 %v3656, %v3658
    %v3660 = vrot.slane %v3646, %v3659
    %v3661 = vcombine.high %v3653, %v3653
    %v3662 = vcombine.high %v3660, %v3660
    %v3663 = vcombine.high %v2847, %v2847
    %v3665 = vunpack.c.l.s4 1983009808
    %v3666 = vunpack.c.0.s8 %v3665
    %v3667 = vlaneseq
    %v3668 = vshrl.u32 %v3667, 7
    %v3669 = vsub.s32 %v3666, %v3668
    %v3670 = vrot.slane %v2847, %v3669
    %v3672 = vunpack.c.l.s4 1983009808
    %v3673 = vunpack.c.0.s8 %v3672
    %v3674 = vlaneseq
    %v3675 = vshrl.u32 %v3674, 7
    %v3676 = vsub.s32 %v3673, %v3675
    %v3677 = vrot.slane %v3663, %v3676
    %v3678 = vcombine.high %v3670, %v3670
    %v3679 = vcombine.high %v3677, %v3677
    %v3680 = vcombine.high %v2848, %v2848
    %v3682 = vunpack.c.l.s4 1983009808
    %v3683 = vunpack.c.0.s8 %v3682
    %v3684 = vlaneseq
    %v3685 = vshrl.u32 %v3684, 7
    %v3686 = vsub.s32 %v3683, %v3685
    %v3687 = vrot.slane %v2848, %v3686
    %v3689 = vunpack.c.l.s4 1983009808
    %v3690 = vunpack.c.0.s8 %v3689
    %v3691 = vlaneseq
    %v3692 = vshrl.u32 %v3691, 7
    %v3693 = vsub.s32 %v3690, %v3692
    %v3694 = vrot.slane %v3680, %v3693
    %v3695 = vcombine.high %v3687, %v3687
    %v3696 = vcombine.high %v3694, %v3694
    %v3697 = vcombine.high %v2849, %v2849
    %v3699 = vunpack.c.l.s4 1983009808
    %v3700 = vunpack.c.0.s8 %v3699
    %v3701 = vlaneseq
    %v3702 = vshrl.u32 %v3701, 7
    %v3703 = vsub.s32 %v3700, %v3702
    %v3704 = vrot.slane %v2849, %v3703
    %v3706 = vunpack.c.l.s4 1983009808
    %v3707 = vunpack.c.0.s8 %v3706
    %v3708 = vlaneseq
    %v3709 = vshrl.u32 %v3708, 7
    %v3710 = vsub.s32 %v3707, %v3709
    %v3711 = vrot.slane %v3697, %v3710
    %v3712 = vcombine.high %v3704, %v3704
    %v3713 = vcombine.high %v3711, %v3711
    %v3714 = vcombine.high %v2850, %v2850
    %v3716 = vunpack.c.l.s4 1983009808
    %v3717 = vunpack.c.0.s8 %v3716
    %v3718 = vlaneseq
    %v3719 = vshrl.u32 %v3718, 7
    %v3720 = vsub.s32 %v3717, %v3719
    %v3721 = vrot.slane %v2850, %v3720
    %v3723 = vunpack.c.l.s4 1983009808
    %v3724 = vunpack.c.0.s8 %v3723
    %v3725 = vlaneseq
    %v3726 = vshrl.u32 %v3725, 7
    %v3727 = vsub.s32 %v3724, %v3726
    %v3728 = vrot.slane %v3714, %v3727
    %v3729 = vcombine.high %v3721, %v3721
    %v3730 = vcombine.high %v3728, %v3728
    %v3731 = vcombine.high %v2851, %v2851
    %v3733 = vunpack.c.l.s4 1983009808
    %v3734 = vunpack.c.0.s8 %v3733
    %v3735 = vlaneseq
    %v3736 = vshrl.u32 %v3735, 7
    %v3737 = vsub.s32 %v3734, %v3736
    %v3738 = vrot.slane %v2851, %v3737
    %v3740 = vunpack.c.l.s4 1983009808
    %v3741 = vunpack.c.0.s8 %v3740
    %v3742 = vlaneseq
    %v3743 = vshrl.u32 %v3742, 7
    %v3744 = vsub.s32 %v3741, %v3743
    %v3745 = vrot.slane %v3731, %v3744
    %v3746 = vcombine.high %v3738, %v3738
    %v3747 = vcombine.high %v3745, %v3745
    %v3748 = vcombine.high %v2852, %v2852
    %v3750 = vunpack.c.l.s4 1983009808
    %v3751 = vunpack.c.0.s8 %v3750
    %v3752 = vlaneseq
    %v3753 = vshrl.u32 %v3752, 7
    %v3754 = vsub.s32 %v3751, %v3753
    %v3755 = vrot.slane %v2852, %v3754
    %v3757 = vunpack.c.l.s4 1983009808
    %v3758 = vunpack.c.0.s8 %v3757
    %v3759 = vlaneseq
    %v3760 = vshrl.u32 %v3759, 7
    %v3761 = vsub.s32 %v3758, %v3760
    %v3762 = vrot.slane %v3748, %v3761
    %v3763 = vcombine.high %v3755, %v3755
    %v3764 = vcombine.high %v3762, %v3762
    %v3765 = vcombine.high %v2853, %v2853
    %v3767 = vunpack.c.l.s4 1983009808
    %v3768 = vunpack.c.0.s8 %v3767
    %v3769 = vlaneseq
    %v3770 = vshrl.u32 %v3769, 7
    %v3771 = vsub.s32 %v3768, %v3770
    %v3772 = vrot.slane %v2853, %v3771
    %v3774 = vunpack.c.l.s4 1983009808
    %v3775 = vunpack.c.0.s8 %v3774
    %v3776 = vlaneseq
    %v3777 = vshrl.u32 %v3776, 7
    %v3778 = vsub.s32 %v3775, %v3777
    %v3779 = vrot.slane %v3765, %v3778
    %v3780 = vcombine.high %v3772, %v3772
    %v3781 = vcombine.high %v3779, %v3779
    %v3782 = vcombine.high %v2854, %v2854
    %v3784 = vunpack.c.l.s4 1983009808
    %v3785 = vunpack.c.0.s8 %v3784
    %v3786 = vlaneseq
    %v3787 = vshrl.u32 %v3786, 7
    %v3788 = vsub.s32 %v3785, %v3787
    %v3789 = vrot.slane %v2854, %v3788
    %v3791 = vunpack.c.l.s4 1983009808
    %v3792 = vunpack.c.0.s8 %v3791
    %v3793 = vlaneseq
    %v3794 = vshrl.u32 %v3793, 7
    %v3795 = vsub.s32 %v3792, %v3794
    %v3796 = vrot.slane %v3782, %v3795
    %v3797 = vcombine.high %v3789, %v3789
    %v3798 = vcombine.high %v3796, %v3796
    %v3799 = vcombine.high %v2855, %v2855
    %v3801 = vunpack.c.l.s4 1983009808
    %v3802 = vunpack.c.0.s8 %v3801
    %v3803 = vlaneseq
    %v3804 = vshrl.u32 %v3803, 7
    %v3805 = vsub.s32 %v3802, %v3804
    %v3806 = vrot.slane %v2855, %v3805
    %v3808 = vunpack.c.l.s4 1983009808
    %v3809 = vunpack.c.0.s8 %v3808
    %v3810 = vlaneseq
    %v3811 = vshrl.u32 %v3810, 7
    %v3812 = vsub.s32 %v3809, %v3811
    %v3813 = vrot.slane %v3799, %v3812
    %v3814 = vcombine.high %v3806, %v3806
    %v3815 = vcombine.high %v3813, %v3813
    %v3816 = vcombine.high %v2856, %v2856
    %v3818 = vunpack.c.l.s4 1983009808
    %v3819 = vunpack.c.0.s8 %v3818
    %v3820 = vlaneseq
    %v3821 = vshrl.u32 %v3820, 7
    %v3822 = vsub.s32 %v3819, %v3821
    %v3823 = vrot.slane %v2856, %v3822
    %v3825 = vunpack.c.l.s4 1983009808
    %v3826 = vunpack.c.0.s8 %v3825
    %v3827 = vlaneseq
    %v3828 = vshrl.u32 %v3827, 7
    %v3829 = vsub.s32 %v3826, %v3828
    %v3830 = vrot.slane %v3816, %v3829
    %v3831 = vcombine.high %v3823, %v3823
    %v3832 = vcombine.high %v3830, %v3830
    %v3833 = vcombine.high %v2857, %v2857
    %v3835 = vunpack.c.l.s4 1983009808
    %v3836 = vunpack.c.0.s8 %v3835
    %v3837 = vlaneseq
    %v3838 = vshrl.u32 %v3837, 7
    %v3839 = vsub.s32 %v3836, %v3838
    %v3840 = vrot.slane %v2857, %v3839
    %v3842 = vunpack.c.l.s4 1983009808
    %v3843 = vunpack.c.0.s8 %v3842
    %v3844 = vlaneseq
    %v3845 = vshrl.u32 %v3844, 7
    %v3846 = vsub.s32 %v3843, %v3845
    %v3847 = vrot.slane %v3833, %v3846
    %v3848 = vcombine.high %v3840, %v3840
    %v3849 = vcombine.high %v3847, %v3847
    %v3850 = vcombine.high %v2858, %v2858
    %v3852 = vunpack.c.l.s4 1983009808
    %v3853 = vunpack.c.0.s8 %v3852
    %v3854 = vlaneseq
    %v3855 = vshrl.u32 %v3854, 7
    %v3856 = vsub.s32 %v3853, %v3855
    %v3857 = vrot.slane %v2858, %v3856
    %v3859 = vunpack.c.l.s4 1983009808
    %v3860 = vunpack.c.0.s8 %v3859
    %v3861 = vlaneseq
    %v3862 = vshrl.u32 %v3861, 7
    %v3863 = vsub.s32 %v3860, %v3862
    %v3864 = vrot.slane %v3850, %v3863
    %v3865 = vcombine.high %v3857, %v3857
    %v3866 = vcombine.high %v3864, %v3864
    %v3867 = vcombine.high %v2859, %v2859
    %v3869 = vunpack.c.l.s4 1983009808
    %v3870 = vunpack.c.0.s8 %v3869
    %v3871 = vlaneseq
    %v3872 = vshrl.u32 %v3871, 7
    %v3873 = vsub.s32 %v3870, %v3872
    %v3874 = vrot.slane %v2859, %v3873
    %v3876 = vunpack.c.l.s4 1983009808
    %v3877 = vunpack.c.0.s8 %v3876
    %v3878 = vlaneseq
    %v3879 = vshrl.u32 %v3878, 7
    %v3880 = vsub.s32 %v3877, %v3879
    %v3881 = vrot.slane %v3867, %v3880
    %v3882 = vcombine.high %v3874, %v3874
    %v3883 = vcombine.high %v3881, %v3881
    %v3884 = vcombine.high %v2860, %v2860
    %v3886 = vunpack.c.l.s4 1983009808
    %v3887 = vunpack.c.0.s8 %v3886
    %v3888 = vlaneseq
    %v3889 = vshrl.u32 %v3888, 7
    %v3890 = vsub.s32 %v3887, %v3889
    %v3891 = vrot.slane %v2860, %v3890
    %v3893 = vunpack.c.l.s4 1983009808
    %v3894 = vunpack.c.0.s8 %v3893
    %v3895 = vlaneseq
    %v3896 = vshrl.u32 %v3895, 7
    %v3897 = vsub.s32 %v3894, %v3896
    %v3898 = vrot.slane %v3884, %v3897
    %v3899 = vcombine.high %v3891, %v3891
    %v3900 = vcombine.high %v3898, %v3898
    %v3901 = vcombine.high %v2861, %v2861
    %v3903 = vunpack.c.l.s4 1983009808
    %v3904 = vunpack.c.0.s8 %v3903
    %v3905 = vlaneseq
    %v3906 = vshrl.u32 %v3905, 7
    %v3907 = vsub.s32 %v3904, %v3906
    %v3908 = vrot.slane %v2861, %v3907
    %v3910 = vunpack.c.l.s4 1983009808
    %v3911 = vunpack.c.0.s8 %v3910
    %v3912 = vlaneseq
    %v3913 = vshrl.u32 %v3912, 7
    %v3914 = vsub.s32 %v3911, %v3913
    %v3915 = vrot.slane %v3901, %v3914
    %v3916 = vcombine.high %v3908, %v3908
    %v3917 = vcombine.high %v3915, %v3915
    %v3918 = vcombine.high %v2862, %v2862
    %v3920 = vunpack.c.l.s4 1983009808
    %v3921 = vunpack.c.0.s8 %v3920
    %v3922 = vlaneseq
    %v3923 = vshrl.u32 %v3922, 7
    %v3924 = vsub.s32 %v3921, %v3923
    %v3925 = vrot.slane %v2862, %v3924
    %v3927 = vunpack.c.l.s4 1983009808
    %v3928 = vunpack.c.0.s8 %v3927
    %v3929 = vlaneseq
    %v3930 = vshrl.u32 %v3929, 7
    %v3931 = vsub.s32 %v3928, %v3930
    %v3932 = vrot.slane %v3918, %v3931
    %v3933 = vcombine.high %v3925, %v3925
    %v3934 = vcombine.high %v3932, %v3932
    %v3935 = vcombine.high %v2863, %v2863
    %v3937 = vunpack.c.l.s4 1983009808
    %v3938 = vunpack.c.0.s8 %v3937
    %v3939 = vlaneseq
    %v3940 = vshrl.u32 %v3939, 7
    %v3941 = vsub.s32 %v3938, %v3940
    %v3942 = vrot.slane %v2863, %v3941
    %v3944 = vunpack.c.l.s4 1983009808
    %v3945 = vunpack.c.0.s8 %v3944
    %v3946 = vlaneseq
    %v3947 = vshrl.u32 %v3946, 7
    %v3948 = vsub.s32 %v3945, %v3947
    %v3949 = vrot.slane %v3935, %v3948
    %v3950 = vcombine.high %v3942, %v3942
    %v3951 = vcombine.high %v3949, %v3949
    %v3952 = vcombine.high %v2864, %v2864
    %v3954 = vunpack.c.l.s4 1983009808
    %v3955 = vunpack.c.0.s8 %v3954
    %v3956 = vlaneseq
    %v3957 = vshrl.u32 %v3956, 7
    %v3958 = vsub.s32 %v3955, %v3957
    %v3959 = vrot.slane %v2864, %v3958
    %v3961 = vunpack.c.l.s4 1983009808
    %v3962 = vunpack.c.0.s8 %v3961
    %v3963 = vlaneseq
    %v3964 = vshrl.u32 %v3963, 7
    %v3965 = vsub.s32 %v3962, %v3964
    %v3966 = vrot.slane %v3952, %v3965
    %v3967 = vcombine.high %v3959, %v3959
    %v3968 = vcombine.high %v3966, %v3966
    %v3969 = vcombine.high %v2865, %v2865
    %v3971 = vunpack.c.l.s4 1983009808
    %v3972 = vunpack.c.0.s8 %v3971
    %v3973 = vlaneseq
    %v3974 = vshrl.u32 %v3973, 7
    %v3975 = vsub.s32 %v3972, %v3974
    %v3976 = vrot.slane %v2865, %v3975
    %v3978 = vunpack.c.l.s4 1983009808
    %v3979 = vunpack.c.0.s8 %v3978
    %v3980 = vlaneseq
    %v3981 = vshrl.u32 %v3980, 7
    %v3982 = vsub.s32 %v3979, %v3981
    %v3983 = vrot.slane %v3969, %v3982
    %v3984 = vcombine.high %v3976, %v3976
    %v3985 = vcombine.high %v3983, %v3983
    %v3986 = vcombine.high %v2866, %v2866
    %v3988 = vunpack.c.l.s4 1983009808
    %v3989 = vunpack.c.0.s8 %v3988
    %v3990 = vlaneseq
    %v3991 = vshrl.u32 %v3990, 7
    %v3992 = vsub.s32 %v3989, %v3991
    %v3993 = vrot.slane %v2866, %v3992
    %v3995 = vunpack.c.l.s4 1983009808
    %v3996 = vunpack.c.0.s8 %v3995
    %v3997 = vlaneseq
    %v3998 = vshrl.u32 %v3997, 7
    %v3999 = vsub.s32 %v3996, %v3998
    %v4000 = vrot.slane %v3986, %v3999
    %v4001 = vcombine.high %v3993, %v3993
    %v4002 = vcombine.high %v4000, %v4000
    %v4003 = vcombine.high %v2867, %v2867
    %v4005 = vunpack.c.l.s4 1983009808
    %v4006 = vunpack.c.0.s8 %v4005
    %v4007 = vlaneseq
    %v4008 = vshrl.u32 %v4007, 7
    %v4009 = vsub.s32 %v4006, %v4008
    %v4010 = vrot.slane %v2867, %v4009
    %v4012 = vunpack.c.l.s4 1983009808
    %v4013 = vunpack.c.0.s8 %v4012
    %v4014 = vlaneseq
    %v4015 = vshrl.u32 %v4014, 7
    %v4016 = vsub.s32 %v4013, %v4015
    %v4017 = vrot.slane %v4003, %v4016
    %v4018 = vcombine.high %v4010, %v4010
    %v4019 = vcombine.high %v4017, %v4017
    %v4020 = vcombine.high %v2868, %v2868
    %v4022 = vunpack.c.l.s4 1983009808
    %v4023 = vunpack.c.0.s8 %v4022
    %v4024 = vlaneseq
    %v4025 = vshrl.u32 %v4024, 7
    %v4026 = vsub.s32 %v4023, %v4025
    %v4027 = vrot.slane %v2868, %v4026
    %v4029 = vunpack.c.l.s4 1983009808
    %v4030 = vunpack.c.0.s8 %v4029
    %v4031 = vlaneseq
    %v4032 = vshrl.u32 %v4031, 7
    %v4033 = vsub.s32 %v4030, %v4032
    %v4034 = vrot.slane %v4020, %v4033
    %v4035 = vcombine.high %v4027, %v4027
    %v4036 = vcombine.high %v4034, %v4034
    %v4037 = vcombine.high %v2869, %v2869
    %v4039 = vunpack.c.l.s4 1983009808
    %v4040 = vunpack.c.0.s8 %v4039
    %v4041 = vlaneseq
    %v4042 = vshrl.u32 %v4041, 7
    %v4043 = vsub.s32 %v4040, %v4042
    %v4044 = vrot.slane %v2869, %v4043
    %v4046 = vunpack.c.l.s4 1983009808
    %v4047 = vunpack.c.0.s8 %v4046
    %v4048 = vlaneseq
    %v4049 = vshrl.u32 %v4048, 7
    %v4050 = vsub.s32 %v4047, %v4049
    %v4051 = vrot.slane %v4037, %v4050
    %v4052 = vcombine.high %v4044, %v4044
    %v4053 = vcombine.high %v4051, %v4051
    %v4054 = vcombine.high %v2870, %v2870
    %v4056 = vunpack.c.l.s4 1983009808
    %v4057 = vunpack.c.0.s8 %v4056
    %v4058 = vlaneseq
    %v4059 = vshrl.u32 %v4058, 7
    %v4060 = vsub.s32 %v4057, %v4059
    %v4061 = vrot.slane %v2870, %v4060
    %v4063 = vunpack.c.l.s4 1983009808
    %v4064 = vunpack.c.0.s8 %v4063
    %v4065 = vlaneseq
    %v4066 = vshrl.u32 %v4065, 7
    %v4067 = vsub.s32 %v4064, %v4066
    %v4068 = vrot.slane %v4054, %v4067
    %v4069 = vcombine.high %v4061, %v4061
    %v4070 = vcombine.high %v4068, %v4068
    %v4071 = vcombine.high %v2871, %v2871
    %v4073 = vunpack.c.l.s4 1983009808
    %v4074 = vunpack.c.0.s8 %v4073
    %v4075 = vlaneseq
    %v4076 = vshrl.u32 %v4075, 7
    %v4077 = vsub.s32 %v4074, %v4076
    %v4078 = vrot.slane %v2871, %v4077
    %v4080 = vunpack.c.l.s4 1983009808
    %v4081 = vunpack.c.0.s8 %v4080
    %v4082 = vlaneseq
    %v4083 = vshrl.u32 %v4082, 7
    %v4084 = vsub.s32 %v4081, %v4083
    %v4085 = vrot.slane %v4071, %v4084
    %v4086 = vcombine.high %v4078, %v4078
    %v4087 = vcombine.high %v4085, %v4085
    %v4088 = vcombine.high %v2872, %v2872
    %v4090 = vunpack.c.l.s4 1983009808
    %v4091 = vunpack.c.0.s8 %v4090
    %v4092 = vlaneseq
    %v4093 = vshrl.u32 %v4092, 7
    %v4094 = vsub.s32 %v4091, %v4093
    %v4095 = vrot.slane %v2872, %v4094
    %v4097 = vunpack.c.l.s4 1983009808
    %v4098 = vunpack.c.0.s8 %v4097
    %v4099 = vlaneseq
    %v4100 = vshrl.u32 %v4099, 7
    %v4101 = vsub.s32 %v4098, %v4100
    %v4102 = vrot.slane %v4088, %v4101
    %v4103 = vcombine.high %v4095, %v4095
    %v4104 = vcombine.high %v4102, %v4102
    %v4105 = vcombine.high %v2873, %v2873
    %v4107 = vunpack.c.l.s4 1983009808
    %v4108 = vunpack.c.0.s8 %v4107
    %v4109 = vlaneseq
    %v4110 = vshrl.u32 %v4109, 7
    %v4111 = vsub.s32 %v4108, %v4110
    %v4112 = vrot.slane %v2873, %v4111
    %v4114 = vunpack.c.l.s4 1983009808
    %v4115 = vunpack.c.0.s8 %v4114
    %v4116 = vlaneseq
    %v4117 = vshrl.u32 %v4116, 7
    %v4118 = vsub.s32 %v4115, %v4117
    %v4119 = vrot.slane %v4105, %v4118
    %v4120 = vcombine.high %v4112, %v4112
    %v4121 = vcombine.high %v4119, %v4119
    %v4122 = vcombine.high %v2874, %v2874
    %v4124 = vunpack.c.l.s4 1983009808
    %v4125 = vunpack.c.0.s8 %v4124
    %v4126 = vlaneseq
    %v4127 = vshrl.u32 %v4126, 7
    %v4128 = vsub.s32 %v4125, %v4127
    %v4129 = vrot.slane %v2874, %v4128
    %v4131 = vunpack.c.l.s4 1983009808
    %v4132 = vunpack.c.0.s8 %v4131
    %v4133 = vlaneseq
    %v4134 = vshrl.u32 %v4133, 7
    %v4135 = vsub.s32 %v4132, %v4134
    %v4136 = vrot.slane %v4122, %v4135
    %v4137 = vcombine.high %v4129, %v4129
    %v4138 = vcombine.high %v4136, %v4136
    %v4139 = vcombine.high %v2875, %v2875
    %v4141 = vunpack.c.l.s4 1983009808
    %v4142 = vunpack.c.0.s8 %v4141
    %v4143 = vlaneseq
    %v4144 = vshrl.u32 %v4143, 7
    %v4145 = vsub.s32 %v4142, %v4144
    %v4146 = vrot.slane %v2875, %v4145
    %v4148 = vunpack.c.l.s4 1983009808
    %v4149 = vunpack.c.0.s8 %v4148
    %v4150 = vlaneseq
    %v4151 = vshrl.u32 %v4150, 7
    %v4152 = vsub.s32 %v4149, %v4151
    %v4153 = vrot.slane %v4139, %v4152
    %v4154 = vcombine.high %v4146, %v4146
    %v4155 = vcombine.high %v4153, %v4153
    %v4156 = vcombine.high %v2876, %v2876
    %v4158 = vunpack.c.l.s4 1983009808
    %v4159 = vunpack.c.0.s8 %v4158
    %v4160 = vlaneseq
    %v4161 = vshrl.u32 %v4160, 7
    %v4162 = vsub.s32 %v4159, %v4161
    %v4163 = vrot.slane %v2876, %v4162
    %v4165 = vunpack.c.l.s4 1983009808
    %v4166 = vunpack.c.0.s8 %v4165
    %v4167 = vlaneseq
    %v4168 = vshrl.u32 %v4167, 7
    %v4169 = vsub.s32 %v4166, %v4168
    %v4170 = vrot.slane %v4156, %v4169
    %v4171 = vcombine.high %v4163, %v4163
    %v4172 = vcombine.high %v4170, %v4170
    %v4173 = vcombine.high %v2877, %v2877
    %v4175 = vunpack.c.l.s4 1983009808
    %v4176 = vunpack.c.0.s8 %v4175
    %v4177 = vlaneseq
    %v4178 = vshrl.u32 %v4177, 7
    %v4179 = vsub.s32 %v4176, %v4178
    %v4180 = vrot.slane %v2877, %v4179
    %v4182 = vunpack.c.l.s4 1983009808
    %v4183 = vunpack.c.0.s8 %v4182
    %v4184 = vlaneseq
    %v4185 = vshrl.u32 %v4184, 7
    %v4186 = vsub.s32 %v4183, %v4185
    %v4187 = vrot.slane %v4173, %v4186
    %v4188 = vcombine.high %v4180, %v4180
    %v4189 = vcombine.high %v4187, %v4187
    %v4190 = vcombine.high %v2878, %v2878
    %v4192 = vunpack.c.l.s4 1983009808
    %v4193 = vunpack.c.0.s8 %v4192
    %v4194 = vlaneseq
    %v4195 = vshrl.u32 %v4194, 7
    %v4196 = vsub.s32 %v4193, %v4195
    %v4197 = vrot.slane %v2878, %v4196
    %v4199 = vunpack.c.l.s4 1983009808
    %v4200 = vunpack.c.0.s8 %v4199
    %v4201 = vlaneseq
    %v4202 = vshrl.u32 %v4201, 7
    %v4203 = vsub.s32 %v4200, %v4202
    %v4204 = vrot.slane %v4190, %v4203
    %v4205 = vcombine.high %v4197, %v4197
    %v4206 = vcombine.high %v4204, %v4204
    %v4207 = vcombine.high %v2879, %v2879
    %v4209 = vunpack.c.l.s4 1983009808
    %v4210 = vunpack.c.0.s8 %v4209
    %v4211 = vlaneseq
    %v4212 = vshrl.u32 %v4211, 7
    %v4213 = vsub.s32 %v4210, %v4212
    %v4214 = vrot.slane %v2879, %v4213
    %v4216 = vunpack.c.l.s4 1983009808
    %v4217 = vunpack.c.0.s8 %v4216
    %v4218 = vlaneseq
    %v4219 = vshrl.u32 %v4218, 7
    %v4220 = vsub.s32 %v4217, %v4219
    %v4221 = vrot.slane %v4207, %v4220
    %v4222 = vcombine.high %v4214, %v4214
    %v4223 = vcombine.high %v4221, %v4221
    %v4224 = vcombine.high %v2880, %v2880
    %v4226 = vunpack.c.l.s4 1983009808
    %v4227 = vunpack.c.0.s8 %v4226
    %v4228 = vlaneseq
    %v4229 = vshrl.u32 %v4228, 7
    %v4230 = vsub.s32 %v4227, %v4229
    %v4231 = vrot.slane %v2880, %v4230
    %v4233 = vunpack.c.l.s4 1983009808
    %v4234 = vunpack.c.0.s8 %v4233
    %v4235 = vlaneseq
    %v4236 = vshrl.u32 %v4235, 7
    %v4237 = vsub.s32 %v4234, %v4236
    %v4238 = vrot.slane %v4224, %v4237
    %v4239 = vcombine.high %v4231, %v4231
    %v4240 = vcombine.high %v4238, %v4238
    %v4241 = vcombine.high %v2881, %v2881
    %v4243 = vunpack.c.l.s4 1983009808
    %v4244 = vunpack.c.0.s8 %v4243
    %v4245 = vlaneseq
    %v4246 = vshrl.u32 %v4245, 7
    %v4247 = vsub.s32 %v4244, %v4246
    %v4248 = vrot.slane %v2881, %v4247
    %v4250 = vunpack.c.l.s4 1983009808
    %v4251 = vunpack.c.0.s8 %v4250
    %v4252 = vlaneseq
    %v4253 = vshrl.u32 %v4252, 7
    %v4254 = vsub.s32 %v4251, %v4253
    %v4255 = vrot.slane %v4241, %v4254
    %v4256 = vcombine.high %v4248, %v4248
    %v4257 = vcombine.high %v4255, %v4255
    %v4258 = vcombine.high %v2882, %v2882
    %v4260 = vunpack.c.l.s4 1983009808
    %v4261 = vunpack.c.0.s8 %v4260
    %v4262 = vlaneseq
    %v4263 = vshrl.u32 %v4262, 7
    %v4264 = vsub.s32 %v4261, %v4263
    %v4265 = vrot.slane %v2882, %v4264
    %v4267 = vunpack.c.l.s4 1983009808
    %v4268 = vunpack.c.0.s8 %v4267
    %v4269 = vlaneseq
    %v4270 = vshrl.u32 %v4269, 7
    %v4271 = vsub.s32 %v4268, %v4270
    %v4272 = vrot.slane %v4258, %v4271
    %v4273 = vcombine.high %v4265, %v4265
    %v4274 = vcombine.high %v4272, %v4272
    %v4275 = vcombine.high %v2883, %v2883
    %v4277 = vunpack.c.l.s4 1983009808
    %v4278 = vunpack.c.0.s8 %v4277
    %v4279 = vlaneseq
    %v4280 = vshrl.u32 %v4279, 7
    %v4281 = vsub.s32 %v4278, %v4280
    %v4282 = vrot.slane %v2883, %v4281
    %v4284 = vunpack.c.l.s4 1983009808
    %v4285 = vunpack.c.0.s8 %v4284
    %v4286 = vlaneseq
    %v4287 = vshrl.u32 %v4286, 7
    %v4288 = vsub.s32 %v4285, %v4287
    %v4289 = vrot.slane %v4275, %v4288
    %v4290 = vcombine.high %v4282, %v4282
    %v4291 = vcombine.high %v4289, %v4289
    %v4292 = vcombine.high %v2884, %v2884
    %v4294 = vunpack.c.l.s4 1983009808
    %v4295 = vunpack.c.0.s8 %v4294
    %v4296 = vlaneseq
    %v4297 = vshrl.u32 %v4296, 7
    %v4298 = vsub.s32 %v4295, %v4297
    %v4299 = vrot.slane %v2884, %v4298
    %v4301 = vunpack.c.l.s4 1983009808
    %v4302 = vunpack.c.0.s8 %v4301
    %v4303 = vlaneseq
    %v4304 = vshrl.u32 %v4303, 7
    %v4305 = vsub.s32 %v4302, %v4304
    %v4306 = vrot.slane %v4292, %v4305
    %v4307 = vcombine.high %v4299, %v4299
    %v4308 = vcombine.high %v4306, %v4306
    %v4309 = vcombine.high %v2885, %v2885
    %v4311 = vunpack.c.l.s4 1983009808
    %v4312 = vunpack.c.0.s8 %v4311
    %v4313 = vlaneseq
    %v4314 = vshrl.u32 %v4313, 7
    %v4315 = vsub.s32 %v4312, %v4314
    %v4316 = vrot.slane %v2885, %v4315
    %v4318 = vunpack.c.l.s4 1983009808
    %v4319 = vunpack.c.0.s8 %v4318
    %v4320 = vlaneseq
    %v4321 = vshrl.u32 %v4320, 7
    %v4322 = vsub.s32 %v4319, %v4321
    %v4323 = vrot.slane %v4309, %v4322
    %v4324 = vcombine.high %v4316, %v4316
    %v4325 = vcombine.high %v4323, %v4323
    %v4326 = vcombine.high %v2886, %v2886
    %v4328 = vunpack.c.l.s4 1983009808
    %v4329 = vunpack.c.0.s8 %v4328
    %v4330 = vlaneseq
    %v4331 = vshrl.u32 %v4330, 7
    %v4332 = vsub.s32 %v4329, %v4331
    %v4333 = vrot.slane %v2886, %v4332
    %v4335 = vunpack.c.l.s4 1983009808
    %v4336 = vunpack.c.0.s8 %v4335
    %v4337 = vlaneseq
    %v4338 = vshrl.u32 %v4337, 7
    %v4339 = vsub.s32 %v4336, %v4338
    %v4340 = vrot.slane %v4326, %v4339
    %v4341 = vcombine.high %v4333, %v4333
    %v4342 = vcombine.high %v4340, %v4340
    %v4343 = vcombine.high %v2887, %v2887
    %v4345 = vunpack.c.l.s4 1983009808
    %v4346 = vunpack.c.0.s8 %v4345
    %v4347 = vlaneseq
    %v4348 = vshrl.u32 %v4347, 7
    %v4349 = vsub.s32 %v4346, %v4348
    %v4350 = vrot.slane %v2887, %v4349
    %v4352 = vunpack.c.l.s4 1983009808
    %v4353 = vunpack.c.0.s8 %v4352
    %v4354 = vlaneseq
    %v4355 = vshrl.u32 %v4354, 7
    %v4356 = vsub.s32 %v4353, %v4355
    %v4357 = vrot.slane %v4343, %v4356
    %v4358 = vcombine.high %v4350, %v4350
    %v4359 = vcombine.high %v4357, %v4357
    %v4360 = vcombine.high %v2888, %v2888
    %v4362 = vunpack.c.l.s4 1983009808
    %v4363 = vunpack.c.0.s8 %v4362
    %v4364 = vlaneseq
    %v4365 = vshrl.u32 %v4364, 7
    %v4366 = vsub.s32 %v4363, %v4365
    %v4367 = vrot.slane %v2888, %v4366
    %v4369 = vunpack.c.l.s4 1983009808
    %v4370 = vunpack.c.0.s8 %v4369
    %v4371 = vlaneseq
    %v4372 = vshrl.u32 %v4371, 7
    %v4373 = vsub.s32 %v4370, %v4372
    %v4374 = vrot.slane %v4360, %v4373
    %v4375 = vcombine.high %v4367, %v4367
    %v4376 = vcombine.high %v4374, %v4374
    %v4377 = vcombine.high %v2889, %v2889
    %v4379 = vunpack.c.l.s4 1983009808
    %v4380 = vunpack.c.0.s8 %v4379
    %v4381 = vlaneseq
    %v4382 = vshrl.u32 %v4381, 7
    %v4383 = vsub.s32 %v4380, %v4382
    %v4384 = vrot.slane %v2889, %v4383
    %v4386 = vunpack.c.l.s4 1983009808
    %v4387 = vunpack.c.0.s8 %v4386
    %v4388 = vlaneseq
    %v4389 = vshrl.u32 %v4388, 7
    %v4390 = vsub.s32 %v4387, %v4389
    %v4391 = vrot.slane %v4377, %v4390
    %v4392 = vcombine.high %v4384, %v4384
    %v4393 = vcombine.high %v4391, %v4391
    %v4394 = vcombine.high %v2890, %v2890
    %v4396 = vunpack.c.l.s4 1983009808
    %v4397 = vunpack.c.0.s8 %v4396
    %v4398 = vlaneseq
    %v4399 = vshrl.u32 %v4398, 7
    %v4400 = vsub.s32 %v4397, %v4399
    %v4401 = vrot.slane %v2890, %v4400
    %v4403 = vunpack.c.l.s4 1983009808
    %v4404 = vunpack.c.0.s8 %v4403
    %v4405 = vlaneseq
    %v4406 = vshrl.u32 %v4405, 7
    %v4407 = vsub.s32 %v4404, %v4406
    %v4408 = vrot.slane %v4394, %v4407
    %v4409 = vcombine.high %v4401, %v4401
    %v4410 = vcombine.high %v4408, %v4408
    %v4411 = vcombine.high %v2891, %v2891
    %v4413 = vunpack.c.l.s4 1983009808
    %v4414 = vunpack.c.0.s8 %v4413
    %v4415 = vlaneseq
    %v4416 = vshrl.u32 %v4415, 7
    %v4417 = vsub.s32 %v4414, %v4416
    %v4418 = vrot.slane %v2891, %v4417
    %v4420 = vunpack.c.l.s4 1983009808
    %v4421 = vunpack.c.0.s8 %v4420
    %v4422 = vlaneseq
    %v4423 = vshrl.u32 %v4422, 7
    %v4424 = vsub.s32 %v4421, %v4423
    %v4425 = vrot.slane %v4411, %v4424
    %v4426 = vcombine.high %v4418, %v4418
    %v4427 = vcombine.high %v4425, %v4425
    %v4428 = vcombine.high %v2892, %v2892
    %v4430 = vunpack.c.l.s4 1983009808
    %v4431 = vunpack.c.0.s8 %v4430
    %v4432 = vlaneseq
    %v4433 = vshrl.u32 %v4432, 7
    %v4434 = vsub.s32 %v4431, %v4433
    %v4435 = vrot.slane %v2892, %v4434
    %v4437 = vunpack.c.l.s4 1983009808
    %v4438 = vunpack.c.0.s8 %v4437
    %v4439 = vlaneseq
    %v4440 = vshrl.u32 %v4439, 7
    %v4441 = vsub.s32 %v4438, %v4440
    %v4442 = vrot.slane %v4428, %v4441
    %v4443 = vcombine.high %v4435, %v4435
    %v4444 = vcombine.high %v4442, %v4442
    %v4445 = vcombine.high %v2893, %v2893
    %v4447 = vunpack.c.l.s4 1983009808
    %v4448 = vunpack.c.0.s8 %v4447
    %v4449 = vlaneseq
    %v4450 = vshrl.u32 %v4449, 7
    %v4451 = vsub.s32 %v4448, %v4450
    %v4452 = vrot.slane %v2893, %v4451
    %v4454 = vunpack.c.l.s4 1983009808
    %v4455 = vunpack.c.0.s8 %v4454
    %v4456 = vlaneseq
    %v4457 = vshrl.u32 %v4456, 7
    %v4458 = vsub.s32 %v4455, %v4457
    %v4459 = vrot.slane %v4445, %v4458
    %v4460 = vcombine.high %v4452, %v4452
    %v4461 = vcombine.high %v4459, %v4459
    %v4462 = vcombine.high %v2894, %v2894
    %v4464 = vunpack.c.l.s4 1983009808
    %v4465 = vunpack.c.0.s8 %v4464
    %v4466 = vlaneseq
    %v4467 = vshrl.u32 %v4466, 7
    %v4468 = vsub.s32 %v4465, %v4467
    %v4469 = vrot.slane %v2894, %v4468
    %v4471 = vunpack.c.l.s4 1983009808
    %v4472 = vunpack.c.0.s8 %v4471
    %v4473 = vlaneseq
    %v4474 = vshrl.u32 %v4473, 7
    %v4475 = vsub.s32 %v4472, %v4474
    %v4476 = vrot.slane %v4462, %v4475
    %v4477 = vcombine.high %v4469, %v4469
    %v4478 = vcombine.high %v4476, %v4476
    %v4479 = vcombine.high %v2895, %v2895
    %v4481 = vunpack.c.l.s4 1983009808
    %v4482 = vunpack.c.0.s8 %v4481
    %v4483 = vlaneseq
    %v4484 = vshrl.u32 %v4483, 7
    %v4485 = vsub.s32 %v4482, %v4484
    %v4486 = vrot.slane %v2895, %v4485
    %v4488 = vunpack.c.l.s4 1983009808
    %v4489 = vunpack.c.0.s8 %v4488
    %v4490 = vlaneseq
    %v4491 = vshrl.u32 %v4490, 7
    %v4492 = vsub.s32 %v4489, %v4491
    %v4493 = vrot.slane %v4479, %v4492
    %v4494 = vcombine.high %v4486, %v4486
    %v4495 = vcombine.high %v4493, %v4493
    %v4496 = vcombine.high %v2896, %v2896
    %v4498 = vunpack.c.l.s4 1983009808
    %v4499 = vunpack.c.0.s8 %v4498
    %v4500 = vlaneseq
    %v4501 = vshrl.u32 %v4500, 7
    %v4502 = vsub.s32 %v4499, %v4501
    %v4503 = vrot.slane %v2896, %v4502
    %v4505 = vunpack.c.l.s4 1983009808
    %v4506 = vunpack.c.0.s8 %v4505
    %v4507 = vlaneseq
    %v4508 = vshrl.u32 %v4507, 7
    %v4509 = vsub.s32 %v4506, %v4508
    %v4510 = vrot.slane %v4496, %v4509
    %v4511 = vcombine.high %v4503, %v4503
    %v4512 = vcombine.high %v4510, %v4510
    %v4513 = vcombine.high %v2897, %v2897
    %v4515 = vunpack.c.l.s4 1983009808
    %v4516 = vunpack.c.0.s8 %v4515
    %v4517 = vlaneseq
    %v4518 = vshrl.u32 %v4517, 7
    %v4519 = vsub.s32 %v4516, %v4518
    %v4520 = vrot.slane %v2897, %v4519
    %v4522 = vunpack.c.l.s4 1983009808
    %v4523 = vunpack.c.0.s8 %v4522
    %v4524 = vlaneseq
    %v4525 = vshrl.u32 %v4524, 7
    %v4526 = vsub.s32 %v4523, %v4525
    %v4527 = vrot.slane %v4513, %v4526
    %v4528 = vcombine.high %v4520, %v4520
    %v4529 = vcombine.high %v4527, %v4527
    %v4530 = vcombine.high %v2898, %v2898
    %v4532 = vunpack.c.l.s4 1983009808
    %v4533 = vunpack.c.0.s8 %v4532
    %v4534 = vlaneseq
    %v4535 = vshrl.u32 %v4534, 7
    %v4536 = vsub.s32 %v4533, %v4535
    %v4537 = vrot.slane %v2898, %v4536
    %v4539 = vunpack.c.l.s4 1983009808
    %v4540 = vunpack.c.0.s8 %v4539
    %v4541 = vlaneseq
    %v4542 = vshrl.u32 %v4541, 7
    %v4543 = vsub.s32 %v4540, %v4542
    %v4544 = vrot.slane %v4530, %v4543
    %v4545 = vcombine.high %v4537, %v4537
    %v4546 = vcombine.high %v4544, %v4544
    %v4547 = vcombine.high %v2899, %v2899
    %v4549 = vunpack.c.l.s4 1983009808
    %v4550 = vunpack.c.0.s8 %v4549
    %v4551 = vlaneseq
    %v4552 = vshrl.u32 %v4551, 7
    %v4553 = vsub.s32 %v4550, %v4552
    %v4554 = vrot.slane %v2899, %v4553
    %v4556 = vunpack.c.l.s4 1983009808
    %v4557 = vunpack.c.0.s8 %v4556
    %v4558 = vlaneseq
    %v4559 = vshrl.u32 %v4558, 7
    %v4560 = vsub.s32 %v4557, %v4559
    %v4561 = vrot.slane %v4547, %v4560
    %v4562 = vcombine.high %v4554, %v4554
    %v4563 = vcombine.high %v4561, %v4561
    %v4564 = vcombine.high %v2900, %v2900
    %v4566 = vunpack.c.l.s4 1983009808
    %v4567 = vunpack.c.0.s8 %v4566
    %v4568 = vlaneseq
    %v4569 = vshrl.u32 %v4568, 7
    %v4570 = vsub.s32 %v4567, %v4569
    %v4571 = vrot.slane %v2900, %v4570
    %v4573 = vunpack.c.l.s4 1983009808
    %v4574 = vunpack.c.0.s8 %v4573
    %v4575 = vlaneseq
    %v4576 = vshrl.u32 %v4575, 7
    %v4577 = vsub.s32 %v4574, %v4576
    %v4578 = vrot.slane %v4564, %v4577
    %v4579 = vcombine.high %v4571, %v4571
    %v4580 = vcombine.high %v4578, %v4578
    %v4581 = vcombine.high %v2901, %v2901
    %v4583 = vunpack.c.l.s4 1983009808
    %v4584 = vunpack.c.0.s8 %v4583
    %v4585 = vlaneseq
    %v4586 = vshrl.u32 %v4585, 7
    %v4587 = vsub.s32 %v4584, %v4586
    %v4588 = vrot.slane %v2901, %v4587
    %v4590 = vunpack.c.l.s4 1983009808
    %v4591 = vunpack.c.0.s8 %v4590
    %v4592 = vlaneseq
    %v4593 = vshrl.u32 %v4592, 7
    %v4594 = vsub.s32 %v4591, %v4593
    %v4595 = vrot.slane %v4581, %v4594
    %v4596 = vcombine.high %v4588, %v4588
    %v4597 = vcombine.high %v4595, %v4595
    %v4598 = vcombine.high %v2902, %v2902
    %v4600 = vunpack.c.l.s4 1983009808
    %v4601 = vunpack.c.0.s8 %v4600
    %v4602 = vlaneseq
    %v4603 = vshrl.u32 %v4602, 7
    %v4604 = vsub.s32 %v4601, %v4603
    %v4605 = vrot.slane %v2902, %v4604
    %v4607 = vunpack.c.l.s4 1983009808
    %v4608 = vunpack.c.0.s8 %v4607
    %v4609 = vlaneseq
    %v4610 = vshrl.u32 %v4609, 7
    %v4611 = vsub.s32 %v4608, %v4610
    %v4612 = vrot.slane %v4598, %v4611
    %v4613 = vcombine.high %v4605, %v4605
    %v4614 = vcombine.high %v4612, %v4612
    %v4615 = vcombine.high %v2903, %v2903
    %v4617 = vunpack.c.l.s4 1983009808
    %v4618 = vunpack.c.0.s8 %v4617
    %v4619 = vlaneseq
    %v4620 = vshrl.u32 %v4619, 7
    %v4621 = vsub.s32 %v4618, %v4620
    %v4622 = vrot.slane %v2903, %v4621
    %v4624 = vunpack.c.l.s4 1983009808
    %v4625 = vunpack.c.0.s8 %v4624
    %v4626 = vlaneseq
    %v4627 = vshrl.u32 %v4626, 7
    %v4628 = vsub.s32 %v4625, %v4627
    %v4629 = vrot.slane %v4615, %v4628
    %v4630 = vcombine.high %v4622, %v4622
    %v4631 = vcombine.high %v4629, %v4629
    %v4632 = vcombine.high %v2904, %v2904
    %v4634 = vunpack.c.l.s4 1983009808
    %v4635 = vunpack.c.0.s8 %v4634
    %v4636 = vlaneseq
    %v4637 = vshrl.u32 %v4636, 7
    %v4638 = vsub.s32 %v4635, %v4637
    %v4639 = vrot.slane %v2904, %v4638
    %v4641 = vunpack.c.l.s4 1983009808
    %v4642 = vunpack.c.0.s8 %v4641
    %v4643 = vlaneseq
    %v4644 = vshrl.u32 %v4643, 7
    %v4645 = vsub.s32 %v4642, %v4644
    %v4646 = vrot.slane %v4632, %v4645
    %v4647 = vcombine.high %v4639, %v4639
    %v4648 = vcombine.high %v4646, %v4646
    %v4649 = vcombine.high %v2905, %v2905
    %v4651 = vunpack.c.l.s4 1983009808
    %v4652 = vunpack.c.0.s8 %v4651
    %v4653 = vlaneseq
    %v4654 = vshrl.u32 %v4653, 7
    %v4655 = vsub.s32 %v4652, %v4654
    %v4656 = vrot.slane %v2905, %v4655
    %v4658 = vunpack.c.l.s4 1983009808
    %v4659 = vunpack.c.0.s8 %v4658
    %v4660 = vlaneseq
    %v4661 = vshrl.u32 %v4660, 7
    %v4662 = vsub.s32 %v4659, %v4661
    %v4663 = vrot.slane %v4649, %v4662
    %v4664 = vcombine.high %v4656, %v4656
    %v4665 = vcombine.high %v4663, %v4663
    %v4666 = vcombine.high %v2906, %v2906
    %v4668 = vunpack.c.l.s4 1983009808
    %v4669 = vunpack.c.0.s8 %v4668
    %v4670 = vlaneseq
    %v4671 = vshrl.u32 %v4670, 7
    %v4672 = vsub.s32 %v4669, %v4671
    %v4673 = vrot.slane %v2906, %v4672
    %v4675 = vunpack.c.l.s4 1983009808
    %v4676 = vunpack.c.0.s8 %v4675
    %v4677 = vlaneseq
    %v4678 = vshrl.u32 %v4677, 7
    %v4679 = vsub.s32 %v4676, %v4678
    %v4680 = vrot.slane %v4666, %v4679
    %v4681 = vcombine.high %v4673, %v4673
    %v4682 = vcombine.high %v4680, %v4680
    %v4683 = vcombine.high %v2907, %v2907
    %v4685 = vunpack.c.l.s4 1983009808
    %v4686 = vunpack.c.0.s8 %v4685
    %v4687 = vlaneseq
    %v4688 = vshrl.u32 %v4687, 7
    %v4689 = vsub.s32 %v4686, %v4688
    %v4690 = vrot.slane %v2907, %v4689
    %v4692 = vunpack.c.l.s4 1983009808
    %v4693 = vunpack.c.0.s8 %v4692
    %v4694 = vlaneseq
    %v4695 = vshrl.u32 %v4694, 7
    %v4696 = vsub.s32 %v4693, %v4695
    %v4697 = vrot.slane %v4683, %v4696
    %v4698 = vcombine.high %v4690, %v4690
    %v4699 = vcombine.high %v4697, %v4697
    %v4700 = vcombine.high %v2908, %v2908
    %v4702 = vunpack.c.l.s4 1983009808
    %v4703 = vunpack.c.0.s8 %v4702
    %v4704 = vlaneseq
    %v4705 = vshrl.u32 %v4704, 7
    %v4706 = vsub.s32 %v4703, %v4705
    %v4707 = vrot.slane %v2908, %v4706
    %v4709 = vunpack.c.l.s4 1983009808
    %v4710 = vunpack.c.0.s8 %v4709
    %v4711 = vlaneseq
    %v4712 = vshrl.u32 %v4711, 7
    %v4713 = vsub.s32 %v4710, %v4712
    %v4714 = vrot.slane %v4700, %v4713
    %v4715 = vcombine.high %v4707, %v4707
    %v4716 = vcombine.high %v4714, %v4714
    %v4717 = vcombine.high %v2909, %v2909
    %v4719 = vunpack.c.l.s4 1983009808
    %v4720 = vunpack.c.0.s8 %v4719
    %v4721 = vlaneseq
    %v4722 = vshrl.u32 %v4721, 7
    %v4723 = vsub.s32 %v4720, %v4722
    %v4724 = vrot.slane %v2909, %v4723
    %v4726 = vunpack.c.l.s4 1983009808
    %v4727 = vunpack.c.0.s8 %v4726
    %v4728 = vlaneseq
    %v4729 = vshrl.u32 %v4728, 7
    %v4730 = vsub.s32 %v4727, %v4729
    %v4731 = vrot.slane %v4717, %v4730
    %v4732 = vcombine.high %v4724, %v4724
    %v4733 = vcombine.high %v4731, %v4731
    %v4734 = vcombine.high %v2910, %v2910
    %v4736 = vunpack.c.l.s4 1983009808
    %v4737 = vunpack.c.0.s8 %v4736
    %v4738 = vlaneseq
    %v4739 = vshrl.u32 %v4738, 7
    %v4740 = vsub.s32 %v4737, %v4739
    %v4741 = vrot.slane %v2910, %v4740
    %v4743 = vunpack.c.l.s4 1983009808
    %v4744 = vunpack.c.0.s8 %v4743
    %v4745 = vlaneseq
    %v4746 = vshrl.u32 %v4745, 7
    %v4747 = vsub.s32 %v4744, %v4746
    %v4748 = vrot.slane %v4734, %v4747
    %v4749 = vcombine.high %v4741, %v4741
    %v4750 = vcombine.high %v4748, %v4748
    %v4751 = vcombine.high %v2911, %v2911
    %v4753 = vunpack.c.l.s4 1983009808
    %v4754 = vunpack.c.0.s8 %v4753
    %v4755 = vlaneseq
    %v4756 = vshrl.u32 %v4755, 7
    %v4757 = vsub.s32 %v4754, %v4756
    %v4758 = vrot.slane %v2911, %v4757
    %v4760 = vunpack.c.l.s4 1983009808
    %v4761 = vunpack.c.0.s8 %v4760
    %v4762 = vlaneseq
    %v4763 = vshrl.u32 %v4762, 7
    %v4764 = vsub.s32 %v4761, %v4763
    %v4765 = vrot.slane %v4751, %v4764
    %v4766 = vcombine.high %v4758, %v4758
    %v4767 = vcombine.high %v4765, %v4765
    %v4768 = vcombine.high %v2912, %v2912
    %v4770 = vunpack.c.l.s4 1983009808
    %v4771 = vunpack.c.0.s8 %v4770
    %v4772 = vlaneseq
    %v4773 = vshrl.u32 %v4772, 7
    %v4774 = vsub.s32 %v4771, %v4773
    %v4775 = vrot.slane %v2912, %v4774
    %v4777 = vunpack.c.l.s4 1983009808
    %v4778 = vunpack.c.0.s8 %v4777
    %v4779 = vlaneseq
    %v4780 = vshrl.u32 %v4779, 7
    %v4781 = vsub.s32 %v4778, %v4780
    %v4782 = vrot.slane %v4768, %v4781
    %v4783 = vcombine.high %v4775, %v4775
    %v4784 = vcombine.high %v4782, %v4782
    %v4785 = vcombine.high %v2913, %v2913
    %v4787 = vunpack.c.l.s4 1983009808
    %v4788 = vunpack.c.0.s8 %v4787
    %v4789 = vlaneseq
    %v4790 = vshrl.u32 %v4789, 7
    %v4791 = vsub.s32 %v4788, %v4790
    %v4792 = vrot.slane %v2913, %v4791
    %v4794 = vunpack.c.l.s4 1983009808
    %v4795 = vunpack.c.0.s8 %v4794
    %v4796 = vlaneseq
    %v4797 = vshrl.u32 %v4796, 7
    %v4798 = vsub.s32 %v4795, %v4797
    %v4799 = vrot.slane %v4785, %v4798
    %v4800 = vcombine.high %v4792, %v4792
    %v4801 = vcombine.high %v4799, %v4799
    %v4802 = vcombine.high %v2914, %v2914
    %v4804 = vunpack.c.l.s4 1983009808
    %v4805 = vunpack.c.0.s8 %v4804
    %v4806 = vlaneseq
    %v4807 = vshrl.u32 %v4806, 7
    %v4808 = vsub.s32 %v4805, %v4807
    %v4809 = vrot.slane %v2914, %v4808
    %v4811 = vunpack.c.l.s4 1983009808
    %v4812 = vunpack.c.0.s8 %v4811
    %v4813 = vlaneseq
    %v4814 = vshrl.u32 %v4813, 7
    %v4815 = vsub.s32 %v4812, %v4814
    %v4816 = vrot.slane %v4802, %v4815
    %v4817 = vcombine.high %v4809, %v4809
    %v4818 = vcombine.high %v4816, %v4816
    %v4819 = vcombine.high %v2915, %v2915
    %v4821 = vunpack.c.l.s4 1983009808
    %v4822 = vunpack.c.0.s8 %v4821
    %v4823 = vlaneseq
    %v4824 = vshrl.u32 %v4823, 7
    %v4825 = vsub.s32 %v4822, %v4824
    %v4826 = vrot.slane %v2915, %v4825
    %v4828 = vunpack.c.l.s4 1983009808
    %v4829 = vunpack.c.0.s8 %v4828
    %v4830 = vlaneseq
    %v4831 = vshrl.u32 %v4830, 7
    %v4832 = vsub.s32 %v4829, %v4831
    %v4833 = vrot.slane %v4819, %v4832
    %v4834 = vcombine.high %v4826, %v4826
    %v4835 = vcombine.high %v4833, %v4833
    %v4836 = vcombine.high %v2916, %v2916
    %v4838 = vunpack.c.l.s4 1983009808
    %v4839 = vunpack.c.0.s8 %v4838
    %v4840 = vlaneseq
    %v4841 = vshrl.u32 %v4840, 7
    %v4842 = vsub.s32 %v4839, %v4841
    %v4843 = vrot.slane %v2916, %v4842
    %v4845 = vunpack.c.l.s4 1983009808
    %v4846 = vunpack.c.0.s8 %v4845
    %v4847 = vlaneseq
    %v4848 = vshrl.u32 %v4847, 7
    %v4849 = vsub.s32 %v4846, %v4848
    %v4850 = vrot.slane %v4836, %v4849
    %v4851 = vcombine.high %v4843, %v4843
    %v4852 = vcombine.high %v4850, %v4850
    %v4853 = vcombine.high %v2917, %v2917
    %v4855 = vunpack.c.l.s4 1983009808
    %v4856 = vunpack.c.0.s8 %v4855
    %v4857 = vlaneseq
    %v4858 = vshrl.u32 %v4857, 7
    %v4859 = vsub.s32 %v4856, %v4858
    %v4860 = vrot.slane %v2917, %v4859
    %v4862 = vunpack.c.l.s4 1983009808
    %v4863 = vunpack.c.0.s8 %v4862
    %v4864 = vlaneseq
    %v4865 = vshrl.u32 %v4864, 7
    %v4866 = vsub.s32 %v4863, %v4865
    %v4867 = vrot.slane %v4853, %v4866
    %v4868 = vcombine.high %v4860, %v4860
    %v4869 = vcombine.high %v4867, %v4867
    %v4870 = vcombine.high %v2918, %v2918
    %v4872 = vunpack.c.l.s4 1983009808
    %v4873 = vunpack.c.0.s8 %v4872
    %v4874 = vlaneseq
    %v4875 = vshrl.u32 %v4874, 7
    %v4876 = vsub.s32 %v4873, %v4875
    %v4877 = vrot.slane %v2918, %v4876
    %v4879 = vunpack.c.l.s4 1983009808
    %v4880 = vunpack.c.0.s8 %v4879
    %v4881 = vlaneseq
    %v4882 = vshrl.u32 %v4881, 7
    %v4883 = vsub.s32 %v4880, %v4882
    %v4884 = vrot.slane %v4870, %v4883
    %v4885 = vcombine.high %v4877, %v4877
    %v4886 = vcombine.high %v4884, %v4884
    %v4887 = vcombine.high %v2919, %v2919
    %v4889 = vunpack.c.l.s4 1983009808
    %v4890 = vunpack.c.0.s8 %v4889
    %v4891 = vlaneseq
    %v4892 = vshrl.u32 %v4891, 7
    %v4893 = vsub.s32 %v4890, %v4892
    %v4894 = vrot.slane %v2919, %v4893
    %v4896 = vunpack.c.l.s4 1983009808
    %v4897 = vunpack.c.0.s8 %v4896
    %v4898 = vlaneseq
    %v4899 = vshrl.u32 %v4898, 7
    %v4900 = vsub.s32 %v4897, %v4899
    %v4901 = vrot.slane %v4887, %v4900
    %v4902 = vcombine.high %v4894, %v4894
    %v4903 = vcombine.high %v4901, %v4901
    %v4904 = vcombine.high %v2920, %v2920
    %v4906 = vunpack.c.l.s4 1983009808
    %v4907 = vunpack.c.0.s8 %v4906
    %v4908 = vlaneseq
    %v4909 = vshrl.u32 %v4908, 7
    %v4910 = vsub.s32 %v4907, %v4909
    %v4911 = vrot.slane %v2920, %v4910
    %v4913 = vunpack.c.l.s4 1983009808
    %v4914 = vunpack.c.0.s8 %v4913
    %v4915 = vlaneseq
    %v4916 = vshrl.u32 %v4915, 7
    %v4917 = vsub.s32 %v4914, %v4916
    %v4918 = vrot.slane %v4904, %v4917
    %v4919 = vcombine.high %v4911, %v4911
    %v4920 = vcombine.high %v4918, %v4918
    %v4921 = vcombine.high %v2921, %v2921
    %v4923 = vunpack.c.l.s4 1983009808
    %v4924 = vunpack.c.0.s8 %v4923
    %v4925 = vlaneseq
    %v4926 = vshrl.u32 %v4925, 7
    %v4927 = vsub.s32 %v4924, %v4926
    %v4928 = vrot.slane %v2921, %v4927
    %v4930 = vunpack.c.l.s4 1983009808
    %v4931 = vunpack.c.0.s8 %v4930
    %v4932 = vlaneseq
    %v4933 = vshrl.u32 %v4932, 7
    %v4934 = vsub.s32 %v4931, %v4933
    %v4935 = vrot.slane %v4921, %v4934
    %v4936 = vcombine.high %v4928, %v4928
    %v4937 = vcombine.high %v4935, %v4935
    %v4938 = vcombine.high %v2922, %v2922
    %v4940 = vunpack.c.l.s4 1983009808
    %v4941 = vunpack.c.0.s8 %v4940
    %v4942 = vlaneseq
    %v4943 = vshrl.u32 %v4942, 7
    %v4944 = vsub.s32 %v4941, %v4943
    %v4945 = vrot.slane %v2922, %v4944
    %v4947 = vunpack.c.l.s4 1983009808
    %v4948 = vunpack.c.0.s8 %v4947
    %v4949 = vlaneseq
    %v4950 = vshrl.u32 %v4949, 7
    %v4951 = vsub.s32 %v4948, %v4950
    %v4952 = vrot.slane %v4938, %v4951
    %v4953 = vcombine.high %v4945, %v4945
    %v4954 = vcombine.high %v4952, %v4952
    %v4955 = vcombine.high %v2923, %v2923
    %v4957 = vunpack.c.l.s4 1983009808
    %v4958 = vunpack.c.0.s8 %v4957
    %v4959 = vlaneseq
    %v4960 = vshrl.u32 %v4959, 7
    %v4961 = vsub.s32 %v4958, %v4960
    %v4962 = vrot.slane %v2923, %v4961
    %v4964 = vunpack.c.l.s4 1983009808
    %v4965 = vunpack.c.0.s8 %v4964
    %v4966 = vlaneseq
    %v4967 = vshrl.u32 %v4966, 7
    %v4968 = vsub.s32 %v4965, %v4967
    %v4969 = vrot.slane %v4955, %v4968
    %v4970 = vcombine.high %v4962, %v4962
    %v4971 = vcombine.high %v4969, %v4969
    %v4972 = vcombine.high %v2924, %v2924
    %v4974 = vunpack.c.l.s4 1983009808
    %v4975 = vunpack.c.0.s8 %v4974
    %v4976 = vlaneseq
    %v4977 = vshrl.u32 %v4976, 7
    %v4978 = vsub.s32 %v4975, %v4977
    %v4979 = vrot.slane %v2924, %v4978
    %v4981 = vunpack.c.l.s4 1983009808
    %v4982 = vunpack.c.0.s8 %v4981
    %v4983 = vlaneseq
    %v4984 = vshrl.u32 %v4983, 7
    %v4985 = vsub.s32 %v4982, %v4984
    %v4986 = vrot.slane %v4972, %v4985
    %v4987 = vcombine.high %v4979, %v4979
    %v4988 = vcombine.high %v4986, %v4986
    %v4989 = vcombine.high %v2925, %v2925
    %v4991 = vunpack.c.l.s4 1983009808
    %v4992 = vunpack.c.0.s8 %v4991
    %v4993 = vlaneseq
    %v4994 = vshrl.u32 %v4993, 7
    %v4995 = vsub.s32 %v4992, %v4994
    %v4996 = vrot.slane %v2925, %v4995
    %v4998 = vunpack.c.l.s4 1983009808
    %v4999 = vunpack.c.0.s8 %v4998
    %v5000 = vlaneseq
    %v5001 = vshrl.u32 %v5000, 7
    %v5002 = vsub.s32 %v4999, %v5001
    %v5003 = vrot.slane %v4989, %v5002
    %v5004 = vcombine.high %v4996, %v4996
    %v5005 = vcombine.high %v5003, %v5003
    %v5006 = vcombine.high %v2926, %v2926
    %v5008 = vunpack.c.l.s4 1983009808
    %v5009 = vunpack.c.0.s8 %v5008
    %v5010 = vlaneseq
    %v5011 = vshrl.u32 %v5010, 7
    %v5012 = vsub.s32 %v5009, %v5011
    %v5013 = vrot.slane %v2926, %v5012
    %v5015 = vunpack.c.l.s4 1983009808
    %v5016 = vunpack.c.0.s8 %v5015
    %v5017 = vlaneseq
    %v5018 = vshrl.u32 %v5017, 7
    %v5019 = vsub.s32 %v5016, %v5018
    %v5020 = vrot.slane %v5006, %v5019
    %v5021 = vcombine.high %v5013, %v5013
    %v5022 = vcombine.high %v5020, %v5020
    %v5023 = vcombine.high %v2927, %v2927
    %v5025 = vunpack.c.l.s4 1983009808
    %v5026 = vunpack.c.0.s8 %v5025
    %v5027 = vlaneseq
    %v5028 = vshrl.u32 %v5027, 7
    %v5029 = vsub.s32 %v5026, %v5028
    %v5030 = vrot.slane %v2927, %v5029
    %v5032 = vunpack.c.l.s4 1983009808
    %v5033 = vunpack.c.0.s8 %v5032
    %v5034 = vlaneseq
    %v5035 = vshrl.u32 %v5034, 7
    %v5036 = vsub.s32 %v5033, %v5035
    %v5037 = vrot.slane %v5023, %v5036
    %v5038 = vcombine.high %v5030, %v5030
    %v5039 = vcombine.high %v5037, %v5037
    %v5040 = vcombine.high %v2928, %v2928
    %v5042 = vunpack.c.l.s4 1983009808
    %v5043 = vunpack.c.0.s8 %v5042
    %v5044 = vlaneseq
    %v5045 = vshrl.u32 %v5044, 7
    %v5046 = vsub.s32 %v5043, %v5045
    %v5047 = vrot.slane %v2928, %v5046
    %v5049 = vunpack.c.l.s4 1983009808
    %v5050 = vunpack.c.0.s8 %v5049
    %v5051 = vlaneseq
    %v5052 = vshrl.u32 %v5051, 7
    %v5053 = vsub.s32 %v5050, %v5052
    %v5054 = vrot.slane %v5040, %v5053
    %v5055 = vcombine.high %v5047, %v5047
    %v5056 = vcombine.high %v5054, %v5054
    %v5057 = vcombine.high %v2929, %v2929
    %v5059 = vunpack.c.l.s4 1983009808
    %v5060 = vunpack.c.0.s8 %v5059
    %v5061 = vlaneseq
    %v5062 = vshrl.u32 %v5061, 7
    %v5063 = vsub.s32 %v5060, %v5062
    %v5064 = vrot.slane %v2929, %v5063
    %v5066 = vunpack.c.l.s4 1983009808
    %v5067 = vunpack.c.0.s8 %v5066
    %v5068 = vlaneseq
    %v5069 = vshrl.u32 %v5068, 7
    %v5070 = vsub.s32 %v5067, %v5069
    %v5071 = vrot.slane %v5057, %v5070
    %v5072 = vcombine.high %v5064, %v5064
    %v5073 = vcombine.high %v5071, %v5071
    %v5074 = vcombine.high %v2930, %v2930
    %v5076 = vunpack.c.l.s4 1983009808
    %v5077 = vunpack.c.0.s8 %v5076
    %v5078 = vlaneseq
    %v5079 = vshrl.u32 %v5078, 7
    %v5080 = vsub.s32 %v5077, %v5079
    %v5081 = vrot.slane %v2930, %v5080
    %v5083 = vunpack.c.l.s4 1983009808
    %v5084 = vunpack.c.0.s8 %v5083
    %v5085 = vlaneseq
    %v5086 = vshrl.u32 %v5085, 7
    %v5087 = vsub.s32 %v5084, %v5086
    %v5088 = vrot.slane %v5074, %v5087
    %v5089 = vcombine.high %v5081, %v5081
    %v5090 = vcombine.high %v5088, %v5088
    %v5091 = vcombine.high %v2931, %v2931
    %v5093 = vunpack.c.l.s4 1983009808
    %v5094 = vunpack.c.0.s8 %v5093
    %v5095 = vlaneseq
    %v5096 = vshrl.u32 %v5095, 7
    %v5097 = vsub.s32 %v5094, %v5096
    %v5098 = vrot.slane %v2931, %v5097
    %v5100 = vunpack.c.l.s4 1983009808
    %v5101 = vunpack.c.0.s8 %v5100
    %v5102 = vlaneseq
    %v5103 = vshrl.u32 %v5102, 7
    %v5104 = vsub.s32 %v5101, %v5103
    %v5105 = vrot.slane %v5091, %v5104
    %v5106 = vcombine.high %v5098, %v5098
    %v5107 = vcombine.high %v5105, %v5105
    %v5108 = vcombine.high %v2932, %v2932
    %v5110 = vunpack.c.l.s4 1983009808
    %v5111 = vunpack.c.0.s8 %v5110
    %v5112 = vlaneseq
    %v5113 = vshrl.u32 %v5112, 7
    %v5114 = vsub.s32 %v5111, %v5113
    %v5115 = vrot.slane %v2932, %v5114
    %v5117 = vunpack.c.l.s4 1983009808
    %v5118 = vunpack.c.0.s8 %v5117
    %v5119 = vlaneseq
    %v5120 = vshrl.u32 %v5119, 7
    %v5121 = vsub.s32 %v5118, %v5120
    %v5122 = vrot.slane %v5108, %v5121
    %v5123 = vcombine.high %v5115, %v5115
    %v5124 = vcombine.high %v5122, %v5122
    %v5125 = vcombine.high %v2933, %v2933
    %v5127 = vunpack.c.l.s4 1983009808
    %v5128 = vunpack.c.0.s8 %v5127
    %v5129 = vlaneseq
    %v5130 = vshrl.u32 %v5129, 7
    %v5131 = vsub.s32 %v5128, %v5130
    %v5132 = vrot.slane %v2933, %v5131
    %v5134 = vunpack.c.l.s4 1983009808
    %v5135 = vunpack.c.0.s8 %v5134
    %v5136 = vlaneseq
    %v5137 = vshrl.u32 %v5136, 7
    %v5138 = vsub.s32 %v5135, %v5137
    %v5139 = vrot.slane %v5125, %v5138
    %v5140 = vcombine.high %v5132, %v5132
    %v5141 = vcombine.high %v5139, %v5139
    %v5142 = vcombine.high %v2934, %v2934
    %v5144 = vunpack.c.l.s4 1983009808
    %v5145 = vunpack.c.0.s8 %v5144
    %v5146 = vlaneseq
    %v5147 = vshrl.u32 %v5146, 7
    %v5148 = vsub.s32 %v5145, %v5147
    %v5149 = vrot.slane %v2934, %v5148
    %v5151 = vunpack.c.l.s4 1983009808
    %v5152 = vunpack.c.0.s8 %v5151
    %v5153 = vlaneseq
    %v5154 = vshrl.u32 %v5153, 7
    %v5155 = vsub.s32 %v5152, %v5154
    %v5156 = vrot.slane %v5142, %v5155
    %v5157 = vcombine.high %v5149, %v5149
    %v5158 = vcombine.high %v5156, %v5156
    %v5159 = vcombine.high %v2935, %v2935
    %v5161 = vunpack.c.l.s4 1983009808
    %v5162 = vunpack.c.0.s8 %v5161
    %v5163 = vlaneseq
    %v5164 = vshrl.u32 %v5163, 7
    %v5165 = vsub.s32 %v5162, %v5164
    %v5166 = vrot.slane %v2935, %v5165
    %v5168 = vunpack.c.l.s4 1983009808
    %v5169 = vunpack.c.0.s8 %v5168
    %v5170 = vlaneseq
    %v5171 = vshrl.u32 %v5170, 7
    %v5172 = vsub.s32 %v5169, %v5171
    %v5173 = vrot.slane %v5159, %v5172
    %v5174 = vcombine.high %v5166, %v5166
    %v5175 = vcombine.high %v5173, %v5173
    %v5176 = vcombine.high %v2936, %v2936
    %v5178 = vunpack.c.l.s4 1983009808
    %v5179 = vunpack.c.0.s8 %v5178
    %v5180 = vlaneseq
    %v5181 = vshrl.u32 %v5180, 7
    %v5182 = vsub.s32 %v5179, %v5181
    %v5183 = vrot.slane %v2936, %v5182
    %v5185 = vunpack.c.l.s4 1983009808
    %v5186 = vunpack.c.0.s8 %v5185
    %v5187 = vlaneseq
    %v5188 = vshrl.u32 %v5187, 7
    %v5189 = vsub.s32 %v5186, %v5188
    %v5190 = vrot.slane %v5176, %v5189
    %v5191 = vcombine.high %v5183, %v5183
    %v5192 = vcombine.high %v5190, %v5190
    %v5193 = vcombine.high %v2937, %v2937
    %v5195 = vunpack.c.l.s4 1983009808
    %v5196 = vunpack.c.0.s8 %v5195
    %v5197 = vlaneseq
    %v5198 = vshrl.u32 %v5197, 7
    %v5199 = vsub.s32 %v5196, %v5198
    %v5200 = vrot.slane %v2937, %v5199
    %v5202 = vunpack.c.l.s4 1983009808
    %v5203 = vunpack.c.0.s8 %v5202
    %v5204 = vlaneseq
    %v5205 = vshrl.u32 %v5204, 7
    %v5206 = vsub.s32 %v5203, %v5205
    %v5207 = vrot.slane %v5193, %v5206
    %v5208 = vcombine.high %v5200, %v5200
    %v5209 = vcombine.high %v5207, %v5207
    %v5210 = vcombine.high %v2938, %v2938
    %v5212 = vunpack.c.l.s4 1983009808
    %v5213 = vunpack.c.0.s8 %v5212
    %v5214 = vlaneseq
    %v5215 = vshrl.u32 %v5214, 7
    %v5216 = vsub.s32 %v5213, %v5215
    %v5217 = vrot.slane %v2938, %v5216
    %v5219 = vunpack.c.l.s4 1983009808
    %v5220 = vunpack.c.0.s8 %v5219
    %v5221 = vlaneseq
    %v5222 = vshrl.u32 %v5221, 7
    %v5223 = vsub.s32 %v5220, %v5222
    %v5224 = vrot.slane %v5210, %v5223
    %v5225 = vcombine.high %v5217, %v5217
    %v5226 = vcombine.high %v5224, %v5224
    %v5227 = vcombine.high %v2939, %v2939
    %v5229 = vunpack.c.l.s4 1983009808
    %v5230 = vunpack.c.0.s8 %v5229
    %v5231 = vlaneseq
    %v5232 = vshrl.u32 %v5231, 7
    %v5233 = vsub.s32 %v5230, %v5232
    %v5234 = vrot.slane %v2939, %v5233
    %v5236 = vunpack.c.l.s4 1983009808
    %v5237 = vunpack.c.0.s8 %v5236
    %v5238 = vlaneseq
    %v5239 = vshrl.u32 %v5238, 7
    %v5240 = vsub.s32 %v5237, %v5239
    %v5241 = vrot.slane %v5227, %v5240
    %v5242 = vcombine.high %v5234, %v5234
    %v5243 = vcombine.high %v5241, %v5241
    %v5244 = vcombine.low %v3075, %v3083
    %v5245 = vcombine.low %v3082, %v3084
    %v5247 = vunpack.c.l.s4 1983009808
    %v5248 = vunpack.c.0.s8 %v5247
    %v5249 = vlaneseq
    %v5250 = vshrl.u32 %v5249, 7
    %v5251 = vsub.s32 %v5248, %v5250
    %v5252 = vrot.slane %v5244, %v5251
    %v5254 = vunpack.c.l.s4 1983009808
    %v5255 = vunpack.c.0.s8 %v5254
    %v5256 = vlaneseq
    %v5257 = vshrl.u32 %v5256, 7
    %v5258 = vsub.s32 %v5255, %v5257
    %v5259 = vrot.slane %v5245, %v5258
    %v5260 = vcombine.low %v5252, %v5259
    %v5261 = vcombine.low %v3092, %v3100
    %v5262 = vcombine.low %v3099, %v3101
    %v5264 = vunpack.c.l.s4 1983009808
    %v5265 = vunpack.c.0.s8 %v5264
    %v5266 = vlaneseq
    %v5267 = vshrl.u32 %v5266, 7
    %v5268 = vsub.s32 %v5265, %v5267
    %v5269 = vrot.slane %v5261, %v5268
    %v5271 = vunpack.c.l.s4 1983009808
    %v5272 = vunpack.c.0.s8 %v5271
    %v5273 = vlaneseq
    %v5274 = vshrl.u32 %v5273, 7
    %v5275 = vsub.s32 %v5272, %v5274
    %v5276 = vrot.slane %v5262, %v5275
    %v5277 = vcombine.low %v5269, %v5276
    %v5278 = vcombine.low %v3109, %v3117
    %v5279 = vcombine.low %v3116, %v3118
    %v5281 = vunpack.c.l.s4 1983009808
    %v5282 = vunpack.c.0.s8 %v5281
    %v5283 = vlaneseq
    %v5284 = vshrl.u32 %v5283, 7
    %v5285 = vsub.s32 %v5282, %v5284
    %v5286 = vrot.slane %v5278, %v5285
    %v5288 = vunpack.c.l.s4 1983009808
    %v5289 = vunpack.c.0.s8 %v5288
    %v5290 = vlaneseq
    %v5291 = vshrl.u32 %v5290, 7
    %v5292 = vsub.s32 %v5289, %v5291
    %v5293 = vrot.slane %v5279, %v5292
    %v5294 = vcombine.low %v5286, %v5293
    %v5295 = vcombine.low %v3126, %v3134
    %v5296 = vcombine.low %v3133, %v3135
    %v5298 = vunpack.c.l.s4 1983009808
    %v5299 = vunpack.c.0.s8 %v5298
    %v5300 = vlaneseq
    %v5301 = vshrl.u32 %v5300, 7
    %v5302 = vsub.s32 %v5299, %v5301
    %v5303 = vrot.slane %v5295, %v5302
    %v5305 = vunpack.c.l.s4 1983009808
    %v5306 = vunpack.c.0.s8 %v5305
    %v5307 = vlaneseq
    %v5308 = vshrl.u32 %v5307, 7
    %v5309 = vsub.s32 %v5306, %v5308
    %v5310 = vrot.slane %v5296, %v5309
    %v5311 = vcombine.low %v5303, %v5310
    %v5312 = vcombine.low %v3143, %v3151
    %v5313 = vcombine.low %v3150, %v3152
    %v5315 = vunpack.c.l.s4 1983009808
    %v5316 = vunpack.c.0.s8 %v5315
    %v5317 = vlaneseq
    %v5318 = vshrl.u32 %v5317, 7
    %v5319 = vsub.s32 %v5316, %v5318
    %v5320 = vrot.slane %v5312, %v5319
    %v5322 = vunpack.c.l.s4 1983009808
    %v5323 = vunpack.c.0.s8 %v5322
    %v5324 = vlaneseq
    %v5325 = vshrl.u32 %v5324, 7
    %v5326 = vsub.s32 %v5323, %v5325
    %v5327 = vrot.slane %v5313, %v5326
    %v5328 = vcombine.low %v5320, %v5327
    %v5329 = vcombine.low %v3160, %v3168
    %v5330 = vcombine.low %v3167, %v3169
    %v5332 = vunpack.c.l.s4 1983009808
    %v5333 = vunpack.c.0.s8 %v5332
    %v5334 = vlaneseq
    %v5335 = vshrl.u32 %v5334, 7
    %v5336 = vsub.s32 %v5333, %v5335
    %v5337 = vrot.slane %v5329, %v5336
    %v5339 = vunpack.c.l.s4 1983009808
    %v5340 = vunpack.c.0.s8 %v5339
    %v5341 = vlaneseq
    %v5342 = vshrl.u32 %v5341, 7
    %v5343 = vsub.s32 %v5340, %v5342
    %v5344 = vrot.slane %v5330, %v5343
    %v5345 = vcombine.low %v5337, %v5344
    %v5346 = vcombine.low %v3177, %v3185
    %v5347 = vcombine.low %v3184, %v3186
    %v5349 = vunpack.c.l.s4 1983009808
    %v5350 = vunpack.c.0.s8 %v5349
    %v5351 = vlaneseq
    %v5352 = vshrl.u32 %v5351, 7
    %v5353 = vsub.s32 %v5350, %v5352
    %v5354 = vrot.slane %v5346, %v5353
    %v5356 = vunpack.c.l.s4 1983009808
    %v5357 = vunpack.c.0.s8 %v5356
    %v5358 = vlaneseq
    %v5359 = vshrl.u32 %v5358, 7
    %v5360 = vsub.s32 %v5357, %v5359
    %v5361 = vrot.slane %v5347, %v5360
    %v5362 = vcombine.low %v5354, %v5361
    %v5363 = vcombine.low %v3194, %v3202
    %v5364 = vcombine.low %v3201, %v3203
    %v5366 = vunpack.c.l.s4 1983009808
    %v5367 = vunpack.c.0.s8 %v5366
    %v5368 = vlaneseq
    %v5369 = vshrl.u32 %v5368, 7
    %v5370 = vsub.s32 %v5367, %v5369
    %v5371 = vrot.slane %v5363, %v5370
    %v5373 = vunpack.c.l.s4 1983009808
    %v5374 = vunpack.c.0.s8 %v5373
    %v5375 = vlaneseq
    %v5376 = vshrl.u32 %v5375, 7
    %v5377 = vsub.s32 %v5374, %v5376
    %v5378 = vrot.slane %v5364, %v5377
    %v5379 = vcombine.low %v5371, %v5378
    %v5380 = vcombine.low %v3211, %v3219
    %v5381 = vcombine.low %v3218, %v3220
    %v5383 = vunpack.c.l.s4 1983009808
    %v5384 = vunpack.c.0.s8 %v5383
    %v5385 = vlaneseq
    %v5386 = vshrl.u32 %v5385, 7
    %v5387 = vsub.s32 %v5384, %v5386
    %v5388 = vrot.slane %v5380, %v5387
    %v5390 = vunpack.c.l.s4 1983009808
    %v5391 = vunpack.c.0.s8 %v5390
    %v5392 = vlaneseq
    %v5393 = vshrl.u32 %v5392, 7
    %v5394 = vsub.s32 %v5391, %v5393
    %v5395 = vrot.slane %v5381, %v5394
    %v5396 = vcombine.low %v5388, %v5395
    %v5397 = vcombine.low %v3228, %v3236
    %v5398 = vcombine.low %v3235, %v3237
    %v5400 = vunpack.c.l.s4 1983009808
    %v5401 = vunpack.c.0.s8 %v5400
    %v5402 = vlaneseq
    %v5403 = vshrl.u32 %v5402, 7
    %v5404 = vsub.s32 %v5401, %v5403
    %v5405 = vrot.slane %v5397, %v5404
    %v5407 = vunpack.c.l.s4 1983009808
    %v5408 = vunpack.c.0.s8 %v5407
    %v5409 = vlaneseq
    %v5410 = vshrl.u32 %v5409, 7
    %v5411 = vsub.s32 %v5408, %v5410
    %v5412 = vrot.slane %v5398, %v5411
    %v5413 = vcombine.low %v5405, %v5412
    %v5414 = vcombine.low %v3245, %v3253
    %v5415 = vcombine.low %v3252, %v3254
    %v5417 = vunpack.c.l.s4 1983009808
    %v5418 = vunpack.c.0.s8 %v5417
    %v5419 = vlaneseq
    %v5420 = vshrl.u32 %v5419, 7
    %v5421 = vsub.s32 %v5418, %v5420
    %v5422 = vrot.slane %v5414, %v5421
    %v5424 = vunpack.c.l.s4 1983009808
    %v5425 = vunpack.c.0.s8 %v5424
    %v5426 = vlaneseq
    %v5427 = vshrl.u32 %v5426, 7
    %v5428 = vsub.s32 %v5425, %v5427
    %v5429 = vrot.slane %v5415, %v5428
    %v5430 = vcombine.low %v5422, %v5429
    %v5431 = vcombine.low %v3262, %v3270
    %v5432 = vcombine.low %v3269, %v3271
    %v5434 = vunpack.c.l.s4 1983009808
    %v5435 = vunpack.c.0.s8 %v5434
    %v5436 = vlaneseq
    %v5437 = vshrl.u32 %v5436, 7
    %v5438 = vsub.s32 %v5435, %v5437
    %v5439 = vrot.slane %v5431, %v5438
    %v5441 = vunpack.c.l.s4 1983009808
    %v5442 = vunpack.c.0.s8 %v5441
    %v5443 = vlaneseq
    %v5444 = vshrl.u32 %v5443, 7
    %v5445 = vsub.s32 %v5442, %v5444
    %v5446 = vrot.slane %v5432, %v5445
    %v5447 = vcombine.low %v5439, %v5446
    %v5448 = vcombine.low %v3279, %v3287
    %v5449 = vcombine.low %v3286, %v3288
    %v5451 = vunpack.c.l.s4 1983009808
    %v5452 = vunpack.c.0.s8 %v5451
    %v5453 = vlaneseq
    %v5454 = vshrl.u32 %v5453, 7
    %v5455 = vsub.s32 %v5452, %v5454
    %v5456 = vrot.slane %v5448, %v5455
    %v5458 = vunpack.c.l.s4 1983009808
    %v5459 = vunpack.c.0.s8 %v5458
    %v5460 = vlaneseq
    %v5461 = vshrl.u32 %v5460, 7
    %v5462 = vsub.s32 %v5459, %v5461
    %v5463 = vrot.slane %v5449, %v5462
    %v5464 = vcombine.low %v5456, %v5463
    %v5465 = vcombine.low %v3296, %v3304
    %v5466 = vcombine.low %v3303, %v3305
    %v5468 = vunpack.c.l.s4 1983009808
    %v5469 = vunpack.c.0.s8 %v5468
    %v5470 = vlaneseq
    %v5471 = vshrl.u32 %v5470, 7
    %v5472 = vsub.s32 %v5469, %v5471
    %v5473 = vrot.slane %v5465, %v5472
    %v5475 = vunpack.c.l.s4 1983009808
    %v5476 = vunpack.c.0.s8 %v5475
    %v5477 = vlaneseq
    %v5478 = vshrl.u32 %v5477, 7
    %v5479 = vsub.s32 %v5476, %v5478
    %v5480 = vrot.slane %v5466, %v5479
    %v5481 = vcombine.low %v5473, %v5480
    %v5482 = vcombine.low %v3313, %v3321
    %v5483 = vcombine.low %v3320, %v3322
    %v5485 = vunpack.c.l.s4 1983009808
    %v5486 = vunpack.c.0.s8 %v5485
    %v5487 = vlaneseq
    %v5488 = vshrl.u32 %v5487, 7
    %v5489 = vsub.s32 %v5486, %v5488
    %v5490 = vrot.slane %v5482, %v5489
    %v5492 = vunpack.c.l.s4 1983009808
    %v5493 = vunpack.c.0.s8 %v5492
    %v5494 = vlaneseq
    %v5495 = vshrl.u32 %v5494, 7
    %v5496 = vsub.s32 %v5493, %v5495
    %v5497 = vrot.slane %v5483, %v5496
    %v5498 = vcombine.low %v5490, %v5497
    %v5499 = vcombine.low %v3330, %v3338
    %v5500 = vcombine.low %v3337, %v3339
    %v5502 = vunpack.c.l.s4 1983009808
    %v5503 = vunpack.c.0.s8 %v5502
    %v5504 = vlaneseq
    %v5505 = vshrl.u32 %v5504, 7
    %v5506 = vsub.s32 %v5503, %v5505
    %v5507 = vrot.slane %v5499, %v5506
    %v5509 = vunpack.c.l.s4 1983009808
    %v5510 = vunpack.c.0.s8 %v5509
    %v5511 = vlaneseq
    %v5512 = vshrl.u32 %v5511, 7
    %v5513 = vsub.s32 %v5510, %v5512
    %v5514 = vrot.slane %v5500, %v5513
    %v5515 = vcombine.low %v5507, %v5514
    %v5516 = vcombine.low %v3347, %v3355
    %v5517 = vcombine.low %v3354, %v3356
    %v5519 = vunpack.c.l.s4 1983009808
    %v5520 = vunpack.c.0.s8 %v5519
    %v5521 = vlaneseq
    %v5522 = vshrl.u32 %v5521, 7
    %v5523 = vsub.s32 %v5520, %v5522
    %v5524 = vrot.slane %v5516, %v5523
    %v5526 = vunpack.c.l.s4 1983009808
    %v5527 = vunpack.c.0.s8 %v5526
    %v5528 = vlaneseq
    %v5529 = vshrl.u32 %v5528, 7
    %v5530 = vsub.s32 %v5527, %v5529
    %v5531 = vrot.slane %v5517, %v5530
    %v5532 = vcombine.low %v5524, %v5531
    %v5533 = vcombine.low %v3364, %v3372
    %v5534 = vcombine.low %v3371, %v3373
    %v5536 = vunpack.c.l.s4 1983009808
    %v5537 = vunpack.c.0.s8 %v5536
    %v5538 = vlaneseq
    %v5539 = vshrl.u32 %v5538, 7
    %v5540 = vsub.s32 %v5537, %v5539
    %v5541 = vrot.slane %v5533, %v5540
    %v5543 = vunpack.c.l.s4 1983009808
    %v5544 = vunpack.c.0.s8 %v5543
    %v5545 = vlaneseq
    %v5546 = vshrl.u32 %v5545, 7
    %v5547 = vsub.s32 %v5544, %v5546
    %v5548 = vrot.slane %v5534, %v5547
    %v5549 = vcombine.low %v5541, %v5548
    %v5550 = vcombine.low %v3381, %v3389
    %v5551 = vcombine.low %v3388, %v3390
    %v5553 = vunpack.c.l.s4 1983009808
    %v5554 = vunpack.c.0.s8 %v5553
    %v5555 = vlaneseq
    %v5556 = vshrl.u32 %v5555, 7
    %v5557 = vsub.s32 %v5554, %v5556
    %v5558 = vrot.slane %v5550, %v5557
    %v5560 = vunpack.c.l.s4 1983009808
    %v5561 = vunpack.c.0.s8 %v5560
    %v5562 = vlaneseq
    %v5563 = vshrl.u32 %v5562, 7
    %v5564 = vsub.s32 %v5561, %v5563
    %v5565 = vrot.slane %v5551, %v5564
    %v5566 = vcombine.low %v5558, %v5565
    %v5567 = vcombine.low %v3398, %v3406
    %v5568 = vcombine.low %v3405, %v3407
    %v5570 = vunpack.c.l.s4 1983009808
    %v5571 = vunpack.c.0.s8 %v5570
    %v5572 = vlaneseq
    %v5573 = vshrl.u32 %v5572, 7
    %v5574 = vsub.s32 %v5571, %v5573
    %v5575 = vrot.slane %v5567, %v5574
    %v5577 = vunpack.c.l.s4 1983009808
    %v5578 = vunpack.c.0.s8 %v5577
    %v5579 = vlaneseq
    %v5580 = vshrl.u32 %v5579, 7
    %v5581 = vsub.s32 %v5578, %v5580
    %v5582 = vrot.slane %v5568, %v5581
    %v5583 = vcombine.low %v5575, %v5582
    %v5584 = vcombine.low %v3415, %v3423
    %v5585 = vcombine.low %v3422, %v3424
    %v5587 = vunpack.c.l.s4 1983009808
    %v5588 = vunpack.c.0.s8 %v5587
    %v5589 = vlaneseq
    %v5590 = vshrl.u32 %v5589, 7
    %v5591 = vsub.s32 %v5588, %v5590
    %v5592 = vrot.slane %v5584, %v5591
    %v5594 = vunpack.c.l.s4 1983009808
    %v5595 = vunpack.c.0.s8 %v5594
    %v5596 = vlaneseq
    %v5597 = vshrl.u32 %v5596, 7
    %v5598 = vsub.s32 %v5595, %v5597
    %v5599 = vrot.slane %v5585, %v5598
    %v5600 = vcombine.low %v5592, %v5599
    %v5601 = vcombine.low %v3432, %v3440
    %v5602 = vcombine.low %v3439, %v3441
    %v5604 = vunpack.c.l.s4 1983009808
    %v5605 = vunpack.c.0.s8 %v5604
    %v5606 = vlaneseq
    %v5607 = vshrl.u32 %v5606, 7
    %v5608 = vsub.s32 %v5605, %v5607
    %v5609 = vrot.slane %v5601, %v5608
    %v5611 = vunpack.c.l.s4 1983009808
    %v5612 = vunpack.c.0.s8 %v5611
    %v5613 = vlaneseq
    %v5614 = vshrl.u32 %v5613, 7
    %v5615 = vsub.s32 %v5612, %v5614
    %v5616 = vrot.slane %v5602, %v5615
    %v5617 = vcombine.low %v5609, %v5616
    %v5618 = vcombine.low %v3449, %v3457
    %v5619 = vcombine.low %v3456, %v3458
    %v5621 = vunpack.c.l.s4 1983009808
    %v5622 = vunpack.c.0.s8 %v5621
    %v5623 = vlaneseq
    %v5624 = vshrl.u32 %v5623, 7
    %v5625 = vsub.s32 %v5622, %v5624
    %v5626 = vrot.slane %v5618, %v5625
    %v5628 = vunpack.c.l.s4 1983009808
    %v5629 = vunpack.c.0.s8 %v5628
    %v5630 = vlaneseq
    %v5631 = vshrl.u32 %v5630, 7
    %v5632 = vsub.s32 %v5629, %v5631
    %v5633 = vrot.slane %v5619, %v5632
    %v5634 = vcombine.low %v5626, %v5633
    %v5635 = vcombine.low %v3466, %v3474
    %v5636 = vcombine.low %v3473, %v3475
    %v5638 = vunpack.c.l.s4 1983009808
    %v5639 = vunpack.c.0.s8 %v5638
    %v5640 = vlaneseq
    %v5641 = vshrl.u32 %v5640, 7
    %v5642 = vsub.s32 %v5639, %v5641
    %v5643 = vrot.slane %v5635, %v5642
    %v5645 = vunpack.c.l.s4 1983009808
    %v5646 = vunpack.c.0.s8 %v5645
    %v5647 = vlaneseq
    %v5648 = vshrl.u32 %v5647, 7
    %v5649 = vsub.s32 %v5646, %v5648
    %v5650 = vrot.slane %v5636, %v5649
    %v5651 = vcombine.low %v5643, %v5650
    %v5652 = vcombine.low %v3483, %v3491
    %v5653 = vcombine.low %v3490, %v3492
    %v5655 = vunpack.c.l.s4 1983009808
    %v5656 = vunpack.c.0.s8 %v5655
    %v5657 = vlaneseq
    %v5658 = vshrl.u32 %v5657, 7
    %v5659 = vsub.s32 %v5656, %v5658
    %v5660 = vrot.slane %v5652, %v5659
    %v5662 = vunpack.c.l.s4 1983009808
    %v5663 = vunpack.c.0.s8 %v5662
    %v5664 = vlaneseq
    %v5665 = vshrl.u32 %v5664, 7
    %v5666 = vsub.s32 %v5663, %v5665
    %v5667 = vrot.slane %v5653, %v5666
    %v5668 = vcombine.low %v5660, %v5667
    %v5669 = vcombine.low %v3500, %v3508
    %v5670 = vcombine.low %v3507, %v3509
    %v5672 = vunpack.c.l.s4 1983009808
    %v5673 = vunpack.c.0.s8 %v5672
    %v5674 = vlaneseq
    %v5675 = vshrl.u32 %v5674, 7
    %v5676 = vsub.s32 %v5673, %v5675
    %v5677 = vrot.slane %v5669, %v5676
    %v5679 = vunpack.c.l.s4 1983009808
    %v5680 = vunpack.c.0.s8 %v5679
    %v5681 = vlaneseq
    %v5682 = vshrl.u32 %v5681, 7
    %v5683 = vsub.s32 %v5680, %v5682
    %v5684 = vrot.slane %v5670, %v5683
    %v5685 = vcombine.low %v5677, %v5684
    %v5686 = vcombine.low %v3517, %v3525
    %v5687 = vcombine.low %v3524, %v3526
    %v5689 = vunpack.c.l.s4 1983009808
    %v5690 = vunpack.c.0.s8 %v5689
    %v5691 = vlaneseq
    %v5692 = vshrl.u32 %v5691, 7
    %v5693 = vsub.s32 %v5690, %v5692
    %v5694 = vrot.slane %v5686, %v5693
    %v5696 = vunpack.c.l.s4 1983009808
    %v5697 = vunpack.c.0.s8 %v5696
    %v5698 = vlaneseq
    %v5699 = vshrl.u32 %v5698, 7
    %v5700 = vsub.s32 %v5697, %v5699
    %v5701 = vrot.slane %v5687, %v5700
    %v5702 = vcombine.low %v5694, %v5701
    %v5703 = vcombine.low %v3534, %v3542
    %v5704 = vcombine.low %v3541, %v3543
    %v5706 = vunpack.c.l.s4 1983009808
    %v5707 = vunpack.c.0.s8 %v5706
    %v5708 = vlaneseq
    %v5709 = vshrl.u32 %v5708, 7
    %v5710 = vsub.s32 %v5707, %v5709
    %v5711 = vrot.slane %v5703, %v5710
    %v5713 = vunpack.c.l.s4 1983009808
    %v5714 = vunpack.c.0.s8 %v5713
    %v5715 = vlaneseq
    %v5716 = vshrl.u32 %v5715, 7
    %v5717 = vsub.s32 %v5714, %v5716
    %v5718 = vrot.slane %v5704, %v5717
    %v5719 = vcombine.low %v5711, %v5718
    %v5720 = vcombine.low %v3551, %v3559
    %v5721 = vcombine.low %v3558, %v3560
    %v5723 = vunpack.c.l.s4 1983009808
    %v5724 = vunpack.c.0.s8 %v5723
    %v5725 = vlaneseq
    %v5726 = vshrl.u32 %v5725, 7
    %v5727 = vsub.s32 %v5724, %v5726
    %v5728 = vrot.slane %v5720, %v5727
    %v5730 = vunpack.c.l.s4 1983009808
    %v5731 = vunpack.c.0.s8 %v5730
    %v5732 = vlaneseq
    %v5733 = vshrl.u32 %v5732, 7
    %v5734 = vsub.s32 %v5731, %v5733
    %v5735 = vrot.slane %v5721, %v5734
    %v5736 = vcombine.low %v5728, %v5735
    %v5737 = vcombine.low %v3568, %v3576
    %v5738 = vcombine.low %v3575, %v3577
    %v5740 = vunpack.c.l.s4 1983009808
    %v5741 = vunpack.c.0.s8 %v5740
    %v5742 = vlaneseq
    %v5743 = vshrl.u32 %v5742, 7
    %v5744 = vsub.s32 %v5741, %v5743
    %v5745 = vrot.slane %v5737, %v5744
    %v5747 = vunpack.c.l.s4 1983009808
    %v5748 = vunpack.c.0.s8 %v5747
    %v5749 = vlaneseq
    %v5750 = vshrl.u32 %v5749, 7
    %v5751 = vsub.s32 %v5748, %v5750
    %v5752 = vrot.slane %v5738, %v5751
    %v5753 = vcombine.low %v5745, %v5752
    %v5754 = vcombine.low %v3585, %v3593
    %v5755 = vcombine.low %v3592, %v3594
    %v5757 = vunpack.c.l.s4 1983009808
    %v5758 = vunpack.c.0.s8 %v5757
    %v5759 = vlaneseq
    %v5760 = vshrl.u32 %v5759, 7
    %v5761 = vsub.s32 %v5758, %v5760
    %v5762 = vrot.slane %v5754, %v5761
    %v5764 = vunpack.c.l.s4 1983009808
    %v5765 = vunpack.c.0.s8 %v5764
    %v5766 = vlaneseq
    %v5767 = vshrl.u32 %v5766, 7
    %v5768 = vsub.s32 %v5765, %v5767
    %v5769 = vrot.slane %v5755, %v5768
    %v5770 = vcombine.low %v5762, %v5769
    %v5771 = vcombine.low %v3602, %v3610
    %v5772 = vcombine.low %v3609, %v3611
    %v5774 = vunpack.c.l.s4 1983009808
    %v5775 = vunpack.c.0.s8 %v5774
    %v5776 = vlaneseq
    %v5777 = vshrl.u32 %v5776, 7
    %v5778 = vsub.s32 %v5775, %v5777
    %v5779 = vrot.slane %v5771, %v5778
    %v5781 = vunpack.c.l.s4 1983009808
    %v5782 = vunpack.c.0.s8 %v5781
    %v5783 = vlaneseq
    %v5784 = vshrl.u32 %v5783, 7
    %v5785 = vsub.s32 %v5782, %v5784
    %v5786 = vrot.slane %v5772, %v5785
    %v5787 = vcombine.low %v5779, %v5786
    %v5788 = vcombine.low %v3619, %v3627
    %v5789 = vcombine.low %v3626, %v3628
    %v5791 = vunpack.c.l.s4 1983009808
    %v5792 = vunpack.c.0.s8 %v5791
    %v5793 = vlaneseq
    %v5794 = vshrl.u32 %v5793, 7
    %v5795 = vsub.s32 %v5792, %v5794
    %v5796 = vrot.slane %v5788, %v5795
    %v5798 = vunpack.c.l.s4 1983009808
    %v5799 = vunpack.c.0.s8 %v5798
    %v5800 = vlaneseq
    %v5801 = vshrl.u32 %v5800, 7
    %v5802 = vsub.s32 %v5799, %v5801
    %v5803 = vrot.slane %v5789, %v5802
    %v5804 = vcombine.low %v5796, %v5803
    %v5805 = vcombine.low %v3636, %v3644
    %v5806 = vcombine.low %v3643, %v3645
    %v5808 = vunpack.c.l.s4 1983009808
    %v5809 = vunpack.c.0.s8 %v5808
    %v5810 = vlaneseq
    %v5811 = vshrl.u32 %v5810, 7
    %v5812 = vsub.s32 %v5809, %v5811
    %v5813 = vrot.slane %v5805, %v5812
    %v5815 = vunpack.c.l.s4 1983009808
    %v5816 = vunpack.c.0.s8 %v5815
    %v5817 = vlaneseq
    %v5818 = vshrl.u32 %v5817, 7
    %v5819 = vsub.s32 %v5816, %v5818
    %v5820 = vrot.slane %v5806, %v5819
    %v5821 = vcombine.low %v5813, %v5820
    %v5822 = vcombine.low %v3653, %v3661
    %v5823 = vcombine.low %v3660, %v3662
    %v5825 = vunpack.c.l.s4 1983009808
    %v5826 = vunpack.c.0.s8 %v5825
    %v5827 = vlaneseq
    %v5828 = vshrl.u32 %v5827, 7
    %v5829 = vsub.s32 %v5826, %v5828
    %v5830 = vrot.slane %v5822, %v5829
    %v5832 = vunpack.c.l.s4 1983009808
    %v5833 = vunpack.c.0.s8 %v5832
    %v5834 = vlaneseq
    %v5835 = vshrl.u32 %v5834, 7
    %v5836 = vsub.s32 %v5833, %v5835
    %v5837 = vrot.slane %v5823, %v5836
    %v5838 = vcombine.low %v5830, %v5837
    %v5839 = vcombine.low %v3670, %v3678
    %v5840 = vcombine.low %v3677, %v3679
    %v5842 = vunpack.c.l.s4 1983009808
    %v5843 = vunpack.c.0.s8 %v5842
    %v5844 = vlaneseq
    %v5845 = vshrl.u32 %v5844, 7
    %v5846 = vsub.s32 %v5843, %v5845
    %v5847 = vrot.slane %v5839, %v5846
    %v5849 = vunpack.c.l.s4 1983009808
    %v5850 = vunpack.c.0.s8 %v5849
    %v5851 = vlaneseq
    %v5852 = vshrl.u32 %v5851, 7
    %v5853 = vsub.s32 %v5850, %v5852
    %v5854 = vrot.slane %v5840, %v5853
    %v5855 = vcombine.low %v5847, %v5854
    %v5856 = vcombine.low %v3687, %v3695
    %v5857 = vcombine.low %v3694, %v3696
    %v5859 = vunpack.c.l.s4 1983009808
    %v5860 = vunpack.c.0.s8 %v5859
    %v5861 = vlaneseq
    %v5862 = vshrl.u32 %v5861, 7
    %v5863 = vsub.s32 %v5860, %v5862
    %v5864 = vrot.slane %v5856, %v5863
    %v5866 = vunpack.c.l.s4 1983009808
    %v5867 = vunpack.c.0.s8 %v5866
    %v5868 = vlaneseq
    %v5869 = vshrl.u32 %v5868, 7
    %v5870 = vsub.s32 %v5867, %v5869
    %v5871 = vrot.slane %v5857, %v5870
    %v5872 = vcombine.low %v5864, %v5871
    %v5873 = vcombine.low %v3704, %v3712
    %v5874 = vcombine.low %v3711, %v3713
    %v5876 = vunpack.c.l.s4 1983009808
    %v5877 = vunpack.c.0.s8 %v5876
    %v5878 = vlaneseq
    %v5879 = vshrl.u32 %v5878, 7
    %v5880 = vsub.s32 %v5877, %v5879
    %v5881 = vrot.slane %v5873, %v5880
    %v5883 = vunpack.c.l.s4 1983009808
    %v5884 = vunpack.c.0.s8 %v5883
    %v5885 = vlaneseq
    %v5886 = vshrl.u32 %v5885, 7
    %v5887 = vsub.s32 %v5884, %v5886
    %v5888 = vrot.slane %v5874, %v5887
    %v5889 = vcombine.low %v5881, %v5888
    %v5890 = vcombine.low %v3721, %v3729
    %v5891 = vcombine.low %v3728, %v3730
    %v5893 = vunpack.c.l.s4 1983009808
    %v5894 = vunpack.c.0.s8 %v5893
    %v5895 = vlaneseq
    %v5896 = vshrl.u32 %v5895, 7
    %v5897 = vsub.s32 %v5894, %v5896
    %v5898 = vrot.slane %v5890, %v5897
    %v5900 = vunpack.c.l.s4 1983009808
    %v5901 = vunpack.c.0.s8 %v5900
    %v5902 = vlaneseq
    %v5903 = vshrl.u32 %v5902, 7
    %v5904 = vsub.s32 %v5901, %v5903
    %v5905 = vrot.slane %v5891, %v5904
    %v5906 = vcombine.low %v5898, %v5905
    %v5907 = vcombine.low %v3738, %v3746
    %v5908 = vcombine.low %v3745, %v3747
    %v5910 = vunpack.c.l.s4 1983009808
    %v5911 = vunpack.c.0.s8 %v5910
    %v5912 = vlaneseq
    %v5913 = vshrl.u32 %v5912, 7
    %v5914 = vsub.s32 %v5911, %v5913
    %v5915 = vrot.slane %v5907, %v5914
    %v5917 = vunpack.c.l.s4 1983009808
    %v5918 = vunpack.c.0.s8 %v5917
    %v5919 = vlaneseq
    %v5920 = vshrl.u32 %v5919, 7
    %v5921 = vsub.s32 %v5918, %v5920
    %v5922 = vrot.slane %v5908, %v5921
    %v5923 = vcombine.low %v5915, %v5922
    %v5924 = vcombine.low %v3755, %v3763
    %v5925 = vcombine.low %v3762, %v3764
    %v5927 = vunpack.c.l.s4 1983009808
    %v5928 = vunpack.c.0.s8 %v5927
    %v5929 = vlaneseq
    %v5930 = vshrl.u32 %v5929, 7
    %v5931 = vsub.s32 %v5928, %v5930
    %v5932 = vrot.slane %v5924, %v5931
    %v5934 = vunpack.c.l.s4 1983009808
    %v5935 = vunpack.c.0.s8 %v5934
    %v5936 = vlaneseq
    %v5937 = vshrl.u32 %v5936, 7
    %v5938 = vsub.s32 %v5935, %v5937
    %v5939 = vrot.slane %v5925, %v5938
    %v5940 = vcombine.low %v5932, %v5939
    %v5941 = vcombine.low %v3772, %v3780
    %v5942 = vcombine.low %v3779, %v3781
    %v5944 = vunpack.c.l.s4 1983009808
    %v5945 = vunpack.c.0.s8 %v5944
    %v5946 = vlaneseq
    %v5947 = vshrl.u32 %v5946, 7
    %v5948 = vsub.s32 %v5945, %v5947
    %v5949 = vrot.slane %v5941, %v5948
    %v5951 = vunpack.c.l.s4 1983009808
    %v5952 = vunpack.c.0.s8 %v5951
    %v5953 = vlaneseq
    %v5954 = vshrl.u32 %v5953, 7
    %v5955 = vsub.s32 %v5952, %v5954
    %v5956 = vrot.slane %v5942, %v5955
    %v5957 = vcombine.low %v5949, %v5956
    %v5958 = vcombine.low %v3789, %v3797
    %v5959 = vcombine.low %v3796, %v3798
    %v5961 = vunpack.c.l.s4 1983009808
    %v5962 = vunpack.c.0.s8 %v5961
    %v5963 = vlaneseq
    %v5964 = vshrl.u32 %v5963, 7
    %v5965 = vsub.s32 %v5962, %v5964
    %v5966 = vrot.slane %v5958, %v5965
    %v5968 = vunpack.c.l.s4 1983009808
    %v5969 = vunpack.c.0.s8 %v5968
    %v5970 = vlaneseq
    %v5971 = vshrl.u32 %v5970, 7
    %v5972 = vsub.s32 %v5969, %v5971
    %v5973 = vrot.slane %v5959, %v5972
    %v5974 = vcombine.low %v5966, %v5973
    %v5975 = vcombine.low %v3806, %v3814
    %v5976 = vcombine.low %v3813, %v3815
    %v5978 = vunpack.c.l.s4 1983009808
    %v5979 = vunpack.c.0.s8 %v5978
    %v5980 = vlaneseq
    %v5981 = vshrl.u32 %v5980, 7
    %v5982 = vsub.s32 %v5979, %v5981
    %v5983 = vrot.slane %v5975, %v5982
    %v5985 = vunpack.c.l.s4 1983009808
    %v5986 = vunpack.c.0.s8 %v5985
    %v5987 = vlaneseq
    %v5988 = vshrl.u32 %v5987, 7
    %v5989 = vsub.s32 %v5986, %v5988
    %v5990 = vrot.slane %v5976, %v5989
    %v5991 = vcombine.low %v5983, %v5990
    %v5992 = vcombine.low %v3823, %v3831
    %v5993 = vcombine.low %v3830, %v3832
    %v5995 = vunpack.c.l.s4 1983009808
    %v5996 = vunpack.c.0.s8 %v5995
    %v5997 = vlaneseq
    %v5998 = vshrl.u32 %v5997, 7
    %v5999 = vsub.s32 %v5996, %v5998
    %v6000 = vrot.slane %v5992, %v5999
    %v6002 = vunpack.c.l.s4 1983009808
    %v6003 = vunpack.c.0.s8 %v6002
    %v6004 = vlaneseq
    %v6005 = vshrl.u32 %v6004, 7
    %v6006 = vsub.s32 %v6003, %v6005
    %v6007 = vrot.slane %v5993, %v6006
    %v6008 = vcombine.low %v6000, %v6007
    %v6009 = vcombine.low %v3840, %v3848
    %v6010 = vcombine.low %v3847, %v3849
    %v6012 = vunpack.c.l.s4 1983009808
    %v6013 = vunpack.c.0.s8 %v6012
    %v6014 = vlaneseq
    %v6015 = vshrl.u32 %v6014, 7
    %v6016 = vsub.s32 %v6013, %v6015
    %v6017 = vrot.slane %v6009, %v6016
    %v6019 = vunpack.c.l.s4 1983009808
    %v6020 = vunpack.c.0.s8 %v6019
    %v6021 = vlaneseq
    %v6022 = vshrl.u32 %v6021, 7
    %v6023 = vsub.s32 %v6020, %v6022
    %v6024 = vrot.slane %v6010, %v6023
    %v6025 = vcombine.low %v6017, %v6024
    %v6026 = vcombine.low %v3857, %v3865
    %v6027 = vcombine.low %v3864, %v3866
    %v6029 = vunpack.c.l.s4 1983009808
    %v6030 = vunpack.c.0.s8 %v6029
    %v6031 = vlaneseq
    %v6032 = vshrl.u32 %v6031, 7
    %v6033 = vsub.s32 %v6030, %v6032
    %v6034 = vrot.slane %v6026, %v6033
    %v6036 = vunpack.c.l.s4 1983009808
    %v6037 = vunpack.c.0.s8 %v6036
    %v6038 = vlaneseq
    %v6039 = vshrl.u32 %v6038, 7
    %v6040 = vsub.s32 %v6037, %v6039
    %v6041 = vrot.slane %v6027, %v6040
    %v6042 = vcombine.low %v6034, %v6041
    %v6043 = vcombine.low %v3874, %v3882
    %v6044 = vcombine.low %v3881, %v3883
    %v6046 = vunpack.c.l.s4 1983009808
    %v6047 = vunpack.c.0.s8 %v6046
    %v6048 = vlaneseq
    %v6049 = vshrl.u32 %v6048, 7
    %v6050 = vsub.s32 %v6047, %v6049
    %v6051 = vrot.slane %v6043, %v6050
    %v6053 = vunpack.c.l.s4 1983009808
    %v6054 = vunpack.c.0.s8 %v6053
    %v6055 = vlaneseq
    %v6056 = vshrl.u32 %v6055, 7
    %v6057 = vsub.s32 %v6054, %v6056
    %v6058 = vrot.slane %v6044, %v6057
    %v6059 = vcombine.low %v6051, %v6058
    %v6060 = vcombine.low %v3891, %v3899
    %v6061 = vcombine.low %v3898, %v3900
    %v6063 = vunpack.c.l.s4 1983009808
    %v6064 = vunpack.c.0.s8 %v6063
    %v6065 = vlaneseq
    %v6066 = vshrl.u32 %v6065, 7
    %v6067 = vsub.s32 %v6064, %v6066
    %v6068 = vrot.slane %v6060, %v6067
    %v6070 = vunpack.c.l.s4 1983009808
    %v6071 = vunpack.c.0.s8 %v6070
    %v6072 = vlaneseq
    %v6073 = vshrl.u32 %v6072, 7
    %v6074 = vsub.s32 %v6071, %v6073
    %v6075 = vrot.slane %v6061, %v6074
    %v6076 = vcombine.low %v6068, %v6075
    %v6077 = vcombine.low %v3908, %v3916
    %v6078 = vcombine.low %v3915, %v3917
    %v6080 = vunpack.c.l.s4 1983009808
    %v6081 = vunpack.c.0.s8 %v6080
    %v6082 = vlaneseq
    %v6083 = vshrl.u32 %v6082, 7
    %v6084 = vsub.s32 %v6081, %v6083
    %v6085 = vrot.slane %v6077, %v6084
    %v6087 = vunpack.c.l.s4 1983009808
    %v6088 = vunpack.c.0.s8 %v6087
    %v6089 = vlaneseq
    %v6090 = vshrl.u32 %v6089, 7
    %v6091 = vsub.s32 %v6088, %v6090
    %v6092 = vrot.slane %v6078, %v6091
    %v6093 = vcombine.low %v6085, %v6092
    %v6094 = vcombine.low %v3925, %v3933
    %v6095 = vcombine.low %v3932, %v3934
    %v6097 = vunpack.c.l.s4 1983009808
    %v6098 = vunpack.c.0.s8 %v6097
    %v6099 = vlaneseq
    %v6100 = vshrl.u32 %v6099, 7
    %v6101 = vsub.s32 %v6098, %v6100
    %v6102 = vrot.slane %v6094, %v6101
    %v6104 = vunpack.c.l.s4 1983009808
    %v6105 = vunpack.c.0.s8 %v6104
    %v6106 = vlaneseq
    %v6107 = vshrl.u32 %v6106, 7
    %v6108 = vsub.s32 %v6105, %v6107
    %v6109 = vrot.slane %v6095, %v6108
    %v6110 = vcombine.low %v6102, %v6109
    %v6111 = vcombine.low %v3942, %v3950
    %v6112 = vcombine.low %v3949, %v3951
    %v6114 = vunpack.c.l.s4 1983009808
    %v6115 = vunpack.c.0.s8 %v6114
    %v6116 = vlaneseq
    %v6117 = vshrl.u32 %v6116, 7
    %v6118 = vsub.s32 %v6115, %v6117
    %v6119 = vrot.slane %v6111, %v6118
    %v6121 = vunpack.c.l.s4 1983009808
    %v6122 = vunpack.c.0.s8 %v6121
    %v6123 = vlaneseq
    %v6124 = vshrl.u32 %v6123, 7
    %v6125 = vsub.s32 %v6122, %v6124
    %v6126 = vrot.slane %v6112, %v6125
    %v6127 = vcombine.low %v6119, %v6126
    %v6128 = vcombine.low %v3959, %v3967
    %v6129 = vcombine.low %v3966, %v3968
    %v6131 = vunpack.c.l.s4 1983009808
    %v6132 = vunpack.c.0.s8 %v6131
    %v6133 = vlaneseq
    %v6134 = vshrl.u32 %v6133, 7
    %v6135 = vsub.s32 %v6132, %v6134
    %v6136 = vrot.slane %v6128, %v6135
    %v6138 = vunpack.c.l.s4 1983009808
    %v6139 = vunpack.c.0.s8 %v6138
    %v6140 = vlaneseq
    %v6141 = vshrl.u32 %v6140, 7
    %v6142 = vsub.s32 %v6139, %v6141
    %v6143 = vrot.slane %v6129, %v6142
    %v6144 = vcombine.low %v6136, %v6143
    %v6145 = vcombine.low %v3976, %v3984
    %v6146 = vcombine.low %v3983, %v3985
    %v6148 = vunpack.c.l.s4 1983009808
    %v6149 = vunpack.c.0.s8 %v6148
    %v6150 = vlaneseq
    %v6151 = vshrl.u32 %v6150, 7
    %v6152 = vsub.s32 %v6149, %v6151
    %v6153 = vrot.slane %v6145, %v6152
    %v6155 = vunpack.c.l.s4 1983009808
    %v6156 = vunpack.c.0.s8 %v6155
    %v6157 = vlaneseq
    %v6158 = vshrl.u32 %v6157, 7
    %v6159 = vsub.s32 %v6156, %v6158
    %v6160 = vrot.slane %v6146, %v6159
    %v6161 = vcombine.low %v6153, %v6160
    %v6162 = vcombine.low %v3993, %v4001
    %v6163 = vcombine.low %v4000, %v4002
    %v6165 = vunpack.c.l.s4 1983009808
    %v6166 = vunpack.c.0.s8 %v6165
    %v6167 = vlaneseq
    %v6168 = vshrl.u32 %v6167, 7
    %v6169 = vsub.s32 %v6166, %v6168
    %v6170 = vrot.slane %v6162, %v6169
    %v6172 = vunpack.c.l.s4 1983009808
    %v6173 = vunpack.c.0.s8 %v6172
    %v6174 = vlaneseq
    %v6175 = vshrl.u32 %v6174, 7
    %v6176 = vsub.s32 %v6173, %v6175
    %v6177 = vrot.slane %v6163, %v6176
    %v6178 = vcombine.low %v6170, %v6177
    %v6179 = vcombine.low %v4010, %v4018
    %v6180 = vcombine.low %v4017, %v4019
    %v6182 = vunpack.c.l.s4 1983009808
    %v6183 = vunpack.c.0.s8 %v6182
    %v6184 = vlaneseq
    %v6185 = vshrl.u32 %v6184, 7
    %v6186 = vsub.s32 %v6183, %v6185
    %v6187 = vrot.slane %v6179, %v6186
    %v6189 = vunpack.c.l.s4 1983009808
    %v6190 = vunpack.c.0.s8 %v6189
    %v6191 = vlaneseq
    %v6192 = vshrl.u32 %v6191, 7
    %v6193 = vsub.s32 %v6190, %v6192
    %v6194 = vrot.slane %v6180, %v6193
    %v6195 = vcombine.low %v6187, %v6194
    %v6196 = vcombine.low %v4027, %v4035
    %v6197 = vcombine.low %v4034, %v4036
    %v6199 = vunpack.c.l.s4 1983009808
    %v6200 = vunpack.c.0.s8 %v6199
    %v6201 = vlaneseq
    %v6202 = vshrl.u32 %v6201, 7
    %v6203 = vsub.s32 %v6200, %v6202
    %v6204 = vrot.slane %v6196, %v6203
    %v6206 = vunpack.c.l.s4 1983009808
    %v6207 = vunpack.c.0.s8 %v6206
    %v6208 = vlaneseq
    %v6209 = vshrl.u32 %v6208, 7
    %v6210 = vsub.s32 %v6207, %v6209
    %v6211 = vrot.slane %v6197, %v6210
    %v6212 = vcombine.low %v6204, %v6211
    %v6213 = vcombine.low %v4044, %v4052
    %v6214 = vcombine.low %v4051, %v4053
    %v6216 = vunpack.c.l.s4 1983009808
    %v6217 = vunpack.c.0.s8 %v6216
    %v6218 = vlaneseq
    %v6219 = vshrl.u32 %v6218, 7
    %v6220 = vsub.s32 %v6217, %v6219
    %v6221 = vrot.slane %v6213, %v6220
    %v6223 = vunpack.c.l.s4 1983009808
    %v6224 = vunpack.c.0.s8 %v6223
    %v6225 = vlaneseq
    %v6226 = vshrl.u32 %v6225, 7
    %v6227 = vsub.s32 %v6224, %v6226
    %v6228 = vrot.slane %v6214, %v6227
    %v6229 = vcombine.low %v6221, %v6228
    %v6230 = vcombine.low %v4061, %v4069
    %v6231 = vcombine.low %v4068, %v4070
    %v6233 = vunpack.c.l.s4 1983009808
    %v6234 = vunpack.c.0.s8 %v6233
    %v6235 = vlaneseq
    %v6236 = vshrl.u32 %v6235, 7
    %v6237 = vsub.s32 %v6234, %v6236
    %v6238 = vrot.slane %v6230, %v6237
    %v6240 = vunpack.c.l.s4 1983009808
    %v6241 = vunpack.c.0.s8 %v6240
    %v6242 = vlaneseq
    %v6243 = vshrl.u32 %v6242, 7
    %v6244 = vsub.s32 %v6241, %v6243
    %v6245 = vrot.slane %v6231, %v6244
    %v6246 = vcombine.low %v6238, %v6245
    %v6247 = vcombine.low %v4078, %v4086
    %v6248 = vcombine.low %v4085, %v4087
    %v6250 = vunpack.c.l.s4 1983009808
    %v6251 = vunpack.c.0.s8 %v6250
    %v6252 = vlaneseq
    %v6253 = vshrl.u32 %v6252, 7
    %v6254 = vsub.s32 %v6251, %v6253
    %v6255 = vrot.slane %v6247, %v6254
    %v6257 = vunpack.c.l.s4 1983009808
    %v6258 = vunpack.c.0.s8 %v6257
    %v6259 = vlaneseq
    %v6260 = vshrl.u32 %v6259, 7
    %v6261 = vsub.s32 %v6258, %v6260
    %v6262 = vrot.slane %v6248, %v6261
    %v6263 = vcombine.low %v6255, %v6262
    %v6264 = vcombine.low %v4095, %v4103
    %v6265 = vcombine.low %v4102, %v4104
    %v6267 = vunpack.c.l.s4 1983009808
    %v6268 = vunpack.c.0.s8 %v6267
    %v6269 = vlaneseq
    %v6270 = vshrl.u32 %v6269, 7
    %v6271 = vsub.s32 %v6268, %v6270
    %v6272 = vrot.slane %v6264, %v6271
    %v6274 = vunpack.c.l.s4 1983009808
    %v6275 = vunpack.c.0.s8 %v6274
    %v6276 = vlaneseq
    %v6277 = vshrl.u32 %v6276, 7
    %v6278 = vsub.s32 %v6275, %v6277
    %v6279 = vrot.slane %v6265, %v6278
    %v6280 = vcombine.low %v6272, %v6279
    %v6281 = vcombine.low %v4112, %v4120
    %v6282 = vcombine.low %v4119, %v4121
    %v6284 = vunpack.c.l.s4 1983009808
    %v6285 = vunpack.c.0.s8 %v6284
    %v6286 = vlaneseq
    %v6287 = vshrl.u32 %v6286, 7
    %v6288 = vsub.s32 %v6285, %v6287
    %v6289 = vrot.slane %v6281, %v6288
    %v6291 = vunpack.c.l.s4 1983009808
    %v6292 = vunpack.c.0.s8 %v6291
    %v6293 = vlaneseq
    %v6294 = vshrl.u32 %v6293, 7
    %v6295 = vsub.s32 %v6292, %v6294
    %v6296 = vrot.slane %v6282, %v6295
    %v6297 = vcombine.low %v6289, %v6296
    %v6298 = vcombine.low %v4129, %v4137
    %v6299 = vcombine.low %v4136, %v4138
    %v6301 = vunpack.c.l.s4 1983009808
    %v6302 = vunpack.c.0.s8 %v6301
    %v6303 = vlaneseq
    %v6304 = vshrl.u32 %v6303, 7
    %v6305 = vsub.s32 %v6302, %v6304
    %v6306 = vrot.slane %v6298, %v6305
    %v6308 = vunpack.c.l.s4 1983009808
    %v6309 = vunpack.c.0.s8 %v6308
    %v6310 = vlaneseq
    %v6311 = vshrl.u32 %v6310, 7
    %v6312 = vsub.s32 %v6309, %v6311
    %v6313 = vrot.slane %v6299, %v6312
    %v6314 = vcombine.low %v6306, %v6313
    %v6315 = vcombine.low %v4146, %v4154
    %v6316 = vcombine.low %v4153, %v4155
    %v6318 = vunpack.c.l.s4 1983009808
    %v6319 = vunpack.c.0.s8 %v6318
    %v6320 = vlaneseq
    %v6321 = vshrl.u32 %v6320, 7
    %v6322 = vsub.s32 %v6319, %v6321
    %v6323 = vrot.slane %v6315, %v6322
    %v6325 = vunpack.c.l.s4 1983009808
    %v6326 = vunpack.c.0.s8 %v6325
    %v6327 = vlaneseq
    %v6328 = vshrl.u32 %v6327, 7
    %v6329 = vsub.s32 %v6326, %v6328
    %v6330 = vrot.slane %v6316, %v6329
    %v6331 = vcombine.low %v6323, %v6330
    %v6332 = vcombine.low %v4163, %v4171
    %v6333 = vcombine.low %v4170, %v4172
    %v6335 = vunpack.c.l.s4 1983009808
    %v6336 = vunpack.c.0.s8 %v6335
    %v6337 = vlaneseq
    %v6338 = vshrl.u32 %v6337, 7
    %v6339 = vsub.s32 %v6336, %v6338
    %v6340 = vrot.slane %v6332, %v6339
    %v6342 = vunpack.c.l.s4 1983009808
    %v6343 = vunpack.c.0.s8 %v6342
    %v6344 = vlaneseq
    %v6345 = vshrl.u32 %v6344, 7
    %v6346 = vsub.s32 %v6343, %v6345
    %v6347 = vrot.slane %v6333, %v6346
    %v6348 = vcombine.low %v6340, %v6347
    %v6349 = vcombine.low %v4180, %v4188
    %v6350 = vcombine.low %v4187, %v4189
    %v6352 = vunpack.c.l.s4 1983009808
    %v6353 = vunpack.c.0.s8 %v6352
    %v6354 = vlaneseq
    %v6355 = vshrl.u32 %v6354, 7
    %v6356 = vsub.s32 %v6353, %v6355
    %v6357 = vrot.slane %v6349, %v6356
    %v6359 = vunpack.c.l.s4 1983009808
    %v6360 = vunpack.c.0.s8 %v6359
    %v6361 = vlaneseq
    %v6362 = vshrl.u32 %v6361, 7
    %v6363 = vsub.s32 %v6360, %v6362
    %v6364 = vrot.slane %v6350, %v6363
    %v6365 = vcombine.low %v6357, %v6364
    %v6366 = vcombine.low %v4197, %v4205
    %v6367 = vcombine.low %v4204, %v4206
    %v6369 = vunpack.c.l.s4 1983009808
    %v6370 = vunpack.c.0.s8 %v6369
    %v6371 = vlaneseq
    %v6372 = vshrl.u32 %v6371, 7
    %v6373 = vsub.s32 %v6370, %v6372
    %v6374 = vrot.slane %v6366, %v6373
    %v6376 = vunpack.c.l.s4 1983009808
    %v6377 = vunpack.c.0.s8 %v6376
    %v6378 = vlaneseq
    %v6379 = vshrl.u32 %v6378, 7
    %v6380 = vsub.s32 %v6377, %v6379
    %v6381 = vrot.slane %v6367, %v6380
    %v6382 = vcombine.low %v6374, %v6381
    %v6383 = vcombine.low %v4214, %v4222
    %v6384 = vcombine.low %v4221, %v4223
    %v6386 = vunpack.c.l.s4 1983009808
    %v6387 = vunpack.c.0.s8 %v6386
    %v6388 = vlaneseq
    %v6389 = vshrl.u32 %v6388, 7
    %v6390 = vsub.s32 %v6387, %v6389
    %v6391 = vrot.slane %v6383, %v6390
    %v6393 = vunpack.c.l.s4 1983009808
    %v6394 = vunpack.c.0.s8 %v6393
    %v6395 = vlaneseq
    %v6396 = vshrl.u32 %v6395, 7
    %v6397 = vsub.s32 %v6394, %v6396
    %v6398 = vrot.slane %v6384, %v6397
    %v6399 = vcombine.low %v6391, %v6398
    %v6400 = vcombine.low %v4231, %v4239
    %v6401 = vcombine.low %v4238, %v4240
    %v6403 = vunpack.c.l.s4 1983009808
    %v6404 = vunpack.c.0.s8 %v6403
    %v6405 = vlaneseq
    %v6406 = vshrl.u32 %v6405, 7
    %v6407 = vsub.s32 %v6404, %v6406
    %v6408 = vrot.slane %v6400, %v6407
    %v6410 = vunpack.c.l.s4 1983009808
    %v6411 = vunpack.c.0.s8 %v6410
    %v6412 = vlaneseq
    %v6413 = vshrl.u32 %v6412, 7
    %v6414 = vsub.s32 %v6411, %v6413
    %v6415 = vrot.slane %v6401, %v6414
    %v6416 = vcombine.low %v6408, %v6415
    %v6417 = vcombine.low %v4248, %v4256
    %v6418 = vcombine.low %v4255, %v4257
    %v6420 = vunpack.c.l.s4 1983009808
    %v6421 = vunpack.c.0.s8 %v6420
    %v6422 = vlaneseq
    %v6423 = vshrl.u32 %v6422, 7
    %v6424 = vsub.s32 %v6421, %v6423
    %v6425 = vrot.slane %v6417, %v6424
    %v6427 = vunpack.c.l.s4 1983009808
    %v6428 = vunpack.c.0.s8 %v6427
    %v6429 = vlaneseq
    %v6430 = vshrl.u32 %v6429, 7
    %v6431 = vsub.s32 %v6428, %v6430
    %v6432 = vrot.slane %v6418, %v6431
    %v6433 = vcombine.low %v6425, %v6432
    %v6434 = vcombine.low %v4265, %v4273
    %v6435 = vcombine.low %v4272, %v4274
    %v6437 = vunpack.c.l.s4 1983009808
    %v6438 = vunpack.c.0.s8 %v6437
    %v6439 = vlaneseq
    %v6440 = vshrl.u32 %v6439, 7
    %v6441 = vsub.s32 %v6438, %v6440
    %v6442 = vrot.slane %v6434, %v6441
    %v6444 = vunpack.c.l.s4 1983009808
    %v6445 = vunpack.c.0.s8 %v6444
    %v6446 = vlaneseq
    %v6447 = vshrl.u32 %v6446, 7
    %v6448 = vsub.s32 %v6445, %v6447
    %v6449 = vrot.slane %v6435, %v6448
    %v6450 = vcombine.low %v6442, %v6449
    %v6451 = vcombine.low %v4282, %v4290
    %v6452 = vcombine.low %v4289, %v4291
    %v6454 = vunpack.c.l.s4 1983009808
    %v6455 = vunpack.c.0.s8 %v6454
    %v6456 = vlaneseq
    %v6457 = vshrl.u32 %v6456, 7
    %v6458 = vsub.s32 %v6455, %v6457
    %v6459 = vrot.slane %v6451, %v6458
    %v6461 = vunpack.c.l.s4 1983009808
    %v6462 = vunpack.c.0.s8 %v6461
    %v6463 = vlaneseq
    %v6464 = vshrl.u32 %v6463, 7
    %v6465 = vsub.s32 %v6462, %v6464
    %v6466 = vrot.slane %v6452, %v6465
    %v6467 = vcombine.low %v6459, %v6466
    %v6468 = vcombine.low %v4299, %v4307
    %v6469 = vcombine.low %v4306, %v4308
    %v6471 = vunpack.c.l.s4 1983009808
    %v6472 = vunpack.c.0.s8 %v6471
    %v6473 = vlaneseq
    %v6474 = vshrl.u32 %v6473, 7
    %v6475 = vsub.s32 %v6472, %v6474
    %v6476 = vrot.slane %v6468, %v6475
    %v6478 = vunpack.c.l.s4 1983009808
    %v6479 = vunpack.c.0.s8 %v6478
    %v6480 = vlaneseq
    %v6481 = vshrl.u32 %v6480, 7
    %v6482 = vsub.s32 %v6479, %v6481
    %v6483 = vrot.slane %v6469, %v6482
    %v6484 = vcombine.low %v6476, %v6483
    %v6485 = vcombine.low %v4316, %v4324
    %v6486 = vcombine.low %v4323, %v4325
    %v6488 = vunpack.c.l.s4 1983009808
    %v6489 = vunpack.c.0.s8 %v6488
    %v6490 = vlaneseq
    %v6491 = vshrl.u32 %v6490, 7
    %v6492 = vsub.s32 %v6489, %v6491
    %v6493 = vrot.slane %v6485, %v6492
    %v6495 = vunpack.c.l.s4 1983009808
    %v6496 = vunpack.c.0.s8 %v6495
    %v6497 = vlaneseq
    %v6498 = vshrl.u32 %v6497, 7
    %v6499 = vsub.s32 %v6496, %v6498
    %v6500 = vrot.slane %v6486, %v6499
    %v6501 = vcombine.low %v6493, %v6500
    %v6502 = vcombine.low %v4333, %v4341
    %v6503 = vcombine.low %v4340, %v4342
    %v6505 = vunpack.c.l.s4 1983009808
    %v6506 = vunpack.c.0.s8 %v6505
    %v6507 = vlaneseq
    %v6508 = vshrl.u32 %v6507, 7
    %v6509 = vsub.s32 %v6506, %v6508
    %v6510 = vrot.slane %v6502, %v6509
    %v6512 = vunpack.c.l.s4 1983009808
    %v6513 = vunpack.c.0.s8 %v6512
    %v6514 = vlaneseq
    %v6515 = vshrl.u32 %v6514, 7
    %v6516 = vsub.s32 %v6513, %v6515
    %v6517 = vrot.slane %v6503, %v6516
    %v6518 = vcombine.low %v6510, %v6517
    %v6519 = vcombine.low %v4350, %v4358
    %v6520 = vcombine.low %v4357, %v4359
    %v6522 = vunpack.c.l.s4 1983009808
    %v6523 = vunpack.c.0.s8 %v6522
    %v6524 = vlaneseq
    %v6525 = vshrl.u32 %v6524, 7
    %v6526 = vsub.s32 %v6523, %v6525
    %v6527 = vrot.slane %v6519, %v6526
    %v6529 = vunpack.c.l.s4 1983009808
    %v6530 = vunpack.c.0.s8 %v6529
    %v6531 = vlaneseq
    %v6532 = vshrl.u32 %v6531, 7
    %v6533 = vsub.s32 %v6530, %v6532
    %v6534 = vrot.slane %v6520, %v6533
    %v6535 = vcombine.low %v6527, %v6534
    %v6536 = vcombine.low %v4367, %v4375
    %v6537 = vcombine.low %v4374, %v4376
    %v6539 = vunpack.c.l.s4 1983009808
    %v6540 = vunpack.c.0.s8 %v6539
    %v6541 = vlaneseq
    %v6542 = vshrl.u32 %v6541, 7
    %v6543 = vsub.s32 %v6540, %v6542
    %v6544 = vrot.slane %v6536, %v6543
    %v6546 = vunpack.c.l.s4 1983009808
    %v6547 = vunpack.c.0.s8 %v6546
    %v6548 = vlaneseq
    %v6549 = vshrl.u32 %v6548, 7
    %v6550 = vsub.s32 %v6547, %v6549
    %v6551 = vrot.slane %v6537, %v6550
    %v6552 = vcombine.low %v6544, %v6551
    %v6553 = vcombine.low %v4384, %v4392
    %v6554 = vcombine.low %v4391, %v4393
    %v6556 = vunpack.c.l.s4 1983009808
    %v6557 = vunpack.c.0.s8 %v6556
    %v6558 = vlaneseq
    %v6559 = vshrl.u32 %v6558, 7
    %v6560 = vsub.s32 %v6557, %v6559
    %v6561 = vrot.slane %v6553, %v6560
    %v6563 = vunpack.c.l.s4 1983009808
    %v6564 = vunpack.c.0.s8 %v6563
    %v6565 = vlaneseq
    %v6566 = vshrl.u32 %v6565, 7
    %v6567 = vsub.s32 %v6564, %v6566
    %v6568 = vrot.slane %v6554, %v6567
    %v6569 = vcombine.low %v6561, %v6568
    %v6570 = vcombine.low %v4401, %v4409
    %v6571 = vcombine.low %v4408, %v4410
    %v6573 = vunpack.c.l.s4 1983009808
    %v6574 = vunpack.c.0.s8 %v6573
    %v6575 = vlaneseq
    %v6576 = vshrl.u32 %v6575, 7
    %v6577 = vsub.s32 %v6574, %v6576
    %v6578 = vrot.slane %v6570, %v6577
    %v6580 = vunpack.c.l.s4 1983009808
    %v6581 = vunpack.c.0.s8 %v6580
    %v6582 = vlaneseq
    %v6583 = vshrl.u32 %v6582, 7
    %v6584 = vsub.s32 %v6581, %v6583
    %v6585 = vrot.slane %v6571, %v6584
    %v6586 = vcombine.low %v6578, %v6585
    %v6587 = vcombine.low %v4418, %v4426
    %v6588 = vcombine.low %v4425, %v4427
    %v6590 = vunpack.c.l.s4 1983009808
    %v6591 = vunpack.c.0.s8 %v6590
    %v6592 = vlaneseq
    %v6593 = vshrl.u32 %v6592, 7
    %v6594 = vsub.s32 %v6591, %v6593
    %v6595 = vrot.slane %v6587, %v6594
    %v6597 = vunpack.c.l.s4 1983009808
    %v6598 = vunpack.c.0.s8 %v6597
    %v6599 = vlaneseq
    %v6600 = vshrl.u32 %v6599, 7
    %v6601 = vsub.s32 %v6598, %v6600
    %v6602 = vrot.slane %v6588, %v6601
    %v6603 = vcombine.low %v6595, %v6602
    %v6604 = vcombine.low %v4435, %v4443
    %v6605 = vcombine.low %v4442, %v4444
    %v6607 = vunpack.c.l.s4 1983009808
    %v6608 = vunpack.c.0.s8 %v6607
    %v6609 = vlaneseq
    %v6610 = vshrl.u32 %v6609, 7
    %v6611 = vsub.s32 %v6608, %v6610
    %v6612 = vrot.slane %v6604, %v6611
    %v6614 = vunpack.c.l.s4 1983009808
    %v6615 = vunpack.c.0.s8 %v6614
    %v6616 = vlaneseq
    %v6617 = vshrl.u32 %v6616, 7
    %v6618 = vsub.s32 %v6615, %v6617
    %v6619 = vrot.slane %v6605, %v6618
    %v6620 = vcombine.low %v6612, %v6619
    %v6621 = vcombine.low %v4452, %v4460
    %v6622 = vcombine.low %v4459, %v4461
    %v6624 = vunpack.c.l.s4 1983009808
    %v6625 = vunpack.c.0.s8 %v6624
    %v6626 = vlaneseq
    %v6627 = vshrl.u32 %v6626, 7
    %v6628 = vsub.s32 %v6625, %v6627
    %v6629 = vrot.slane %v6621, %v6628
    %v6631 = vunpack.c.l.s4 1983009808
    %v6632 = vunpack.c.0.s8 %v6631
    %v6633 = vlaneseq
    %v6634 = vshrl.u32 %v6633, 7
    %v6635 = vsub.s32 %v6632, %v6634
    %v6636 = vrot.slane %v6622, %v6635
    %v6637 = vcombine.low %v6629, %v6636
    %v6638 = vcombine.low %v4469, %v4477
    %v6639 = vcombine.low %v4476, %v4478
    %v6641 = vunpack.c.l.s4 1983009808
    %v6642 = vunpack.c.0.s8 %v6641
    %v6643 = vlaneseq
    %v6644 = vshrl.u32 %v6643, 7
    %v6645 = vsub.s32 %v6642, %v6644
    %v6646 = vrot.slane %v6638, %v6645
    %v6648 = vunpack.c.l.s4 1983009808
    %v6649 = vunpack.c.0.s8 %v6648
    %v6650 = vlaneseq
    %v6651 = vshrl.u32 %v6650, 7
    %v6652 = vsub.s32 %v6649, %v6651
    %v6653 = vrot.slane %v6639, %v6652
    %v6654 = vcombine.low %v6646, %v6653
    %v6655 = vcombine.low %v4486, %v4494
    %v6656 = vcombine.low %v4493, %v4495
    %v6658 = vunpack.c.l.s4 1983009808
    %v6659 = vunpack.c.0.s8 %v6658
    %v6660 = vlaneseq
    %v6661 = vshrl.u32 %v6660, 7
    %v6662 = vsub.s32 %v6659, %v6661
    %v6663 = vrot.slane %v6655, %v6662
    %v6665 = vunpack.c.l.s4 1983009808
    %v6666 = vunpack.c.0.s8 %v6665
    %v6667 = vlaneseq
    %v6668 = vshrl.u32 %v6667, 7
    %v6669 = vsub.s32 %v6666, %v6668
    %v6670 = vrot.slane %v6656, %v6669
    %v6671 = vcombine.low %v6663, %v6670
    %v6672 = vcombine.low %v4503, %v4511
    %v6673 = vcombine.low %v4510, %v4512
    %v6675 = vunpack.c.l.s4 1983009808
    %v6676 = vunpack.c.0.s8 %v6675
    %v6677 = vlaneseq
    %v6678 = vshrl.u32 %v6677, 7
    %v6679 = vsub.s32 %v6676, %v6678
    %v6680 = vrot.slane %v6672, %v6679
    %v6682 = vunpack.c.l.s4 1983009808
    %v6683 = vunpack.c.0.s8 %v6682
    %v6684 = vlaneseq
    %v6685 = vshrl.u32 %v6684, 7
    %v6686 = vsub.s32 %v6683, %v6685
    %v6687 = vrot.slane %v6673, %v6686
    %v6688 = vcombine.low %v6680, %v6687
    %v6689 = vcombine.low %v4520, %v4528
    %v6690 = vcombine.low %v4527, %v4529
    %v6692 = vunpack.c.l.s4 1983009808
    %v6693 = vunpack.c.0.s8 %v6692
    %v6694 = vlaneseq
    %v6695 = vshrl.u32 %v6694, 7
    %v6696 = vsub.s32 %v6693, %v6695
    %v6697 = vrot.slane %v6689, %v6696
    %v6699 = vunpack.c.l.s4 1983009808
    %v6700 = vunpack.c.0.s8 %v6699
    %v6701 = vlaneseq
    %v6702 = vshrl.u32 %v6701, 7
    %v6703 = vsub.s32 %v6700, %v6702
    %v6704 = vrot.slane %v6690, %v6703
    %v6705 = vcombine.low %v6697, %v6704
    %v6706 = vcombine.low %v4537, %v4545
    %v6707 = vcombine.low %v4544, %v4546
    %v6709 = vunpack.c.l.s4 1983009808
    %v6710 = vunpack.c.0.s8 %v6709
    %v6711 = vlaneseq
    %v6712 = vshrl.u32 %v6711, 7
    %v6713 = vsub.s32 %v6710, %v6712
    %v6714 = vrot.slane %v6706, %v6713
    %v6716 = vunpack.c.l.s4 1983009808
    %v6717 = vunpack.c.0.s8 %v6716
    %v6718 = vlaneseq
    %v6719 = vshrl.u32 %v6718, 7
    %v6720 = vsub.s32 %v6717, %v6719
    %v6721 = vrot.slane %v6707, %v6720
    %v6722 = vcombine.low %v6714, %v6721
    %v6723 = vcombine.low %v4554, %v4562
    %v6724 = vcombine.low %v4561, %v4563
    %v6726 = vunpack.c.l.s4 1983009808
    %v6727 = vunpack.c.0.s8 %v6726
    %v6728 = vlaneseq
    %v6729 = vshrl.u32 %v6728, 7
    %v6730 = vsub.s32 %v6727, %v6729
    %v6731 = vrot.slane %v6723, %v6730
    %v6733 = vunpack.c.l.s4 1983009808
    %v6734 = vunpack.c.0.s8 %v6733
    %v6735 = vlaneseq
    %v6736 = vshrl.u32 %v6735, 7
    %v6737 = vsub.s32 %v6734, %v6736
    %v6738 = vrot.slane %v6724, %v6737
    %v6739 = vcombine.low %v6731, %v6738
    %v6740 = vcombine.low %v4571, %v4579
    %v6741 = vcombine.low %v4578, %v4580
    %v6743 = vunpack.c.l.s4 1983009808
    %v6744 = vunpack.c.0.s8 %v6743
    %v6745 = vlaneseq
    %v6746 = vshrl.u32 %v6745, 7
    %v6747 = vsub.s32 %v6744, %v6746
    %v6748 = vrot.slane %v6740, %v6747
    %v6750 = vunpack.c.l.s4 1983009808
    %v6751 = vunpack.c.0.s8 %v6750
    %v6752 = vlaneseq
    %v6753 = vshrl.u32 %v6752, 7
    %v6754 = vsub.s32 %v6751, %v6753
    %v6755 = vrot.slane %v6741, %v6754
    %v6756 = vcombine.low %v6748, %v6755
    %v6757 = vcombine.low %v4588, %v4596
    %v6758 = vcombine.low %v4595, %v4597
    %v6760 = vunpack.c.l.s4 1983009808
    %v6761 = vunpack.c.0.s8 %v6760
    %v6762 = vlaneseq
    %v6763 = vshrl.u32 %v6762, 7
    %v6764 = vsub.s32 %v6761, %v6763
    %v6765 = vrot.slane %v6757, %v6764
    %v6767 = vunpack.c.l.s4 1983009808
    %v6768 = vunpack.c.0.s8 %v6767
    %v6769 = vlaneseq
    %v6770 = vshrl.u32 %v6769, 7
    %v6771 = vsub.s32 %v6768, %v6770
    %v6772 = vrot.slane %v6758, %v6771
    %v6773 = vcombine.low %v6765, %v6772
    %v6774 = vcombine.low %v4605, %v4613
    %v6775 = vcombine.low %v4612, %v4614
    %v6777 = vunpack.c.l.s4 1983009808
    %v6778 = vunpack.c.0.s8 %v6777
    %v6779 = vlaneseq
    %v6780 = vshrl.u32 %v6779, 7
    %v6781 = vsub.s32 %v6778, %v6780
    %v6782 = vrot.slane %v6774, %v6781
    %v6784 = vunpack.c.l.s4 1983009808
    %v6785 = vunpack.c.0.s8 %v6784
    %v6786 = vlaneseq
    %v6787 = vshrl.u32 %v6786, 7
    %v6788 = vsub.s32 %v6785, %v6787
    %v6789 = vrot.slane %v6775, %v6788
    %v6790 = vcombine.low %v6782, %v6789
    %v6791 = vcombine.low %v4622, %v4630
    %v6792 = vcombine.low %v4629, %v4631
    %v6794 = vunpack.c.l.s4 1983009808
    %v6795 = vunpack.c.0.s8 %v6794
    %v6796 = vlaneseq
    %v6797 = vshrl.u32 %v6796, 7
    %v6798 = vsub.s32 %v6795, %v6797
    %v6799 = vrot.slane %v6791, %v6798
    %v6801 = vunpack.c.l.s4 1983009808
    %v6802 = vunpack.c.0.s8 %v6801
    %v6803 = vlaneseq
    %v6804 = vshrl.u32 %v6803, 7
    %v6805 = vsub.s32 %v6802, %v6804
    %v6806 = vrot.slane %v6792, %v6805
    %v6807 = vcombine.low %v6799, %v6806
    %v6808 = vcombine.low %v4639, %v4647
    %v6809 = vcombine.low %v4646, %v4648
    %v6811 = vunpack.c.l.s4 1983009808
    %v6812 = vunpack.c.0.s8 %v6811
    %v6813 = vlaneseq
    %v6814 = vshrl.u32 %v6813, 7
    %v6815 = vsub.s32 %v6812, %v6814
    %v6816 = vrot.slane %v6808, %v6815
    %v6818 = vunpack.c.l.s4 1983009808
    %v6819 = vunpack.c.0.s8 %v6818
    %v6820 = vlaneseq
    %v6821 = vshrl.u32 %v6820, 7
    %v6822 = vsub.s32 %v6819, %v6821
    %v6823 = vrot.slane %v6809, %v6822
    %v6824 = vcombine.low %v6816, %v6823
    %v6825 = vcombine.low %v4656, %v4664
    %v6826 = vcombine.low %v4663, %v4665
    %v6828 = vunpack.c.l.s4 1983009808
    %v6829 = vunpack.c.0.s8 %v6828
    %v6830 = vlaneseq
    %v6831 = vshrl.u32 %v6830, 7
    %v6832 = vsub.s32 %v6829, %v6831
    %v6833 = vrot.slane %v6825, %v6832
    %v6835 = vunpack.c.l.s4 1983009808
    %v6836 = vunpack.c.0.s8 %v6835
    %v6837 = vlaneseq
    %v6838 = vshrl.u32 %v6837, 7
    %v6839 = vsub.s32 %v6836, %v6838
    %v6840 = vrot.slane %v6826, %v6839
    %v6841 = vcombine.low %v6833, %v6840
    %v6842 = vcombine.low %v4673, %v4681
    %v6843 = vcombine.low %v4680, %v4682
    %v6845 = vunpack.c.l.s4 1983009808
    %v6846 = vunpack.c.0.s8 %v6845
    %v6847 = vlaneseq
    %v6848 = vshrl.u32 %v6847, 7
    %v6849 = vsub.s32 %v6846, %v6848
    %v6850 = vrot.slane %v6842, %v6849
    %v6852 = vunpack.c.l.s4 1983009808
    %v6853 = vunpack.c.0.s8 %v6852
    %v6854 = vlaneseq
    %v6855 = vshrl.u32 %v6854, 7
    %v6856 = vsub.s32 %v6853, %v6855
    %v6857 = vrot.slane %v6843, %v6856
    %v6858 = vcombine.low %v6850, %v6857
    %v6859 = vcombine.low %v4690, %v4698
    %v6860 = vcombine.low %v4697, %v4699
    %v6862 = vunpack.c.l.s4 1983009808
    %v6863 = vunpack.c.0.s8 %v6862
    %v6864 = vlaneseq
    %v6865 = vshrl.u32 %v6864, 7
    %v6866 = vsub.s32 %v6863, %v6865
    %v6867 = vrot.slane %v6859, %v6866
    %v6869 = vunpack.c.l.s4 1983009808
    %v6870 = vunpack.c.0.s8 %v6869
    %v6871 = vlaneseq
    %v6872 = vshrl.u32 %v6871, 7
    %v6873 = vsub.s32 %v6870, %v6872
    %v6874 = vrot.slane %v6860, %v6873
    %v6875 = vcombine.low %v6867, %v6874
    %v6876 = vcombine.low %v4707, %v4715
    %v6877 = vcombine.low %v4714, %v4716
    %v6879 = vunpack.c.l.s4 1983009808
    %v6880 = vunpack.c.0.s8 %v6879
    %v6881 = vlaneseq
    %v6882 = vshrl.u32 %v6881, 7
    %v6883 = vsub.s32 %v6880, %v6882
    %v6884 = vrot.slane %v6876, %v6883
    %v6886 = vunpack.c.l.s4 1983009808
    %v6887 = vunpack.c.0.s8 %v6886
    %v6888 = vlaneseq
    %v6889 = vshrl.u32 %v6888, 7
    %v6890 = vsub.s32 %v6887, %v6889
    %v6891 = vrot.slane %v6877, %v6890
    %v6892 = vcombine.low %v6884, %v6891
    %v6893 = vcombine.low %v4724, %v4732
    %v6894 = vcombine.low %v4731, %v4733
    %v6896 = vunpack.c.l.s4 1983009808
    %v6897 = vunpack.c.0.s8 %v6896
    %v6898 = vlaneseq
    %v6899 = vshrl.u32 %v6898, 7
    %v6900 = vsub.s32 %v6897, %v6899
    %v6901 = vrot.slane %v6893, %v6900
    %v6903 = vunpack.c.l.s4 1983009808
    %v6904 = vunpack.c.0.s8 %v6903
    %v6905 = vlaneseq
    %v6906 = vshrl.u32 %v6905, 7
    %v6907 = vsub.s32 %v6904, %v6906
    %v6908 = vrot.slane %v6894, %v6907
    %v6909 = vcombine.low %v6901, %v6908
    %v6910 = vcombine.low %v4741, %v4749
    %v6911 = vcombine.low %v4748, %v4750
    %v6913 = vunpack.c.l.s4 1983009808
    %v6914 = vunpack.c.0.s8 %v6913
    %v6915 = vlaneseq
    %v6916 = vshrl.u32 %v6915, 7
    %v6917 = vsub.s32 %v6914, %v6916
    %v6918 = vrot.slane %v6910, %v6917
    %v6920 = vunpack.c.l.s4 1983009808
    %v6921 = vunpack.c.0.s8 %v6920
    %v6922 = vlaneseq
    %v6923 = vshrl.u32 %v6922, 7
    %v6924 = vsub.s32 %v6921, %v6923
    %v6925 = vrot.slane %v6911, %v6924
    %v6926 = vcombine.low %v6918, %v6925
    %v6927 = vcombine.low %v4758, %v4766
    %v6928 = vcombine.low %v4765, %v4767
    %v6930 = vunpack.c.l.s4 1983009808
    %v6931 = vunpack.c.0.s8 %v6930
    %v6932 = vlaneseq
    %v6933 = vshrl.u32 %v6932, 7
    %v6934 = vsub.s32 %v6931, %v6933
    %v6935 = vrot.slane %v6927, %v6934
    %v6937 = vunpack.c.l.s4 1983009808
    %v6938 = vunpack.c.0.s8 %v6937
    %v6939 = vlaneseq
    %v6940 = vshrl.u32 %v6939, 7
    %v6941 = vsub.s32 %v6938, %v6940
    %v6942 = vrot.slane %v6928, %v6941
    %v6943 = vcombine.low %v6935, %v6942
    %v6944 = vcombine.low %v4775, %v4783
    %v6945 = vcombine.low %v4782, %v4784
    %v6947 = vunpack.c.l.s4 1983009808
    %v6948 = vunpack.c.0.s8 %v6947
    %v6949 = vlaneseq
    %v6950 = vshrl.u32 %v6949, 7
    %v6951 = vsub.s32 %v6948, %v6950
    %v6952 = vrot.slane %v6944, %v6951
    %v6954 = vunpack.c.l.s4 1983009808
    %v6955 = vunpack.c.0.s8 %v6954
    %v6956 = vlaneseq
    %v6957 = vshrl.u32 %v6956, 7
    %v6958 = vsub.s32 %v6955, %v6957
    %v6959 = vrot.slane %v6945, %v6958
    %v6960 = vcombine.low %v6952, %v6959
    %v6961 = vcombine.low %v4792, %v4800
    %v6962 = vcombine.low %v4799, %v4801
    %v6964 = vunpack.c.l.s4 1983009808
    %v6965 = vunpack.c.0.s8 %v6964
    %v6966 = vlaneseq
    %v6967 = vshrl.u32 %v6966, 7
    %v6968 = vsub.s32 %v6965, %v6967
    %v6969 = vrot.slane %v6961, %v6968
    %v6971 = vunpack.c.l.s4 1983009808
    %v6972 = vunpack.c.0.s8 %v6971
    %v6973 = vlaneseq
    %v6974 = vshrl.u32 %v6973, 7
    %v6975 = vsub.s32 %v6972, %v6974
    %v6976 = vrot.slane %v6962, %v6975
    %v6977 = vcombine.low %v6969, %v6976
    %v6978 = vcombine.low %v4809, %v4817
    %v6979 = vcombine.low %v4816, %v4818
    %v6981 = vunpack.c.l.s4 1983009808
    %v6982 = vunpack.c.0.s8 %v6981
    %v6983 = vlaneseq
    %v6984 = vshrl.u32 %v6983, 7
    %v6985 = vsub.s32 %v6982, %v6984
    %v6986 = vrot.slane %v6978, %v6985
    %v6988 = vunpack.c.l.s4 1983009808
    %v6989 = vunpack.c.0.s8 %v6988
    %v6990 = vlaneseq
    %v6991 = vshrl.u32 %v6990, 7
    %v6992 = vsub.s32 %v6989, %v6991
    %v6993 = vrot.slane %v6979, %v6992
    %v6994 = vcombine.low %v6986, %v6993
    %v6995 = vcombine.low %v4826, %v4834
    %v6996 = vcombine.low %v4833, %v4835
    %v6998 = vunpack.c.l.s4 1983009808
    %v6999 = vunpack.c.0.s8 %v6998
    %v7000 = vlaneseq
    %v7001 = vshrl.u32 %v7000, 7
    %v7002 = vsub.s32 %v6999, %v7001
    %v7003 = vrot.slane %v6995, %v7002
    %v7005 = vunpack.c.l.s4 1983009808
    %v7006 = vunpack.c.0.s8 %v7005
    %v7007 = vlaneseq
    %v7008 = vshrl.u32 %v7007, 7
    %v7009 = vsub.s32 %v7006, %v7008
    %v7010 = vrot.slane %v6996, %v7009
    %v7011 = vcombine.low %v7003, %v7010
    %v7012 = vcombine.low %v4843, %v4851
    %v7013 = vcombine.low %v4850, %v4852
    %v7015 = vunpack.c.l.s4 1983009808
    %v7016 = vunpack.c.0.s8 %v7015
    %v7017 = vlaneseq
    %v7018 = vshrl.u32 %v7017, 7
    %v7019 = vsub.s32 %v7016, %v7018
    %v7020 = vrot.slane %v7012, %v7019
    %v7022 = vunpack.c.l.s4 1983009808
    %v7023 = vunpack.c.0.s8 %v7022
    %v7024 = vlaneseq
    %v7025 = vshrl.u32 %v7024, 7
    %v7026 = vsub.s32 %v7023, %v7025
    %v7027 = vrot.slane %v7013, %v7026
    %v7028 = vcombine.low %v7020, %v7027
    %v7029 = vcombine.low %v4860, %v4868
    %v7030 = vcombine.low %v4867, %v4869
    %v7032 = vunpack.c.l.s4 1983009808
    %v7033 = vunpack.c.0.s8 %v7032
    %v7034 = vlaneseq
    %v7035 = vshrl.u32 %v7034, 7
    %v7036 = vsub.s32 %v7033, %v7035
    %v7037 = vrot.slane %v7029, %v7036
    %v7039 = vunpack.c.l.s4 1983009808
    %v7040 = vunpack.c.0.s8 %v7039
    %v7041 = vlaneseq
    %v7042 = vshrl.u32 %v7041, 7
    %v7043 = vsub.s32 %v7040, %v7042
    %v7044 = vrot.slane %v7030, %v7043
    %v7045 = vcombine.low %v7037, %v7044
    %v7046 = vcombine.low %v4877, %v4885
    %v7047 = vcombine.low %v4884, %v4886
    %v7049 = vunpack.c.l.s4 1983009808
    %v7050 = vunpack.c.0.s8 %v7049
    %v7051 = vlaneseq
    %v7052 = vshrl.u32 %v7051, 7
    %v7053 = vsub.s32 %v7050, %v7052
    %v7054 = vrot.slane %v7046, %v7053
    %v7056 = vunpack.c.l.s4 1983009808
    %v7057 = vunpack.c.0.s8 %v7056
    %v7058 = vlaneseq
    %v7059 = vshrl.u32 %v7058, 7
    %v7060 = vsub.s32 %v7057, %v7059
    %v7061 = vrot.slane %v7047, %v7060
    %v7062 = vcombine.low %v7054, %v7061
    %v7063 = vcombine.low %v4894, %v4902
    %v7064 = vcombine.low %v4901, %v4903
    %v7066 = vunpack.c.l.s4 1983009808
    %v7067 = vunpack.c.0.s8 %v7066
    %v7068 = vlaneseq
    %v7069 = vshrl.u32 %v7068, 7
    %v7070 = vsub.s32 %v7067, %v7069
    %v7071 = vrot.slane %v7063, %v7070
    %v7073 = vunpack.c.l.s4 1983009808
    %v7074 = vunpack.c.0.s8 %v7073
    %v7075 = vlaneseq
    %v7076 = vshrl.u32 %v7075, 7
    %v7077 = vsub.s32 %v7074, %v7076
    %v7078 = vrot.slane %v7064, %v7077
    %v7079 = vcombine.low %v7071, %v7078
    %v7080 = vcombine.low %v4911, %v4919
    %v7081 = vcombine.low %v4918, %v4920
    %v7083 = vunpack.c.l.s4 1983009808
    %v7084 = vunpack.c.0.s8 %v7083
    %v7085 = vlaneseq
    %v7086 = vshrl.u32 %v7085, 7
    %v7087 = vsub.s32 %v7084, %v7086
    %v7088 = vrot.slane %v7080, %v7087
    %v7090 = vunpack.c.l.s4 1983009808
    %v7091 = vunpack.c.0.s8 %v7090
    %v7092 = vlaneseq
    %v7093 = vshrl.u32 %v7092, 7
    %v7094 = vsub.s32 %v7091, %v7093
    %v7095 = vrot.slane %v7081, %v7094
    %v7096 = vcombine.low %v7088, %v7095
    %v7097 = vcombine.low %v4928, %v4936
    %v7098 = vcombine.low %v4935, %v4937
    %v7100 = vunpack.c.l.s4 1983009808
    %v7101 = vunpack.c.0.s8 %v7100
    %v7102 = vlaneseq
    %v7103 = vshrl.u32 %v7102, 7
    %v7104 = vsub.s32 %v7101, %v7103
    %v7105 = vrot.slane %v7097, %v7104
    %v7107 = vunpack.c.l.s4 1983009808
    %v7108 = vunpack.c.0.s8 %v7107
    %v7109 = vlaneseq
    %v7110 = vshrl.u32 %v7109, 7
    %v7111 = vsub.s32 %v7108, %v7110
    %v7112 = vrot.slane %v7098, %v7111
    %v7113 = vcombine.low %v7105, %v7112
    %v7114 = vcombine.low %v4945, %v4953
    %v7115 = vcombine.low %v4952, %v4954
    %v7117 = vunpack.c.l.s4 1983009808
    %v7118 = vunpack.c.0.s8 %v7117
    %v7119 = vlaneseq
    %v7120 = vshrl.u32 %v7119, 7
    %v7121 = vsub.s32 %v7118, %v7120
    %v7122 = vrot.slane %v7114, %v7121
    %v7124 = vunpack.c.l.s4 1983009808
    %v7125 = vunpack.c.0.s8 %v7124
    %v7126 = vlaneseq
    %v7127 = vshrl.u32 %v7126, 7
    %v7128 = vsub.s32 %v7125, %v7127
    %v7129 = vrot.slane %v7115, %v7128
    %v7130 = vcombine.low %v7122, %v7129
    %v7131 = vcombine.low %v4962, %v4970
    %v7132 = vcombine.low %v4969, %v4971
    %v7134 = vunpack.c.l.s4 1983009808
    %v7135 = vunpack.c.0.s8 %v7134
    %v7136 = vlaneseq
    %v7137 = vshrl.u32 %v7136, 7
    %v7138 = vsub.s32 %v7135, %v7137
    %v7139 = vrot.slane %v7131, %v7138
    %v7141 = vunpack.c.l.s4 1983009808
    %v7142 = vunpack.c.0.s8 %v7141
    %v7143 = vlaneseq
    %v7144 = vshrl.u32 %v7143, 7
    %v7145 = vsub.s32 %v7142, %v7144
    %v7146 = vrot.slane %v7132, %v7145
    %v7147 = vcombine.low %v7139, %v7146
    %v7148 = vcombine.low %v4979, %v4987
    %v7149 = vcombine.low %v4986, %v4988
    %v7151 = vunpack.c.l.s4 1983009808
    %v7152 = vunpack.c.0.s8 %v7151
    %v7153 = vlaneseq
    %v7154 = vshrl.u32 %v7153, 7
    %v7155 = vsub.s32 %v7152, %v7154
    %v7156 = vrot.slane %v7148, %v7155
    %v7158 = vunpack.c.l.s4 1983009808
    %v7159 = vunpack.c.0.s8 %v7158
    %v7160 = vlaneseq
    %v7161 = vshrl.u32 %v7160, 7
    %v7162 = vsub.s32 %v7159, %v7161
    %v7163 = vrot.slane %v7149, %v7162
    %v7164 = vcombine.low %v7156, %v7163
    %v7165 = vcombine.low %v4996, %v5004
    %v7166 = vcombine.low %v5003, %v5005
    %v7168 = vunpack.c.l.s4 1983009808
    %v7169 = vunpack.c.0.s8 %v7168
    %v7170 = vlaneseq
    %v7171 = vshrl.u32 %v7170, 7
    %v7172 = vsub.s32 %v7169, %v7171
    %v7173 = vrot.slane %v7165, %v7172
    %v7175 = vunpack.c.l.s4 1983009808
    %v7176 = vunpack.c.0.s8 %v7175
    %v7177 = vlaneseq
    %v7178 = vshrl.u32 %v7177, 7
    %v7179 = vsub.s32 %v7176, %v7178
    %v7180 = vrot.slane %v7166, %v7179
    %v7181 = vcombine.low %v7173, %v7180
    %v7182 = vcombine.low %v5013, %v5021
    %v7183 = vcombine.low %v5020, %v5022
    %v7185 = vunpack.c.l.s4 1983009808
    %v7186 = vunpack.c.0.s8 %v7185
    %v7187 = vlaneseq
    %v7188 = vshrl.u32 %v7187, 7
    %v7189 = vsub.s32 %v7186, %v7188
    %v7190 = vrot.slane %v7182, %v7189
    %v7192 = vunpack.c.l.s4 1983009808
    %v7193 = vunpack.c.0.s8 %v7192
    %v7194 = vlaneseq
    %v7195 = vshrl.u32 %v7194, 7
    %v7196 = vsub.s32 %v7193, %v7195
    %v7197 = vrot.slane %v7183, %v7196
    %v7198 = vcombine.low %v7190, %v7197
    %v7199 = vcombine.low %v5030, %v5038
    %v7200 = vcombine.low %v5037, %v5039
    %v7202 = vunpack.c.l.s4 1983009808
    %v7203 = vunpack.c.0.s8 %v7202
    %v7204 = vlaneseq
    %v7205 = vshrl.u32 %v7204, 7
    %v7206 = vsub.s32 %v7203, %v7205
    %v7207 = vrot.slane %v7199, %v7206
    %v7209 = vunpack.c.l.s4 1983009808
    %v7210 = vunpack.c.0.s8 %v7209
    %v7211 = vlaneseq
    %v7212 = vshrl.u32 %v7211, 7
    %v7213 = vsub.s32 %v7210, %v7212
    %v7214 = vrot.slane %v7200, %v7213
    %v7215 = vcombine.low %v7207, %v7214
    %v7216 = vcombine.low %v5047, %v5055
    %v7217 = vcombine.low %v5054, %v5056
    %v7219 = vunpack.c.l.s4 1983009808
    %v7220 = vunpack.c.0.s8 %v7219
    %v7221 = vlaneseq
    %v7222 = vshrl.u32 %v7221, 7
    %v7223 = vsub.s32 %v7220, %v7222
    %v7224 = vrot.slane %v7216, %v7223
    %v7226 = vunpack.c.l.s4 1983009808
    %v7227 = vunpack.c.0.s8 %v7226
    %v7228 = vlaneseq
    %v7229 = vshrl.u32 %v7228, 7
    %v7230 = vsub.s32 %v7227, %v7229
    %v7231 = vrot.slane %v7217, %v7230
    %v7232 = vcombine.low %v7224, %v7231
    %v7233 = vcombine.low %v5064, %v5072
    %v7234 = vcombine.low %v5071, %v5073
    %v7236 = vunpack.c.l.s4 1983009808
    %v7237 = vunpack.c.0.s8 %v7236
    %v7238 = vlaneseq
    %v7239 = vshrl.u32 %v7238, 7
    %v7240 = vsub.s32 %v7237, %v7239
    %v7241 = vrot.slane %v7233, %v7240
    %v7243 = vunpack.c.l.s4 1983009808
    %v7244 = vunpack.c.0.s8 %v7243
    %v7245 = vlaneseq
    %v7246 = vshrl.u32 %v7245, 7
    %v7247 = vsub.s32 %v7244, %v7246
    %v7248 = vrot.slane %v7234, %v7247
    %v7249 = vcombine.low %v7241, %v7248
    %v7250 = vcombine.low %v5081, %v5089
    %v7251 = vcombine.low %v5088, %v5090
    %v7253 = vunpack.c.l.s4 1983009808
    %v7254 = vunpack.c.0.s8 %v7253
    %v7255 = vlaneseq
    %v7256 = vshrl.u32 %v7255, 7
    %v7257 = vsub.s32 %v7254, %v7256
    %v7258 = vrot.slane %v7250, %v7257
    %v7260 = vunpack.c.l.s4 1983009808
    %v7261 = vunpack.c.0.s8 %v7260
    %v7262 = vlaneseq
    %v7263 = vshrl.u32 %v7262, 7
    %v7264 = vsub.s32 %v7261, %v7263
    %v7265 = vrot.slane %v7251, %v7264
    %v7266 = vcombine.low %v7258, %v7265
    %v7267 = vcombine.low %v5098, %v5106
    %v7268 = vcombine.low %v5105, %v5107
    %v7270 = vunpack.c.l.s4 1983009808
    %v7271 = vunpack.c.0.s8 %v7270
    %v7272 = vlaneseq
    %v7273 = vshrl.u32 %v7272, 7
    %v7274 = vsub.s32 %v7271, %v7273
    %v7275 = vrot.slane %v7267, %v7274
    %v7277 = vunpack.c.l.s4 1983009808
    %v7278 = vunpack.c.0.s8 %v7277
    %v7279 = vlaneseq
    %v7280 = vshrl.u32 %v7279, 7
    %v7281 = vsub.s32 %v7278, %v7280
    %v7282 = vrot.slane %v7268, %v7281
    %v7283 = vcombine.low %v7275, %v7282
    %v7284 = vcombine.low %v5115, %v5123
    %v7285 = vcombine.low %v5122, %v5124
    %v7287 = vunpack.c.l.s4 1983009808
    %v7288 = vunpack.c.0.s8 %v7287
    %v7289 = vlaneseq
    %v7290 = vshrl.u32 %v7289, 7
    %v7291 = vsub.s32 %v7288, %v7290
    %v7292 = vrot.slane %v7284, %v7291
    %v7294 = vunpack.c.l.s4 1983009808
    %v7295 = vunpack.c.0.s8 %v7294
    %v7296 = vlaneseq
    %v7297 = vshrl.u32 %v7296, 7
    %v7298 = vsub.s32 %v7295, %v7297
    %v7299 = vrot.slane %v7285, %v7298
    %v7300 = vcombine.low %v7292, %v7299
    %v7301 = vcombine.low %v5132, %v5140
    %v7302 = vcombine.low %v5139, %v5141
    %v7304 = vunpack.c.l.s4 1983009808
    %v7305 = vunpack.c.0.s8 %v7304
    %v7306 = vlaneseq
    %v7307 = vshrl.u32 %v7306, 7
    %v7308 = vsub.s32 %v7305, %v7307
    %v7309 = vrot.slane %v7301, %v7308
    %v7311 = vunpack.c.l.s4 1983009808
    %v7312 = vunpack.c.0.s8 %v7311
    %v7313 = vlaneseq
    %v7314 = vshrl.u32 %v7313, 7
    %v7315 = vsub.s32 %v7312, %v7314
    %v7316 = vrot.slane %v7302, %v7315
    %v7317 = vcombine.low %v7309, %v7316
    %v7318 = vcombine.low %v5149, %v5157
    %v7319 = vcombine.low %v5156, %v5158
    %v7321 = vunpack.c.l.s4 1983009808
    %v7322 = vunpack.c.0.s8 %v7321
    %v7323 = vlaneseq
    %v7324 = vshrl.u32 %v7323, 7
    %v7325 = vsub.s32 %v7322, %v7324
    %v7326 = vrot.slane %v7318, %v7325
    %v7328 = vunpack.c.l.s4 1983009808
    %v7329 = vunpack.c.0.s8 %v7328
    %v7330 = vlaneseq
    %v7331 = vshrl.u32 %v7330, 7
    %v7332 = vsub.s32 %v7329, %v7331
    %v7333 = vrot.slane %v7319, %v7332
    %v7334 = vcombine.low %v7326, %v7333
    %v7335 = vcombine.low %v5166, %v5174
    %v7336 = vcombine.low %v5173, %v5175
    %v7338 = vunpack.c.l.s4 1983009808
    %v7339 = vunpack.c.0.s8 %v7338
    %v7340 = vlaneseq
    %v7341 = vshrl.u32 %v7340, 7
    %v7342 = vsub.s32 %v7339, %v7341
    %v7343 = vrot.slane %v7335, %v7342
    %v7345 = vunpack.c.l.s4 1983009808
    %v7346 = vunpack.c.0.s8 %v7345
    %v7347 = vlaneseq
    %v7348 = vshrl.u32 %v7347, 7
    %v7349 = vsub.s32 %v7346, %v7348
    %v7350 = vrot.slane %v7336, %v7349
    %v7351 = vcombine.low %v7343, %v7350
    %v7352 = vcombine.low %v5183, %v5191
    %v7353 = vcombine.low %v5190, %v5192
    %v7355 = vunpack.c.l.s4 1983009808
    %v7356 = vunpack.c.0.s8 %v7355
    %v7357 = vlaneseq
    %v7358 = vshrl.u32 %v7357, 7
    %v7359 = vsub.s32 %v7356, %v7358
    %v7360 = vrot.slane %v7352, %v7359
    %v7362 = vunpack.c.l.s4 1983009808
    %v7363 = vunpack.c.0.s8 %v7362
    %v7364 = vlaneseq
    %v7365 = vshrl.u32 %v7364, 7
    %v7366 = vsub.s32 %v7363, %v7365
    %v7367 = vrot.slane %v7353, %v7366
    %v7368 = vcombine.low %v7360, %v7367
    %v7369 = vcombine.low %v5200, %v5208
    %v7370 = vcombine.low %v5207, %v5209
    %v7372 = vunpack.c.l.s4 1983009808
    %v7373 = vunpack.c.0.s8 %v7372
    %v7374 = vlaneseq
    %v7375 = vshrl.u32 %v7374, 7
    %v7376 = vsub.s32 %v7373, %v7375
    %v7377 = vrot.slane %v7369, %v7376
    %v7379 = vunpack.c.l.s4 1983009808
    %v7380 = vunpack.c.0.s8 %v7379
    %v7381 = vlaneseq
    %v7382 = vshrl.u32 %v7381, 7
    %v7383 = vsub.s32 %v7380, %v7382
    %v7384 = vrot.slane %v7370, %v7383
    %v7385 = vcombine.low %v7377, %v7384
    %v7386 = vcombine.low %v5217, %v5225
    %v7387 = vcombine.low %v5224, %v5226
    %v7389 = vunpack.c.l.s4 1983009808
    %v7390 = vunpack.c.0.s8 %v7389
    %v7391 = vlaneseq
    %v7392 = vshrl.u32 %v7391, 7
    %v7393 = vsub.s32 %v7390, %v7392
    %v7394 = vrot.slane %v7386, %v7393
    %v7396 = vunpack.c.l.s4 1983009808
    %v7397 = vunpack.c.0.s8 %v7396
    %v7398 = vlaneseq
    %v7399 = vshrl.u32 %v7398, 7
    %v7400 = vsub.s32 %v7397, %v7399
    %v7401 = vrot.slane %v7387, %v7400
    %v7402 = vcombine.low %v7394, %v7401
    %v7403 = vcombine.low %v5234, %v5242
    %v7404 = vcombine.low %v5241, %v5243
    %v7406 = vunpack.c.l.s4 1983009808
    %v7407 = vunpack.c.0.s8 %v7406
    %v7408 = vlaneseq
    %v7409 = vshrl.u32 %v7408, 7
    %v7410 = vsub.s32 %v7407, %v7409
    %v7411 = vrot.slane %v7403, %v7410
    %v7413 = vunpack.c.l.s4 1983009808
    %v7414 = vunpack.c.0.s8 %v7413
    %v7415 = vlaneseq
    %v7416 = vshrl.u32 %v7415, 7
    %v7417 = vsub.s32 %v7414, %v7416
    %v7418 = vrot.slane %v7404, %v7417
    %v7419 = vcombine.low %v7411, %v7418
    %7420 = vset.pattern.permute.xlu0 0
    %7421 = vperm.xlu0 %7420, %v5260
    %v7422 = vpop.permute.xlu0 %7421
    %7423 = vset.pattern.permute.xlu0 0
    %7424 = vperm.xlu0 %7423, %v5277
    %v7425 = vpop.permute.xlu0 %7424
    %7426 = vset.pattern.permute.xlu0 0
    %7427 = vperm.xlu0 %7426, %v5294
    %v7428 = vpop.permute.xlu0 %7427
    %7429 = vset.pattern.permute.xlu0 0
    %7430 = vperm.xlu0 %7429, %v5311
    %v7431 = vpop.permute.xlu0 %7430
    %7432 = vset.pattern.permute.xlu0 0
    %7433 = vperm.xlu0 %7432, %v5328
    %v7434 = vpop.permute.xlu0 %7433
    %7435 = vset.pattern.permute.xlu0 0
    %7436 = vperm.xlu0 %7435, %v5345
    %v7437 = vpop.permute.xlu0 %7436
    %7438 = vset.pattern.permute.xlu0 0
    %7439 = vperm.xlu0 %7438, %v5362
    %v7440 = vpop.permute.xlu0 %7439
    %7441 = vset.pattern.permute.xlu0 0
    %7442 = vperm.xlu0 %7441, %v5379
    %v7443 = vpop.permute.xlu0 %7442
    %7444 = vset.pattern.permute.xlu0 0
    %7445 = vperm.xlu0 %7444, %v5396
    %v7446 = vpop.permute.xlu0 %7445
    %7447 = vset.pattern.permute.xlu0 0
    %7448 = vperm.xlu0 %7447, %v5413
    %v7449 = vpop.permute.xlu0 %7448
    %7450 = vset.pattern.permute.xlu0 0
    %7451 = vperm.xlu0 %7450, %v5430
    %v7452 = vpop.permute.xlu0 %7451
    %7453 = vset.pattern.permute.xlu0 0
    %7454 = vperm.xlu0 %7453, %v5447
    %v7455 = vpop.permute.xlu0 %7454
    %7456 = vset.pattern.permute.xlu0 0
    %7457 = vperm.xlu0 %7456, %v5464
    %v7458 = vpop.permute.xlu0 %7457
    %7459 = vset.pattern.permute.xlu0 0
    %7460 = vperm.xlu0 %7459, %v5481
    %v7461 = vpop.permute.xlu0 %7460
    %7462 = vset.pattern.permute.xlu0 0
    %7463 = vperm.xlu0 %7462, %v5498
    %v7464 = vpop.permute.xlu0 %7463
    %7465 = vset.pattern.permute.xlu0 0
    %7466 = vperm.xlu0 %7465, %v5515
    %v7467 = vpop.permute.xlu0 %7466
    %7468 = vset.pattern.permute.xlu0 0
    %7469 = vperm.xlu0 %7468, %v5532
    %v7470 = vpop.permute.xlu0 %7469
    %7471 = vset.pattern.permute.xlu0 0
    %7472 = vperm.xlu0 %7471, %v5549
    %v7473 = vpop.permute.xlu0 %7472
    %7474 = vset.pattern.permute.xlu0 0
    %7475 = vperm.xlu0 %7474, %v5566
    %v7476 = vpop.permute.xlu0 %7475
    %7477 = vset.pattern.permute.xlu0 0
    %7478 = vperm.xlu0 %7477, %v5583
    %v7479 = vpop.permute.xlu0 %7478
    %7480 = vset.pattern.permute.xlu0 0
    %7481 = vperm.xlu0 %7480, %v5600
    %v7482 = vpop.permute.xlu0 %7481
    %7483 = vset.pattern.permute.xlu0 0
    %7484 = vperm.xlu0 %7483, %v5617
    %v7485 = vpop.permute.xlu0 %7484
    %7486 = vset.pattern.permute.xlu0 0
    %7487 = vperm.xlu0 %7486, %v5634
    %v7488 = vpop.permute.xlu0 %7487
    %7489 = vset.pattern.permute.xlu0 0
    %7490 = vperm.xlu0 %7489, %v5651
    %v7491 = vpop.permute.xlu0 %7490
    %7492 = vset.pattern.permute.xlu0 0
    %7493 = vperm.xlu0 %7492, %v5668
    %v7494 = vpop.permute.xlu0 %7493
    %7495 = vset.pattern.permute.xlu0 0
    %7496 = vperm.xlu0 %7495, %v5685
    %v7497 = vpop.permute.xlu0 %7496
    %7498 = vset.pattern.permute.xlu0 0
    %7499 = vperm.xlu0 %7498, %v5702
    %v7500 = vpop.permute.xlu0 %7499
    %7501 = vset.pattern.permute.xlu0 0
    %7502 = vperm.xlu0 %7501, %v5719
    %v7503 = vpop.permute.xlu0 %7502
    %7504 = vset.pattern.permute.xlu0 0
    %7505 = vperm.xlu0 %7504, %v5736
    %v7506 = vpop.permute.xlu0 %7505
    %7507 = vset.pattern.permute.xlu0 0
    %7508 = vperm.xlu0 %7507, %v5753
    %v7509 = vpop.permute.xlu0 %7508
    %7510 = vset.pattern.permute.xlu0 0
    %7511 = vperm.xlu0 %7510, %v5770
    %v7512 = vpop.permute.xlu0 %7511
    %7513 = vset.pattern.permute.xlu0 0
    %7514 = vperm.xlu0 %7513, %v5787
    %v7515 = vpop.permute.xlu0 %7514
    %7516 = vset.pattern.permute.xlu0 0
    %7517 = vperm.xlu0 %7516, %v5804
    %v7518 = vpop.permute.xlu0 %7517
    %7519 = vset.pattern.permute.xlu0 0
    %7520 = vperm.xlu0 %7519, %v5821
    %v7521 = vpop.permute.xlu0 %7520
    %7522 = vset.pattern.permute.xlu0 0
    %7523 = vperm.xlu0 %7522, %v5838
    %v7524 = vpop.permute.xlu0 %7523
    %7525 = vset.pattern.permute.xlu0 0
    %7526 = vperm.xlu0 %7525, %v5855
    %v7527 = vpop.permute.xlu0 %7526
    %7528 = vset.pattern.permute.xlu0 0
    %7529 = vperm.xlu0 %7528, %v5872
    %v7530 = vpop.permute.xlu0 %7529
    %7531 = vset.pattern.permute.xlu0 0
    %7532 = vperm.xlu0 %7531, %v5889
    %v7533 = vpop.permute.xlu0 %7532
    %7534 = vset.pattern.permute.xlu0 0
    %7535 = vperm.xlu0 %7534, %v5906
    %v7536 = vpop.permute.xlu0 %7535
    %7537 = vset.pattern.permute.xlu0 0
    %7538 = vperm.xlu0 %7537, %v5923
    %v7539 = vpop.permute.xlu0 %7538
    %7540 = vset.pattern.permute.xlu0 0
    %7541 = vperm.xlu0 %7540, %v5940
    %v7542 = vpop.permute.xlu0 %7541
    %7543 = vset.pattern.permute.xlu0 0
    %7544 = vperm.xlu0 %7543, %v5957
    %v7545 = vpop.permute.xlu0 %7544
    %7546 = vset.pattern.permute.xlu0 0
    %7547 = vperm.xlu0 %7546, %v5974
    %v7548 = vpop.permute.xlu0 %7547
    %7549 = vset.pattern.permute.xlu0 0
    %7550 = vperm.xlu0 %7549, %v5991
    %v7551 = vpop.permute.xlu0 %7550
    %7552 = vset.pattern.permute.xlu0 0
    %7553 = vperm.xlu0 %7552, %v6008
    %v7554 = vpop.permute.xlu0 %7553
    %7555 = vset.pattern.permute.xlu0 0
    %7556 = vperm.xlu0 %7555, %v6025
    %v7557 = vpop.permute.xlu0 %7556
    %7558 = vset.pattern.permute.xlu0 0
    %7559 = vperm.xlu0 %7558, %v6042
    %v7560 = vpop.permute.xlu0 %7559
    %7561 = vset.pattern.permute.xlu0 0
    %7562 = vperm.xlu0 %7561, %v6059
    %v7563 = vpop.permute.xlu0 %7562
    %7564 = vset.pattern.permute.xlu0 0
    %7565 = vperm.xlu0 %7564, %v6076
    %v7566 = vpop.permute.xlu0 %7565
    %7567 = vset.pattern.permute.xlu0 0
    %7568 = vperm.xlu0 %7567, %v6093
    %v7569 = vpop.permute.xlu0 %7568
    %7570 = vset.pattern.permute.xlu0 0
    %7571 = vperm.xlu0 %7570, %v6110
    %v7572 = vpop.permute.xlu0 %7571
    %7573 = vset.pattern.permute.xlu0 0
    %7574 = vperm.xlu0 %7573, %v6127
    %v7575 = vpop.permute.xlu0 %7574
    %7576 = vset.pattern.permute.xlu0 0
    %7577 = vperm.xlu0 %7576, %v6144
    %v7578 = vpop.permute.xlu0 %7577
    %7579 = vset.pattern.permute.xlu0 0
    %7580 = vperm.xlu0 %7579, %v6161
    %v7581 = vpop.permute.xlu0 %7580
    %7582 = vset.pattern.permute.xlu0 0
    %7583 = vperm.xlu0 %7582, %v6178
    %v7584 = vpop.permute.xlu0 %7583
    %7585 = vset.pattern.permute.xlu0 0
    %7586 = vperm.xlu0 %7585, %v6195
    %v7587 = vpop.permute.xlu0 %7586
    %7588 = vset.pattern.permute.xlu0 0
    %7589 = vperm.xlu0 %7588, %v6212
    %v7590 = vpop.permute.xlu0 %7589
    %7591 = vset.pattern.permute.xlu0 0
    %7592 = vperm.xlu0 %7591, %v6229
    %v7593 = vpop.permute.xlu0 %7592
    %7594 = vset.pattern.permute.xlu0 0
    %7595 = vperm.xlu0 %7594, %v6246
    %v7596 = vpop.permute.xlu0 %7595
    %7597 = vset.pattern.permute.xlu0 0
    %7598 = vperm.xlu0 %7597, %v6263
    %v7599 = vpop.permute.xlu0 %7598
    %7600 = vset.pattern.permute.xlu0 0
    %7601 = vperm.xlu0 %7600, %v6280
    %v7602 = vpop.permute.xlu0 %7601
    %7603 = vset.pattern.permute.xlu0 0
    %7604 = vperm.xlu0 %7603, %v6297
    %v7605 = vpop.permute.xlu0 %7604
    %7606 = vset.pattern.permute.xlu0 0
    %7607 = vperm.xlu0 %7606, %v6314
    %v7608 = vpop.permute.xlu0 %7607
    %7609 = vset.pattern.permute.xlu0 0
    %7610 = vperm.xlu0 %7609, %v6331
    %v7611 = vpop.permute.xlu0 %7610
    %7612 = vset.pattern.permute.xlu0 0
    %7613 = vperm.xlu0 %7612, %v6348
    %v7614 = vpop.permute.xlu0 %7613
    %7615 = vset.pattern.permute.xlu0 0
    %7616 = vperm.xlu0 %7615, %v6365
    %v7617 = vpop.permute.xlu0 %7616
    %7618 = vset.pattern.permute.xlu0 0
    %7619 = vperm.xlu0 %7618, %v6382
    %v7620 = vpop.permute.xlu0 %7619
    %7621 = vset.pattern.permute.xlu0 0
    %7622 = vperm.xlu0 %7621, %v6399
    %v7623 = vpop.permute.xlu0 %7622
    %7624 = vset.pattern.permute.xlu0 0
    %7625 = vperm.xlu0 %7624, %v6416
    %v7626 = vpop.permute.xlu0 %7625
    %7627 = vset.pattern.permute.xlu0 0
    %7628 = vperm.xlu0 %7627, %v6433
    %v7629 = vpop.permute.xlu0 %7628
    %7630 = vset.pattern.permute.xlu0 0
    %7631 = vperm.xlu0 %7630, %v6450
    %v7632 = vpop.permute.xlu0 %7631
    %7633 = vset.pattern.permute.xlu0 0
    %7634 = vperm.xlu0 %7633, %v6467
    %v7635 = vpop.permute.xlu0 %7634
    %7636 = vset.pattern.permute.xlu0 0
    %7637 = vperm.xlu0 %7636, %v6484
    %v7638 = vpop.permute.xlu0 %7637
    %7639 = vset.pattern.permute.xlu0 0
    %7640 = vperm.xlu0 %7639, %v6501
    %v7641 = vpop.permute.xlu0 %7640
    %7642 = vset.pattern.permute.xlu0 0
    %7643 = vperm.xlu0 %7642, %v6518
    %v7644 = vpop.permute.xlu0 %7643
    %7645 = vset.pattern.permute.xlu0 0
    %7646 = vperm.xlu0 %7645, %v6535
    %v7647 = vpop.permute.xlu0 %7646
    %7648 = vset.pattern.permute.xlu0 0
    %7649 = vperm.xlu0 %7648, %v6552
    %v7650 = vpop.permute.xlu0 %7649
    %7651 = vset.pattern.permute.xlu0 0
    %7652 = vperm.xlu0 %7651, %v6569
    %v7653 = vpop.permute.xlu0 %7652
    %7654 = vset.pattern.permute.xlu0 0
    %7655 = vperm.xlu0 %7654, %v6586
    %v7656 = vpop.permute.xlu0 %7655
    %7657 = vset.pattern.permute.xlu0 0
    %7658 = vperm.xlu0 %7657, %v6603
    %v7659 = vpop.permute.xlu0 %7658
    %7660 = vset.pattern.permute.xlu0 0
    %7661 = vperm.xlu0 %7660, %v6620
    %v7662 = vpop.permute.xlu0 %7661
    %7663 = vset.pattern.permute.xlu0 0
    %7664 = vperm.xlu0 %7663, %v6637
    %v7665 = vpop.permute.xlu0 %7664
    %7666 = vset.pattern.permute.xlu0 0
    %7667 = vperm.xlu0 %7666, %v6654
    %v7668 = vpop.permute.xlu0 %7667
    %7669 = vset.pattern.permute.xlu0 0
    %7670 = vperm.xlu0 %7669, %v6671
    %v7671 = vpop.permute.xlu0 %7670
    %7672 = vset.pattern.permute.xlu0 0
    %7673 = vperm.xlu0 %7672, %v6688
    %v7674 = vpop.permute.xlu0 %7673
    %7675 = vset.pattern.permute.xlu0 0
    %7676 = vperm.xlu0 %7675, %v6705
    %v7677 = vpop.permute.xlu0 %7676
    %7678 = vset.pattern.permute.xlu0 0
    %7679 = vperm.xlu0 %7678, %v6722
    %v7680 = vpop.permute.xlu0 %7679
    %7681 = vset.pattern.permute.xlu0 0
    %7682 = vperm.xlu0 %7681, %v6739
    %v7683 = vpop.permute.xlu0 %7682
    %7684 = vset.pattern.permute.xlu0 0
    %7685 = vperm.xlu0 %7684, %v6756
    %v7686 = vpop.permute.xlu0 %7685
    %7687 = vset.pattern.permute.xlu0 0
    %7688 = vperm.xlu0 %7687, %v6773
    %v7689 = vpop.permute.xlu0 %7688
    %7690 = vset.pattern.permute.xlu0 0
    %7691 = vperm.xlu0 %7690, %v6790
    %v7692 = vpop.permute.xlu0 %7691
    %7693 = vset.pattern.permute.xlu0 0
    %7694 = vperm.xlu0 %7693, %v6807
    %v7695 = vpop.permute.xlu0 %7694
    %7696 = vset.pattern.permute.xlu0 0
    %7697 = vperm.xlu0 %7696, %v6824
    %v7698 = vpop.permute.xlu0 %7697
    %7699 = vset.pattern.permute.xlu0 0
    %7700 = vperm.xlu0 %7699, %v6841
    %v7701 = vpop.permute.xlu0 %7700
    %7702 = vset.pattern.permute.xlu0 0
    %7703 = vperm.xlu0 %7702, %v6858
    %v7704 = vpop.permute.xlu0 %7703
    %7705 = vset.pattern.permute.xlu0 0
    %7706 = vperm.xlu0 %7705, %v6875
    %v7707 = vpop.permute.xlu0 %7706
    %7708 = vset.pattern.permute.xlu0 0
    %7709 = vperm.xlu0 %7708, %v6892
    %v7710 = vpop.permute.xlu0 %7709
    %7711 = vset.pattern.permute.xlu0 0
    %7712 = vperm.xlu0 %7711, %v6909
    %v7713 = vpop.permute.xlu0 %7712
    %7714 = vset.pattern.permute.xlu0 0
    %7715 = vperm.xlu0 %7714, %v6926
    %v7716 = vpop.permute.xlu0 %7715
    %7717 = vset.pattern.permute.xlu0 0
    %7718 = vperm.xlu0 %7717, %v6943
    %v7719 = vpop.permute.xlu0 %7718
    %7720 = vset.pattern.permute.xlu0 0
    %7721 = vperm.xlu0 %7720, %v6960
    %v7722 = vpop.permute.xlu0 %7721
    %7723 = vset.pattern.permute.xlu0 0
    %7724 = vperm.xlu0 %7723, %v6977
    %v7725 = vpop.permute.xlu0 %7724
    %7726 = vset.pattern.permute.xlu0 0
    %7727 = vperm.xlu0 %7726, %v6994
    %v7728 = vpop.permute.xlu0 %7727
    %7729 = vset.pattern.permute.xlu0 0
    %7730 = vperm.xlu0 %7729, %v7011
    %v7731 = vpop.permute.xlu0 %7730
    %7732 = vset.pattern.permute.xlu0 0
    %7733 = vperm.xlu0 %7732, %v7028
    %v7734 = vpop.permute.xlu0 %7733
    %7735 = vset.pattern.permute.xlu0 0
    %7736 = vperm.xlu0 %7735, %v7045
    %v7737 = vpop.permute.xlu0 %7736
    %7738 = vset.pattern.permute.xlu0 0
    %7739 = vperm.xlu0 %7738, %v7062
    %v7740 = vpop.permute.xlu0 %7739
    %7741 = vset.pattern.permute.xlu0 0
    %7742 = vperm.xlu0 %7741, %v7079
    %v7743 = vpop.permute.xlu0 %7742
    %7744 = vset.pattern.permute.xlu0 0
    %7745 = vperm.xlu0 %7744, %v7096
    %v7746 = vpop.permute.xlu0 %7745
    %7747 = vset.pattern.permute.xlu0 0
    %7748 = vperm.xlu0 %7747, %v7113
    %v7749 = vpop.permute.xlu0 %7748
    %7750 = vset.pattern.permute.xlu0 0
    %7751 = vperm.xlu0 %7750, %v7130
    %v7752 = vpop.permute.xlu0 %7751
    %7753 = vset.pattern.permute.xlu0 0
    %7754 = vperm.xlu0 %7753, %v7147
    %v7755 = vpop.permute.xlu0 %7754
    %7756 = vset.pattern.permute.xlu0 0
    %7757 = vperm.xlu0 %7756, %v7164
    %v7758 = vpop.permute.xlu0 %7757
    %7759 = vset.pattern.permute.xlu0 0
    %7760 = vperm.xlu0 %7759, %v7181
    %v7761 = vpop.permute.xlu0 %7760
    %7762 = vset.pattern.permute.xlu0 0
    %7763 = vperm.xlu0 %7762, %v7198
    %v7764 = vpop.permute.xlu0 %7763
    %7765 = vset.pattern.permute.xlu0 0
    %7766 = vperm.xlu0 %7765, %v7215
    %v7767 = vpop.permute.xlu0 %7766
    %7768 = vset.pattern.permute.xlu0 0
    %7769 = vperm.xlu0 %7768, %v7232
    %v7770 = vpop.permute.xlu0 %7769
    %7771 = vset.pattern.permute.xlu0 0
    %7772 = vperm.xlu0 %7771, %v7249
    %v7773 = vpop.permute.xlu0 %7772
    %7774 = vset.pattern.permute.xlu0 0
    %7775 = vperm.xlu0 %7774, %v7266
    %v7776 = vpop.permute.xlu0 %7775
    %7777 = vset.pattern.permute.xlu0 0
    %7778 = vperm.xlu0 %7777, %v7283
    %v7779 = vpop.permute.xlu0 %7778
    %7780 = vset.pattern.permute.xlu0 0
    %7781 = vperm.xlu0 %7780, %v7300
    %v7782 = vpop.permute.xlu0 %7781
    %7783 = vset.pattern.permute.xlu0 0
    %7784 = vperm.xlu0 %7783, %v7317
    %v7785 = vpop.permute.xlu0 %7784
    %7786 = vset.pattern.permute.xlu0 0
    %7787 = vperm.xlu0 %7786, %v7334
    %v7788 = vpop.permute.xlu0 %7787
    %7789 = vset.pattern.permute.xlu0 0
    %7790 = vperm.xlu0 %7789, %v7351
    %v7791 = vpop.permute.xlu0 %7790
    %7792 = vset.pattern.permute.xlu0 0
    %7793 = vperm.xlu0 %7792, %v7368
    %v7794 = vpop.permute.xlu0 %7793
    %7795 = vset.pattern.permute.xlu0 0
    %7796 = vperm.xlu0 %7795, %v7385
    %v7797 = vpop.permute.xlu0 %7796
    %7798 = vset.pattern.permute.xlu0 0
    %7799 = vperm.xlu0 %7798, %v7402
    %v7800 = vpop.permute.xlu0 %7799
    %7801 = vset.pattern.permute.xlu0 0
    %7802 = vperm.xlu0 %7801, %v7419
    %v7803 = vpop.permute.xlu0 %7802
    %v7804 = vlaneseq
    %v7805 = vshrl.u32 %v7804, 7
    %v7806 = vsub.s32 %v987, %v7805
    %v7807 = vrot.slane %v7422, %v7806
    %v7808 = vlaneseq
    %v7809 = vshrl.u32 %v7808, 7
    %v7810 = vsub.s32 %v992, %v7809
    %v7811 = vrot.slane %v7425, %v7810
    %v7812 = vsel %vm997, %v7811, %v7807
    %v7813 = vlaneseq
    %v7814 = vshrl.u32 %v7813, 7
    %v7815 = vsub.s32 %v999, %v7814
    %v7816 = vrot.slane %v7428, %v7815
    %v7817 = vsel %vm1004, %v7816, %v7812
    %v7818 = vlaneseq
    %v7819 = vshrl.u32 %v7818, 7
    %v7820 = vsub.s32 %v1006, %v7819
    %v7821 = vrot.slane %v7431, %v7820
    %v7822 = vsel %vm1011, %v7821, %v7817
    %v7823 = vlaneseq
    %v7824 = vshrl.u32 %v7823, 7
    %v7825 = vsub.s32 %v1013, %v7824
    %v7826 = vrot.slane %v7434, %v7825
    %v7827 = vsel %vm1018, %v7826, %v7822
    %v7828 = vlaneseq
    %v7829 = vshrl.u32 %v7828, 7
    %v7830 = vsub.s32 %v1020, %v7829
    %v7831 = vrot.slane %v7437, %v7830
    %v7832 = vsel %vm1025, %v7831, %v7827
    %v7833 = vlaneseq
    %v7834 = vshrl.u32 %v7833, 7
    %v7835 = vsub.s32 %v1027, %v7834
    %v7836 = vrot.slane %v7440, %v7835
    %v7837 = vsel %vm1032, %v7836, %v7832
    %v7838 = vlaneseq
    %v7839 = vshrl.u32 %v7838, 7
    %v7840 = vsub.s32 %v1034, %v7839
    %v7841 = vrot.slane %v7443, %v7840
    %v7842 = vsel %vm1039, %v7841, %v7837
    %v7843 = vlaneseq
    %v7844 = vshrl.u32 %v7843, 7
    %v7845 = vsub.s32 %v1041, %v7844
    %v7846 = vrot.slane %v7446, %v7845
    %v7847 = vsel %vm1046, %v7846, %v7842
    %v7848 = vlaneseq
    %v7849 = vshrl.u32 %v7848, 7
    %v7850 = vsub.s32 %v1048, %v7849
    %v7851 = vrot.slane %v7449, %v7850
    %v7852 = vsel %vm1053, %v7851, %v7847
    %v7853 = vlaneseq
    %v7854 = vshrl.u32 %v7853, 7
    %v7855 = vsub.s32 %v1055, %v7854
    %v7856 = vrot.slane %v7452, %v7855
    %v7857 = vsel %vm1060, %v7856, %v7852
    %v7858 = vlaneseq
    %v7859 = vshrl.u32 %v7858, 7
    %v7860 = vsub.s32 %v1062, %v7859
    %v7861 = vrot.slane %v7455, %v7860
    %v7862 = vsel %vm1067, %v7861, %v7857
    %v7863 = vlaneseq
    %v7864 = vshrl.u32 %v7863, 7
    %v7865 = vsub.s32 %v1069, %v7864
    %v7866 = vrot.slane %v7458, %v7865
    %v7867 = vsel %vm1074, %v7866, %v7862
    %v7868 = vlaneseq
    %v7869 = vshrl.u32 %v7868, 7
    %v7870 = vsub.s32 %v1076, %v7869
    %v7871 = vrot.slane %v7461, %v7870
    %v7872 = vsel %vm1081, %v7871, %v7867
    %v7873 = vlaneseq
    %v7874 = vshrl.u32 %v7873, 7
    %v7875 = vsub.s32 %v1083, %v7874
    %v7876 = vrot.slane %v7464, %v7875
    %v7877 = vsel %vm1088, %v7876, %v7872
    %v7878 = vlaneseq
    %v7879 = vshrl.u32 %v7878, 7
    %v7880 = vsub.s32 %v1090, %v7879
    %v7881 = vrot.slane %v7467, %v7880
    %v7882 = vsel %vm1095, %v7881, %v7877
    %v7883 = vlaneseq
    %v7884 = vshrl.u32 %v7883, 7
    %v7885 = vsub.s32 %v987, %v7884
    %v7886 = vrot.slane %v7470, %v7885
    %v7887 = vlaneseq
    %v7888 = vshrl.u32 %v7887, 7
    %v7889 = vsub.s32 %v992, %v7888
    %v7890 = vrot.slane %v7473, %v7889
    %v7891 = vsel %vm997, %v7890, %v7886
    %v7892 = vlaneseq
    %v7893 = vshrl.u32 %v7892, 7
    %v7894 = vsub.s32 %v999, %v7893
    %v7895 = vrot.slane %v7476, %v7894
    %v7896 = vsel %vm1004, %v7895, %v7891
    %v7897 = vlaneseq
    %v7898 = vshrl.u32 %v7897, 7
    %v7899 = vsub.s32 %v1006, %v7898
    %v7900 = vrot.slane %v7479, %v7899
    %v7901 = vsel %vm1011, %v7900, %v7896
    %v7902 = vlaneseq
    %v7903 = vshrl.u32 %v7902, 7
    %v7904 = vsub.s32 %v1013, %v7903
    %v7905 = vrot.slane %v7482, %v7904
    %v7906 = vsel %vm1018, %v7905, %v7901
    %v7907 = vlaneseq
    %v7908 = vshrl.u32 %v7907, 7
    %v7909 = vsub.s32 %v1020, %v7908
    %v7910 = vrot.slane %v7485, %v7909
    %v7911 = vsel %vm1025, %v7910, %v7906
    %v7912 = vlaneseq
    %v7913 = vshrl.u32 %v7912, 7
    %v7914 = vsub.s32 %v1027, %v7913
    %v7915 = vrot.slane %v7488, %v7914
    %v7916 = vsel %vm1032, %v7915, %v7911
    %v7917 = vlaneseq
    %v7918 = vshrl.u32 %v7917, 7
    %v7919 = vsub.s32 %v1034, %v7918
    %v7920 = vrot.slane %v7491, %v7919
    %v7921 = vsel %vm1039, %v7920, %v7916
    %v7922 = vlaneseq
    %v7923 = vshrl.u32 %v7922, 7
    %v7924 = vsub.s32 %v1041, %v7923
    %v7925 = vrot.slane %v7494, %v7924
    %v7926 = vsel %vm1046, %v7925, %v7921
    %v7927 = vlaneseq
    %v7928 = vshrl.u32 %v7927, 7
    %v7929 = vsub.s32 %v1048, %v7928
    %v7930 = vrot.slane %v7497, %v7929
    %v7931 = vsel %vm1053, %v7930, %v7926
    %v7932 = vlaneseq
    %v7933 = vshrl.u32 %v7932, 7
    %v7934 = vsub.s32 %v1055, %v7933
    %v7935 = vrot.slane %v7500, %v7934
    %v7936 = vsel %vm1060, %v7935, %v7931
    %v7937 = vlaneseq
    %v7938 = vshrl.u32 %v7937, 7
    %v7939 = vsub.s32 %v1062, %v7938
    %v7940 = vrot.slane %v7503, %v7939
    %v7941 = vsel %vm1067, %v7940, %v7936
    %v7942 = vlaneseq
    %v7943 = vshrl.u32 %v7942, 7
    %v7944 = vsub.s32 %v1069, %v7943
    %v7945 = vrot.slane %v7506, %v7944
    %v7946 = vsel %vm1074, %v7945, %v7941
    %v7947 = vlaneseq
    %v7948 = vshrl.u32 %v7947, 7
    %v7949 = vsub.s32 %v1076, %v7948
    %v7950 = vrot.slane %v7509, %v7949
    %v7951 = vsel %vm1081, %v7950, %v7946
    %v7952 = vlaneseq
    %v7953 = vshrl.u32 %v7952, 7
    %v7954 = vsub.s32 %v1083, %v7953
    %v7955 = vrot.slane %v7512, %v7954
    %v7956 = vsel %vm1088, %v7955, %v7951
    %v7957 = vlaneseq
    %v7958 = vshrl.u32 %v7957, 7
    %v7959 = vsub.s32 %v1090, %v7958
    %v7960 = vrot.slane %v7515, %v7959
    %v7961 = vsel %vm1095, %v7960, %v7956
    %v7962 = vlaneseq
    %v7963 = vshrl.u32 %v7962, 7
    %v7964 = vsub.s32 %v987, %v7963
    %v7965 = vrot.slane %v7518, %v7964
    %v7966 = vlaneseq
    %v7967 = vshrl.u32 %v7966, 7
    %v7968 = vsub.s32 %v992, %v7967
    %v7969 = vrot.slane %v7521, %v7968
    %v7970 = vsel %vm997, %v7969, %v7965
    %v7971 = vlaneseq
    %v7972 = vshrl.u32 %v7971, 7
    %v7973 = vsub.s32 %v999, %v7972
    %v7974 = vrot.slane %v7524, %v7973
    %v7975 = vsel %vm1004, %v7974, %v7970
    %v7976 = vlaneseq
    %v7977 = vshrl.u32 %v7976, 7
    %v7978 = vsub.s32 %v1006, %v7977
    %v7979 = vrot.slane %v7527, %v7978
    %v7980 = vsel %vm1011, %v7979, %v7975
    %v7981 = vlaneseq
    %v7982 = vshrl.u32 %v7981, 7
    %v7983 = vsub.s32 %v1013, %v7982
    %v7984 = vrot.slane %v7530, %v7983
    %v7985 = vsel %vm1018, %v7984, %v7980
    %v7986 = vlaneseq
    %v7987 = vshrl.u32 %v7986, 7
    %v7988 = vsub.s32 %v1020, %v7987
    %v7989 = vrot.slane %v7533, %v7988
    %v7990 = vsel %vm1025, %v7989, %v7985
    %v7991 = vlaneseq
    %v7992 = vshrl.u32 %v7991, 7
    %v7993 = vsub.s32 %v1027, %v7992
    %v7994 = vrot.slane %v7536, %v7993
    %v7995 = vsel %vm1032, %v7994, %v7990
    %v7996 = vlaneseq
    %v7997 = vshrl.u32 %v7996, 7
    %v7998 = vsub.s32 %v1034, %v7997
    %v7999 = vrot.slane %v7539, %v7998
    %v8000 = vsel %vm1039, %v7999, %v7995
    %v8001 = vlaneseq
    %v8002 = vshrl.u32 %v8001, 7
    %v8003 = vsub.s32 %v1041, %v8002
    %v8004 = vrot.slane %v7542, %v8003
    %v8005 = vsel %vm1046, %v8004, %v8000
    %v8006 = vlaneseq
    %v8007 = vshrl.u32 %v8006, 7
    %v8008 = vsub.s32 %v1048, %v8007
    %v8009 = vrot.slane %v7545, %v8008
    %v8010 = vsel %vm1053, %v8009, %v8005
    %v8011 = vlaneseq
    %v8012 = vshrl.u32 %v8011, 7
    %v8013 = vsub.s32 %v1055, %v8012
    %v8014 = vrot.slane %v7548, %v8013
    %v8015 = vsel %vm1060, %v8014, %v8010
    %v8016 = vlaneseq
    %v8017 = vshrl.u32 %v8016, 7
    %v8018 = vsub.s32 %v1062, %v8017
    %v8019 = vrot.slane %v7551, %v8018
    %v8020 = vsel %vm1067, %v8019, %v8015
    %v8021 = vlaneseq
    %v8022 = vshrl.u32 %v8021, 7
    %v8023 = vsub.s32 %v1069, %v8022
    %v8024 = vrot.slane %v7554, %v8023
    %v8025 = vsel %vm1074, %v8024, %v8020
    %v8026 = vlaneseq
    %v8027 = vshrl.u32 %v8026, 7
    %v8028 = vsub.s32 %v1076, %v8027
    %v8029 = vrot.slane %v7557, %v8028
    %v8030 = vsel %vm1081, %v8029, %v8025
    %v8031 = vlaneseq
    %v8032 = vshrl.u32 %v8031, 7
    %v8033 = vsub.s32 %v1083, %v8032
    %v8034 = vrot.slane %v7560, %v8033
    %v8035 = vsel %vm1088, %v8034, %v8030
    %v8036 = vlaneseq
    %v8037 = vshrl.u32 %v8036, 7
    %v8038 = vsub.s32 %v1090, %v8037
    %v8039 = vrot.slane %v7563, %v8038
    %v8040 = vsel %vm1095, %v8039, %v8035
    %v8041 = vlaneseq
    %v8042 = vshrl.u32 %v8041, 7
    %v8043 = vsub.s32 %v987, %v8042
    %v8044 = vrot.slane %v7566, %v8043
    %v8045 = vlaneseq
    %v8046 = vshrl.u32 %v8045, 7
    %v8047 = vsub.s32 %v992, %v8046
    %v8048 = vrot.slane %v7569, %v8047
    %v8049 = vsel %vm997, %v8048, %v8044
    %v8050 = vlaneseq
    %v8051 = vshrl.u32 %v8050, 7
    %v8052 = vsub.s32 %v999, %v8051
    %v8053 = vrot.slane %v7572, %v8052
    %v8054 = vsel %vm1004, %v8053, %v8049
    %v8055 = vlaneseq
    %v8056 = vshrl.u32 %v8055, 7
    %v8057 = vsub.s32 %v1006, %v8056
    %v8058 = vrot.slane %v7575, %v8057
    %v8059 = vsel %vm1011, %v8058, %v8054
    %v8060 = vlaneseq
    %v8061 = vshrl.u32 %v8060, 7
    %v8062 = vsub.s32 %v1013, %v8061
    %v8063 = vrot.slane %v7578, %v8062
    %v8064 = vsel %vm1018, %v8063, %v8059
    %v8065 = vlaneseq
    %v8066 = vshrl.u32 %v8065, 7
    %v8067 = vsub.s32 %v1020, %v8066
    %v8068 = vrot.slane %v7581, %v8067
    %v8069 = vsel %vm1025, %v8068, %v8064
    %v8070 = vlaneseq
    %v8071 = vshrl.u32 %v8070, 7
    %v8072 = vsub.s32 %v1027, %v8071
    %v8073 = vrot.slane %v7584, %v8072
    %v8074 = vsel %vm1032, %v8073, %v8069
    %v8075 = vlaneseq
    %v8076 = vshrl.u32 %v8075, 7
    %v8077 = vsub.s32 %v1034, %v8076
    %v8078 = vrot.slane %v7587, %v8077
    %v8079 = vsel %vm1039, %v8078, %v8074
    %v8080 = vlaneseq
    %v8081 = vshrl.u32 %v8080, 7
    %v8082 = vsub.s32 %v1041, %v8081
    %v8083 = vrot.slane %v7590, %v8082
    %v8084 = vsel %vm1046, %v8083, %v8079
    %v8085 = vlaneseq
    %v8086 = vshrl.u32 %v8085, 7
    %v8087 = vsub.s32 %v1048, %v8086
    %v8088 = vrot.slane %v7593, %v8087
    %v8089 = vsel %vm1053, %v8088, %v8084
    %v8090 = vlaneseq
    %v8091 = vshrl.u32 %v8090, 7
    %v8092 = vsub.s32 %v1055, %v8091
    %v8093 = vrot.slane %v7596, %v8092
    %v8094 = vsel %vm1060, %v8093, %v8089
    %v8095 = vlaneseq
    %v8096 = vshrl.u32 %v8095, 7
    %v8097 = vsub.s32 %v1062, %v8096
    %v8098 = vrot.slane %v7599, %v8097
    %v8099 = vsel %vm1067, %v8098, %v8094
    %v8100 = vlaneseq
    %v8101 = vshrl.u32 %v8100, 7
    %v8102 = vsub.s32 %v1069, %v8101
    %v8103 = vrot.slane %v7602, %v8102
    %v8104 = vsel %vm1074, %v8103, %v8099
    %v8105 = vlaneseq
    %v8106 = vshrl.u32 %v8105, 7
    %v8107 = vsub.s32 %v1076, %v8106
    %v8108 = vrot.slane %v7605, %v8107
    %v8109 = vsel %vm1081, %v8108, %v8104
    %v8110 = vlaneseq
    %v8111 = vshrl.u32 %v8110, 7
    %v8112 = vsub.s32 %v1083, %v8111
    %v8113 = vrot.slane %v7608, %v8112
    %v8114 = vsel %vm1088, %v8113, %v8109
    %v8115 = vlaneseq
    %v8116 = vshrl.u32 %v8115, 7
    %v8117 = vsub.s32 %v1090, %v8116
    %v8118 = vrot.slane %v7611, %v8117
    %v8119 = vsel %vm1095, %v8118, %v8114
    %v8120 = vlaneseq
    %v8121 = vshrl.u32 %v8120, 7
    %v8122 = vsub.s32 %v987, %v8121
    %v8123 = vrot.slane %v7614, %v8122
    %v8124 = vlaneseq
    %v8125 = vshrl.u32 %v8124, 7
    %v8126 = vsub.s32 %v992, %v8125
    %v8127 = vrot.slane %v7617, %v8126
    %v8128 = vsel %vm997, %v8127, %v8123
    %v8129 = vlaneseq
    %v8130 = vshrl.u32 %v8129, 7
    %v8131 = vsub.s32 %v999, %v8130
    %v8132 = vrot.slane %v7620, %v8131
    %v8133 = vsel %vm1004, %v8132, %v8128
    %v8134 = vlaneseq
    %v8135 = vshrl.u32 %v8134, 7
    %v8136 = vsub.s32 %v1006, %v8135
    %v8137 = vrot.slane %v7623, %v8136
    %v8138 = vsel %vm1011, %v8137, %v8133
    %v8139 = vlaneseq
    %v8140 = vshrl.u32 %v8139, 7
    %v8141 = vsub.s32 %v1013, %v8140
    %v8142 = vrot.slane %v7626, %v8141
    %v8143 = vsel %vm1018, %v8142, %v8138
    %v8144 = vlaneseq
    %v8145 = vshrl.u32 %v8144, 7
    %v8146 = vsub.s32 %v1020, %v8145
    %v8147 = vrot.slane %v7629, %v8146
    %v8148 = vsel %vm1025, %v8147, %v8143
    %v8149 = vlaneseq
    %v8150 = vshrl.u32 %v8149, 7
    %v8151 = vsub.s32 %v1027, %v8150
    %v8152 = vrot.slane %v7632, %v8151
    %v8153 = vsel %vm1032, %v8152, %v8148
    %v8154 = vlaneseq
    %v8155 = vshrl.u32 %v8154, 7
    %v8156 = vsub.s32 %v1034, %v8155
    %v8157 = vrot.slane %v7635, %v8156
    %v8158 = vsel %vm1039, %v8157, %v8153
    %v8159 = vlaneseq
    %v8160 = vshrl.u32 %v8159, 7
    %v8161 = vsub.s32 %v1041, %v8160
    %v8162 = vrot.slane %v7638, %v8161
    %v8163 = vsel %vm1046, %v8162, %v8158
    %v8164 = vlaneseq
    %v8165 = vshrl.u32 %v8164, 7
    %v8166 = vsub.s32 %v1048, %v8165
    %v8167 = vrot.slane %v7641, %v8166
    %v8168 = vsel %vm1053, %v8167, %v8163
    %v8169 = vlaneseq
    %v8170 = vshrl.u32 %v8169, 7
    %v8171 = vsub.s32 %v1055, %v8170
    %v8172 = vrot.slane %v7644, %v8171
    %v8173 = vsel %vm1060, %v8172, %v8168
    %v8174 = vlaneseq
    %v8175 = vshrl.u32 %v8174, 7
    %v8176 = vsub.s32 %v1062, %v8175
    %v8177 = vrot.slane %v7647, %v8176
    %v8178 = vsel %vm1067, %v8177, %v8173
    %v8179 = vlaneseq
    %v8180 = vshrl.u32 %v8179, 7
    %v8181 = vsub.s32 %v1069, %v8180
    %v8182 = vrot.slane %v7650, %v8181
    %v8183 = vsel %vm1074, %v8182, %v8178
    %v8184 = vlaneseq
    %v8185 = vshrl.u32 %v8184, 7
    %v8186 = vsub.s32 %v1076, %v8185
    %v8187 = vrot.slane %v7653, %v8186
    %v8188 = vsel %vm1081, %v8187, %v8183
    %v8189 = vlaneseq
    %v8190 = vshrl.u32 %v8189, 7
    %v8191 = vsub.s32 %v1083, %v8190
    %v8192 = vrot.slane %v7656, %v8191
    %v8193 = vsel %vm1088, %v8192, %v8188
    %v8194 = vlaneseq
    %v8195 = vshrl.u32 %v8194, 7
    %v8196 = vsub.s32 %v1090, %v8195
    %v8197 = vrot.slane %v7659, %v8196
    %v8198 = vsel %vm1095, %v8197, %v8193
    %v8199 = vlaneseq
    %v8200 = vshrl.u32 %v8199, 7
    %v8201 = vsub.s32 %v987, %v8200
    %v8202 = vrot.slane %v7662, %v8201
    %v8203 = vlaneseq
    %v8204 = vshrl.u32 %v8203, 7
    %v8205 = vsub.s32 %v992, %v8204
    %v8206 = vrot.slane %v7665, %v8205
    %v8207 = vsel %vm997, %v8206, %v8202
    %v8208 = vlaneseq
    %v8209 = vshrl.u32 %v8208, 7
    %v8210 = vsub.s32 %v999, %v8209
    %v8211 = vrot.slane %v7668, %v8210
    %v8212 = vsel %vm1004, %v8211, %v8207
    %v8213 = vlaneseq
    %v8214 = vshrl.u32 %v8213, 7
    %v8215 = vsub.s32 %v1006, %v8214
    %v8216 = vrot.slane %v7671, %v8215
    %v8217 = vsel %vm1011, %v8216, %v8212
    %v8218 = vlaneseq
    %v8219 = vshrl.u32 %v8218, 7
    %v8220 = vsub.s32 %v1013, %v8219
    %v8221 = vrot.slane %v7674, %v8220
    %v8222 = vsel %vm1018, %v8221, %v8217
    %v8223 = vlaneseq
    %v8224 = vshrl.u32 %v8223, 7
    %v8225 = vsub.s32 %v1020, %v8224
    %v8226 = vrot.slane %v7677, %v8225
    %v8227 = vsel %vm1025, %v8226, %v8222
    %v8228 = vlaneseq
    %v8229 = vshrl.u32 %v8228, 7
    %v8230 = vsub.s32 %v1027, %v8229
    %v8231 = vrot.slane %v7680, %v8230
    %v8232 = vsel %vm1032, %v8231, %v8227
    %v8233 = vlaneseq
    %v8234 = vshrl.u32 %v8233, 7
    %v8235 = vsub.s32 %v1034, %v8234
    %v8236 = vrot.slane %v7683, %v8235
    %v8237 = vsel %vm1039, %v8236, %v8232
    %v8238 = vlaneseq
    %v8239 = vshrl.u32 %v8238, 7
    %v8240 = vsub.s32 %v1041, %v8239
    %v8241 = vrot.slane %v7686, %v8240
    %v8242 = vsel %vm1046, %v8241, %v8237
    %v8243 = vlaneseq
    %v8244 = vshrl.u32 %v8243, 7
    %v8245 = vsub.s32 %v1048, %v8244
    %v8246 = vrot.slane %v7689, %v8245
    %v8247 = vsel %vm1053, %v8246, %v8242
    %v8248 = vlaneseq
    %v8249 = vshrl.u32 %v8248, 7
    %v8250 = vsub.s32 %v1055, %v8249
    %v8251 = vrot.slane %v7692, %v8250
    %v8252 = vsel %vm1060, %v8251, %v8247
    %v8253 = vlaneseq
    %v8254 = vshrl.u32 %v8253, 7
    %v8255 = vsub.s32 %v1062, %v8254
    %v8256 = vrot.slane %v7695, %v8255
    %v8257 = vsel %vm1067, %v8256, %v8252
    %v8258 = vlaneseq
    %v8259 = vshrl.u32 %v8258, 7
    %v8260 = vsub.s32 %v1069, %v8259
    %v8261 = vrot.slane %v7698, %v8260
    %v8262 = vsel %vm1074, %v8261, %v8257
    %v8263 = vlaneseq
    %v8264 = vshrl.u32 %v8263, 7
    %v8265 = vsub.s32 %v1076, %v8264
    %v8266 = vrot.slane %v7701, %v8265
    %v8267 = vsel %vm1081, %v8266, %v8262
    %v8268 = vlaneseq
    %v8269 = vshrl.u32 %v8268, 7
    %v8270 = vsub.s32 %v1083, %v8269
    %v8271 = vrot.slane %v7704, %v8270
    %v8272 = vsel %vm1088, %v8271, %v8267
    %v8273 = vlaneseq
    %v8274 = vshrl.u32 %v8273, 7
    %v8275 = vsub.s32 %v1090, %v8274
    %v8276 = vrot.slane %v7707, %v8275
    %v8277 = vsel %vm1095, %v8276, %v8272
    %v8278 = vlaneseq
    %v8279 = vshrl.u32 %v8278, 7
    %v8280 = vsub.s32 %v987, %v8279
    %v8281 = vrot.slane %v7710, %v8280
    %v8282 = vlaneseq
    %v8283 = vshrl.u32 %v8282, 7
    %v8284 = vsub.s32 %v992, %v8283
    %v8285 = vrot.slane %v7713, %v8284
    %v8286 = vsel %vm997, %v8285, %v8281
    %v8287 = vlaneseq
    %v8288 = vshrl.u32 %v8287, 7
    %v8289 = vsub.s32 %v999, %v8288
    %v8290 = vrot.slane %v7716, %v8289
    %v8291 = vsel %vm1004, %v8290, %v8286
    %v8292 = vlaneseq
    %v8293 = vshrl.u32 %v8292, 7
    %v8294 = vsub.s32 %v1006, %v8293
    %v8295 = vrot.slane %v7719, %v8294
    %v8296 = vsel %vm1011, %v8295, %v8291
    %v8297 = vlaneseq
    %v8298 = vshrl.u32 %v8297, 7
    %v8299 = vsub.s32 %v1013, %v8298
    %v8300 = vrot.slane %v7722, %v8299
    %v8301 = vsel %vm1018, %v8300, %v8296
    %v8302 = vlaneseq
    %v8303 = vshrl.u32 %v8302, 7
    %v8304 = vsub.s32 %v1020, %v8303
    %v8305 = vrot.slane %v7725, %v8304
    %v8306 = vsel %vm1025, %v8305, %v8301
    %v8307 = vlaneseq
    %v8308 = vshrl.u32 %v8307, 7
    %v8309 = vsub.s32 %v1027, %v8308
    %v8310 = vrot.slane %v7728, %v8309
    %v8311 = vsel %vm1032, %v8310, %v8306
    %v8312 = vlaneseq
    %v8313 = vshrl.u32 %v8312, 7
    %v8314 = vsub.s32 %v1034, %v8313
    %v8315 = vrot.slane %v7731, %v8314
    %v8316 = vsel %vm1039, %v8315, %v8311
    %v8317 = vlaneseq
    %v8318 = vshrl.u32 %v8317, 7
    %v8319 = vsub.s32 %v1041, %v8318
    %v8320 = vrot.slane %v7734, %v8319
    %v8321 = vsel %vm1046, %v8320, %v8316
    %v8322 = vlaneseq
    %v8323 = vshrl.u32 %v8322, 7
    %v8324 = vsub.s32 %v1048, %v8323
    %v8325 = vrot.slane %v7737, %v8324
    %v8326 = vsel %vm1053, %v8325, %v8321
    %v8327 = vlaneseq
    %v8328 = vshrl.u32 %v8327, 7
    %v8329 = vsub.s32 %v1055, %v8328
    %v8330 = vrot.slane %v7740, %v8329
    %v8331 = vsel %vm1060, %v8330, %v8326
    %v8332 = vlaneseq
    %v8333 = vshrl.u32 %v8332, 7
    %v8334 = vsub.s32 %v1062, %v8333
    %v8335 = vrot.slane %v7743, %v8334
    %v8336 = vsel %vm1067, %v8335, %v8331
    %v8337 = vlaneseq
    %v8338 = vshrl.u32 %v8337, 7
    %v8339 = vsub.s32 %v1069, %v8338
    %v8340 = vrot.slane %v7746, %v8339
    %v8341 = vsel %vm1074, %v8340, %v8336
    %v8342 = vlaneseq
    %v8343 = vshrl.u32 %v8342, 7
    %v8344 = vsub.s32 %v1076, %v8343
    %v8345 = vrot.slane %v7749, %v8344
    %v8346 = vsel %vm1081, %v8345, %v8341
    %v8347 = vlaneseq
    %v8348 = vshrl.u32 %v8347, 7
    %v8349 = vsub.s32 %v1083, %v8348
    %v8350 = vrot.slane %v7752, %v8349
    %v8351 = vsel %vm1088, %v8350, %v8346
    %v8352 = vlaneseq
    %v8353 = vshrl.u32 %v8352, 7
    %v8354 = vsub.s32 %v1090, %v8353
    %v8355 = vrot.slane %v7755, %v8354
    %v8356 = vsel %vm1095, %v8355, %v8351
    %v8357 = vlaneseq
    %v8358 = vshrl.u32 %v8357, 7
    %v8359 = vsub.s32 %v987, %v8358
    %v8360 = vrot.slane %v7758, %v8359
    %v8361 = vlaneseq
    %v8362 = vshrl.u32 %v8361, 7
    %v8363 = vsub.s32 %v992, %v8362
    %v8364 = vrot.slane %v7761, %v8363
    %v8365 = vsel %vm997, %v8364, %v8360
    %v8366 = vlaneseq
    %v8367 = vshrl.u32 %v8366, 7
    %v8368 = vsub.s32 %v999, %v8367
    %v8369 = vrot.slane %v7764, %v8368
    %v8370 = vsel %vm1004, %v8369, %v8365
    %v8371 = vlaneseq
    %v8372 = vshrl.u32 %v8371, 7
    %v8373 = vsub.s32 %v1006, %v8372
    %v8374 = vrot.slane %v7767, %v8373
    %v8375 = vsel %vm1011, %v8374, %v8370
    %v8376 = vlaneseq
    %v8377 = vshrl.u32 %v8376, 7
    %v8378 = vsub.s32 %v1013, %v8377
    %v8379 = vrot.slane %v7770, %v8378
    %v8380 = vsel %vm1018, %v8379, %v8375
    %v8381 = vlaneseq
    %v8382 = vshrl.u32 %v8381, 7
    %v8383 = vsub.s32 %v1020, %v8382
    %v8384 = vrot.slane %v7773, %v8383
    %v8385 = vsel %vm1025, %v8384, %v8380
    %v8386 = vlaneseq
    %v8387 = vshrl.u32 %v8386, 7
    %v8388 = vsub.s32 %v1027, %v8387
    %v8389 = vrot.slane %v7776, %v8388
    %v8390 = vsel %vm1032, %v8389, %v8385
    %v8391 = vlaneseq
    %v8392 = vshrl.u32 %v8391, 7
    %v8393 = vsub.s32 %v1034, %v8392
    %v8394 = vrot.slane %v7779, %v8393
    %v8395 = vsel %vm1039, %v8394, %v8390
    %v8396 = vlaneseq
    %v8397 = vshrl.u32 %v8396, 7
    %v8398 = vsub.s32 %v1041, %v8397
    %v8399 = vrot.slane %v7782, %v8398
    %v8400 = vsel %vm1046, %v8399, %v8395
    %v8401 = vlaneseq
    %v8402 = vshrl.u32 %v8401, 7
    %v8403 = vsub.s32 %v1048, %v8402
    %v8404 = vrot.slane %v7785, %v8403
    %v8405 = vsel %vm1053, %v8404, %v8400
    %v8406 = vlaneseq
    %v8407 = vshrl.u32 %v8406, 7
    %v8408 = vsub.s32 %v1055, %v8407
    %v8409 = vrot.slane %v7788, %v8408
    %v8410 = vsel %vm1060, %v8409, %v8405
    %v8411 = vlaneseq
    %v8412 = vshrl.u32 %v8411, 7
    %v8413 = vsub.s32 %v1062, %v8412
    %v8414 = vrot.slane %v7791, %v8413
    %v8415 = vsel %vm1067, %v8414, %v8410
    %v8416 = vlaneseq
    %v8417 = vshrl.u32 %v8416, 7
    %v8418 = vsub.s32 %v1069, %v8417
    %v8419 = vrot.slane %v7794, %v8418
    %v8420 = vsel %vm1074, %v8419, %v8415
    %v8421 = vlaneseq
    %v8422 = vshrl.u32 %v8421, 7
    %v8423 = vsub.s32 %v1076, %v8422
    %v8424 = vrot.slane %v7797, %v8423
    %v8425 = vsel %vm1081, %v8424, %v8420
    %v8426 = vlaneseq
    %v8427 = vshrl.u32 %v8426, 7
    %v8428 = vsub.s32 %v1083, %v8427
    %v8429 = vrot.slane %v7800, %v8428
    %v8430 = vsel %vm1088, %v8429, %v8425
    %v8431 = vlaneseq
    %v8432 = vshrl.u32 %v8431, 7
    %v8433 = vsub.s32 %v1090, %v8432
    %v8434 = vrot.slane %v7803, %v8433
    %v8435 = vsel %vm1095, %v8434, %v8430
    %v8436 = vsel %vm1650, %v8198, %v7882
    %v8437 = vsel %vm1650, %v8277, %v7961
    %v8438 = vsel %vm1650, %v8356, %v8040
    %v8439 = vsel %vm1650, %v8435, %v8119
    %v8440 = vcombine.low %v8436, %v8437
    %v8441 = vcombine.low %v8438, %v8439
    %v8443 = vunpack.c.l.s4 1983009808
    %v8444 = vunpack.c.0.s8 %v8443
    %v8445 = vlaneseq
    %v8446 = vshrl.u32 %v8445, 7
    %v8447 = vsub.s32 %v8444, %v8446
    %v8448 = vrot.slane %v8440, %v8447
    %v8450 = vunpack.c.l.s4 1983009808
    %v8451 = vunpack.c.0.s8 %v8450
    %v8452 = vlaneseq
    %v8453 = vshrl.u32 %v8452, 7
    %v8454 = vsub.s32 %v8451, %v8453
    %v8455 = vrot.slane %v8441, %v8454
    %v8456 = vcombine.low %v8448, %v8455
    %8458 = vst [vmem:[#allocation2] sm:$0xff] %v8456
    // Predicated region
    $region18: #{channel_attention.1} parent=1 // pred_check
      _
    $region19: #{channel_attention.1} parent=1 // pred_check_branch
      %8460 = sbr.rel (0) target = $region21
    $region20: #{channel_attention.1} parent=1 // pred_region
      %s8462 = ssub.s32 128, 128
      %8463 = vsyncadd [#allocation3], %s8462
      %s8465 = sshll.u32 [#allocation2], 4
      %s8466 = int_to_ptr.vmem [resolvable:$true] %s8465
      %8468 = dma.vmem_to_hbm [thread:$0]  %s8466, 128, %s4, [#allocation3]
    $region21: #{channel_attention.1} parent=1 // pred_fallthru
      _
    // Predicated region
    $region22: #{channel_attention.1} parent=1 // pred_check
      _
    $region23: #{channel_attention.1} parent=1 // pred_check_branch
      %8470 = sbr.rel (0) target = $region25
    $region24: #{channel_attention.1} parent=1 // pred_region
      %8471 = dma.done [#allocation3], 128
    $region25: #{channel_attention.1} parent=1 // pred_fallthru
      _
    %8472 = vsyncpa [#allocation3], 1

</llo_original>
